<compile_context>
chip_gen: v7x
topology: tpu7x:2x2x1
jax: 0.10.0
libtpu: 0.0.40
codegen_flags: <defaults>
</compile_context>

<pallas_src>
import functools

import jax
import jax.numpy as jnp
from jax.experimental import pallas as pl
from jax.experimental.pallas import tpu as pltpu


# ------------------------------ fused kernel ------------------------------

def _encoder_block_kernel(xp_ref, w_ref, b_ref, g_ref, bt_ref, base_ref,
                          out_ref, idx_ref, *, B, Cin, Cout, Ho, Wo, Wc):
    # xp_ref  : (4*B, Hp, Wp, Cin)  2x2 phase-split input, phase ph = 2*pi+pj at
    #                               rows [ph*B, (ph+1)*B)
    # w_ref   : (9*Cin, Cout)       conv weight, rows ordered (di, dj, cin)
    # b_ref   : (1, Cout)           conv bias
    # g_ref   : (1, Cout)           BN gamma        bt_ref: (1, Cout) BN beta
    # base_ref: (B, Ho, Wo, 1) i32  flat conv-plane index of each window's top-left
    # out_ref : (B, Ho, Wo, Cout)   BN output (NHWC)
    # idx_ref : (B, Ho, Wo, Cout)   max-pool indices (int32)
    w_all = w_ref[...]                                   # (9*Cin, Cout)
    bias = b_ref[...]                                    # (1, Cout)
    base = base_ref[...]                                 # (B, Ho, Wo, 1) int32

    def conv_phase(pi, pj):
        # conv output at spatial positions (2*ho + pi, 2*wo + pj), fully unrolled
        # 3x3xCin contraction as VPU broadcast-FMAs (lowering-safe, no reshapes).
        acc = None
        for di in range(3):
            for dj in range(3):
                oi, oj = pi + di, pj + dj
                ph = (oi % 2) * 2 + (oj % 2)
                t = xp_ref[ph * B:(ph + 1) * B,
                           oi // 2: oi // 2 + Ho,
                           oj // 2: oj // 2 + Wo, :]      # (B, Ho, Wo, Cin)
                for c in range(Cin):
                    k = (di * 3 + dj) * Cin + c
                    term = t[..., c:c + 1] * w_all[k:k + 1, :]   # (B, Ho, Wo, Cout)
                    acc = term if acc is None else acc + term
        return acc + bias

    # ---- fused 2x2 max-pool + PyTorch-style flat indices ----
    pooled = None
    best_idx = None
    for pi in range(2):
        for pj in range(2):
            val = conv_phase(pi, pj)
            idx = base + (pi * Wc + pj)                   # (B, Ho, Wo, 1)
            if pooled is None:
                pooled = val
                best_idx = jnp.broadcast_to(idx, val.shape)
            else:
                take = val > pooled                       # strict '>' keeps first max on ties
                pooled = jnp.maximum(pooled, val)
                best_idx = jnp.where(take, idx, best_idx)
    idx_ref[...] = best_idx

    # ---- BatchNorm2d, training mode: per-channel batch stats (biased var) ----
    inv_n = 1.0 / float(B * Ho * Wo)

    def channel_mean(v):
        s = jnp.sum(v, axis=2, keepdims=True)             # sublane (Wo) reduce
        s = jnp.sum(s, axis=1, keepdims=True)             # Ho
        s = jnp.sum(s, axis=0, keepdims=True)             # B
        return s * inv_n                                  # (1, 1, 1, Cout)

    mean = channel_mean(pooled)
    centered = pooled - mean
    var = channel_mean(centered * centered)
    inv = jax.lax.rsqrt(var + 1e-5)
    out_ref[...] = centered * inv * g_ref[...] + bt_ref[...]


# ------------------------------ host wrapper ------------------------------

def encoder_block(x_nchw, w, b, gamma, beta):
    """EncoderBlock.forward: returns (bn(maxpool(conv(x))), mp_idx) in NCHW."""
    B, Cin, H, W = x_nchw.shape
    Cout = w.shape[0]
    assert H % 2 == 0 and W % 2 == 0, "expects even spatial dims"
    Hc, Wc = H - 2, W - 2
    Ho, Wo = Hc // 2, Wc // 2
    Hp, Wp = H // 2, W // 2

    # ---- layout plumbing only (tiny tensors); all compute happens in the kernel ----
    x = jnp.transpose(x_nchw, (0, 2, 3, 1))                         # NCHW -> NHWC
    # 2x2 space-to-depth phase split: xp[ph*B + b, i, j, c] = x[b, 2i+pi, 2j+pj, c]
    xp = x.reshape(B, Hp, 2, Wp, 2, Cin)
    xp = jnp.transpose(xp, (2, 4, 0, 1, 3, 5)).reshape(4 * B, Hp, Wp, Cin)
    # torch weight (Cout, Cin, 3, 3) -> rows ordered (di, dj, cin)
    w2 = jnp.transpose(w, (2, 3, 1, 0)).reshape(9 * Cin, Cout)
    # flat conv-plane index of the top-left element of every pooling window
    base = (2 * jnp.arange(Ho, dtype=jnp.int32)[:, None] * Wc
            + 2 * jnp.arange(Wo, dtype=jnp.int32)[None, :])
    base = jnp.broadcast_to(base[None, :, :, None], (B, Ho, Wo, 1)).astype(jnp.int32)

    kernel = functools.partial(_encoder_block_kernel, B=B, Cin=Cin, Cout=Cout,
                               Ho=Ho, Wo=Wo, Wc=Wc)

    def full_spec(shape):
        return pl.BlockSpec(shape, lambda i, _n=len(shape): (0,) * _n)

    y4, idx4 = pl.pallas_call(
        kernel,
        out_shape=(jax.ShapeDtypeStruct((B, Ho, Wo, Cout), jnp.float32),
                   jax.ShapeDtypeStruct((B, Ho, Wo, Cout), jnp.int32)),
        grid=(1,),
        in_specs=[full_spec((4 * B, Hp, Wp, Cin)),
                  full_spec((9 * Cin, Cout)),
                  full_spec((1, Cout)),
                  full_spec((1, Cout)),
                  full_spec((1, Cout)),
                  full_spec((B, Ho, Wo, 1))],
        out_specs=(full_spec((B, Ho, Wo, Cout)),
                   full_spec((B, Ho, Wo, Cout))),
        compiler_params=pltpu.CompilerParams(dimension_semantics=("arbitrary",)),
    )(xp, w2, b.reshape(1, Cout), gamma.reshape(1, Cout), beta.reshape(1, Cout),
      base)

    # NHWC -> NCHW on the tiny outputs
    y = jnp.transpose(y4, (0, 3, 1, 2))
    mp_idx = jnp.transpose(idx4, (0, 3, 1, 2))
    return y, mp_idx


# --------------------------- pure-JAX reference ---------------------------

def encoder_block_ref(x, w, b, gamma, beta):
    conv = jax.lax.conv_general_dilated(
        x, w, window_strides=(1, 1), padding="VALID",
        dimension_numbers=("NCHW", "OIHW", "NCHW")) + b.reshape(1, -1, 1, 1)
    B, C, Hc, Wc = conv.shape
    Ho, Wo = Hc // 2, Wc // 2
    win = conv[:, :, :2 * Ho, :2 * Wo].reshape(B, C, Ho, 2, Wo, 2)
    win = jnp.transpose(win, (0, 1, 2, 4, 3, 5)).reshape(B, C, Ho, Wo, 4)
    pooled = win.max(axis=-1)
    k = jnp.argmax(win, axis=-1).astype(jnp.int32)
    rows = 2 * jnp.arange(Ho, dtype=jnp.int32).reshape(1, 1, Ho, 1) + k // 2
    cols = 2 * jnp.arange(Wo, dtype=jnp.int32).reshape(1, 1, 1, Wo) + k % 2
    idx = rows * Wc + cols
    mean = pooled.mean(axis=(0, 2, 3), keepdims=True)
    var = ((pooled - mean) ** 2).mean(axis=(0, 2, 3), keepdims=True)
    y = (pooled - mean) * jax.lax.rsqrt(var + 1e-5) * gamma.reshape(1, -1, 1, 1) \
        + beta.reshape(1, -1, 1, 1)
    return y, idx


# ---------------------------------- main ----------------------------------

if __name__ == "__main__":
    key = jax.random.PRNGKey(0)
    k1, k2, k3, k4, k5 = jax.random.split(key, 5)
    B, Cin, H, W = 2, 4, 16, 16          # x: [2, 4, 16, 16]
    Cout = 8                             # EncoderBlock(4, 8)

    x = jax.random.normal(k1, (B, Cin, H, W), jnp.float32)
    w = 0.2 * jax.random.normal(k2, (Cout, Cin, 3, 3), jnp.float32)
    b = 0.1 * jax.random.normal(k3, (Cout,), jnp.float32)
    gamma = 1.0 + 0.1 * jax.random.normal(k4, (Cout,), jnp.float32)
    beta = 0.1 * jax.random.normal(k5, (Cout,), jnp.float32)

    y, mp_idx = jax.jit(encoder_block)(x, w, b, gamma, beta)
    jax.block_until_ready((y, mp_idx))

    Ho = Wo = (H - 2) // 2               # matches EncoderBlock.output_shape
    assert y.shape == (B, Cout, Ho, Wo) and y.dtype == jnp.float32
    assert mp_idx.shape == (B, Cout, Ho, Wo) and mp_idx.dtype == jnp.int32

    y_exp, idx_exp = encoder_block_ref(x, w, b, gamma, beta)
    assert jnp.allclose(y, y_exp, atol=1e-3, rtol=1e-3), \
        float(jnp.max(jnp.abs(y - y_exp)))
    assert bool(jnp.all(mp_idx == idx_exp))

    print("KERNEL_OK")
</pallas_src>

<mosaic_0001>
module attributes {stable_mosaic.version = 11 : i64} {
  func.func @_encoder_block_kernel(%arg0: i32, %arg1: memref<8x8x8x4xf32, #tpu.memory_space<vmem>>, %arg2: memref<36x8xf32, #tpu.memory_space<vmem>>, %arg3: memref<1x8xf32, #tpu.memory_space<vmem>>, %arg4: memref<1x8xf32, #tpu.memory_space<vmem>>, %arg5: memref<1x8xf32, #tpu.memory_space<vmem>>, %arg6: memref<2x7x7x1xi32, #tpu.memory_space<vmem>>, %arg7: memref<2x7x7x8xf32, #tpu.memory_space<vmem>>, %arg8: memref<2x7x7x8xi32, #tpu.memory_space<vmem>>) attributes {dimension_semantics = [#tpu.dimension_semantics<arbitrary>], iteration_bounds = array<i64: 1>, scalar_prefetch = 0 : i64, scratch_operands = 0 : i64, tpu.core_type = #tpu.core_type<tc>, window_params = [{pipeline_mode = #tpu.pipeline_mode<synchronous>, transform_indices = @transform_0, window_bounds = array<i64: 8, 8, 8, 4>}, {pipeline_mode = #tpu.pipeline_mode<synchronous>, transform_indices = @transform_1, window_bounds = array<i64: 36, 8>}, {pipeline_mode = #tpu.pipeline_mode<synchronous>, transform_indices = @transform_2, window_bounds = array<i64: 1, 8>}, {pipeline_mode = #tpu.pipeline_mode<synchronous>, transform_indices = @transform_3, window_bounds = array<i64: 1, 8>}, {pipeline_mode = #tpu.pipeline_mode<synchronous>, transform_indices = @transform_4, window_bounds = array<i64: 1, 8>}, {pipeline_mode = #tpu.pipeline_mode<synchronous>, transform_indices = @transform_5, window_bounds = array<i64: 2, 7, 7, 1>}, {pipeline_mode = #tpu.pipeline_mode<synchronous>, transform_indices = @transform_6, window_bounds = array<i64: 2, 7, 7, 8>}, {pipeline_mode = #tpu.pipeline_mode<synchronous>, transform_indices = @transform_7, window_bounds = array<i64: 2, 7, 7, 8>}]} {
    %c0 = arith.constant 0 : index
    %c0_0 = arith.constant 0 : index
    %0 = vector.load %arg2[%c0, %c0_0] : memref<36x8xf32, #tpu.memory_space<vmem>>, vector<36x8xf32>
    %c0_1 = arith.constant 0 : index
    %c0_2 = arith.constant 0 : index
    %1 = vector.load %arg3[%c0_1, %c0_2] : memref<1x8xf32, #tpu.memory_space<vmem>>, vector<1x8xf32>
    %c0_3 = arith.constant 0 : index
    %c0_4 = arith.constant 0 : index
    %c0_5 = arith.constant 0 : index
    %c0_6 = arith.constant 0 : index
    %2 = vector.load %arg6[%c0_3, %c0_4, %c0_5, %c0_6] : memref<2x7x7x1xi32, #tpu.memory_space<vmem>>, vector<2x7x7x1xi32>
    %c0_7 = arith.constant 0 : index
    %c0_8 = arith.constant 0 : index
    %c0_9 = arith.constant 0 : index
    %c0_10 = arith.constant 0 : index
    %3 = vector.load %arg1[%c0_7, %c0_8, %c0_9, %c0_10] : memref<8x8x8x4xf32, #tpu.memory_space<vmem>>, vector<2x7x7x4xf32>
    %4 = vector.extract_strided_slice %3 {offsets = [0, 0, 0, 0], sizes = [2, 7, 7, 1], strides = [1, 1, 1, 1]} : vector<2x7x7x4xf32> to vector<2x7x7x1xf32>
    %5 = vector.extract_strided_slice %0 {offsets = [0, 0], sizes = [1, 8], strides = [1, 1]} : vector<36x8xf32> to vector<1x8xf32>
    %6 = vector.shape_cast %5 : vector<1x8xf32> to vector<1x1x1x8xf32>
    %7 = vector.broadcast %4 : vector<2x7x7x1xf32> to vector<2x7x7x8xf32>
    %8 = vector.broadcast %6 : vector<1x1x1x8xf32> to vector<2x7x7x8xf32>
    %9 = arith.mulf %7, %8 : vector<2x7x7x8xf32>
    %10 = vector.extract_strided_slice %3 {offsets = [0, 0, 0, 1], sizes = [2, 7, 7, 1], strides = [1, 1, 1, 1]} : vector<2x7x7x4xf32> to vector<2x7x7x1xf32>
    %11 = vector.extract_strided_slice %0 {offsets = [1, 0], sizes = [1, 8], strides = [1, 1]} : vector<36x8xf32> to vector<1x8xf32>
    %12 = vector.shape_cast %11 : vector<1x8xf32> to vector<1x1x1x8xf32>
    %13 = vector.broadcast %10 : vector<2x7x7x1xf32> to vector<2x7x7x8xf32>
    %14 = vector.broadcast %12 : vector<1x1x1x8xf32> to vector<2x7x7x8xf32>
    %15 = arith.mulf %13, %14 : vector<2x7x7x8xf32>
    %16 = arith.addf %9, %15 : vector<2x7x7x8xf32>
    %17 = vector.extract_strided_slice %3 {offsets = [0, 0, 0, 2], sizes = [2, 7, 7, 1], strides = [1, 1, 1, 1]} : vector<2x7x7x4xf32> to vector<2x7x7x1xf32>
    %18 = vector.extract_strided_slice %0 {offsets = [2, 0], sizes = [1, 8], strides = [1, 1]} : vector<36x8xf32> to vector<1x8xf32>
    %19 = vector.shape_cast %18 : vector<1x8xf32> to vector<1x1x1x8xf32>
    %20 = vector.broadcast %17 : vector<2x7x7x1xf32> to vector<2x7x7x8xf32>
    %21 = vector.broadcast %19 : vector<1x1x1x8xf32> to vector<2x7x7x8xf32>
    %22 = arith.mulf %20, %21 : vector<2x7x7x8xf32>
    %23 = arith.addf %16, %22 : vector<2x7x7x8xf32>
    %24 = vector.extract_strided_slice %3 {offsets = [0, 0, 0, 3], sizes = [2, 7, 7, 1], strides = [1, 1, 1, 1]} : vector<2x7x7x4xf32> to vector<2x7x7x1xf32>
    %25 = vector.extract_strided_slice %0 {offsets = [3, 0], sizes = [1, 8], strides = [1, 1]} : vector<36x8xf32> to vector<1x8xf32>
    %26 = vector.shape_cast %25 : vector<1x8xf32> to vector<1x1x1x8xf32>
    %27 = vector.broadcast %24 : vector<2x7x7x1xf32> to vector<2x7x7x8xf32>
    %28 = vector.broadcast %26 : vector<1x1x1x8xf32> to vector<2x7x7x8xf32>
    %29 = arith.mulf %27, %28 : vector<2x7x7x8xf32>
    %30 = arith.addf %23, %29 : vector<2x7x7x8xf32>
    %c2 = arith.constant 2 : index
    %c0_11 = arith.constant 0 : index
    %c0_12 = arith.constant 0 : index
    %c0_13 = arith.constant 0 : index
    %31 = vector.load %arg1[%c2, %c0_11, %c0_12, %c0_13] : memref<8x8x8x4xf32, #tpu.memory_space<vmem>>, vector<2x7x7x4xf32>
    %32 = vector.extract_strided_slice %31 {offsets = [0, 0, 0, 0], sizes = [2, 7, 7, 1], strides = [1, 1, 1, 1]} : vector<2x7x7x4xf32> to vector<2x7x7x1xf32>
    %33 = vector.extract_strided_slice %0 {offsets = [4, 0], sizes = [1, 8], strides = [1, 1]} : vector<36x8xf32> to vector<1x8xf32>
    %34 = vector.shape_cast %33 : vector<1x8xf32> to vector<1x1x1x8xf32>
    %35 = vector.broadcast %32 : vector<2x7x7x1xf32> to vector<2x7x7x8xf32>
    %36 = vector.broadcast %34 : vector<1x1x1x8xf32> to vector<2x7x7x8xf32>
    %37 = arith.mulf %35, %36 : vector<2x7x7x8xf32>
    %38 = arith.addf %30, %37 : vector<2x7x7x8xf32>
    %39 = vector.extract_strided_slice %31 {offsets = [0, 0, 0, 1], sizes = [2, 7, 7, 1], strides = [1, 1, 1, 1]} : vector<2x7x7x4xf32> to vector<2x7x7x1xf32>
    %40 = vector.extract_strided_slice %0 {offsets = [5, 0], sizes = [1, 8], strides = [1, 1]} : vector<36x8xf32> to vector<1x8xf32>
    %41 = vector.shape_cast %40 : vector<1x8xf32> to vector<1x1x1x8xf32>
    %42 = vector.broadcast %39 : vector<2x7x7x1xf32> to vector<2x7x7x8xf32>
    %43 = vector.broadcast %41 : vector<1x1x1x8xf32> to vector<2x7x7x8xf32>
    %44 = arith.mulf %42, %43 : vector<2x7x7x8xf32>
    %45 = arith.addf %38, %44 : vector<2x7x7x8xf32>
    %46 = vector.extract_strided_slice %31 {offsets = [0, 0, 0, 2], sizes = [2, 7, 7, 1], strides = [1, 1, 1, 1]} : vector<2x7x7x4xf32> to vector<2x7x7x1xf32>
    %47 = vector.extract_strided_slice %0 {offsets = [6, 0], sizes = [1, 8], strides = [1, 1]} : vector<36x8xf32> to vector<1x8xf32>
    %48 = vector.shape_cast %47 : vector<1x8xf32> to vector<1x1x1x8xf32>
    %49 = vector.broadcast %46 : vector<2x7x7x1xf32> to vector<2x7x7x8xf32>
    %50 = vector.broadcast %48 : vector<1x1x1x8xf32> to vector<2x7x7x8xf32>
    %51 = arith.mulf %49, %50 : vector<2x7x7x8xf32>
    %52 = arith.addf %45, %51 : vector<2x7x7x8xf32>
    %53 = vector.extract_strided_slice %31 {offsets = [0, 0, 0, 3], sizes = [2, 7, 7, 1], strides = [1, 1, 1, 1]} : vector<2x7x7x4xf32> to vector<2x7x7x1xf32>
    %54 = vector.extract_strided_slice %0 {offsets = [7, 0], sizes = [1, 8], strides = [1, 1]} : vector<36x8xf32> to vector<1x8xf32>
    %55 = vector.shape_cast %54 : vector<1x8xf32> to vector<1x1x1x8xf32>
    %56 = vector.broadcast %53 : vector<2x7x7x1xf32> to vector<2x7x7x8xf32>
    %57 = vector.broadcast %55 : vector<1x1x1x8xf32> to vector<2x7x7x8xf32>
    %58 = arith.mulf %56, %57 : vector<2x7x7x8xf32>
    %59 = arith.addf %52, %58 : vector<2x7x7x8xf32>
    %c0_14 = arith.constant 0 : index
    %c0_15 = arith.constant 0 : index
    %c1 = arith.constant 1 : index
    %c0_16 = arith.constant 0 : index
    %60 = vector.load %arg1[%c0_14, %c0_15, %c1, %c0_16] : memref<8x8x8x4xf32, #tpu.memory_space<vmem>>, vector<2x7x7x4xf32>
    %61 = vector.extract_strided_slice %60 {offsets = [0, 0, 0, 0], sizes = [2, 7, 7, 1], strides = [1, 1, 1, 1]} : vector<2x7x7x4xf32> to vector<2x7x7x1xf32>
    %62 = vector.extract_strided_slice %0 {offsets = [8, 0], sizes = [1, 8], strides = [1, 1]} : vector<36x8xf32> to vector<1x8xf32>
    %63 = vector.shape_cast %62 : vector<1x8xf32> to vector<1x1x1x8xf32>
    %64 = vector.broadcast %61 : vector<2x7x7x1xf32> to vector<2x7x7x8xf32>
    %65 = vector.broadcast %63 : vector<1x1x1x8xf32> to vector<2x7x7x8xf32>
    %66 = arith.mulf %64, %65 : vector<2x7x7x8xf32>
    %67 = arith.addf %59, %66 : vector<2x7x7x8xf32>
    %68 = vector.extract_strided_slice %60 {offsets = [0, 0, 0, 1], sizes = [2, 7, 7, 1], strides = [1, 1, 1, 1]} : vector<2x7x7x4xf32> to vector<2x7x7x1xf32>
    %69 = vector.extract_strided_slice %0 {offsets = [9, 0], sizes = [1, 8], strides = [1, 1]} : vector<36x8xf32> to vector<1x8xf32>
    %70 = vector.shape_cast %69 : vector<1x8xf32> to vector<1x1x1x8xf32>
    %71 = vector.broadcast %68 : vector<2x7x7x1xf32> to vector<2x7x7x8xf32>
    %72 = vector.broadcast %70 : vector<1x1x1x8xf32> to vector<2x7x7x8xf32>
    %73 = arith.mulf %71, %72 : vector<2x7x7x8xf32>
    %74 = arith.addf %67, %73 : vector<2x7x7x8xf32>
    %75 = vector.extract_strided_slice %60 {offsets = [0, 0, 0, 2], sizes = [2, 7, 7, 1], strides = [1, 1, 1, 1]} : vector<2x7x7x4xf32> to vector<2x7x7x1xf32>
    %76 = vector.extract_strided_slice %0 {offsets = [10, 0], sizes = [1, 8], strides = [1, 1]} : vector<36x8xf32> to vector<1x8xf32>
    %77 = vector.shape_cast %76 : vector<1x8xf32> to vector<1x1x1x8xf32>
    %78 = vector.broadcast %75 : vector<2x7x7x1xf32> to vector<2x7x7x8xf32>
    %79 = vector.broadcast %77 : vector<1x1x1x8xf32> to vector<2x7x7x8xf32>
    %80 = arith.mulf %78, %79 : vector<2x7x7x8xf32>
    %81 = arith.addf %74, %80 : vector<2x7x7x8xf32>
    %82 = vector.extract_strided_slice %60 {offsets = [0, 0, 0, 3], sizes = [2, 7, 7, 1], strides = [1, 1, 1, 1]} : vector<2x7x7x4xf32> to vector<2x7x7x1xf32>
    %83 = vector.extract_strided_slice %0 {offsets = [11, 0], sizes = [1, 8], strides = [1, 1]} : vector<36x8xf32> to vector<1x8xf32>
    %84 = vector.shape_cast %83 : vector<1x8xf32> to vector<1x1x1x8xf32>
    %85 = vector.broadcast %82 : vector<2x7x7x1xf32> to vector<2x7x7x8xf32>
    %86 = vector.broadcast %84 : vector<1x1x1x8xf32> to vector<2x7x7x8xf32>
    %87 = arith.mulf %85, %86 : vector<2x7x7x8xf32>
    %88 = arith.addf %81, %87 : vector<2x7x7x8xf32>
    %c4 = arith.constant 4 : index
    %c0_17 = arith.constant 0 : index
    %c0_18 = arith.constant 0 : index
    %c0_19 = arith.constant 0 : index
    %89 = vector.load %arg1[%c4, %c0_17, %c0_18, %c0_19] : memref<8x8x8x4xf32, #tpu.memory_space<vmem>>, vector<2x7x7x4xf32>
    %90 = vector.extract_strided_slice %89 {offsets = [0, 0, 0, 0], sizes = [2, 7, 7, 1], strides = [1, 1, 1, 1]} : vector<2x7x7x4xf32> to vector<2x7x7x1xf32>
    %91 = vector.extract_strided_slice %0 {offsets = [12, 0], sizes = [1, 8], strides = [1, 1]} : vector<36x8xf32> to vector<1x8xf32>
    %92 = vector.shape_cast %91 : vector<1x8xf32> to vector<1x1x1x8xf32>
    %93 = vector.broadcast %90 : vector<2x7x7x1xf32> to vector<2x7x7x8xf32>
    %94 = vector.broadcast %92 : vector<1x1x1x8xf32> to vector<2x7x7x8xf32>
    %95 = arith.mulf %93, %94 : vector<2x7x7x8xf32>
    %96 = arith.addf %88, %95 : vector<2x7x7x8xf32>
    %97 = vector.extract_strided_slice %89 {offsets = [0, 0, 0, 1], sizes = [2, 7, 7, 1], strides = [1, 1, 1, 1]} : vector<2x7x7x4xf32> to vector<2x7x7x1xf32>
    %98 = vector.extract_strided_slice %0 {offsets = [13, 0], sizes = [1, 8], strides = [1, 1]} : vector<36x8xf32> to vector<1x8xf32>
    %99 = vector.shape_cast %98 : vector<1x8xf32> to vector<1x1x1x8xf32>
    %100 = vector.broadcast %97 : vector<2x7x7x1xf32> to vector<2x7x7x8xf32>
    %101 = vector.broadcast %99 : vector<1x1x1x8xf32> to vector<2x7x7x8xf32>
    %102 = arith.mulf %100, %101 : vector<2x7x7x8xf32>
    %103 = arith.addf %96, %102 : vector<2x7x7x8xf32>
    %104 = vector.extract_strided_slice %89 {offsets = [0, 0, 0, 2], sizes = [2, 7, 7, 1], strides = [1, 1, 1, 1]} : vector<2x7x7x4xf32> to vector<2x7x7x1xf32>
    %105 = vector.extract_strided_slice %0 {offsets = [14, 0], sizes = [1, 8], strides = [1, 1]} : vector<36x8xf32> to vector<1x8xf32>
    %106 = vector.shape_cast %105 : vector<1x8xf32> to vector<1x1x1x8xf32>
    %107 = vector.broadcast %104 : vector<2x7x7x1xf32> to vector<2x7x7x8xf32>
    %108 = vector.broadcast %106 : vector<1x1x1x8xf32> to vector<2x7x7x8xf32>
    %109 = arith.mulf %107, %108 : vector<2x7x7x8xf32>
    %110 = arith.addf %103, %109 : vector<2x7x7x8xf32>
    %111 = vector.extract_strided_slice %89 {offsets = [0, 0, 0, 3], sizes = [2, 7, 7, 1], strides = [1, 1, 1, 1]} : vector<2x7x7x4xf32> to vector<2x7x7x1xf32>
    %112 = vector.extract_strided_slice %0 {offsets = [15, 0], sizes = [1, 8], strides = [1, 1]} : vector<36x8xf32> to vector<1x8xf32>
    %113 = vector.shape_cast %112 : vector<1x8xf32> to vector<1x1x1x8xf32>
    %114 = vector.broadcast %111 : vector<2x7x7x1xf32> to vector<2x7x7x8xf32>
    %115 = vector.broadcast %113 : vector<1x1x1x8xf32> to vector<2x7x7x8xf32>
    %116 = arith.mulf %114, %115 : vector<2x7x7x8xf32>
    %117 = arith.addf %110, %116 : vector<2x7x7x8xf32>
    %c6 = arith.constant 6 : index
    %c0_20 = arith.constant 0 : index
    %c0_21 = arith.constant 0 : index
    %c0_22 = arith.constant 0 : index
    %118 = vector.load %arg1[%c6, %c0_20, %c0_21, %c0_22] : memref<8x8x8x4xf32, #tpu.memory_space<vmem>>, vector<2x7x7x4xf32>
    %119 = vector.extract_strided_slice %118 {offsets = [0, 0, 0, 0], sizes = [2, 7, 7, 1], strides = [1, 1, 1, 1]} : vector<2x7x7x4xf32> to vector<2x7x7x1xf32>
    %120 = vector.extract_strided_slice %0 {offsets = [16, 0], sizes = [1, 8], strides = [1, 1]} : vector<36x8xf32> to vector<1x8xf32>
    %121 = vector.shape_cast %120 : vector<1x8xf32> to vector<1x1x1x8xf32>
    %122 = vector.broadcast %119 : vector<2x7x7x1xf32> to vector<2x7x7x8xf32>
    %123 = vector.broadcast %121 : vector<1x1x1x8xf32> to vector<2x7x7x8xf32>
    %124 = arith.mulf %122, %123 : vector<2x7x7x8xf32>
    %125 = arith.addf %117, %124 : vector<2x7x7x8xf32>
    %126 = vector.extract_strided_slice %118 {offsets = [0, 0, 0, 1], sizes = [2, 7, 7, 1], strides = [1, 1, 1, 1]} : vector<2x7x7x4xf32> to vector<2x7x7x1xf32>
    %127 = vector.extract_strided_slice %0 {offsets = [17, 0], sizes = [1, 8], strides = [1, 1]} : vector<36x8xf32> to vector<1x8xf32>
    %128 = vector.shape_cast %127 : vector<1x8xf32> to vector<1x1x1x8xf32>
    %129 = vector.broadcast %126 : vector<2x7x7x1xf32> to vector<2x7x7x8xf32>
    %130 = vector.broadcast %128 : vector<1x1x1x8xf32> to vector<2x7x7x8xf32>
    %131 = arith.mulf %129, %130 : vector<2x7x7x8xf32>
    %132 = arith.addf %125, %131 : vector<2x7x7x8xf32>
    %133 = vector.extract_strided_slice %118 {offsets = [0, 0, 0, 2], sizes = [2, 7, 7, 1], strides = [1, 1, 1, 1]} : vector<2x7x7x4xf32> to vector<2x7x7x1xf32>
    %134 = vector.extract_strided_slice %0 {offsets = [18, 0], sizes = [1, 8], strides = [1, 1]} : vector<36x8xf32> to vector<1x8xf32>
    %135 = vector.shape_cast %134 : vector<1x8xf32> to vector<1x1x1x8xf32>
    %136 = vector.broadcast %133 : vector<2x7x7x1xf32> to vector<2x7x7x8xf32>
    %137 = vector.broadcast %135 : vector<1x1x1x8xf32> to vector<2x7x7x8xf32>
    %138 = arith.mulf %136, %137 : vector<2x7x7x8xf32>
    %139 = arith.addf %132, %138 : vector<2x7x7x8xf32>
    %140 = vector.extract_strided_slice %118 {offsets = [0, 0, 0, 3], sizes = [2, 7, 7, 1], strides = [1, 1, 1, 1]} : vector<2x7x7x4xf32> to vector<2x7x7x1xf32>
    %141 = vector.extract_strided_slice %0 {offsets = [19, 0], sizes = [1, 8], strides = [1, 1]} : vector<36x8xf32> to vector<1x8xf32>
    %142 = vector.shape_cast %141 : vector<1x8xf32> to vector<1x1x1x8xf32>
    %143 = vector.broadcast %140 : vector<2x7x7x1xf32> to vector<2x7x7x8xf32>
    %144 = vector.broadcast %142 : vector<1x1x1x8xf32> to vector<2x7x7x8xf32>
    %145 = arith.mulf %143, %144 : vector<2x7x7x8xf32>
    %146 = arith.addf %139, %145 : vector<2x7x7x8xf32>
    %c4_23 = arith.constant 4 : index
    %c0_24 = arith.constant 0 : index
    %c1_25 = arith.constant 1 : index
    %c0_26 = arith.constant 0 : index
    %147 = vector.load %arg1[%c4_23, %c0_24, %c1_25, %c0_26] : memref<8x8x8x4xf32, #tpu.memory_space<vmem>>, vector<2x7x7x4xf32>
    %148 = vector.extract_strided_slice %147 {offsets = [0, 0, 0, 0], sizes = [2, 7, 7, 1], strides = [1, 1, 1, 1]} : vector<2x7x7x4xf32> to vector<2x7x7x1xf32>
    %149 = vector.extract_strided_slice %0 {offsets = [20, 0], sizes = [1, 8], strides = [1, 1]} : vector<36x8xf32> to vector<1x8xf32>
    %150 = vector.shape_cast %149 : vector<1x8xf32> to vector<1x1x1x8xf32>
    %151 = vector.broadcast %148 : vector<2x7x7x1xf32> to vector<2x7x7x8xf32>
    %152 = vector.broadcast %150 : vector<1x1x1x8xf32> to vector<2x7x7x8xf32>
    %153 = arith.mulf %151, %152 : vector<2x7x7x8xf32>
    %154 = arith.addf %146, %153 : vector<2x7x7x8xf32>
    %155 = vector.extract_strided_slice %147 {offsets = [0, 0, 0, 1], sizes = [2, 7, 7, 1], strides = [1, 1, 1, 1]} : vector<2x7x7x4xf32> to vector<2x7x7x1xf32>
    %156 = vector.extract_strided_slice %0 {offsets = [21, 0], sizes = [1, 8], strides = [1, 1]} : vector<36x8xf32> to vector<1x8xf32>
    %157 = vector.shape_cast %156 : vector<1x8xf32> to vector<1x1x1x8xf32>
    %158 = vector.broadcast %155 : vector<2x7x7x1xf32> to vector<2x7x7x8xf32>
    %159 = vector.broadcast %157 : vector<1x1x1x8xf32> to vector<2x7x7x8xf32>
    %160 = arith.mulf %158, %159 : vector<2x7x7x8xf32>
    %161 = arith.addf %154, %160 : vector<2x7x7x8xf32>
    %162 = vector.extract_strided_slice %147 {offsets = [0, 0, 0, 2], sizes = [2, 7, 7, 1], strides = [1, 1, 1, 1]} : vector<2x7x7x4xf32> to vector<2x7x7x1xf32>
    %163 = vector.extract_strided_slice %0 {offsets = [22, 0], sizes = [1, 8], strides = [1, 1]} : vector<36x8xf32> to vector<1x8xf32>
    %164 = vector.shape_cast %163 : vector<1x8xf32> to vector<1x1x1x8xf32>
    %165 = vector.broadcast %162 : vector<2x7x7x1xf32> to vector<2x7x7x8xf32>
    %166 = vector.broadcast %164 : vector<1x1x1x8xf32> to vector<2x7x7x8xf32>
    %167 = arith.mulf %165, %166 : vector<2x7x7x8xf32>
    %168 = arith.addf %161, %167 : vector<2x7x7x8xf32>
    %169 = vector.extract_strided_slice %147 {offsets = [0, 0, 0, 3], sizes = [2, 7, 7, 1], strides = [1, 1, 1, 1]} : vector<2x7x7x4xf32> to vector<2x7x7x1xf32>
    %170 = vector.extract_strided_slice %0 {offsets = [23, 0], sizes = [1, 8], strides = [1, 1]} : vector<36x8xf32> to vector<1x8xf32>
    %171 = vector.shape_cast %170 : vector<1x8xf32> to vector<1x1x1x8xf32>
    %172 = vector.broadcast %169 : vector<2x7x7x1xf32> to vector<2x7x7x8xf32>
    %173 = vector.broadcast %171 : vector<1x1x1x8xf32> to vector<2x7x7x8xf32>
    %174 = arith.mulf %172, %173 : vector<2x7x7x8xf32>
    %175 = arith.addf %168, %174 : vector<2x7x7x8xf32>
    %c0_27 = arith.constant 0 : index
    %c1_28 = arith.constant 1 : index
    %c0_29 = arith.constant 0 : index
    %c0_30 = arith.constant 0 : index
    %176 = vector.load %arg1[%c0_27, %c1_28, %c0_29, %c0_30] : memref<8x8x8x4xf32, #tpu.memory_space<vmem>>, vector<2x7x7x4xf32>
    %177 = vector.extract_strided_slice %176 {offsets = [0, 0, 0, 0], sizes = [2, 7, 7, 1], strides = [1, 1, 1, 1]} : vector<2x7x7x4xf32> to vector<2x7x7x1xf32>
    %178 = vector.extract_strided_slice %0 {offsets = [24, 0], sizes = [1, 8], strides = [1, 1]} : vector<36x8xf32> to vector<1x8xf32>
    %179 = vector.shape_cast %178 : vector<1x8xf32> to vector<1x1x1x8xf32>
    %180 = vector.broadcast %177 : vector<2x7x7x1xf32> to vector<2x7x7x8xf32>
    %181 = vector.broadcast %179 : vector<1x1x1x8xf32> to vector<2x7x7x8xf32>
    %182 = arith.mulf %180, %181 : vector<2x7x7x8xf32>
    %183 = arith.addf %175, %182 : vector<2x7x7x8xf32>
    %184 = vector.extract_strided_slice %176 {offsets = [0, 0, 0, 1], sizes = [2, 7, 7, 1], strides = [1, 1, 1, 1]} : vector<2x7x7x4xf32> to vector<2x7x7x1xf32>
    %185 = vector.extract_strided_slice %0 {offsets = [25, 0], sizes = [1, 8], strides = [1, 1]} : vector<36x8xf32> to vector<1x8xf32>
    %186 = vector.shape_cast %185 : vector<1x8xf32> to vector<1x1x1x8xf32>
    %187 = vector.broadcast %184 : vector<2x7x7x1xf32> to vector<2x7x7x8xf32>
    %188 = vector.broadcast %186 : vector<1x1x1x8xf32> to vector<2x7x7x8xf32>
    %189 = arith.mulf %187, %188 : vector<2x7x7x8xf32>
    %190 = arith.addf %183, %189 : vector<2x7x7x8xf32>
    %191 = vector.extract_strided_slice %176 {offsets = [0, 0, 0, 2], sizes = [2, 7, 7, 1], strides = [1, 1, 1, 1]} : vector<2x7x7x4xf32> to vector<2x7x7x1xf32>
    %192 = vector.extract_strided_slice %0 {offsets = [26, 0], sizes = [1, 8], strides = [1, 1]} : vector<36x8xf32> to vector<1x8xf32>
    %193 = vector.shape_cast %192 : vector<1x8xf32> to vector<1x1x1x8xf32>
    %194 = vector.broadcast %191 : vector<2x7x7x1xf32> to vector<2x7x7x8xf32>
    %195 = vector.broadcast %193 : vector<1x1x1x8xf32> to vector<2x7x7x8xf32>
    %196 = arith.mulf %194, %195 : vector<2x7x7x8xf32>
    %197 = arith.addf %190, %196 : vector<2x7x7x8xf32>
    %198 = vector.extract_strided_slice %176 {offsets = [0, 0, 0, 3], sizes = [2, 7, 7, 1], strides = [1, 1, 1, 1]} : vector<2x7x7x4xf32> to vector<2x7x7x1xf32>
    %199 = vector.extract_strided_slice %0 {offsets = [27, 0], sizes = [1, 8], strides = [1, 1]} : vector<36x8xf32> to vector<1x8xf32>
    %200 = vector.shape_cast %199 : vector<1x8xf32> to vector<1x1x1x8xf32>
    %201 = vector.broadcast %198 : vector<2x7x7x1xf32> to vector<2x7x7x8xf32>
    %202 = vector.broadcast %200 : vector<1x1x1x8xf32> to vector<2x7x7x8xf32>
    %203 = arith.mulf %201, %202 : vector<2x7x7x8xf32>
    %204 = arith.addf %197, %203 : vector<2x7x7x8xf32>
    %c2_31 = arith.constant 2 : index
    %c1_32 = arith.constant 1 : index
    %c0_33 = arith.constant 0 : index
    %c0_34 = arith.constant 0 : index
    %205 = vector.load %arg1[%c2_31, %c1_32, %c0_33, %c0_34] : memref<8x8x8x4xf32, #tpu.memory_space<vmem>>, vector<2x7x7x4xf32>
    %206 = vector.extract_strided_slice %205 {offsets = [0, 0, 0, 0], sizes = [2, 7, 7, 1], strides = [1, 1, 1, 1]} : vector<2x7x7x4xf32> to vector<2x7x7x1xf32>
    %207 = vector.extract_strided_slice %0 {offsets = [28, 0], sizes = [1, 8], strides = [1, 1]} : vector<36x8xf32> to vector<1x8xf32>
    %208 = vector.shape_cast %207 : vector<1x8xf32> to vector<1x1x1x8xf32>
    %209 = vector.broadcast %206 : vector<2x7x7x1xf32> to vector<2x7x7x8xf32>
    %210 = vector.broadcast %208 : vector<1x1x1x8xf32> to vector<2x7x7x8xf32>
    %211 = arith.mulf %209, %210 : vector<2x7x7x8xf32>
    %212 = arith.addf %204, %211 : vector<2x7x7x8xf32>
    %213 = vector.extract_strided_slice %205 {offsets = [0, 0, 0, 1], sizes = [2, 7, 7, 1], strides = [1, 1, 1, 1]} : vector<2x7x7x4xf32> to vector<2x7x7x1xf32>
    %214 = vector.extract_strided_slice %0 {offsets = [29, 0], sizes = [1, 8], strides = [1, 1]} : vector<36x8xf32> to vector<1x8xf32>
    %215 = vector.shape_cast %214 : vector<1x8xf32> to vector<1x1x1x8xf32>
    %216 = vector.broadcast %213 : vector<2x7x7x1xf32> to vector<2x7x7x8xf32>
    %217 = vector.broadcast %215 : vector<1x1x1x8xf32> to vector<2x7x7x8xf32>
    %218 = arith.mulf %216, %217 : vector<2x7x7x8xf32>
    %219 = arith.addf %212, %218 : vector<2x7x7x8xf32>
    %220 = vector.extract_strided_slice %205 {offsets = [0, 0, 0, 2], sizes = [2, 7, 7, 1], strides = [1, 1, 1, 1]} : vector<2x7x7x4xf32> to vector<2x7x7x1xf32>
    %221 = vector.extract_strided_slice %0 {offsets = [30, 0], sizes = [1, 8], strides = [1, 1]} : vector<36x8xf32> to vector<1x8xf32>
    %222 = vector.shape_cast %221 : vector<1x8xf32> to vector<1x1x1x8xf32>
    %223 = vector.broadcast %220 : vector<2x7x7x1xf32> to vector<2x7x7x8xf32>
    %224 = vector.broadcast %222 : vector<1x1x1x8xf32> to vector<2x7x7x8xf32>
    %225 = arith.mulf %223, %224 : vector<2x7x7x8xf32>
    %226 = arith.addf %219, %225 : vector<2x7x7x8xf32>
    %227 = vector.extract_strided_slice %205 {offsets = [0, 0, 0, 3], sizes = [2, 7, 7, 1], strides = [1, 1, 1, 1]} : vector<2x7x7x4xf32> to vector<2x7x7x1xf32>
    %228 = vector.extract_strided_slice %0 {offsets = [31, 0], sizes = [1, 8], strides = [1, 1]} : vector<36x8xf32> to vector<1x8xf32>
    %229 = vector.shape_cast %228 : vector<1x8xf32> to vector<1x1x1x8xf32>
    %230 = vector.broadcast %227 : vector<2x7x7x1xf32> to vector<2x7x7x8xf32>
    %231 = vector.broadcast %229 : vector<1x1x1x8xf32> to vector<2x7x7x8xf32>
    %232 = arith.mulf %230, %231 : vector<2x7x7x8xf32>
    %233 = arith.addf %226, %232 : vector<2x7x7x8xf32>
    %c0_35 = arith.constant 0 : index
    %c1_36 = arith.constant 1 : index
    %c1_37 = arith.constant 1 : index
    %c0_38 = arith.constant 0 : index
    %234 = vector.load %arg1[%c0_35, %c1_36, %c1_37, %c0_38] : memref<8x8x8x4xf32, #tpu.memory_space<vmem>>, vector<2x7x7x4xf32>
    %235 = vector.extract_strided_slice %234 {offsets = [0, 0, 0, 0], sizes = [2, 7, 7, 1], strides = [1, 1, 1, 1]} : vector<2x7x7x4xf32> to vector<2x7x7x1xf32>
    %236 = vector.extract_strided_slice %0 {offsets = [32, 0], sizes = [1, 8], strides = [1, 1]} : vector<36x8xf32> to vector<1x8xf32>
    %237 = vector.shape_cast %236 : vector<1x8xf32> to vector<1x1x1x8xf32>
    %238 = vector.broadcast %235 : vector<2x7x7x1xf32> to vector<2x7x7x8xf32>
    %239 = vector.broadcast %237 : vector<1x1x1x8xf32> to vector<2x7x7x8xf32>
    %240 = arith.mulf %238, %239 : vector<2x7x7x8xf32>
    %241 = arith.addf %233, %240 : vector<2x7x7x8xf32>
    %242 = vector.extract_strided_slice %234 {offsets = [0, 0, 0, 1], sizes = [2, 7, 7, 1], strides = [1, 1, 1, 1]} : vector<2x7x7x4xf32> to vector<2x7x7x1xf32>
    %243 = vector.extract_strided_slice %0 {offsets = [33, 0], sizes = [1, 8], strides = [1, 1]} : vector<36x8xf32> to vector<1x8xf32>
    %244 = vector.shape_cast %243 : vector<1x8xf32> to vector<1x1x1x8xf32>
    %245 = vector.broadcast %242 : vector<2x7x7x1xf32> to vector<2x7x7x8xf32>
    %246 = vector.broadcast %244 : vector<1x1x1x8xf32> to vector<2x7x7x8xf32>
    %247 = arith.mulf %245, %246 : vector<2x7x7x8xf32>
    %248 = arith.addf %241, %247 : vector<2x7x7x8xf32>
    %249 = vector.extract_strided_slice %234 {offsets = [0, 0, 0, 2], sizes = [2, 7, 7, 1], strides = [1, 1, 1, 1]} : vector<2x7x7x4xf32> to vector<2x7x7x1xf32>
    %250 = vector.extract_strided_slice %0 {offsets = [34, 0], sizes = [1, 8], strides = [1, 1]} : vector<36x8xf32> to vector<1x8xf32>
    %251 = vector.shape_cast %250 : vector<1x8xf32> to vector<1x1x1x8xf32>
    %252 = vector.broadcast %249 : vector<2x7x7x1xf32> to vector<2x7x7x8xf32>
    %253 = vector.broadcast %251 : vector<1x1x1x8xf32> to vector<2x7x7x8xf32>
    %254 = arith.mulf %252, %253 : vector<2x7x7x8xf32>
    %255 = arith.addf %248, %254 : vector<2x7x7x8xf32>
    %256 = vector.extract_strided_slice %234 {offsets = [0, 0, 0, 3], sizes = [2, 7, 7, 1], strides = [1, 1, 1, 1]} : vector<2x7x7x4xf32> to vector<2x7x7x1xf32>
    %257 = vector.extract_strided_slice %0 {offsets = [35, 0], sizes = [1, 8], strides = [1, 1]} : vector<36x8xf32> to vector<1x8xf32>
    %258 = vector.shape_cast %257 : vector<1x8xf32> to vector<1x1x1x8xf32>
    %259 = vector.broadcast %256 : vector<2x7x7x1xf32> to vector<2x7x7x8xf32>
    %260 = vector.broadcast %258 : vector<1x1x1x8xf32> to vector<2x7x7x8xf32>
    %261 = arith.mulf %259, %260 : vector<2x7x7x8xf32>
    %262 = arith.addf %255, %261 : vector<2x7x7x8xf32>
    %263 = vector.shape_cast %1 : vector<1x8xf32> to vector<1x1x1x8xf32>
    %264 = vector.broadcast %263 : vector<1x1x1x8xf32> to vector<2x7x7x8xf32>
    %265 = arith.addf %262, %264 : vector<2x7x7x8xf32>
    %c0_i32 = arith.constant 0 : i32
    %266 = vector.broadcast %c0_i32 : i32 to vector<2x7x7x1xi32>
    %267 = arith.addi %2, %266 : vector<2x7x7x1xi32>
    %268 = vector.shape_cast %267 : vector<2x7x7x1xi32> to vector<2x7x7x1xi32>
    %269 = vector.broadcast %268 : vector<2x7x7x1xi32> to vector<2x7x7x8xi32>
    %c2_39 = arith.constant 2 : index
    %c0_40 = arith.constant 0 : index
    %c0_41 = arith.constant 0 : index
    %c0_42 = arith.constant 0 : index
    %270 = vector.load %arg1[%c2_39, %c0_40, %c0_41, %c0_42] : memref<8x8x8x4xf32, #tpu.memory_space<vmem>>, vector<2x7x7x4xf32>
    %271 = vector.extract_strided_slice %270 {offsets = [0, 0, 0, 0], sizes = [2, 7, 7, 1], strides = [1, 1, 1, 1]} : vector<2x7x7x4xf32> to vector<2x7x7x1xf32>
    %272 = vector.extract_strided_slice %0 {offsets = [0, 0], sizes = [1, 8], strides = [1, 1]} : vector<36x8xf32> to vector<1x8xf32>
    %273 = vector.shape_cast %272 : vector<1x8xf32> to vector<1x1x1x8xf32>
    %274 = vector.broadcast %271 : vector<2x7x7x1xf32> to vector<2x7x7x8xf32>
    %275 = vector.broadcast %273 : vector<1x1x1x8xf32> to vector<2x7x7x8xf32>
    %276 = arith.mulf %274, %275 : vector<2x7x7x8xf32>
    %277 = vector.extract_strided_slice %270 {offsets = [0, 0, 0, 1], sizes = [2, 7, 7, 1], strides = [1, 1, 1, 1]} : vector<2x7x7x4xf32> to vector<2x7x7x1xf32>
    %278 = vector.extract_strided_slice %0 {offsets = [1, 0], sizes = [1, 8], strides = [1, 1]} : vector<36x8xf32> to vector<1x8xf32>
    %279 = vector.shape_cast %278 : vector<1x8xf32> to vector<1x1x1x8xf32>
    %280 = vector.broadcast %277 : vector<2x7x7x1xf32> to vector<2x7x7x8xf32>
    %281 = vector.broadcast %279 : vector<1x1x1x8xf32> to vector<2x7x7x8xf32>
    %282 = arith.mulf %280, %281 : vector<2x7x7x8xf32>
    %283 = arith.addf %276, %282 : vector<2x7x7x8xf32>
    %284 = vector.extract_strided_slice %270 {offsets = [0, 0, 0, 2], sizes = [2, 7, 7, 1], strides = [1, 1, 1, 1]} : vector<2x7x7x4xf32> to vector<2x7x7x1xf32>
    %285 = vector.extract_strided_slice %0 {offsets = [2, 0], sizes = [1, 8], strides = [1, 1]} : vector<36x8xf32> to vector<1x8xf32>
    %286 = vector.shape_cast %285 : vector<1x8xf32> to vector<1x1x1x8xf32>
    %287 = vector.broadcast %284 : vector<2x7x7x1xf32> to vector<2x7x7x8xf32>
    %288 = vector.broadcast %286 : vector<1x1x1x8xf32> to vector<2x7x7x8xf32>
    %289 = arith.mulf %287, %288 : vector<2x7x7x8xf32>
    %290 = arith.addf %283, %289 : vector<2x7x7x8xf32>
    %291 = vector.extract_strided_slice %270 {offsets = [0, 0, 0, 3], sizes = [2, 7, 7, 1], strides = [1, 1, 1, 1]} : vector<2x7x7x4xf32> to vector<2x7x7x1xf32>
    %292 = vector.extract_strided_slice %0 {offsets = [3, 0], sizes = [1, 8], strides = [1, 1]} : vector<36x8xf32> to vector<1x8xf32>
    %293 = vector.shape_cast %292 : vector<1x8xf32> to vector<1x1x1x8xf32>
    %294 = vector.broadcast %291 : vector<2x7x7x1xf32> to vector<2x7x7x8xf32>
    %295 = vector.broadcast %293 : vector<1x1x1x8xf32> to vector<2x7x7x8xf32>
    %296 = arith.mulf %294, %295 : vector<2x7x7x8xf32>
    %297 = arith.addf %290, %296 : vector<2x7x7x8xf32>
    %c0_43 = arith.constant 0 : index
    %c0_44 = arith.constant 0 : index
    %c1_45 = arith.constant 1 : index
    %c0_46 = arith.constant 0 : index
    %298 = vector.load %arg1[%c0_43, %c0_44, %c1_45, %c0_46] : memref<8x8x8x4xf32, #tpu.memory_space<vmem>>, vector<2x7x7x4xf32>
    %299 = vector.extract_strided_slice %298 {offsets = [0, 0, 0, 0], sizes = [2, 7, 7, 1], strides = [1, 1, 1, 1]} : vector<2x7x7x4xf32> to vector<2x7x7x1xf32>
    %300 = vector.extract_strided_slice %0 {offsets = [4, 0], sizes = [1, 8], strides = [1, 1]} : vector<36x8xf32> to vector<1x8xf32>
    %301 = vector.shape_cast %300 : vector<1x8xf32> to vector<1x1x1x8xf32>
    %302 = vector.broadcast %299 : vector<2x7x7x1xf32> to vector<2x7x7x8xf32>
    %303 = vector.broadcast %301 : vector<1x1x1x8xf32> to vector<2x7x7x8xf32>
    %304 = arith.mulf %302, %303 : vector<2x7x7x8xf32>
    %305 = arith.addf %297, %304 : vector<2x7x7x8xf32>
    %306 = vector.extract_strided_slice %298 {offsets = [0, 0, 0, 1], sizes = [2, 7, 7, 1], strides = [1, 1, 1, 1]} : vector<2x7x7x4xf32> to vector<2x7x7x1xf32>
    %307 = vector.extract_strided_slice %0 {offsets = [5, 0], sizes = [1, 8], strides = [1, 1]} : vector<36x8xf32> to vector<1x8xf32>
    %308 = vector.shape_cast %307 : vector<1x8xf32> to vector<1x1x1x8xf32>
    %309 = vector.broadcast %306 : vector<2x7x7x1xf32> to vector<2x7x7x8xf32>
    %310 = vector.broadcast %308 : vector<1x1x1x8xf32> to vector<2x7x7x8xf32>
    %311 = arith.mulf %309, %310 : vector<2x7x7x8xf32>
    %312 = arith.addf %305, %311 : vector<2x7x7x8xf32>
    %313 = vector.extract_strided_slice %298 {offsets = [0, 0, 0, 2], sizes = [2, 7, 7, 1], strides = [1, 1, 1, 1]} : vector<2x7x7x4xf32> to vector<2x7x7x1xf32>
    %314 = vector.extract_strided_slice %0 {offsets = [6, 0], sizes = [1, 8], strides = [1, 1]} : vector<36x8xf32> to vector<1x8xf32>
    %315 = vector.shape_cast %314 : vector<1x8xf32> to vector<1x1x1x8xf32>
    %316 = vector.broadcast %313 : vector<2x7x7x1xf32> to vector<2x7x7x8xf32>
    %317 = vector.broadcast %315 : vector<1x1x1x8xf32> to vector<2x7x7x8xf32>
    %318 = arith.mulf %316, %317 : vector<2x7x7x8xf32>
    %319 = arith.addf %312, %318 : vector<2x7x7x8xf32>
    %320 = vector.extract_strided_slice %298 {offsets = [0, 0, 0, 3], sizes = [2, 7, 7, 1], strides = [1, 1, 1, 1]} : vector<2x7x7x4xf32> to vector<2x7x7x1xf32>
    %321 = vector.extract_strided_slice %0 {offsets = [7, 0], sizes = [1, 8], strides = [1, 1]} : vector<36x8xf32> to vector<1x8xf32>
    %322 = vector.shape_cast %321 : vector<1x8xf32> to vector<1x1x1x8xf32>
    %323 = vector.broadcast %320 : vector<2x7x7x1xf32> to vector<2x7x7x8xf32>
    %324 = vector.broadcast %322 : vector<1x1x1x8xf32> to vector<2x7x7x8xf32>
    %325 = arith.mulf %323, %324 : vector<2x7x7x8xf32>
    %326 = arith.addf %319, %325 : vector<2x7x7x8xf32>
    %c2_47 = arith.constant 2 : index
    %c0_48 = arith.constant 0 : index
    %c1_49 = arith.constant 1 : index
    %c0_50 = arith.constant 0 : index
    %327 = vector.load %arg1[%c2_47, %c0_48, %c1_49, %c0_50] : memref<8x8x8x4xf32, #tpu.memory_space<vmem>>, vector<2x7x7x4xf32>
    %328 = vector.extract_strided_slice %327 {offsets = [0, 0, 0, 0], sizes = [2, 7, 7, 1], strides = [1, 1, 1, 1]} : vector<2x7x7x4xf32> to vector<2x7x7x1xf32>
    %329 = vector.extract_strided_slice %0 {offsets = [8, 0], sizes = [1, 8], strides = [1, 1]} : vector<36x8xf32> to vector<1x8xf32>
    %330 = vector.shape_cast %329 : vector<1x8xf32> to vector<1x1x1x8xf32>
    %331 = vector.broadcast %328 : vector<2x7x7x1xf32> to vector<2x7x7x8xf32>
    %332 = vector.broadcast %330 : vector<1x1x1x8xf32> to vector<2x7x7x8xf32>
    %333 = arith.mulf %331, %332 : vector<2x7x7x8xf32>
    %334 = arith.addf %326, %333 : vector<2x7x7x8xf32>
    %335 = vector.extract_strided_slice %327 {offsets = [0, 0, 0, 1], sizes = [2, 7, 7, 1], strides = [1, 1, 1, 1]} : vector<2x7x7x4xf32> to vector<2x7x7x1xf32>
    %336 = vector.extract_strided_slice %0 {offsets = [9, 0], sizes = [1, 8], strides = [1, 1]} : vector<36x8xf32> to vector<1x8xf32>
    %337 = vector.shape_cast %336 : vector<1x8xf32> to vector<1x1x1x8xf32>
    %338 = vector.broadcast %335 : vector<2x7x7x1xf32> to vector<2x7x7x8xf32>
    %339 = vector.broadcast %337 : vector<1x1x1x8xf32> to vector<2x7x7x8xf32>
    %340 = arith.mulf %338, %339 : vector<2x7x7x8xf32>
    %341 = arith.addf %334, %340 : vector<2x7x7x8xf32>
    %342 = vector.extract_strided_slice %327 {offsets = [0, 0, 0, 2], sizes = [2, 7, 7, 1], strides = [1, 1, 1, 1]} : vector<2x7x7x4xf32> to vector<2x7x7x1xf32>
    %343 = vector.extract_strided_slice %0 {offsets = [10, 0], sizes = [1, 8], strides = [1, 1]} : vector<36x8xf32> to vector<1x8xf32>
    %344 = vector.shape_cast %343 : vector<1x8xf32> to vector<1x1x1x8xf32>
    %345 = vector.broadcast %342 : vector<2x7x7x1xf32> to vector<2x7x7x8xf32>
    %346 = vector.broadcast %344 : vector<1x1x1x8xf32> to vector<2x7x7x8xf32>
    %347 = arith.mulf %345, %346 : vector<2x7x7x8xf32>
    %348 = arith.addf %341, %347 : vector<2x7x7x8xf32>
    %349 = vector.extract_strided_slice %327 {offsets = [0, 0, 0, 3], sizes = [2, 7, 7, 1], strides = [1, 1, 1, 1]} : vector<2x7x7x4xf32> to vector<2x7x7x1xf32>
    %350 = vector.extract_strided_slice %0 {offsets = [11, 0], sizes = [1, 8], strides = [1, 1]} : vector<36x8xf32> to vector<1x8xf32>
    %351 = vector.shape_cast %350 : vector<1x8xf32> to vector<1x1x1x8xf32>
    %352 = vector.broadcast %349 : vector<2x7x7x1xf32> to vector<2x7x7x8xf32>
    %353 = vector.broadcast %351 : vector<1x1x1x8xf32> to vector<2x7x7x8xf32>
    %354 = arith.mulf %352, %353 : vector<2x7x7x8xf32>
    %355 = arith.addf %348, %354 : vector<2x7x7x8xf32>
    %c6_51 = arith.constant 6 : index
    %c0_52 = arith.constant 0 : index
    %c0_53 = arith.constant 0 : index
    %c0_54 = arith.constant 0 : index
    %356 = vector.load %arg1[%c6_51, %c0_52, %c0_53, %c0_54] : memref<8x8x8x4xf32, #tpu.memory_space<vmem>>, vector<2x7x7x4xf32>
    %357 = vector.extract_strided_slice %356 {offsets = [0, 0, 0, 0], sizes = [2, 7, 7, 1], strides = [1, 1, 1, 1]} : vector<2x7x7x4xf32> to vector<2x7x7x1xf32>
    %358 = vector.extract_strided_slice %0 {offsets = [12, 0], sizes = [1, 8], strides = [1, 1]} : vector<36x8xf32> to vector<1x8xf32>
    %359 = vector.shape_cast %358 : vector<1x8xf32> to vector<1x1x1x8xf32>
    %360 = vector.broadcast %357 : vector<2x7x7x1xf32> to vector<2x7x7x8xf32>
    %361 = vector.broadcast %359 : vector<1x1x1x8xf32> to vector<2x7x7x8xf32>
    %362 = arith.mulf %360, %361 : vector<2x7x7x8xf32>
    %363 = arith.addf %355, %362 : vector<2x7x7x8xf32>
    %364 = vector.extract_strided_slice %356 {offsets = [0, 0, 0, 1], sizes = [2, 7, 7, 1], strides = [1, 1, 1, 1]} : vector<2x7x7x4xf32> to vector<2x7x7x1xf32>
    %365 = vector.extract_strided_slice %0 {offsets = [13, 0], sizes = [1, 8], strides = [1, 1]} : vector<36x8xf32> to vector<1x8xf32>
    %366 = vector.shape_cast %365 : vector<1x8xf32> to vector<1x1x1x8xf32>
    %367 = vector.broadcast %364 : vector<2x7x7x1xf32> to vector<2x7x7x8xf32>
    %368 = vector.broadcast %366 : vector<1x1x1x8xf32> to vector<2x7x7x8xf32>
    %369 = arith.mulf %367, %368 : vector<2x7x7x8xf32>
    %370 = arith.addf %363, %369 : vector<2x7x7x8xf32>
    %371 = vector.extract_strided_slice %356 {offsets = [0, 0, 0, 2], sizes = [2, 7, 7, 1], strides = [1, 1, 1, 1]} : vector<2x7x7x4xf32> to vector<2x7x7x1xf32>
    %372 = vector.extract_strided_slice %0 {offsets = [14, 0], sizes = [1, 8], strides = [1, 1]} : vector<36x8xf32> to vector<1x8xf32>
    %373 = vector.shape_cast %372 : vector<1x8xf32> to vector<1x1x1x8xf32>
    %374 = vector.broadcast %371 : vector<2x7x7x1xf32> to vector<2x7x7x8xf32>
    %375 = vector.broadcast %373 : vector<1x1x1x8xf32> to vector<2x7x7x8xf32>
    %376 = arith.mulf %374, %375 : vector<2x7x7x8xf32>
    %377 = arith.addf %370, %376 : vector<2x7x7x8xf32>
    %378 = vector.extract_strided_slice %356 {offsets = [0, 0, 0, 3], sizes = [2, 7, 7, 1], strides = [1, 1, 1, 1]} : vector<2x7x7x4xf32> to vector<2x7x7x1xf32>
    %379 = vector.extract_strided_slice %0 {offsets = [15, 0], sizes = [1, 8], strides = [1, 1]} : vector<36x8xf32> to vector<1x8xf32>
    %380 = vector.shape_cast %379 : vector<1x8xf32> to vector<1x1x1x8xf32>
    %381 = vector.broadcast %378 : vector<2x7x7x1xf32> to vector<2x7x7x8xf32>
    %382 = vector.broadcast %380 : vector<1x1x1x8xf32> to vector<2x7x7x8xf32>
    %383 = arith.mulf %381, %382 : vector<2x7x7x8xf32>
    %384 = arith.addf %377, %383 : vector<2x7x7x8xf32>
    %c4_55 = arith.constant 4 : index
    %c0_56 = arith.constant 0 : index
    %c1_57 = arith.constant 1 : index
    %c0_58 = arith.constant 0 : index
    %385 = vector.load %arg1[%c4_55, %c0_56, %c1_57, %c0_58] : memref<8x8x8x4xf32, #tpu.memory_space<vmem>>, vector<2x7x7x4xf32>
    %386 = vector.extract_strided_slice %385 {offsets = [0, 0, 0, 0], sizes = [2, 7, 7, 1], strides = [1, 1, 1, 1]} : vector<2x7x7x4xf32> to vector<2x7x7x1xf32>
    %387 = vector.extract_strided_slice %0 {offsets = [16, 0], sizes = [1, 8], strides = [1, 1]} : vector<36x8xf32> to vector<1x8xf32>
    %388 = vector.shape_cast %387 : vector<1x8xf32> to vector<1x1x1x8xf32>
    %389 = vector.broadcast %386 : vector<2x7x7x1xf32> to vector<2x7x7x8xf32>
    %390 = vector.broadcast %388 : vector<1x1x1x8xf32> to vector<2x7x7x8xf32>
    %391 = arith.mulf %389, %390 : vector<2x7x7x8xf32>
    %392 = arith.addf %384, %391 : vector<2x7x7x8xf32>
    %393 = vector.extract_strided_slice %385 {offsets = [0, 0, 0, 1], sizes = [2, 7, 7, 1], strides = [1, 1, 1, 1]} : vector<2x7x7x4xf32> to vector<2x7x7x1xf32>
    %394 = vector.extract_strided_slice %0 {offsets = [17, 0], sizes = [1, 8], strides = [1, 1]} : vector<36x8xf32> to vector<1x8xf32>
    %395 = vector.shape_cast %394 : vector<1x8xf32> to vector<1x1x1x8xf32>
    %396 = vector.broadcast %393 : vector<2x7x7x1xf32> to vector<2x7x7x8xf32>
    %397 = vector.broadcast %395 : vector<1x1x1x8xf32> to vector<2x7x7x8xf32>
    %398 = arith.mulf %396, %397 : vector<2x7x7x8xf32>
    %399 = arith.addf %392, %398 : vector<2x7x7x8xf32>
    %400 = vector.extract_strided_slice %385 {offsets = [0, 0, 0, 2], sizes = [2, 7, 7, 1], strides = [1, 1, 1, 1]} : vector<2x7x7x4xf32> to vector<2x7x7x1xf32>
    %401 = vector.extract_strided_slice %0 {offsets = [18, 0], sizes = [1, 8], strides = [1, 1]} : vector<36x8xf32> to vector<1x8xf32>
    %402 = vector.shape_cast %401 : vector<1x8xf32> to vector<1x1x1x8xf32>
    %403 = vector.broadcast %400 : vector<2x7x7x1xf32> to vector<2x7x7x8xf32>
    %404 = vector.broadcast %402 : vector<1x1x1x8xf32> to vector<2x7x7x8xf32>
    %405 = arith.mulf %403, %404 : vector<2x7x7x8xf32>
    %406 = arith.addf %399, %405 : vector<2x7x7x8xf32>
    %407 = vector.extract_strided_slice %385 {offsets = [0, 0, 0, 3], sizes = [2, 7, 7, 1], strides = [1, 1, 1, 1]} : vector<2x7x7x4xf32> to vector<2x7x7x1xf32>
    %408 = vector.extract_strided_slice %0 {offsets = [19, 0], sizes = [1, 8], strides = [1, 1]} : vector<36x8xf32> to vector<1x8xf32>
    %409 = vector.shape_cast %408 : vector<1x8xf32> to vector<1x1x1x8xf32>
    %410 = vector.broadcast %407 : vector<2x7x7x1xf32> to vector<2x7x7x8xf32>
    %411 = vector.broadcast %409 : vector<1x1x1x8xf32> to vector<2x7x7x8xf32>
    %412 = arith.mulf %410, %411 : vector<2x7x7x8xf32>
    %413 = arith.addf %406, %412 : vector<2x7x7x8xf32>
    %c6_59 = arith.constant 6 : index
    %c0_60 = arith.constant 0 : index
    %c1_61 = arith.constant 1 : index
    %c0_62 = arith.constant 0 : index
    %414 = vector.load %arg1[%c6_59, %c0_60, %c1_61, %c0_62] : memref<8x8x8x4xf32, #tpu.memory_space<vmem>>, vector<2x7x7x4xf32>
    %415 = vector.extract_strided_slice %414 {offsets = [0, 0, 0, 0], sizes = [2, 7, 7, 1], strides = [1, 1, 1, 1]} : vector<2x7x7x4xf32> to vector<2x7x7x1xf32>
    %416 = vector.extract_strided_slice %0 {offsets = [20, 0], sizes = [1, 8], strides = [1, 1]} : vector<36x8xf32> to vector<1x8xf32>
    %417 = vector.shape_cast %416 : vector<1x8xf32> to vector<1x1x1x8xf32>
    %418 = vector.broadcast %415 : vector<2x7x7x1xf32> to vector<2x7x7x8xf32>
    %419 = vector.broadcast %417 : vector<1x1x1x8xf32> to vector<2x7x7x8xf32>
    %420 = arith.mulf %418, %419 : vector<2x7x7x8xf32>
    %421 = arith.addf %413, %420 : vector<2x7x7x8xf32>
    %422 = vector.extract_strided_slice %414 {offsets = [0, 0, 0, 1], sizes = [2, 7, 7, 1], strides = [1, 1, 1, 1]} : vector<2x7x7x4xf32> to vector<2x7x7x1xf32>
    %423 = vector.extract_strided_slice %0 {offsets = [21, 0], sizes = [1, 8], strides = [1, 1]} : vector<36x8xf32> to vector<1x8xf32>
    %424 = vector.shape_cast %423 : vector<1x8xf32> to vector<1x1x1x8xf32>
    %425 = vector.broadcast %422 : vector<2x7x7x1xf32> to vector<2x7x7x8xf32>
    %426 = vector.broadcast %424 : vector<1x1x1x8xf32> to vector<2x7x7x8xf32>
    %427 = arith.mulf %425, %426 : vector<2x7x7x8xf32>
    %428 = arith.addf %421, %427 : vector<2x7x7x8xf32>
    %429 = vector.extract_strided_slice %414 {offsets = [0, 0, 0, 2], sizes = [2, 7, 7, 1], strides = [1, 1, 1, 1]} : vector<2x7x7x4xf32> to vector<2x7x7x1xf32>
    %430 = vector.extract_strided_slice %0 {offsets = [22, 0], sizes = [1, 8], strides = [1, 1]} : vector<36x8xf32> to vector<1x8xf32>
    %431 = vector.shape_cast %430 : vector<1x8xf32> to vector<1x1x1x8xf32>
    %432 = vector.broadcast %429 : vector<2x7x7x1xf32> to vector<2x7x7x8xf32>
    %433 = vector.broadcast %431 : vector<1x1x1x8xf32> to vector<2x7x7x8xf32>
    %434 = arith.mulf %432, %433 : vector<2x7x7x8xf32>
    %435 = arith.addf %428, %434 : vector<2x7x7x8xf32>
    %436 = vector.extract_strided_slice %414 {offsets = [0, 0, 0, 3], sizes = [2, 7, 7, 1], strides = [1, 1, 1, 1]} : vector<2x7x7x4xf32> to vector<2x7x7x1xf32>
    %437 = vector.extract_strided_slice %0 {offsets = [23, 0], sizes = [1, 8], strides = [1, 1]} : vector<36x8xf32> to vector<1x8xf32>
    %438 = vector.shape_cast %437 : vector<1x8xf32> to vector<1x1x1x8xf32>
    %439 = vector.broadcast %436 : vector<2x7x7x1xf32> to vector<2x7x7x8xf32>
    %440 = vector.broadcast %438 : vector<1x1x1x8xf32> to vector<2x7x7x8xf32>
    %441 = arith.mulf %439, %440 : vector<2x7x7x8xf32>
    %442 = arith.addf %435, %441 : vector<2x7x7x8xf32>
    %c2_63 = arith.constant 2 : index
    %c1_64 = arith.constant 1 : index
    %c0_65 = arith.constant 0 : index
    %c0_66 = arith.constant 0 : index
    %443 = vector.load %arg1[%c2_63, %c1_64, %c0_65, %c0_66] : memref<8x8x8x4xf32, #tpu.memory_space<vmem>>, vector<2x7x7x4xf32>
    %444 = vector.extract_strided_slice %443 {offsets = [0, 0, 0, 0], sizes = [2, 7, 7, 1], strides = [1, 1, 1, 1]} : vector<2x7x7x4xf32> to vector<2x7x7x1xf32>
    %445 = vector.extract_strided_slice %0 {offsets = [24, 0], sizes = [1, 8], strides = [1, 1]} : vector<36x8xf32> to vector<1x8xf32>
    %446 = vector.shape_cast %445 : vector<1x8xf32> to vector<1x1x1x8xf32>
    %447 = vector.broadcast %444 : vector<2x7x7x1xf32> to vector<2x7x7x8xf32>
    %448 = vector.broadcast %446 : vector<1x1x1x8xf32> to vector<2x7x7x8xf32>
    %449 = arith.mulf %447, %448 : vector<2x7x7x8xf32>
    %450 = arith.addf %442, %449 : vector<2x7x7x8xf32>
    %451 = vector.extract_strided_slice %443 {offsets = [0, 0, 0, 1], sizes = [2, 7, 7, 1], strides = [1, 1, 1, 1]} : vector<2x7x7x4xf32> to vector<2x7x7x1xf32>
    %452 = vector.extract_strided_slice %0 {offsets = [25, 0], sizes = [1, 8], strides = [1, 1]} : vector<36x8xf32> to vector<1x8xf32>
    %453 = vector.shape_cast %452 : vector<1x8xf32> to vector<1x1x1x8xf32>
    %454 = vector.broadcast %451 : vector<2x7x7x1xf32> to vector<2x7x7x8xf32>
    %455 = vector.broadcast %453 : vector<1x1x1x8xf32> to vector<2x7x7x8xf32>
    %456 = arith.mulf %454, %455 : vector<2x7x7x8xf32>
    %457 = arith.addf %450, %456 : vector<2x7x7x8xf32>
    %458 = vector.extract_strided_slice %443 {offsets = [0, 0, 0, 2], sizes = [2, 7, 7, 1], strides = [1, 1, 1, 1]} : vector<2x7x7x4xf32> to vector<2x7x7x1xf32>
    %459 = vector.extract_strided_slice %0 {offsets = [26, 0], sizes = [1, 8], strides = [1, 1]} : vector<36x8xf32> to vector<1x8xf32>
    %460 = vector.shape_cast %459 : vector<1x8xf32> to vector<1x1x1x8xf32>
    %461 = vector.broadcast %458 : vector<2x7x7x1xf32> to vector<2x7x7x8xf32>
    %462 = vector.broadcast %460 : vector<1x1x1x8xf32> to vector<2x7x7x8xf32>
    %463 = arith.mulf %461, %462 : vector<2x7x7x8xf32>
    %464 = arith.addf %457, %463 : vector<2x7x7x8xf32>
    %465 = vector.extract_strided_slice %443 {offsets = [0, 0, 0, 3], sizes = [2, 7, 7, 1], strides = [1, 1, 1, 1]} : vector<2x7x7x4xf32> to vector<2x7x7x1xf32>
    %466 = vector.extract_strided_slice %0 {offsets = [27, 0], sizes = [1, 8], strides = [1, 1]} : vector<36x8xf32> to vector<1x8xf32>
    %467 = vector.shape_cast %466 : vector<1x8xf32> to vector<1x1x1x8xf32>
    %468 = vector.broadcast %465 : vector<2x7x7x1xf32> to vector<2x7x7x8xf32>
    %469 = vector.broadcast %467 : vector<1x1x1x8xf32> to vector<2x7x7x8xf32>
    %470 = arith.mulf %468, %469 : vector<2x7x7x8xf32>
    %471 = arith.addf %464, %470 : vector<2x7x7x8xf32>
    %c0_67 = arith.constant 0 : index
    %c1_68 = arith.constant 1 : index
    %c1_69 = arith.constant 1 : index
    %c0_70 = arith.constant 0 : index
    %472 = vector.load %arg1[%c0_67, %c1_68, %c1_69, %c0_70] : memref<8x8x8x4xf32, #tpu.memory_space<vmem>>, vector<2x7x7x4xf32>
    %473 = vector.extract_strided_slice %472 {offsets = [0, 0, 0, 0], sizes = [2, 7, 7, 1], strides = [1, 1, 1, 1]} : vector<2x7x7x4xf32> to vector<2x7x7x1xf32>
    %474 = vector.extract_strided_slice %0 {offsets = [28, 0], sizes = [1, 8], strides = [1, 1]} : vector<36x8xf32> to vector<1x8xf32>
    %475 = vector.shape_cast %474 : vector<1x8xf32> to vector<1x1x1x8xf32>
    %476 = vector.broadcast %473 : vector<2x7x7x1xf32> to vector<2x7x7x8xf32>
    %477 = vector.broadcast %475 : vector<1x1x1x8xf32> to vector<2x7x7x8xf32>
    %478 = arith.mulf %476, %477 : vector<2x7x7x8xf32>
    %479 = arith.addf %471, %478 : vector<2x7x7x8xf32>
    %480 = vector.extract_strided_slice %472 {offsets = [0, 0, 0, 1], sizes = [2, 7, 7, 1], strides = [1, 1, 1, 1]} : vector<2x7x7x4xf32> to vector<2x7x7x1xf32>
    %481 = vector.extract_strided_slice %0 {offsets = [29, 0], sizes = [1, 8], strides = [1, 1]} : vector<36x8xf32> to vector<1x8xf32>
    %482 = vector.shape_cast %481 : vector<1x8xf32> to vector<1x1x1x8xf32>
    %483 = vector.broadcast %480 : vector<2x7x7x1xf32> to vector<2x7x7x8xf32>
    %484 = vector.broadcast %482 : vector<1x1x1x8xf32> to vector<2x7x7x8xf32>
    %485 = arith.mulf %483, %484 : vector<2x7x7x8xf32>
    %486 = arith.addf %479, %485 : vector<2x7x7x8xf32>
    %487 = vector.extract_strided_slice %472 {offsets = [0, 0, 0, 2], sizes = [2, 7, 7, 1], strides = [1, 1, 1, 1]} : vector<2x7x7x4xf32> to vector<2x7x7x1xf32>
    %488 = vector.extract_strided_slice %0 {offsets = [30, 0], sizes = [1, 8], strides = [1, 1]} : vector<36x8xf32> to vector<1x8xf32>
    %489 = vector.shape_cast %488 : vector<1x8xf32> to vector<1x1x1x8xf32>
    %490 = vector.broadcast %487 : vector<2x7x7x1xf32> to vector<2x7x7x8xf32>
    %491 = vector.broadcast %489 : vector<1x1x1x8xf32> to vector<2x7x7x8xf32>
    %492 = arith.mulf %490, %491 : vector<2x7x7x8xf32>
    %493 = arith.addf %486, %492 : vector<2x7x7x8xf32>
    %494 = vector.extract_strided_slice %472 {offsets = [0, 0, 0, 3], sizes = [2, 7, 7, 1], strides = [1, 1, 1, 1]} : vector<2x7x7x4xf32> to vector<2x7x7x1xf32>
    %495 = vector.extract_strided_slice %0 {offsets = [31, 0], sizes = [1, 8], strides = [1, 1]} : vector<36x8xf32> to vector<1x8xf32>
    %496 = vector.shape_cast %495 : vector<1x8xf32> to vector<1x1x1x8xf32>
    %497 = vector.broadcast %494 : vector<2x7x7x1xf32> to vector<2x7x7x8xf32>
    %498 = vector.broadcast %496 : vector<1x1x1x8xf32> to vector<2x7x7x8xf32>
    %499 = arith.mulf %497, %498 : vector<2x7x7x8xf32>
    %500 = arith.addf %493, %499 : vector<2x7x7x8xf32>
    %c2_71 = arith.constant 2 : index
    %c1_72 = arith.constant 1 : index
    %c1_73 = arith.constant 1 : index
    %c0_74 = arith.constant 0 : index
    %501 = vector.load %arg1[%c2_71, %c1_72, %c1_73, %c0_74] : memref<8x8x8x4xf32, #tpu.memory_space<vmem>>, vector<2x7x7x4xf32>
    %502 = vector.extract_strided_slice %501 {offsets = [0, 0, 0, 0], sizes = [2, 7, 7, 1], strides = [1, 1, 1, 1]} : vector<2x7x7x4xf32> to vector<2x7x7x1xf32>
    %503 = vector.extract_strided_slice %0 {offsets = [32, 0], sizes = [1, 8], strides = [1, 1]} : vector<36x8xf32> to vector<1x8xf32>
    %504 = vector.shape_cast %503 : vector<1x8xf32> to vector<1x1x1x8xf32>
    %505 = vector.broadcast %502 : vector<2x7x7x1xf32> to vector<2x7x7x8xf32>
    %506 = vector.broadcast %504 : vector<1x1x1x8xf32> to vector<2x7x7x8xf32>
    %507 = arith.mulf %505, %506 : vector<2x7x7x8xf32>
    %508 = arith.addf %500, %507 : vector<2x7x7x8xf32>
    %509 = vector.extract_strided_slice %501 {offsets = [0, 0, 0, 1], sizes = [2, 7, 7, 1], strides = [1, 1, 1, 1]} : vector<2x7x7x4xf32> to vector<2x7x7x1xf32>
    %510 = vector.extract_strided_slice %0 {offsets = [33, 0], sizes = [1, 8], strides = [1, 1]} : vector<36x8xf32> to vector<1x8xf32>
    %511 = vector.shape_cast %510 : vector<1x8xf32> to vector<1x1x1x8xf32>
    %512 = vector.broadcast %509 : vector<2x7x7x1xf32> to vector<2x7x7x8xf32>
    %513 = vector.broadcast %511 : vector<1x1x1x8xf32> to vector<2x7x7x8xf32>
    %514 = arith.mulf %512, %513 : vector<2x7x7x8xf32>
    %515 = arith.addf %508, %514 : vector<2x7x7x8xf32>
    %516 = vector.extract_strided_slice %501 {offsets = [0, 0, 0, 2], sizes = [2, 7, 7, 1], strides = [1, 1, 1, 1]} : vector<2x7x7x4xf32> to vector<2x7x7x1xf32>
    %517 = vector.extract_strided_slice %0 {offsets = [34, 0], sizes = [1, 8], strides = [1, 1]} : vector<36x8xf32> to vector<1x8xf32>
    %518 = vector.shape_cast %517 : vector<1x8xf32> to vector<1x1x1x8xf32>
    %519 = vector.broadcast %516 : vector<2x7x7x1xf32> to vector<2x7x7x8xf32>
    %520 = vector.broadcast %518 : vector<1x1x1x8xf32> to vector<2x7x7x8xf32>
    %521 = arith.mulf %519, %520 : vector<2x7x7x8xf32>
    %522 = arith.addf %515, %521 : vector<2x7x7x8xf32>
    %523 = vector.extract_strided_slice %501 {offsets = [0, 0, 0, 3], sizes = [2, 7, 7, 1], strides = [1, 1, 1, 1]} : vector<2x7x7x4xf32> to vector<2x7x7x1xf32>
    %524 = vector.extract_strided_slice %0 {offsets = [35, 0], sizes = [1, 8], strides = [1, 1]} : vector<36x8xf32> to vector<1x8xf32>
    %525 = vector.shape_cast %524 : vector<1x8xf32> to vector<1x1x1x8xf32>
    %526 = vector.broadcast %523 : vector<2x7x7x1xf32> to vector<2x7x7x8xf32>
    %527 = vector.broadcast %525 : vector<1x1x1x8xf32> to vector<2x7x7x8xf32>
    %528 = arith.mulf %526, %527 : vector<2x7x7x8xf32>
    %529 = arith.addf %522, %528 : vector<2x7x7x8xf32>
    %530 = vector.shape_cast %1 : vector<1x8xf32> to vector<1x1x1x8xf32>
    %531 = vector.broadcast %530 : vector<1x1x1x8xf32> to vector<2x7x7x8xf32>
    %532 = arith.addf %529, %531 : vector<2x7x7x8xf32>
    %c1_i32 = arith.constant 1 : i32
    %533 = vector.broadcast %c1_i32 : i32 to vector<2x7x7x1xi32>
    %534 = arith.addi %2, %533 : vector<2x7x7x1xi32>
    %535 = arith.cmpf ogt, %532, %265 : vector<2x7x7x8xf32>
    %536 = arith.maximumf %265, %532 : vector<2x7x7x8xf32>
    %537 = vector.shape_cast %534 : vector<2x7x7x1xi32> to vector<2x7x7x1xi32>
    %538 = vector.broadcast %537 : vector<2x7x7x1xi32> to vector<2x7x7x8xi32>
    %539 = arith.select %535, %538, %269 : vector<2x7x7x8xi1>, vector<2x7x7x8xi32>
    %c4_75 = arith.constant 4 : index
    %c0_76 = arith.constant 0 : index
    %c0_77 = arith.constant 0 : index
    %c0_78 = arith.constant 0 : index
    %540 = vector.load %arg1[%c4_75, %c0_76, %c0_77, %c0_78] : memref<8x8x8x4xf32, #tpu.memory_space<vmem>>, vector<2x7x7x4xf32>
    %541 = vector.extract_strided_slice %540 {offsets = [0, 0, 0, 0], sizes = [2, 7, 7, 1], strides = [1, 1, 1, 1]} : vector<2x7x7x4xf32> to vector<2x7x7x1xf32>
    %542 = vector.extract_strided_slice %0 {offsets = [0, 0], sizes = [1, 8], strides = [1, 1]} : vector<36x8xf32> to vector<1x8xf32>
    %543 = vector.shape_cast %542 : vector<1x8xf32> to vector<1x1x1x8xf32>
    %544 = vector.broadcast %541 : vector<2x7x7x1xf32> to vector<2x7x7x8xf32>
    %545 = vector.broadcast %543 : vector<1x1x1x8xf32> to vector<2x7x7x8xf32>
    %546 = arith.mulf %544, %545 : vector<2x7x7x8xf32>
    %547 = vector.extract_strided_slice %540 {offsets = [0, 0, 0, 1], sizes = [2, 7, 7, 1], strides = [1, 1, 1, 1]} : vector<2x7x7x4xf32> to vector<2x7x7x1xf32>
    %548 = vector.extract_strided_slice %0 {offsets = [1, 0], sizes = [1, 8], strides = [1, 1]} : vector<36x8xf32> to vector<1x8xf32>
    %549 = vector.shape_cast %548 : vector<1x8xf32> to vector<1x1x1x8xf32>
    %550 = vector.broadcast %547 : vector<2x7x7x1xf32> to vector<2x7x7x8xf32>
    %551 = vector.broadcast %549 : vector<1x1x1x8xf32> to vector<2x7x7x8xf32>
    %552 = arith.mulf %550, %551 : vector<2x7x7x8xf32>
    %553 = arith.addf %546, %552 : vector<2x7x7x8xf32>
    %554 = vector.extract_strided_slice %540 {offsets = [0, 0, 0, 2], sizes = [2, 7, 7, 1], strides = [1, 1, 1, 1]} : vector<2x7x7x4xf32> to vector<2x7x7x1xf32>
    %555 = vector.extract_strided_slice %0 {offsets = [2, 0], sizes = [1, 8], strides = [1, 1]} : vector<36x8xf32> to vector<1x8xf32>
    %556 = vector.shape_cast %555 : vector<1x8xf32> to vector<1x1x1x8xf32>
    %557 = vector.broadcast %554 : vector<2x7x7x1xf32> to vector<2x7x7x8xf32>
    %558 = vector.broadcast %556 : vector<1x1x1x8xf32> to vector<2x7x7x8xf32>
    %559 = arith.mulf %557, %558 : vector<2x7x7x8xf32>
    %560 = arith.addf %553, %559 : vector<2x7x7x8xf32>
    %561 = vector.extract_strided_slice %540 {offsets = [0, 0, 0, 3], sizes = [2, 7, 7, 1], strides = [1, 1, 1, 1]} : vector<2x7x7x4xf32> to vector<2x7x7x1xf32>
    %562 = vector.extract_strided_slice %0 {offsets = [3, 0], sizes = [1, 8], strides = [1, 1]} : vector<36x8xf32> to vector<1x8xf32>
    %563 = vector.shape_cast %562 : vector<1x8xf32> to vector<1x1x1x8xf32>
    %564 = vector.broadcast %561 : vector<2x7x7x1xf32> to vector<2x7x7x8xf32>
    %565 = vector.broadcast %563 : vector<1x1x1x8xf32> to vector<2x7x7x8xf32>
    %566 = arith.mulf %564, %565 : vector<2x7x7x8xf32>
    %567 = arith.addf %560, %566 : vector<2x7x7x8xf32>
    %c6_79 = arith.constant 6 : index
    %c0_80 = arith.constant 0 : index
    %c0_81 = arith.constant 0 : index
    %c0_82 = arith.constant 0 : index
    %568 = vector.load %arg1[%c6_79, %c0_80, %c0_81, %c0_82] : memref<8x8x8x4xf32, #tpu.memory_space<vmem>>, vector<2x7x7x4xf32>
    %569 = vector.extract_strided_slice %568 {offsets = [0, 0, 0, 0], sizes = [2, 7, 7, 1], strides = [1, 1, 1, 1]} : vector<2x7x7x4xf32> to vector<2x7x7x1xf32>
    %570 = vector.extract_strided_slice %0 {offsets = [4, 0], sizes = [1, 8], strides = [1, 1]} : vector<36x8xf32> to vector<1x8xf32>
    %571 = vector.shape_cast %570 : vector<1x8xf32> to vector<1x1x1x8xf32>
    %572 = vector.broadcast %569 : vector<2x7x7x1xf32> to vector<2x7x7x8xf32>
    %573 = vector.broadcast %571 : vector<1x1x1x8xf32> to vector<2x7x7x8xf32>
    %574 = arith.mulf %572, %573 : vector<2x7x7x8xf32>
    %575 = arith.addf %567, %574 : vector<2x7x7x8xf32>
    %576 = vector.extract_strided_slice %568 {offsets = [0, 0, 0, 1], sizes = [2, 7, 7, 1], strides = [1, 1, 1, 1]} : vector<2x7x7x4xf32> to vector<2x7x7x1xf32>
    %577 = vector.extract_strided_slice %0 {offsets = [5, 0], sizes = [1, 8], strides = [1, 1]} : vector<36x8xf32> to vector<1x8xf32>
    %578 = vector.shape_cast %577 : vector<1x8xf32> to vector<1x1x1x8xf32>
    %579 = vector.broadcast %576 : vector<2x7x7x1xf32> to vector<2x7x7x8xf32>
    %580 = vector.broadcast %578 : vector<1x1x1x8xf32> to vector<2x7x7x8xf32>
    %581 = arith.mulf %579, %580 : vector<2x7x7x8xf32>
    %582 = arith.addf %575, %581 : vector<2x7x7x8xf32>
    %583 = vector.extract_strided_slice %568 {offsets = [0, 0, 0, 2], sizes = [2, 7, 7, 1], strides = [1, 1, 1, 1]} : vector<2x7x7x4xf32> to vector<2x7x7x1xf32>
    %584 = vector.extract_strided_slice %0 {offsets = [6, 0], sizes = [1, 8], strides = [1, 1]} : vector<36x8xf32> to vector<1x8xf32>
    %585 = vector.shape_cast %584 : vector<1x8xf32> to vector<1x1x1x8xf32>
    %586 = vector.broadcast %583 : vector<2x7x7x1xf32> to vector<2x7x7x8xf32>
    %587 = vector.broadcast %585 : vector<1x1x1x8xf32> to vector<2x7x7x8xf32>
    %588 = arith.mulf %586, %587 : vector<2x7x7x8xf32>
    %589 = arith.addf %582, %588 : vector<2x7x7x8xf32>
    %590 = vector.extract_strided_slice %568 {offsets = [0, 0, 0, 3], sizes = [2, 7, 7, 1], strides = [1, 1, 1, 1]} : vector<2x7x7x4xf32> to vector<2x7x7x1xf32>
    %591 = vector.extract_strided_slice %0 {offsets = [7, 0], sizes = [1, 8], strides = [1, 1]} : vector<36x8xf32> to vector<1x8xf32>
    %592 = vector.shape_cast %591 : vector<1x8xf32> to vector<1x1x1x8xf32>
    %593 = vector.broadcast %590 : vector<2x7x7x1xf32> to vector<2x7x7x8xf32>
    %594 = vector.broadcast %592 : vector<1x1x1x8xf32> to vector<2x7x7x8xf32>
    %595 = arith.mulf %593, %594 : vector<2x7x7x8xf32>
    %596 = arith.addf %589, %595 : vector<2x7x7x8xf32>
    %c4_83 = arith.constant 4 : index
    %c0_84 = arith.constant 0 : index
    %c1_85 = arith.constant 1 : index
    %c0_86 = arith.constant 0 : index
    %597 = vector.load %arg1[%c4_83, %c0_84, %c1_85, %c0_86] : memref<8x8x8x4xf32, #tpu.memory_space<vmem>>, vector<2x7x7x4xf32>
    %598 = vector.extract_strided_slice %597 {offsets = [0, 0, 0, 0], sizes = [2, 7, 7, 1], strides = [1, 1, 1, 1]} : vector<2x7x7x4xf32> to vector<2x7x7x1xf32>
    %599 = vector.extract_strided_slice %0 {offsets = [8, 0], sizes = [1, 8], strides = [1, 1]} : vector<36x8xf32> to vector<1x8xf32>
    %600 = vector.shape_cast %599 : vector<1x8xf32> to vector<1x1x1x8xf32>
    %601 = vector.broadcast %598 : vector<2x7x7x1xf32> to vector<2x7x7x8xf32>
    %602 = vector.broadcast %600 : vector<1x1x1x8xf32> to vector<2x7x7x8xf32>
    %603 = arith.mulf %601, %602 : vector<2x7x7x8xf32>
    %604 = arith.addf %596, %603 : vector<2x7x7x8xf32>
    %605 = vector.extract_strided_slice %597 {offsets = [0, 0, 0, 1], sizes = [2, 7, 7, 1], strides = [1, 1, 1, 1]} : vector<2x7x7x4xf32> to vector<2x7x7x1xf32>
    %606 = vector.extract_strided_slice %0 {offsets = [9, 0], sizes = [1, 8], strides = [1, 1]} : vector<36x8xf32> to vector<1x8xf32>
    %607 = vector.shape_cast %606 : vector<1x8xf32> to vector<1x1x1x8xf32>
    %608 = vector.broadcast %605 : vector<2x7x7x1xf32> to vector<2x7x7x8xf32>
    %609 = vector.broadcast %607 : vector<1x1x1x8xf32> to vector<2x7x7x8xf32>
    %610 = arith.mulf %608, %609 : vector<2x7x7x8xf32>
    %611 = arith.addf %604, %610 : vector<2x7x7x8xf32>
    %612 = vector.extract_strided_slice %597 {offsets = [0, 0, 0, 2], sizes = [2, 7, 7, 1], strides = [1, 1, 1, 1]} : vector<2x7x7x4xf32> to vector<2x7x7x1xf32>
    %613 = vector.extract_strided_slice %0 {offsets = [10, 0], sizes = [1, 8], strides = [1, 1]} : vector<36x8xf32> to vector<1x8xf32>
    %614 = vector.shape_cast %613 : vector<1x8xf32> to vector<1x1x1x8xf32>
    %615 = vector.broadcast %612 : vector<2x7x7x1xf32> to vector<2x7x7x8xf32>
    %616 = vector.broadcast %614 : vector<1x1x1x8xf32> to vector<2x7x7x8xf32>
    %617 = arith.mulf %615, %616 : vector<2x7x7x8xf32>
    %618 = arith.addf %611, %617 : vector<2x7x7x8xf32>
    %619 = vector.extract_strided_slice %597 {offsets = [0, 0, 0, 3], sizes = [2, 7, 7, 1], strides = [1, 1, 1, 1]} : vector<2x7x7x4xf32> to vector<2x7x7x1xf32>
    %620 = vector.extract_strided_slice %0 {offsets = [11, 0], sizes = [1, 8], strides = [1, 1]} : vector<36x8xf32> to vector<1x8xf32>
    %621 = vector.shape_cast %620 : vector<1x8xf32> to vector<1x1x1x8xf32>
    %622 = vector.broadcast %619 : vector<2x7x7x1xf32> to vector<2x7x7x8xf32>
    %623 = vector.broadcast %621 : vector<1x1x1x8xf32> to vector<2x7x7x8xf32>
    %624 = arith.mulf %622, %623 : vector<2x7x7x8xf32>
    %625 = arith.addf %618, %624 : vector<2x7x7x8xf32>
    %c0_87 = arith.constant 0 : index
    %c1_88 = arith.constant 1 : index
    %c0_89 = arith.constant 0 : index
    %c0_90 = arith.constant 0 : index
    %626 = vector.load %arg1[%c0_87, %c1_88, %c0_89, %c0_90] : memref<8x8x8x4xf32, #tpu.memory_space<vmem>>, vector<2x7x7x4xf32>
    %627 = vector.extract_strided_slice %626 {offsets = [0, 0, 0, 0], sizes = [2, 7, 7, 1], strides = [1, 1, 1, 1]} : vector<2x7x7x4xf32> to vector<2x7x7x1xf32>
    %628 = vector.extract_strided_slice %0 {offsets = [12, 0], sizes = [1, 8], strides = [1, 1]} : vector<36x8xf32> to vector<1x8xf32>
    %629 = vector.shape_cast %628 : vector<1x8xf32> to vector<1x1x1x8xf32>
    %630 = vector.broadcast %627 : vector<2x7x7x1xf32> to vector<2x7x7x8xf32>
    %631 = vector.broadcast %629 : vector<1x1x1x8xf32> to vector<2x7x7x8xf32>
    %632 = arith.mulf %630, %631 : vector<2x7x7x8xf32>
    %633 = arith.addf %625, %632 : vector<2x7x7x8xf32>
    %634 = vector.extract_strided_slice %626 {offsets = [0, 0, 0, 1], sizes = [2, 7, 7, 1], strides = [1, 1, 1, 1]} : vector<2x7x7x4xf32> to vector<2x7x7x1xf32>
    %635 = vector.extract_strided_slice %0 {offsets = [13, 0], sizes = [1, 8], strides = [1, 1]} : vector<36x8xf32> to vector<1x8xf32>
    %636 = vector.shape_cast %635 : vector<1x8xf32> to vector<1x1x1x8xf32>
    %637 = vector.broadcast %634 : vector<2x7x7x1xf32> to vector<2x7x7x8xf32>
    %638 = vector.broadcast %636 : vector<1x1x1x8xf32> to vector<2x7x7x8xf32>
    %639 = arith.mulf %637, %638 : vector<2x7x7x8xf32>
    %640 = arith.addf %633, %639 : vector<2x7x7x8xf32>
    %641 = vector.extract_strided_slice %626 {offsets = [0, 0, 0, 2], sizes = [2, 7, 7, 1], strides = [1, 1, 1, 1]} : vector<2x7x7x4xf32> to vector<2x7x7x1xf32>
    %642 = vector.extract_strided_slice %0 {offsets = [14, 0], sizes = [1, 8], strides = [1, 1]} : vector<36x8xf32> to vector<1x8xf32>
    %643 = vector.shape_cast %642 : vector<1x8xf32> to vector<1x1x1x8xf32>
    %644 = vector.broadcast %641 : vector<2x7x7x1xf32> to vector<2x7x7x8xf32>
    %645 = vector.broadcast %643 : vector<1x1x1x8xf32> to vector<2x7x7x8xf32>
    %646 = arith.mulf %644, %645 : vector<2x7x7x8xf32>
    %647 = arith.addf %640, %646 : vector<2x7x7x8xf32>
    %648 = vector.extract_strided_slice %626 {offsets = [0, 0, 0, 3], sizes = [2, 7, 7, 1], strides = [1, 1, 1, 1]} : vector<2x7x7x4xf32> to vector<2x7x7x1xf32>
    %649 = vector.extract_strided_slice %0 {offsets = [15, 0], sizes = [1, 8], strides = [1, 1]} : vector<36x8xf32> to vector<1x8xf32>
    %650 = vector.shape_cast %649 : vector<1x8xf32> to vector<1x1x1x8xf32>
    %651 = vector.broadcast %648 : vector<2x7x7x1xf32> to vector<2x7x7x8xf32>
    %652 = vector.broadcast %650 : vector<1x1x1x8xf32> to vector<2x7x7x8xf32>
    %653 = arith.mulf %651, %652 : vector<2x7x7x8xf32>
    %654 = arith.addf %647, %653 : vector<2x7x7x8xf32>
    %c2_91 = arith.constant 2 : index
    %c1_92 = arith.constant 1 : index
    %c0_93 = arith.constant 0 : index
    %c0_94 = arith.constant 0 : index
    %655 = vector.load %arg1[%c2_91, %c1_92, %c0_93, %c0_94] : memref<8x8x8x4xf32, #tpu.memory_space<vmem>>, vector<2x7x7x4xf32>
    %656 = vector.extract_strided_slice %655 {offsets = [0, 0, 0, 0], sizes = [2, 7, 7, 1], strides = [1, 1, 1, 1]} : vector<2x7x7x4xf32> to vector<2x7x7x1xf32>
    %657 = vector.extract_strided_slice %0 {offsets = [16, 0], sizes = [1, 8], strides = [1, 1]} : vector<36x8xf32> to vector<1x8xf32>
    %658 = vector.shape_cast %657 : vector<1x8xf32> to vector<1x1x1x8xf32>
    %659 = vector.broadcast %656 : vector<2x7x7x1xf32> to vector<2x7x7x8xf32>
    %660 = vector.broadcast %658 : vector<1x1x1x8xf32> to vector<2x7x7x8xf32>
    %661 = arith.mulf %659, %660 : vector<2x7x7x8xf32>
    %662 = arith.addf %654, %661 : vector<2x7x7x8xf32>
    %663 = vector.extract_strided_slice %655 {offsets = [0, 0, 0, 1], sizes = [2, 7, 7, 1], strides = [1, 1, 1, 1]} : vector<2x7x7x4xf32> to vector<2x7x7x1xf32>
    %664 = vector.extract_strided_slice %0 {offsets = [17, 0], sizes = [1, 8], strides = [1, 1]} : vector<36x8xf32> to vector<1x8xf32>
    %665 = vector.shape_cast %664 : vector<1x8xf32> to vector<1x1x1x8xf32>
    %666 = vector.broadcast %663 : vector<2x7x7x1xf32> to vector<2x7x7x8xf32>
    %667 = vector.broadcast %665 : vector<1x1x1x8xf32> to vector<2x7x7x8xf32>
    %668 = arith.mulf %666, %667 : vector<2x7x7x8xf32>
    %669 = arith.addf %662, %668 : vector<2x7x7x8xf32>
    %670 = vector.extract_strided_slice %655 {offsets = [0, 0, 0, 2], sizes = [2, 7, 7, 1], strides = [1, 1, 1, 1]} : vector<2x7x7x4xf32> to vector<2x7x7x1xf32>
    %671 = vector.extract_strided_slice %0 {offsets = [18, 0], sizes = [1, 8], strides = [1, 1]} : vector<36x8xf32> to vector<1x8xf32>
    %672 = vector.shape_cast %671 : vector<1x8xf32> to vector<1x1x1x8xf32>
    %673 = vector.broadcast %670 : vector<2x7x7x1xf32> to vector<2x7x7x8xf32>
    %674 = vector.broadcast %672 : vector<1x1x1x8xf32> to vector<2x7x7x8xf32>
    %675 = arith.mulf %673, %674 : vector<2x7x7x8xf32>
    %676 = arith.addf %669, %675 : vector<2x7x7x8xf32>
    %677 = vector.extract_strided_slice %655 {offsets = [0, 0, 0, 3], sizes = [2, 7, 7, 1], strides = [1, 1, 1, 1]} : vector<2x7x7x4xf32> to vector<2x7x7x1xf32>
    %678 = vector.extract_strided_slice %0 {offsets = [19, 0], sizes = [1, 8], strides = [1, 1]} : vector<36x8xf32> to vector<1x8xf32>
    %679 = vector.shape_cast %678 : vector<1x8xf32> to vector<1x1x1x8xf32>
    %680 = vector.broadcast %677 : vector<2x7x7x1xf32> to vector<2x7x7x8xf32>
    %681 = vector.broadcast %679 : vector<1x1x1x8xf32> to vector<2x7x7x8xf32>
    %682 = arith.mulf %680, %681 : vector<2x7x7x8xf32>
    %683 = arith.addf %676, %682 : vector<2x7x7x8xf32>
    %c0_95 = arith.constant 0 : index
    %c1_96 = arith.constant 1 : index
    %c1_97 = arith.constant 1 : index
    %c0_98 = arith.constant 0 : index
    %684 = vector.load %arg1[%c0_95, %c1_96, %c1_97, %c0_98] : memref<8x8x8x4xf32, #tpu.memory_space<vmem>>, vector<2x7x7x4xf32>
    %685 = vector.extract_strided_slice %684 {offsets = [0, 0, 0, 0], sizes = [2, 7, 7, 1], strides = [1, 1, 1, 1]} : vector<2x7x7x4xf32> to vector<2x7x7x1xf32>
    %686 = vector.extract_strided_slice %0 {offsets = [20, 0], sizes = [1, 8], strides = [1, 1]} : vector<36x8xf32> to vector<1x8xf32>
    %687 = vector.shape_cast %686 : vector<1x8xf32> to vector<1x1x1x8xf32>
    %688 = vector.broadcast %685 : vector<2x7x7x1xf32> to vector<2x7x7x8xf32>
    %689 = vector.broadcast %687 : vector<1x1x1x8xf32> to vector<2x7x7x8xf32>
    %690 = arith.mulf %688, %689 : vector<2x7x7x8xf32>
    %691 = arith.addf %683, %690 : vector<2x7x7x8xf32>
    %692 = vector.extract_strided_slice %684 {offsets = [0, 0, 0, 1], sizes = [2, 7, 7, 1], strides = [1, 1, 1, 1]} : vector<2x7x7x4xf32> to vector<2x7x7x1xf32>
    %693 = vector.extract_strided_slice %0 {offsets = [21, 0], sizes = [1, 8], strides = [1, 1]} : vector<36x8xf32> to vector<1x8xf32>
    %694 = vector.shape_cast %693 : vector<1x8xf32> to vector<1x1x1x8xf32>
    %695 = vector.broadcast %692 : vector<2x7x7x1xf32> to vector<2x7x7x8xf32>
    %696 = vector.broadcast %694 : vector<1x1x1x8xf32> to vector<2x7x7x8xf32>
    %697 = arith.mulf %695, %696 : vector<2x7x7x8xf32>
    %698 = arith.addf %691, %697 : vector<2x7x7x8xf32>
    %699 = vector.extract_strided_slice %684 {offsets = [0, 0, 0, 2], sizes = [2, 7, 7, 1], strides = [1, 1, 1, 1]} : vector<2x7x7x4xf32> to vector<2x7x7x1xf32>
    %700 = vector.extract_strided_slice %0 {offsets = [22, 0], sizes = [1, 8], strides = [1, 1]} : vector<36x8xf32> to vector<1x8xf32>
    %701 = vector.shape_cast %700 : vector<1x8xf32> to vector<1x1x1x8xf32>
    %702 = vector.broadcast %699 : vector<2x7x7x1xf32> to vector<2x7x7x8xf32>
    %703 = vector.broadcast %701 : vector<1x1x1x8xf32> to vector<2x7x7x8xf32>
    %704 = arith.mulf %702, %703 : vector<2x7x7x8xf32>
    %705 = arith.addf %698, %704 : vector<2x7x7x8xf32>
    %706 = vector.extract_strided_slice %684 {offsets = [0, 0, 0, 3], sizes = [2, 7, 7, 1], strides = [1, 1, 1, 1]} : vector<2x7x7x4xf32> to vector<2x7x7x1xf32>
    %707 = vector.extract_strided_slice %0 {offsets = [23, 0], sizes = [1, 8], strides = [1, 1]} : vector<36x8xf32> to vector<1x8xf32>
    %708 = vector.shape_cast %707 : vector<1x8xf32> to vector<1x1x1x8xf32>
    %709 = vector.broadcast %706 : vector<2x7x7x1xf32> to vector<2x7x7x8xf32>
    %710 = vector.broadcast %708 : vector<1x1x1x8xf32> to vector<2x7x7x8xf32>
    %711 = arith.mulf %709, %710 : vector<2x7x7x8xf32>
    %712 = arith.addf %705, %711 : vector<2x7x7x8xf32>
    %c4_99 = arith.constant 4 : index
    %c1_100 = arith.constant 1 : index
    %c0_101 = arith.constant 0 : index
    %c0_102 = arith.constant 0 : index
    %713 = vector.load %arg1[%c4_99, %c1_100, %c0_101, %c0_102] : memref<8x8x8x4xf32, #tpu.memory_space<vmem>>, vector<2x7x7x4xf32>
    %714 = vector.extract_strided_slice %713 {offsets = [0, 0, 0, 0], sizes = [2, 7, 7, 1], strides = [1, 1, 1, 1]} : vector<2x7x7x4xf32> to vector<2x7x7x1xf32>
    %715 = vector.extract_strided_slice %0 {offsets = [24, 0], sizes = [1, 8], strides = [1, 1]} : vector<36x8xf32> to vector<1x8xf32>
    %716 = vector.shape_cast %715 : vector<1x8xf32> to vector<1x1x1x8xf32>
    %717 = vector.broadcast %714 : vector<2x7x7x1xf32> to vector<2x7x7x8xf32>
    %718 = vector.broadcast %716 : vector<1x1x1x8xf32> to vector<2x7x7x8xf32>
    %719 = arith.mulf %717, %718 : vector<2x7x7x8xf32>
    %720 = arith.addf %712, %719 : vector<2x7x7x8xf32>
    %721 = vector.extract_strided_slice %713 {offsets = [0, 0, 0, 1], sizes = [2, 7, 7, 1], strides = [1, 1, 1, 1]} : vector<2x7x7x4xf32> to vector<2x7x7x1xf32>
    %722 = vector.extract_strided_slice %0 {offsets = [25, 0], sizes = [1, 8], strides = [1, 1]} : vector<36x8xf32> to vector<1x8xf32>
    %723 = vector.shape_cast %722 : vector<1x8xf32> to vector<1x1x1x8xf32>
    %724 = vector.broadcast %721 : vector<2x7x7x1xf32> to vector<2x7x7x8xf32>
    %725 = vector.broadcast %723 : vector<1x1x1x8xf32> to vector<2x7x7x8xf32>
    %726 = arith.mulf %724, %725 : vector<2x7x7x8xf32>
    %727 = arith.addf %720, %726 : vector<2x7x7x8xf32>
    %728 = vector.extract_strided_slice %713 {offsets = [0, 0, 0, 2], sizes = [2, 7, 7, 1], strides = [1, 1, 1, 1]} : vector<2x7x7x4xf32> to vector<2x7x7x1xf32>
    %729 = vector.extract_strided_slice %0 {offsets = [26, 0], sizes = [1, 8], strides = [1, 1]} : vector<36x8xf32> to vector<1x8xf32>
    %730 = vector.shape_cast %729 : vector<1x8xf32> to vector<1x1x1x8xf32>
    %731 = vector.broadcast %728 : vector<2x7x7x1xf32> to vector<2x7x7x8xf32>
    %732 = vector.broadcast %730 : vector<1x1x1x8xf32> to vector<2x7x7x8xf32>
    %733 = arith.mulf %731, %732 : vector<2x7x7x8xf32>
    %734 = arith.addf %727, %733 : vector<2x7x7x8xf32>
    %735 = vector.extract_strided_slice %713 {offsets = [0, 0, 0, 3], sizes = [2, 7, 7, 1], strides = [1, 1, 1, 1]} : vector<2x7x7x4xf32> to vector<2x7x7x1xf32>
    %736 = vector.extract_strided_slice %0 {offsets = [27, 0], sizes = [1, 8], strides = [1, 1]} : vector<36x8xf32> to vector<1x8xf32>
    %737 = vector.shape_cast %736 : vector<1x8xf32> to vector<1x1x1x8xf32>
    %738 = vector.broadcast %735 : vector<2x7x7x1xf32> to vector<2x7x7x8xf32>
    %739 = vector.broadcast %737 : vector<1x1x1x8xf32> to vector<2x7x7x8xf32>
    %740 = arith.mulf %738, %739 : vector<2x7x7x8xf32>
    %741 = arith.addf %734, %740 : vector<2x7x7x8xf32>
    %c6_103 = arith.constant 6 : index
    %c1_104 = arith.constant 1 : index
    %c0_105 = arith.constant 0 : index
    %c0_106 = arith.constant 0 : index
    %742 = vector.load %arg1[%c6_103, %c1_104, %c0_105, %c0_106] : memref<8x8x8x4xf32, #tpu.memory_space<vmem>>, vector<2x7x7x4xf32>
    %743 = vector.extract_strided_slice %742 {offsets = [0, 0, 0, 0], sizes = [2, 7, 7, 1], strides = [1, 1, 1, 1]} : vector<2x7x7x4xf32> to vector<2x7x7x1xf32>
    %744 = vector.extract_strided_slice %0 {offsets = [28, 0], sizes = [1, 8], strides = [1, 1]} : vector<36x8xf32> to vector<1x8xf32>
    %745 = vector.shape_cast %744 : vector<1x8xf32> to vector<1x1x1x8xf32>
    %746 = vector.broadcast %743 : vector<2x7x7x1xf32> to vector<2x7x7x8xf32>
    %747 = vector.broadcast %745 : vector<1x1x1x8xf32> to vector<2x7x7x8xf32>
    %748 = arith.mulf %746, %747 : vector<2x7x7x8xf32>
    %749 = arith.addf %741, %748 : vector<2x7x7x8xf32>
    %750 = vector.extract_strided_slice %742 {offsets = [0, 0, 0, 1], sizes = [2, 7, 7, 1], strides = [1, 1, 1, 1]} : vector<2x7x7x4xf32> to vector<2x7x7x1xf32>
    %751 = vector.extract_strided_slice %0 {offsets = [29, 0], sizes = [1, 8], strides = [1, 1]} : vector<36x8xf32> to vector<1x8xf32>
    %752 = vector.shape_cast %751 : vector<1x8xf32> to vector<1x1x1x8xf32>
    %753 = vector.broadcast %750 : vector<2x7x7x1xf32> to vector<2x7x7x8xf32>
    %754 = vector.broadcast %752 : vector<1x1x1x8xf32> to vector<2x7x7x8xf32>
    %755 = arith.mulf %753, %754 : vector<2x7x7x8xf32>
    %756 = arith.addf %749, %755 : vector<2x7x7x8xf32>
    %757 = vector.extract_strided_slice %742 {offsets = [0, 0, 0, 2], sizes = [2, 7, 7, 1], strides = [1, 1, 1, 1]} : vector<2x7x7x4xf32> to vector<2x7x7x1xf32>
    %758 = vector.extract_strided_slice %0 {offsets = [30, 0], sizes = [1, 8], strides = [1, 1]} : vector<36x8xf32> to vector<1x8xf32>
    %759 = vector.shape_cast %758 : vector<1x8xf32> to vector<1x1x1x8xf32>
    %760 = vector.broadcast %757 : vector<2x7x7x1xf32> to vector<2x7x7x8xf32>
    %761 = vector.broadcast %759 : vector<1x1x1x8xf32> to vector<2x7x7x8xf32>
    %762 = arith.mulf %760, %761 : vector<2x7x7x8xf32>
    %763 = arith.addf %756, %762 : vector<2x7x7x8xf32>
    %764 = vector.extract_strided_slice %742 {offsets = [0, 0, 0, 3], sizes = [2, 7, 7, 1], strides = [1, 1, 1, 1]} : vector<2x7x7x4xf32> to vector<2x7x7x1xf32>
    %765 = vector.extract_strided_slice %0 {offsets = [31, 0], sizes = [1, 8], strides = [1, 1]} : vector<36x8xf32> to vector<1x8xf32>
    %766 = vector.shape_cast %765 : vector<1x8xf32> to vector<1x1x1x8xf32>
    %767 = vector.broadcast %764 : vector<2x7x7x1xf32> to vector<2x7x7x8xf32>
    %768 = vector.broadcast %766 : vector<1x1x1x8xf32> to vector<2x7x7x8xf32>
    %769 = arith.mulf %767, %768 : vector<2x7x7x8xf32>
    %770 = arith.addf %763, %769 : vector<2x7x7x8xf32>
    %c4_107 = arith.constant 4 : index
    %c1_108 = arith.constant 1 : index
    %c1_109 = arith.constant 1 : index
    %c0_110 = arith.constant 0 : index
    %771 = vector.load %arg1[%c4_107, %c1_108, %c1_109, %c0_110] : memref<8x8x8x4xf32, #tpu.memory_space<vmem>>, vector<2x7x7x4xf32>
    %772 = vector.extract_strided_slice %771 {offsets = [0, 0, 0, 0], sizes = [2, 7, 7, 1], strides = [1, 1, 1, 1]} : vector<2x7x7x4xf32> to vector<2x7x7x1xf32>
    %773 = vector.extract_strided_slice %0 {offsets = [32, 0], sizes = [1, 8], strides = [1, 1]} : vector<36x8xf32> to vector<1x8xf32>
    %774 = vector.shape_cast %773 : vector<1x8xf32> to vector<1x1x1x8xf32>
    %775 = vector.broadcast %772 : vector<2x7x7x1xf32> to vector<2x7x7x8xf32>
    %776 = vector.broadcast %774 : vector<1x1x1x8xf32> to vector<2x7x7x8xf32>
    %777 = arith.mulf %775, %776 : vector<2x7x7x8xf32>
    %778 = arith.addf %770, %777 : vector<2x7x7x8xf32>
    %779 = vector.extract_strided_slice %771 {offsets = [0, 0, 0, 1], sizes = [2, 7, 7, 1], strides = [1, 1, 1, 1]} : vector<2x7x7x4xf32> to vector<2x7x7x1xf32>
    %780 = vector.extract_strided_slice %0 {offsets = [33, 0], sizes = [1, 8], strides = [1, 1]} : vector<36x8xf32> to vector<1x8xf32>
    %781 = vector.shape_cast %780 : vector<1x8xf32> to vector<1x1x1x8xf32>
    %782 = vector.broadcast %779 : vector<2x7x7x1xf32> to vector<2x7x7x8xf32>
    %783 = vector.broadcast %781 : vector<1x1x1x8xf32> to vector<2x7x7x8xf32>
    %784 = arith.mulf %782, %783 : vector<2x7x7x8xf32>
    %785 = arith.addf %778, %784 : vector<2x7x7x8xf32>
    %786 = vector.extract_strided_slice %771 {offsets = [0, 0, 0, 2], sizes = [2, 7, 7, 1], strides = [1, 1, 1, 1]} : vector<2x7x7x4xf32> to vector<2x7x7x1xf32>
    %787 = vector.extract_strided_slice %0 {offsets = [34, 0], sizes = [1, 8], strides = [1, 1]} : vector<36x8xf32> to vector<1x8xf32>
    %788 = vector.shape_cast %787 : vector<1x8xf32> to vector<1x1x1x8xf32>
    %789 = vector.broadcast %786 : vector<2x7x7x1xf32> to vector<2x7x7x8xf32>
    %790 = vector.broadcast %788 : vector<1x1x1x8xf32> to vector<2x7x7x8xf32>
    %791 = arith.mulf %789, %790 : vector<2x7x7x8xf32>
    %792 = arith.addf %785, %791 : vector<2x7x7x8xf32>
    %793 = vector.extract_strided_slice %771 {offsets = [0, 0, 0, 3], sizes = [2, 7, 7, 1], strides = [1, 1, 1, 1]} : vector<2x7x7x4xf32> to vector<2x7x7x1xf32>
    %794 = vector.extract_strided_slice %0 {offsets = [35, 0], sizes = [1, 8], strides = [1, 1]} : vector<36x8xf32> to vector<1x8xf32>
    %795 = vector.shape_cast %794 : vector<1x8xf32> to vector<1x1x1x8xf32>
    %796 = vector.broadcast %793 : vector<2x7x7x1xf32> to vector<2x7x7x8xf32>
    %797 = vector.broadcast %795 : vector<1x1x1x8xf32> to vector<2x7x7x8xf32>
    %798 = arith.mulf %796, %797 : vector<2x7x7x8xf32>
    %799 = arith.addf %792, %798 : vector<2x7x7x8xf32>
    %800 = vector.shape_cast %1 : vector<1x8xf32> to vector<1x1x1x8xf32>
    %801 = vector.broadcast %800 : vector<1x1x1x8xf32> to vector<2x7x7x8xf32>
    %802 = arith.addf %799, %801 : vector<2x7x7x8xf32>
    %c14_i32 = arith.constant 14 : i32
    %803 = vector.broadcast %c14_i32 : i32 to vector<2x7x7x1xi32>
    %804 = arith.addi %2, %803 : vector<2x7x7x1xi32>
    %805 = arith.cmpf ogt, %802, %536 : vector<2x7x7x8xf32>
    %806 = arith.maximumf %536, %802 : vector<2x7x7x8xf32>
    %807 = vector.shape_cast %804 : vector<2x7x7x1xi32> to vector<2x7x7x1xi32>
    %808 = vector.broadcast %807 : vector<2x7x7x1xi32> to vector<2x7x7x8xi32>
    %809 = arith.select %805, %808, %539 : vector<2x7x7x8xi1>, vector<2x7x7x8xi32>
    %c6_111 = arith.constant 6 : index
    %c0_112 = arith.constant 0 : index
    %c0_113 = arith.constant 0 : index
    %c0_114 = arith.constant 0 : index
    %810 = vector.load %arg1[%c6_111, %c0_112, %c0_113, %c0_114] : memref<8x8x8x4xf32, #tpu.memory_space<vmem>>, vector<2x7x7x4xf32>
    %811 = vector.extract_strided_slice %810 {offsets = [0, 0, 0, 0], sizes = [2, 7, 7, 1], strides = [1, 1, 1, 1]} : vector<2x7x7x4xf32> to vector<2x7x7x1xf32>
    %812 = vector.extract_strided_slice %0 {offsets = [0, 0], sizes = [1, 8], strides = [1, 1]} : vector<36x8xf32> to vector<1x8xf32>
    %813 = vector.shape_cast %812 : vector<1x8xf32> to vector<1x1x1x8xf32>
    %814 = vector.broadcast %811 : vector<2x7x7x1xf32> to vector<2x7x7x8xf32>
    %815 = vector.broadcast %813 : vector<1x1x1x8xf32> to vector<2x7x7x8xf32>
    %816 = arith.mulf %814, %815 : vector<2x7x7x8xf32>
    %817 = vector.extract_strided_slice %810 {offsets = [0, 0, 0, 1], sizes = [2, 7, 7, 1], strides = [1, 1, 1, 1]} : vector<2x7x7x4xf32> to vector<2x7x7x1xf32>
    %818 = vector.extract_strided_slice %0 {offsets = [1, 0], sizes = [1, 8], strides = [1, 1]} : vector<36x8xf32> to vector<1x8xf32>
    %819 = vector.shape_cast %818 : vector<1x8xf32> to vector<1x1x1x8xf32>
    %820 = vector.broadcast %817 : vector<2x7x7x1xf32> to vector<2x7x7x8xf32>
    %821 = vector.broadcast %819 : vector<1x1x1x8xf32> to vector<2x7x7x8xf32>
    %822 = arith.mulf %820, %821 : vector<2x7x7x8xf32>
    %823 = arith.addf %816, %822 : vector<2x7x7x8xf32>
    %824 = vector.extract_strided_slice %810 {offsets = [0, 0, 0, 2], sizes = [2, 7, 7, 1], strides = [1, 1, 1, 1]} : vector<2x7x7x4xf32> to vector<2x7x7x1xf32>
    %825 = vector.extract_strided_slice %0 {offsets = [2, 0], sizes = [1, 8], strides = [1, 1]} : vector<36x8xf32> to vector<1x8xf32>
    %826 = vector.shape_cast %825 : vector<1x8xf32> to vector<1x1x1x8xf32>
    %827 = vector.broadcast %824 : vector<2x7x7x1xf32> to vector<2x7x7x8xf32>
    %828 = vector.broadcast %826 : vector<1x1x1x8xf32> to vector<2x7x7x8xf32>
    %829 = arith.mulf %827, %828 : vector<2x7x7x8xf32>
    %830 = arith.addf %823, %829 : vector<2x7x7x8xf32>
    %831 = vector.extract_strided_slice %810 {offsets = [0, 0, 0, 3], sizes = [2, 7, 7, 1], strides = [1, 1, 1, 1]} : vector<2x7x7x4xf32> to vector<2x7x7x1xf32>
    %832 = vector.extract_strided_slice %0 {offsets = [3, 0], sizes = [1, 8], strides = [1, 1]} : vector<36x8xf32> to vector<1x8xf32>
    %833 = vector.shape_cast %832 : vector<1x8xf32> to vector<1x1x1x8xf32>
    %834 = vector.broadcast %831 : vector<2x7x7x1xf32> to vector<2x7x7x8xf32>
    %835 = vector.broadcast %833 : vector<1x1x1x8xf32> to vector<2x7x7x8xf32>
    %836 = arith.mulf %834, %835 : vector<2x7x7x8xf32>
    %837 = arith.addf %830, %836 : vector<2x7x7x8xf32>
    %c4_115 = arith.constant 4 : index
    %c0_116 = arith.constant 0 : index
    %c1_117 = arith.constant 1 : index
    %c0_118 = arith.constant 0 : index
    %838 = vector.load %arg1[%c4_115, %c0_116, %c1_117, %c0_118] : memref<8x8x8x4xf32, #tpu.memory_space<vmem>>, vector<2x7x7x4xf32>
    %839 = vector.extract_strided_slice %838 {offsets = [0, 0, 0, 0], sizes = [2, 7, 7, 1], strides = [1, 1, 1, 1]} : vector<2x7x7x4xf32> to vector<2x7x7x1xf32>
    %840 = vector.extract_strided_slice %0 {offsets = [4, 0], sizes = [1, 8], strides = [1, 1]} : vector<36x8xf32> to vector<1x8xf32>
    %841 = vector.shape_cast %840 : vector<1x8xf32> to vector<1x1x1x8xf32>
    %842 = vector.broadcast %839 : vector<2x7x7x1xf32> to vector<2x7x7x8xf32>
    %843 = vector.broadcast %841 : vector<1x1x1x8xf32> to vector<2x7x7x8xf32>
    %844 = arith.mulf %842, %843 : vector<2x7x7x8xf32>
    %845 = arith.addf %837, %844 : vector<2x7x7x8xf32>
    %846 = vector.extract_strided_slice %838 {offsets = [0, 0, 0, 1], sizes = [2, 7, 7, 1], strides = [1, 1, 1, 1]} : vector<2x7x7x4xf32> to vector<2x7x7x1xf32>
    %847 = vector.extract_strided_slice %0 {offsets = [5, 0], sizes = [1, 8], strides = [1, 1]} : vector<36x8xf32> to vector<1x8xf32>
    %848 = vector.shape_cast %847 : vector<1x8xf32> to vector<1x1x1x8xf32>
    %849 = vector.broadcast %846 : vector<2x7x7x1xf32> to vector<2x7x7x8xf32>
    %850 = vector.broadcast %848 : vector<1x1x1x8xf32> to vector<2x7x7x8xf32>
    %851 = arith.mulf %849, %850 : vector<2x7x7x8xf32>
    %852 = arith.addf %845, %851 : vector<2x7x7x8xf32>
    %853 = vector.extract_strided_slice %838 {offsets = [0, 0, 0, 2], sizes = [2, 7, 7, 1], strides = [1, 1, 1, 1]} : vector<2x7x7x4xf32> to vector<2x7x7x1xf32>
    %854 = vector.extract_strided_slice %0 {offsets = [6, 0], sizes = [1, 8], strides = [1, 1]} : vector<36x8xf32> to vector<1x8xf32>
    %855 = vector.shape_cast %854 : vector<1x8xf32> to vector<1x1x1x8xf32>
    %856 = vector.broadcast %853 : vector<2x7x7x1xf32> to vector<2x7x7x8xf32>
    %857 = vector.broadcast %855 : vector<1x1x1x8xf32> to vector<2x7x7x8xf32>
    %858 = arith.mulf %856, %857 : vector<2x7x7x8xf32>
    %859 = arith.addf %852, %858 : vector<2x7x7x8xf32>
    %860 = vector.extract_strided_slice %838 {offsets = [0, 0, 0, 3], sizes = [2, 7, 7, 1], strides = [1, 1, 1, 1]} : vector<2x7x7x4xf32> to vector<2x7x7x1xf32>
    %861 = vector.extract_strided_slice %0 {offsets = [7, 0], sizes = [1, 8], strides = [1, 1]} : vector<36x8xf32> to vector<1x8xf32>
    %862 = vector.shape_cast %861 : vector<1x8xf32> to vector<1x1x1x8xf32>
    %863 = vector.broadcast %860 : vector<2x7x7x1xf32> to vector<2x7x7x8xf32>
    %864 = vector.broadcast %862 : vector<1x1x1x8xf32> to vector<2x7x7x8xf32>
    %865 = arith.mulf %863, %864 : vector<2x7x7x8xf32>
    %866 = arith.addf %859, %865 : vector<2x7x7x8xf32>
    %c6_119 = arith.constant 6 : index
    %c0_120 = arith.constant 0 : index
    %c1_121 = arith.constant 1 : index
    %c0_122 = arith.constant 0 : index
    %867 = vector.load %arg1[%c6_119, %c0_120, %c1_121, %c0_122] : memref<8x8x8x4xf32, #tpu.memory_space<vmem>>, vector<2x7x7x4xf32>
    %868 = vector.extract_strided_slice %867 {offsets = [0, 0, 0, 0], sizes = [2, 7, 7, 1], strides = [1, 1, 1, 1]} : vector<2x7x7x4xf32> to vector<2x7x7x1xf32>
    %869 = vector.extract_strided_slice %0 {offsets = [8, 0], sizes = [1, 8], strides = [1, 1]} : vector<36x8xf32> to vector<1x8xf32>
    %870 = vector.shape_cast %869 : vector<1x8xf32> to vector<1x1x1x8xf32>
    %871 = vector.broadcast %868 : vector<2x7x7x1xf32> to vector<2x7x7x8xf32>
    %872 = vector.broadcast %870 : vector<1x1x1x8xf32> to vector<2x7x7x8xf32>
    %873 = arith.mulf %871, %872 : vector<2x7x7x8xf32>
    %874 = arith.addf %866, %873 : vector<2x7x7x8xf32>
    %875 = vector.extract_strided_slice %867 {offsets = [0, 0, 0, 1], sizes = [2, 7, 7, 1], strides = [1, 1, 1, 1]} : vector<2x7x7x4xf32> to vector<2x7x7x1xf32>
    %876 = vector.extract_strided_slice %0 {offsets = [9, 0], sizes = [1, 8], strides = [1, 1]} : vector<36x8xf32> to vector<1x8xf32>
    %877 = vector.shape_cast %876 : vector<1x8xf32> to vector<1x1x1x8xf32>
    %878 = vector.broadcast %875 : vector<2x7x7x1xf32> to vector<2x7x7x8xf32>
    %879 = vector.broadcast %877 : vector<1x1x1x8xf32> to vector<2x7x7x8xf32>
    %880 = arith.mulf %878, %879 : vector<2x7x7x8xf32>
    %881 = arith.addf %874, %880 : vector<2x7x7x8xf32>
    %882 = vector.extract_strided_slice %867 {offsets = [0, 0, 0, 2], sizes = [2, 7, 7, 1], strides = [1, 1, 1, 1]} : vector<2x7x7x4xf32> to vector<2x7x7x1xf32>
    %883 = vector.extract_strided_slice %0 {offsets = [10, 0], sizes = [1, 8], strides = [1, 1]} : vector<36x8xf32> to vector<1x8xf32>
    %884 = vector.shape_cast %883 : vector<1x8xf32> to vector<1x1x1x8xf32>
    %885 = vector.broadcast %882 : vector<2x7x7x1xf32> to vector<2x7x7x8xf32>
    %886 = vector.broadcast %884 : vector<1x1x1x8xf32> to vector<2x7x7x8xf32>
    %887 = arith.mulf %885, %886 : vector<2x7x7x8xf32>
    %888 = arith.addf %881, %887 : vector<2x7x7x8xf32>
    %889 = vector.extract_strided_slice %867 {offsets = [0, 0, 0, 3], sizes = [2, 7, 7, 1], strides = [1, 1, 1, 1]} : vector<2x7x7x4xf32> to vector<2x7x7x1xf32>
    %890 = vector.extract_strided_slice %0 {offsets = [11, 0], sizes = [1, 8], strides = [1, 1]} : vector<36x8xf32> to vector<1x8xf32>
    %891 = vector.shape_cast %890 : vector<1x8xf32> to vector<1x1x1x8xf32>
    %892 = vector.broadcast %889 : vector<2x7x7x1xf32> to vector<2x7x7x8xf32>
    %893 = vector.broadcast %891 : vector<1x1x1x8xf32> to vector<2x7x7x8xf32>
    %894 = arith.mulf %892, %893 : vector<2x7x7x8xf32>
    %895 = arith.addf %888, %894 : vector<2x7x7x8xf32>
    %c2_123 = arith.constant 2 : index
    %c1_124 = arith.constant 1 : index
    %c0_125 = arith.constant 0 : index
    %c0_126 = arith.constant 0 : index
    %896 = vector.load %arg1[%c2_123, %c1_124, %c0_125, %c0_126] : memref<8x8x8x4xf32, #tpu.memory_space<vmem>>, vector<2x7x7x4xf32>
    %897 = vector.extract_strided_slice %896 {offsets = [0, 0, 0, 0], sizes = [2, 7, 7, 1], strides = [1, 1, 1, 1]} : vector<2x7x7x4xf32> to vector<2x7x7x1xf32>
    %898 = vector.extract_strided_slice %0 {offsets = [12, 0], sizes = [1, 8], strides = [1, 1]} : vector<36x8xf32> to vector<1x8xf32>
    %899 = vector.shape_cast %898 : vector<1x8xf32> to vector<1x1x1x8xf32>
    %900 = vector.broadcast %897 : vector<2x7x7x1xf32> to vector<2x7x7x8xf32>
    %901 = vector.broadcast %899 : vector<1x1x1x8xf32> to vector<2x7x7x8xf32>
    %902 = arith.mulf %900, %901 : vector<2x7x7x8xf32>
    %903 = arith.addf %895, %902 : vector<2x7x7x8xf32>
    %904 = vector.extract_strided_slice %896 {offsets = [0, 0, 0, 1], sizes = [2, 7, 7, 1], strides = [1, 1, 1, 1]} : vector<2x7x7x4xf32> to vector<2x7x7x1xf32>
    %905 = vector.extract_strided_slice %0 {offsets = [13, 0], sizes = [1, 8], strides = [1, 1]} : vector<36x8xf32> to vector<1x8xf32>
    %906 = vector.shape_cast %905 : vector<1x8xf32> to vector<1x1x1x8xf32>
    %907 = vector.broadcast %904 : vector<2x7x7x1xf32> to vector<2x7x7x8xf32>
    %908 = vector.broadcast %906 : vector<1x1x1x8xf32> to vector<2x7x7x8xf32>
    %909 = arith.mulf %907, %908 : vector<2x7x7x8xf32>
    %910 = arith.addf %903, %909 : vector<2x7x7x8xf32>
    %911 = vector.extract_strided_slice %896 {offsets = [0, 0, 0, 2], sizes = [2, 7, 7, 1], strides = [1, 1, 1, 1]} : vector<2x7x7x4xf32> to vector<2x7x7x1xf32>
    %912 = vector.extract_strided_slice %0 {offsets = [14, 0], sizes = [1, 8], strides = [1, 1]} : vector<36x8xf32> to vector<1x8xf32>
    %913 = vector.shape_cast %912 : vector<1x8xf32> to vector<1x1x1x8xf32>
    %914 = vector.broadcast %911 : vector<2x7x7x1xf32> to vector<2x7x7x8xf32>
    %915 = vector.broadcast %913 : vector<1x1x1x8xf32> to vector<2x7x7x8xf32>
    %916 = arith.mulf %914, %915 : vector<2x7x7x8xf32>
    %917 = arith.addf %910, %916 : vector<2x7x7x8xf32>
    %918 = vector.extract_strided_slice %896 {offsets = [0, 0, 0, 3], sizes = [2, 7, 7, 1], strides = [1, 1, 1, 1]} : vector<2x7x7x4xf32> to vector<2x7x7x1xf32>
    %919 = vector.extract_strided_slice %0 {offsets = [15, 0], sizes = [1, 8], strides = [1, 1]} : vector<36x8xf32> to vector<1x8xf32>
    %920 = vector.shape_cast %919 : vector<1x8xf32> to vector<1x1x1x8xf32>
    %921 = vector.broadcast %918 : vector<2x7x7x1xf32> to vector<2x7x7x8xf32>
    %922 = vector.broadcast %920 : vector<1x1x1x8xf32> to vector<2x7x7x8xf32>
    %923 = arith.mulf %921, %922 : vector<2x7x7x8xf32>
    %924 = arith.addf %917, %923 : vector<2x7x7x8xf32>
    %c0_127 = arith.constant 0 : index
    %c1_128 = arith.constant 1 : index
    %c1_129 = arith.constant 1 : index
    %c0_130 = arith.constant 0 : index
    %925 = vector.load %arg1[%c0_127, %c1_128, %c1_129, %c0_130] : memref<8x8x8x4xf32, #tpu.memory_space<vmem>>, vector<2x7x7x4xf32>
    %926 = vector.extract_strided_slice %925 {offsets = [0, 0, 0, 0], sizes = [2, 7, 7, 1], strides = [1, 1, 1, 1]} : vector<2x7x7x4xf32> to vector<2x7x7x1xf32>
    %927 = vector.extract_strided_slice %0 {offsets = [16, 0], sizes = [1, 8], strides = [1, 1]} : vector<36x8xf32> to vector<1x8xf32>
    %928 = vector.shape_cast %927 : vector<1x8xf32> to vector<1x1x1x8xf32>
    %929 = vector.broadcast %926 : vector<2x7x7x1xf32> to vector<2x7x7x8xf32>
    %930 = vector.broadcast %928 : vector<1x1x1x8xf32> to vector<2x7x7x8xf32>
    %931 = arith.mulf %929, %930 : vector<2x7x7x8xf32>
    %932 = arith.addf %924, %931 : vector<2x7x7x8xf32>
    %933 = vector.extract_strided_slice %925 {offsets = [0, 0, 0, 1], sizes = [2, 7, 7, 1], strides = [1, 1, 1, 1]} : vector<2x7x7x4xf32> to vector<2x7x7x1xf32>
    %934 = vector.extract_strided_slice %0 {offsets = [17, 0], sizes = [1, 8], strides = [1, 1]} : vector<36x8xf32> to vector<1x8xf32>
    %935 = vector.shape_cast %934 : vector<1x8xf32> to vector<1x1x1x8xf32>
    %936 = vector.broadcast %933 : vector<2x7x7x1xf32> to vector<2x7x7x8xf32>
    %937 = vector.broadcast %935 : vector<1x1x1x8xf32> to vector<2x7x7x8xf32>
    %938 = arith.mulf %936, %937 : vector<2x7x7x8xf32>
    %939 = arith.addf %932, %938 : vector<2x7x7x8xf32>
    %940 = vector.extract_strided_slice %925 {offsets = [0, 0, 0, 2], sizes = [2, 7, 7, 1], strides = [1, 1, 1, 1]} : vector<2x7x7x4xf32> to vector<2x7x7x1xf32>
    %941 = vector.extract_strided_slice %0 {offsets = [18, 0], sizes = [1, 8], strides = [1, 1]} : vector<36x8xf32> to vector<1x8xf32>
    %942 = vector.shape_cast %941 : vector<1x8xf32> to vector<1x1x1x8xf32>
    %943 = vector.broadcast %940 : vector<2x7x7x1xf32> to vector<2x7x7x8xf32>
    %944 = vector.broadcast %942 : vector<1x1x1x8xf32> to vector<2x7x7x8xf32>
    %945 = arith.mulf %943, %944 : vector<2x7x7x8xf32>
    %946 = arith.addf %939, %945 : vector<2x7x7x8xf32>
    %947 = vector.extract_strided_slice %925 {offsets = [0, 0, 0, 3], sizes = [2, 7, 7, 1], strides = [1, 1, 1, 1]} : vector<2x7x7x4xf32> to vector<2x7x7x1xf32>
    %948 = vector.extract_strided_slice %0 {offsets = [19, 0], sizes = [1, 8], strides = [1, 1]} : vector<36x8xf32> to vector<1x8xf32>
    %949 = vector.shape_cast %948 : vector<1x8xf32> to vector<1x1x1x8xf32>
    %950 = vector.broadcast %947 : vector<2x7x7x1xf32> to vector<2x7x7x8xf32>
    %951 = vector.broadcast %949 : vector<1x1x1x8xf32> to vector<2x7x7x8xf32>
    %952 = arith.mulf %950, %951 : vector<2x7x7x8xf32>
    %953 = arith.addf %946, %952 : vector<2x7x7x8xf32>
    %c2_131 = arith.constant 2 : index
    %c1_132 = arith.constant 1 : index
    %c1_133 = arith.constant 1 : index
    %c0_134 = arith.constant 0 : index
    %954 = vector.load %arg1[%c2_131, %c1_132, %c1_133, %c0_134] : memref<8x8x8x4xf32, #tpu.memory_space<vmem>>, vector<2x7x7x4xf32>
    %955 = vector.extract_strided_slice %954 {offsets = [0, 0, 0, 0], sizes = [2, 7, 7, 1], strides = [1, 1, 1, 1]} : vector<2x7x7x4xf32> to vector<2x7x7x1xf32>
    %956 = vector.extract_strided_slice %0 {offsets = [20, 0], sizes = [1, 8], strides = [1, 1]} : vector<36x8xf32> to vector<1x8xf32>
    %957 = vector.shape_cast %956 : vector<1x8xf32> to vector<1x1x1x8xf32>
    %958 = vector.broadcast %955 : vector<2x7x7x1xf32> to vector<2x7x7x8xf32>
    %959 = vector.broadcast %957 : vector<1x1x1x8xf32> to vector<2x7x7x8xf32>
    %960 = arith.mulf %958, %959 : vector<2x7x7x8xf32>
    %961 = arith.addf %953, %960 : vector<2x7x7x8xf32>
    %962 = vector.extract_strided_slice %954 {offsets = [0, 0, 0, 1], sizes = [2, 7, 7, 1], strides = [1, 1, 1, 1]} : vector<2x7x7x4xf32> to vector<2x7x7x1xf32>
    %963 = vector.extract_strided_slice %0 {offsets = [21, 0], sizes = [1, 8], strides = [1, 1]} : vector<36x8xf32> to vector<1x8xf32>
    %964 = vector.shape_cast %963 : vector<1x8xf32> to vector<1x1x1x8xf32>
    %965 = vector.broadcast %962 : vector<2x7x7x1xf32> to vector<2x7x7x8xf32>
    %966 = vector.broadcast %964 : vector<1x1x1x8xf32> to vector<2x7x7x8xf32>
    %967 = arith.mulf %965, %966 : vector<2x7x7x8xf32>
    %968 = arith.addf %961, %967 : vector<2x7x7x8xf32>
    %969 = vector.extract_strided_slice %954 {offsets = [0, 0, 0, 2], sizes = [2, 7, 7, 1], strides = [1, 1, 1, 1]} : vector<2x7x7x4xf32> to vector<2x7x7x1xf32>
    %970 = vector.extract_strided_slice %0 {offsets = [22, 0], sizes = [1, 8], strides = [1, 1]} : vector<36x8xf32> to vector<1x8xf32>
    %971 = vector.shape_cast %970 : vector<1x8xf32> to vector<1x1x1x8xf32>
    %972 = vector.broadcast %969 : vector<2x7x7x1xf32> to vector<2x7x7x8xf32>
    %973 = vector.broadcast %971 : vector<1x1x1x8xf32> to vector<2x7x7x8xf32>
    %974 = arith.mulf %972, %973 : vector<2x7x7x8xf32>
    %975 = arith.addf %968, %974 : vector<2x7x7x8xf32>
    %976 = vector.extract_strided_slice %954 {offsets = [0, 0, 0, 3], sizes = [2, 7, 7, 1], strides = [1, 1, 1, 1]} : vector<2x7x7x4xf32> to vector<2x7x7x1xf32>
    %977 = vector.extract_strided_slice %0 {offsets = [23, 0], sizes = [1, 8], strides = [1, 1]} : vector<36x8xf32> to vector<1x8xf32>
    %978 = vector.shape_cast %977 : vector<1x8xf32> to vector<1x1x1x8xf32>
    %979 = vector.broadcast %976 : vector<2x7x7x1xf32> to vector<2x7x7x8xf32>
    %980 = vector.broadcast %978 : vector<1x1x1x8xf32> to vector<2x7x7x8xf32>
    %981 = arith.mulf %979, %980 : vector<2x7x7x8xf32>
    %982 = arith.addf %975, %981 : vector<2x7x7x8xf32>
    %c6_135 = arith.constant 6 : index
    %c1_136 = arith.constant 1 : index
    %c0_137 = arith.constant 0 : index
    %c0_138 = arith.constant 0 : index
    %983 = vector.load %arg1[%c6_135, %c1_136, %c0_137, %c0_138] : memref<8x8x8x4xf32, #tpu.memory_space<vmem>>, vector<2x7x7x4xf32>
    %984 = vector.extract_strided_slice %983 {offsets = [0, 0, 0, 0], sizes = [2, 7, 7, 1], strides = [1, 1, 1, 1]} : vector<2x7x7x4xf32> to vector<2x7x7x1xf32>
    %985 = vector.extract_strided_slice %0 {offsets = [24, 0], sizes = [1, 8], strides = [1, 1]} : vector<36x8xf32> to vector<1x8xf32>
    %986 = vector.shape_cast %985 : vector<1x8xf32> to vector<1x1x1x8xf32>
    %987 = vector.broadcast %984 : vector<2x7x7x1xf32> to vector<2x7x7x8xf32>
    %988 = vector.broadcast %986 : vector<1x1x1x8xf32> to vector<2x7x7x8xf32>
    %989 = arith.mulf %987, %988 : vector<2x7x7x8xf32>
    %990 = arith.addf %982, %989 : vector<2x7x7x8xf32>
    %991 = vector.extract_strided_slice %983 {offsets = [0, 0, 0, 1], sizes = [2, 7, 7, 1], strides = [1, 1, 1, 1]} : vector<2x7x7x4xf32> to vector<2x7x7x1xf32>
    %992 = vector.extract_strided_slice %0 {offsets = [25, 0], sizes = [1, 8], strides = [1, 1]} : vector<36x8xf32> to vector<1x8xf32>
    %993 = vector.shape_cast %992 : vector<1x8xf32> to vector<1x1x1x8xf32>
    %994 = vector.broadcast %991 : vector<2x7x7x1xf32> to vector<2x7x7x8xf32>
    %995 = vector.broadcast %993 : vector<1x1x1x8xf32> to vector<2x7x7x8xf32>
    %996 = arith.mulf %994, %995 : vector<2x7x7x8xf32>
    %997 = arith.addf %990, %996 : vector<2x7x7x8xf32>
    %998 = vector.extract_strided_slice %983 {offsets = [0, 0, 0, 2], sizes = [2, 7, 7, 1], strides = [1, 1, 1, 1]} : vector<2x7x7x4xf32> to vector<2x7x7x1xf32>
    %999 = vector.extract_strided_slice %0 {offsets = [26, 0], sizes = [1, 8], strides = [1, 1]} : vector<36x8xf32> to vector<1x8xf32>
    %1000 = vector.shape_cast %999 : vector<1x8xf32> to vector<1x1x1x8xf32>
    %1001 = vector.broadcast %998 : vector<2x7x7x1xf32> to vector<2x7x7x8xf32>
    %1002 = vector.broadcast %1000 : vector<1x1x1x8xf32> to vector<2x7x7x8xf32>
    %1003 = arith.mulf %1001, %1002 : vector<2x7x7x8xf32>
    %1004 = arith.addf %997, %1003 : vector<2x7x7x8xf32>
    %1005 = vector.extract_strided_slice %983 {offsets = [0, 0, 0, 3], sizes = [2, 7, 7, 1], strides = [1, 1, 1, 1]} : vector<2x7x7x4xf32> to vector<2x7x7x1xf32>
    %1006 = vector.extract_strided_slice %0 {offsets = [27, 0], sizes = [1, 8], strides = [1, 1]} : vector<36x8xf32> to vector<1x8xf32>
    %1007 = vector.shape_cast %1006 : vector<1x8xf32> to vector<1x1x1x8xf32>
    %1008 = vector.broadcast %1005 : vector<2x7x7x1xf32> to vector<2x7x7x8xf32>
    %1009 = vector.broadcast %1007 : vector<1x1x1x8xf32> to vector<2x7x7x8xf32>
    %1010 = arith.mulf %1008, %1009 : vector<2x7x7x8xf32>
    %1011 = arith.addf %1004, %1010 : vector<2x7x7x8xf32>
    %c4_139 = arith.constant 4 : index
    %c1_140 = arith.constant 1 : index
    %c1_141 = arith.constant 1 : index
    %c0_142 = arith.constant 0 : index
    %1012 = vector.load %arg1[%c4_139, %c1_140, %c1_141, %c0_142] : memref<8x8x8x4xf32, #tpu.memory_space<vmem>>, vector<2x7x7x4xf32>
    %1013 = vector.extract_strided_slice %1012 {offsets = [0, 0, 0, 0], sizes = [2, 7, 7, 1], strides = [1, 1, 1, 1]} : vector<2x7x7x4xf32> to vector<2x7x7x1xf32>
    %1014 = vector.extract_strided_slice %0 {offsets = [28, 0], sizes = [1, 8], strides = [1, 1]} : vector<36x8xf32> to vector<1x8xf32>
    %1015 = vector.shape_cast %1014 : vector<1x8xf32> to vector<1x1x1x8xf32>
    %1016 = vector.broadcast %1013 : vector<2x7x7x1xf32> to vector<2x7x7x8xf32>
    %1017 = vector.broadcast %1015 : vector<1x1x1x8xf32> to vector<2x7x7x8xf32>
    %1018 = arith.mulf %1016, %1017 : vector<2x7x7x8xf32>
    %1019 = arith.addf %1011, %1018 : vector<2x7x7x8xf32>
    %1020 = vector.extract_strided_slice %1012 {offsets = [0, 0, 0, 1], sizes = [2, 7, 7, 1], strides = [1, 1, 1, 1]} : vector<2x7x7x4xf32> to vector<2x7x7x1xf32>
    %1021 = vector.extract_strided_slice %0 {offsets = [29, 0], sizes = [1, 8], strides = [1, 1]} : vector<36x8xf32> to vector<1x8xf32>
    %1022 = vector.shape_cast %1021 : vector<1x8xf32> to vector<1x1x1x8xf32>
    %1023 = vector.broadcast %1020 : vector<2x7x7x1xf32> to vector<2x7x7x8xf32>
    %1024 = vector.broadcast %1022 : vector<1x1x1x8xf32> to vector<2x7x7x8xf32>
    %1025 = arith.mulf %1023, %1024 : vector<2x7x7x8xf32>
    %1026 = arith.addf %1019, %1025 : vector<2x7x7x8xf32>
    %1027 = vector.extract_strided_slice %1012 {offsets = [0, 0, 0, 2], sizes = [2, 7, 7, 1], strides = [1, 1, 1, 1]} : vector<2x7x7x4xf32> to vector<2x7x7x1xf32>
    %1028 = vector.extract_strided_slice %0 {offsets = [30, 0], sizes = [1, 8], strides = [1, 1]} : vector<36x8xf32> to vector<1x8xf32>
    %1029 = vector.shape_cast %1028 : vector<1x8xf32> to vector<1x1x1x8xf32>
    %1030 = vector.broadcast %1027 : vector<2x7x7x1xf32> to vector<2x7x7x8xf32>
    %1031 = vector.broadcast %1029 : vector<1x1x1x8xf32> to vector<2x7x7x8xf32>
    %1032 = arith.mulf %1030, %1031 : vector<2x7x7x8xf32>
    %1033 = arith.addf %1026, %1032 : vector<2x7x7x8xf32>
    %1034 = vector.extract_strided_slice %1012 {offsets = [0, 0, 0, 3], sizes = [2, 7, 7, 1], strides = [1, 1, 1, 1]} : vector<2x7x7x4xf32> to vector<2x7x7x1xf32>
    %1035 = vector.extract_strided_slice %0 {offsets = [31, 0], sizes = [1, 8], strides = [1, 1]} : vector<36x8xf32> to vector<1x8xf32>
    %1036 = vector.shape_cast %1035 : vector<1x8xf32> to vector<1x1x1x8xf32>
    %1037 = vector.broadcast %1034 : vector<2x7x7x1xf32> to vector<2x7x7x8xf32>
    %1038 = vector.broadcast %1036 : vector<1x1x1x8xf32> to vector<2x7x7x8xf32>
    %1039 = arith.mulf %1037, %1038 : vector<2x7x7x8xf32>
    %1040 = arith.addf %1033, %1039 : vector<2x7x7x8xf32>
    %c6_143 = arith.constant 6 : index
    %c1_144 = arith.constant 1 : index
    %c1_145 = arith.constant 1 : index
    %c0_146 = arith.constant 0 : index
    %1041 = vector.load %arg1[%c6_143, %c1_144, %c1_145, %c0_146] : memref<8x8x8x4xf32, #tpu.memory_space<vmem>>, vector<2x7x7x4xf32>
    %1042 = vector.extract_strided_slice %1041 {offsets = [0, 0, 0, 0], sizes = [2, 7, 7, 1], strides = [1, 1, 1, 1]} : vector<2x7x7x4xf32> to vector<2x7x7x1xf32>
    %1043 = vector.extract_strided_slice %0 {offsets = [32, 0], sizes = [1, 8], strides = [1, 1]} : vector<36x8xf32> to vector<1x8xf32>
    %1044 = vector.shape_cast %1043 : vector<1x8xf32> to vector<1x1x1x8xf32>
    %1045 = vector.broadcast %1042 : vector<2x7x7x1xf32> to vector<2x7x7x8xf32>
    %1046 = vector.broadcast %1044 : vector<1x1x1x8xf32> to vector<2x7x7x8xf32>
    %1047 = arith.mulf %1045, %1046 : vector<2x7x7x8xf32>
    %1048 = arith.addf %1040, %1047 : vector<2x7x7x8xf32>
    %1049 = vector.extract_strided_slice %1041 {offsets = [0, 0, 0, 1], sizes = [2, 7, 7, 1], strides = [1, 1, 1, 1]} : vector<2x7x7x4xf32> to vector<2x7x7x1xf32>
    %1050 = vector.extract_strided_slice %0 {offsets = [33, 0], sizes = [1, 8], strides = [1, 1]} : vector<36x8xf32> to vector<1x8xf32>
    %1051 = vector.shape_cast %1050 : vector<1x8xf32> to vector<1x1x1x8xf32>
    %1052 = vector.broadcast %1049 : vector<2x7x7x1xf32> to vector<2x7x7x8xf32>
    %1053 = vector.broadcast %1051 : vector<1x1x1x8xf32> to vector<2x7x7x8xf32>
    %1054 = arith.mulf %1052, %1053 : vector<2x7x7x8xf32>
    %1055 = arith.addf %1048, %1054 : vector<2x7x7x8xf32>
    %1056 = vector.extract_strided_slice %1041 {offsets = [0, 0, 0, 2], sizes = [2, 7, 7, 1], strides = [1, 1, 1, 1]} : vector<2x7x7x4xf32> to vector<2x7x7x1xf32>
    %1057 = vector.extract_strided_slice %0 {offsets = [34, 0], sizes = [1, 8], strides = [1, 1]} : vector<36x8xf32> to vector<1x8xf32>
    %1058 = vector.shape_cast %1057 : vector<1x8xf32> to vector<1x1x1x8xf32>
    %1059 = vector.broadcast %1056 : vector<2x7x7x1xf32> to vector<2x7x7x8xf32>
    %1060 = vector.broadcast %1058 : vector<1x1x1x8xf32> to vector<2x7x7x8xf32>
    %1061 = arith.mulf %1059, %1060 : vector<2x7x7x8xf32>
    %1062 = arith.addf %1055, %1061 : vector<2x7x7x8xf32>
    %1063 = vector.extract_strided_slice %1041 {offsets = [0, 0, 0, 3], sizes = [2, 7, 7, 1], strides = [1, 1, 1, 1]} : vector<2x7x7x4xf32> to vector<2x7x7x1xf32>
    %1064 = vector.extract_strided_slice %0 {offsets = [35, 0], sizes = [1, 8], strides = [1, 1]} : vector<36x8xf32> to vector<1x8xf32>
    %1065 = vector.shape_cast %1064 : vector<1x8xf32> to vector<1x1x1x8xf32>
    %1066 = vector.broadcast %1063 : vector<2x7x7x1xf32> to vector<2x7x7x8xf32>
    %1067 = vector.broadcast %1065 : vector<1x1x1x8xf32> to vector<2x7x7x8xf32>
    %1068 = arith.mulf %1066, %1067 : vector<2x7x7x8xf32>
    %1069 = arith.addf %1062, %1068 : vector<2x7x7x8xf32>
    %1070 = vector.shape_cast %1 : vector<1x8xf32> to vector<1x1x1x8xf32>
    %1071 = vector.broadcast %1070 : vector<1x1x1x8xf32> to vector<2x7x7x8xf32>
    %1072 = arith.addf %1069, %1071 : vector<2x7x7x8xf32>
    %c15_i32 = arith.constant 15 : i32
    %1073 = vector.broadcast %c15_i32 : i32 to vector<2x7x7x1xi32>
    %1074 = arith.addi %2, %1073 : vector<2x7x7x1xi32>
    %1075 = arith.cmpf ogt, %1072, %806 : vector<2x7x7x8xf32>
    %1076 = arith.maximumf %806, %1072 : vector<2x7x7x8xf32>
    %1077 = vector.shape_cast %1074 : vector<2x7x7x1xi32> to vector<2x7x7x1xi32>
    %1078 = vector.broadcast %1077 : vector<2x7x7x1xi32> to vector<2x7x7x8xi32>
    %1079 = arith.select %1075, %1078, %809 : vector<2x7x7x8xi1>, vector<2x7x7x8xi32>
    %c0_147 = arith.constant 0 : index
    %c0_148 = arith.constant 0 : index
    %c0_149 = arith.constant 0 : index
    %c0_150 = arith.constant 0 : index
    %1080 = vector.load %arg8[%c0_147, %c0_148, %c0_149, %c0_150] : memref<2x7x7x8xi32, #tpu.memory_space<vmem>>, vector<2x7x7x8xi32>
    tpu.vector_store %arg8[%c0_147, %c0_148, %c0_149, %c0_150], %1079 {strides = array<i32>} : memref<2x7x7x8xi32, #tpu.memory_space<vmem>>, vector<2x7x7x8xi32>,
    %cst = arith.constant dense<0.000000e+00> : vector<2x7x8xf32>
    %1081 = vector.multi_reduction <add>, %1076, %cst [2] : vector<2x7x7x8xf32> to vector<2x7x8xf32>
    %1082 = vector.shape_cast %1081 : vector<2x7x8xf32> to vector<2x7x1x8xf32>
    %cst_151 = arith.constant dense<0.000000e+00> : vector<2x1x8xf32>
    %1083 = vector.multi_reduction <add>, %1082, %cst_151 [1] : vector<2x7x1x8xf32> to vector<2x1x8xf32>
    %1084 = vector.shape_cast %1083 : vector<2x1x8xf32> to vector<2x1x1x8xf32>
    %cst_152 = arith.constant dense<0.000000e+00> : vector<1x1x8xf32>
    %1085 = vector.multi_reduction <add>, %1084, %cst_152 [0] : vector<2x1x1x8xf32> to vector<1x1x8xf32>
    %1086 = vector.shape_cast %1085 : vector<1x1x8xf32> to vector<1x1x1x8xf32>
    %cst_153 = arith.constant 0.0102040814 : f32
    %1087 = vector.broadcast %cst_153 : f32 to vector<1x1x1x8xf32>
    %1088 = arith.mulf %1086, %1087 : vector<1x1x1x8xf32>
    %1089 = vector.broadcast %1088 : vector<1x1x1x8xf32> to vector<2x7x7x8xf32>
    %1090 = arith.subf %1076, %1089 : vector<2x7x7x8xf32>
    %1091 = arith.mulf %1090, %1090 : vector<2x7x7x8xf32>
    %cst_154 = arith.constant dense<0.000000e+00> : vector<2x7x8xf32>
    %1092 = vector.multi_reduction <add>, %1091, %cst_154 [2] : vector<2x7x7x8xf32> to vector<2x7x8xf32>
    %1093 = vector.shape_cast %1092 : vector<2x7x8xf32> to vector<2x7x1x8xf32>
    %cst_155 = arith.constant dense<0.000000e+00> : vector<2x1x8xf32>
    %1094 = vector.multi_reduction <add>, %1093, %cst_155 [1] : vector<2x7x1x8xf32> to vector<2x1x8xf32>
    %1095 = vector.shape_cast %1094 : vector<2x1x8xf32> to vector<2x1x1x8xf32>
    %cst_156 = arith.constant dense<0.000000e+00> : vector<1x1x8xf32>
    %1096 = vector.multi_reduction <add>, %1095, %cst_156 [0] : vector<2x1x1x8xf32> to vector<1x1x8xf32>
    %1097 = vector.shape_cast %1096 : vector<1x1x8xf32> to vector<1x1x1x8xf32>
    %cst_157 = arith.constant 0.0102040814 : f32
    %1098 = vector.broadcast %cst_157 : f32 to vector<1x1x1x8xf32>
    %1099 = arith.mulf %1097, %1098 : vector<1x1x1x8xf32>
    %cst_158 = arith.constant 9.99999974E-6 : f32
    %1100 = vector.broadcast %cst_158 : f32 to vector<1x1x1x8xf32>
    %1101 = arith.addf %1099, %1100 : vector<1x1x1x8xf32>
    %1102 = math.rsqrt %1101 : vector<1x1x1x8xf32>
    %1103 = vector.broadcast %1102 : vector<1x1x1x8xf32> to vector<2x7x7x8xf32>
    %1104 = arith.mulf %1090, %1103 : vector<2x7x7x8xf32>
    %c0_159 = arith.constant 0 : index
    %c0_160 = arith.constant 0 : index
    %1105 = vector.load %arg4[%c0_159, %c0_160] : memref<1x8xf32, #tpu.memory_space<vmem>>, vector<1x8xf32>
    %1106 = vector.shape_cast %1105 : vector<1x8xf32> to vector<1x1x1x8xf32>
    %1107 = vector.broadcast %1106 : vector<1x1x1x8xf32> to vector<2x7x7x8xf32>
    %1108 = arith.mulf %1104, %1107 : vector<2x7x7x8xf32>
    %c0_161 = arith.constant 0 : index
    %c0_162 = arith.constant 0 : index
    %1109 = vector.load %arg5[%c0_161, %c0_162] : memref<1x8xf32, #tpu.memory_space<vmem>>, vector<1x8xf32>
    %1110 = vector.shape_cast %1109 : vector<1x8xf32> to vector<1x1x1x8xf32>
    %1111 = vector.broadcast %1110 : vector<1x1x1x8xf32> to vector<2x7x7x8xf32>
    %1112 = arith.addf %1108, %1111 : vector<2x7x7x8xf32>
    %c0_163 = arith.constant 0 : index
    %c0_164 = arith.constant 0 : index
    %c0_165 = arith.constant 0 : index
    %c0_166 = arith.constant 0 : index
    %1113 = vector.load %arg7[%c0_163, %c0_164, %c0_165, %c0_166] : memref<2x7x7x8xf32, #tpu.memory_space<vmem>>, vector<2x7x7x8xf32>
    tpu.vector_store %arg7[%c0_163, %c0_164, %c0_165, %c0_166], %1112 {strides = array<i32>} : memref<2x7x7x8xf32, #tpu.memory_space<vmem>>, vector<2x7x7x8xf32>,
    return
  }
  func.func @transform_0(%arg0: i32) -> (i32, i32, i32, i32) {
    %c0_i32 = arith.constant 0 : i32
    %c0_i32_0 = arith.constant 0 : i32
    %c0_i32_1 = arith.constant 0 : i32
    %c0_i32_2 = arith.constant 0 : i32
    %c0_i32_3 = arith.constant 0 : i32
    return %c0_i32, %c0_i32_0, %c0_i32_1, %c0_i32_2 : i32, i32, i32, i32
  }
  func.func @transform_1(%arg0: i32) -> (i32, i32) {
    %c0_i32 = arith.constant 0 : i32
    %c0_i32_0 = arith.constant 0 : i32
    %c0_i32_1 = arith.constant 0 : i32
    return %c0_i32, %c0_i32_0 : i32, i32
  }
  func.func @transform_2(%arg0: i32) -> (i32, i32) {
    %c0_i32 = arith.constant 0 : i32
    %c0_i32_0 = arith.constant 0 : i32
    %c0_i32_1 = arith.constant 0 : i32
    return %c0_i32, %c0_i32_0 : i32, i32
  }
  func.func @transform_3(%arg0: i32) -> (i32, i32) {
    %c0_i32 = arith.constant 0 : i32
    %c0_i32_0 = arith.constant 0 : i32
    %c0_i32_1 = arith.constant 0 : i32
    return %c0_i32, %c0_i32_0 : i32, i32
  }
  func.func @transform_4(%arg0: i32) -> (i32, i32) {
    %c0_i32 = arith.constant 0 : i32
    %c0_i32_0 = arith.constant 0 : i32
    %c0_i32_1 = arith.constant 0 : i32
    return %c0_i32, %c0_i32_0 : i32, i32
  }
  func.func @transform_5(%arg0: i32) -> (i32, i32, i32, i32) {
    %c0_i32 = arith.constant 0 : i32
    %c0_i32_0 = arith.constant 0 : i32
    %c0_i32_1 = arith.constant 0 : i32
    %c0_i32_2 = arith.constant 0 : i32
    %c0_i32_3 = arith.constant 0 : i32
    return %c0_i32, %c0_i32_0, %c0_i32_1, %c0_i32_2 : i32, i32, i32, i32
  }
  func.func @transform_6(%arg0: i32) -> (i32, i32, i32, i32) {
    %c0_i32 = arith.constant 0 : i32
    %c0_i32_0 = arith.constant 0 : i32
    %c0_i32_1 = arith.constant 0 : i32
    %c0_i32_2 = arith.constant 0 : i32
    %c0_i32_3 = arith.constant 0 : i32
    return %c0_i32, %c0_i32_0, %c0_i32_1, %c0_i32_2 : i32, i32, i32, i32
  }
  func.func @transform_7(%arg0: i32) -> (i32, i32, i32, i32) {
    %c0_i32 = arith.constant 0 : i32
    %c0_i32_0 = arith.constant 0 : i32
    %c0_i32_1 = arith.constant 0 : i32
    %c0_i32_2 = arith.constant 0 : i32
    %c0_i32_3 = arith.constant 0 : i32
    return %c0_i32, %c0_i32_0, %c0_i32_1, %c0_i32_2 : i32, i32, i32, i32
  }
}

</mosaic_0001>

<llo_original>
// kernel: encoder_block.1
$region0: #{encoder_block.1}
  #allocation0 [shape = 'u32[]', space=smem, size = 0x4, offset = 0x4, fixed_abs, tag = 'smem constant byte address 0x4 - core index']
  #allocation1 [shape = 'u32[144,128]{1,0:T(1,128)}', space=vmem, size = 0x12000, scoped, tag = 'internal scratch']
  %s0 = inlined_call_operand.vmem [shape: f32[8,8,8,4], index: 0, kind: input, shape index: {}]
  %s1 = inlined_call_operand.vmem [shape: f32[36,8], index: 1, kind: input, shape index: {}]
  %s2 = inlined_call_operand.vmem [shape: f32[1,8], index: 2, kind: input, shape index: {}]
  %s3 = inlined_call_operand.vmem [shape: f32[1,8], index: 3, kind: input, shape index: {}]
  %s4 = inlined_call_operand.vmem [shape: f32[1,8], index: 4, kind: input, shape index: {}]
  %s5 = inlined_call_operand.vmem [shape: s32[2,7,7,1], index: 5, kind: input, shape index: {}]
  %s6 = inlined_call_operand.vmem [shape: f32[2,7,7,8], index: 6, kind: output, shape index: {0}]
  %s7 = inlined_call_operand.vmem [shape: s32[2,7,7,8], index: 7, kind: output, shape index: {1}]
  %8 = xla_tuple %s6, %s7
  %s9 = sld [smem:[#allocation0]]
  $region42: #{encoder_block.1} parent=0
    _
  %s11 = ssub.s32 1, %s9
  %s12 = scalar_select 0, %s11, %s9
  // Predicated region
  $region2: #{encoder_block.1} parent=0 // pred_check
    _
  $region3: #{encoder_block.1} parent=0 // pred_check_branch
    %14 = sbr.rel (0) target = $region5
  $region4: #{encoder_block.1} parent=0 // pred_region
    _
  $region5: #{encoder_block.1} parent=0 // pred_fallthru
    _
  // Predicated region
  $region6: #{encoder_block.1} parent=0 // pred_check
    _
  $region7: #{encoder_block.1} parent=0 // pred_check_branch
    %16 = sbr.rel (0) target = $region9
  $region8: #{encoder_block.1} parent=0 // pred_region
    _
  $region9: #{encoder_block.1} parent=0 // pred_fallthru
    _
  // Predicated region
  $region10: #{encoder_block.1} parent=0 // pred_check
    _
  $region11: #{encoder_block.1} parent=0 // pred_check_branch
    %18 = sbr.rel (0) target = $region13
  $region12: #{encoder_block.1} parent=0 // pred_region
    _
  $region13: #{encoder_block.1} parent=0 // pred_fallthru
    _
  // Predicated region
  $region14: #{encoder_block.1} parent=0 // pred_check
    _
  $region15: #{encoder_block.1} parent=0 // pred_check_branch
    %20 = sbr.rel (0) target = $region17
  $region16: #{encoder_block.1} parent=0 // pred_region
    _
  $region17: #{encoder_block.1} parent=0 // pred_fallthru
    _
  // Predicated region
  $region18: #{encoder_block.1} parent=0 // pred_check
    _
  $region19: #{encoder_block.1} parent=0 // pred_check_branch
    %22 = sbr.rel (0) target = $region21
  $region20: #{encoder_block.1} parent=0 // pred_region
    _
  $region21: #{encoder_block.1} parent=0 // pred_fallthru
    _
  // Predicated region
  $region22: #{encoder_block.1} parent=0 // pred_check
    _
  $region23: #{encoder_block.1} parent=0 // pred_check_branch
    %24 = sbr.rel (0) target = $region25
  $region24: #{encoder_block.1} parent=0 // pred_region
    _
  $region25: #{encoder_block.1} parent=0 // pred_fallthru
    _
  %v25 = vld [vmem:[%s1] sm:$0xff]
  %v26 = vld [vmem:[%s1 + $0x8] sm:$0xff]
  %v27 = vld [vmem:[%s1 + $0x10] sm:$0xff]
  %v28 = vld [vmem:[%s1 + $0x18] sm:$0xff]
  %v29 = vld [vmem:[%s1 + $0x20] sm:$0xf]
  %v30 = vld [vmem:[%s2] sm:$0x1]
  %v31 = vld [vmem:[%s5] sm:$0x7f]
  %v32 = vld [vmem:[%s5 + $0x8] sm:$0x7f]
  %v33 = vld [vmem:[%s5 + $0x10] sm:$0x7f]
  %v34 = vld [vmem:[%s5 + $0x18] sm:$0x7f]
  %v35 = vld [vmem:[%s5 + $0x20] sm:$0x7f]
  %v36 = vld [vmem:[%s5 + $0x28] sm:$0x7f]
  %v37 = vld [vmem:[%s5 + $0x30] sm:$0x7f]
  %v38 = vld [vmem:[%s5 + $0x38] sm:$0x7f]
  %v39 = vld [vmem:[%s5 + $0x40] sm:$0x7f]
  %v40 = vld [vmem:[%s5 + $0x48] sm:$0x7f]
  %v41 = vld [vmem:[%s5 + $0x50] sm:$0x7f]
  %v42 = vld [vmem:[%s5 + $0x58] sm:$0x7f]
  %v43 = vld [vmem:[%s5 + $0x60] sm:$0x7f]
  %v44 = vld [vmem:[%s5 + $0x68] sm:$0x7f]
  %v45 = vld [vmem:[%s0] sm:$0x7f]
  %v46 = vld [vmem:[%s0 + $0x8] sm:$0x7f]
  %v47 = vld [vmem:[%s0 + $0x10] sm:$0x7f]
  %v48 = vld [vmem:[%s0 + $0x18] sm:$0x7f]
  %v49 = vld [vmem:[%s0 + $0x20] sm:$0x7f]
  %v50 = vld [vmem:[%s0 + $0x28] sm:$0x7f]
  %v51 = vld [vmem:[%s0 + $0x30] sm:$0x7f]
  %v52 = vld [vmem:[%s0 + $0x40] sm:$0x7f]
  %v53 = vld [vmem:[%s0 + $0x48] sm:$0x7f]
  %v54 = vld [vmem:[%s0 + $0x50] sm:$0x7f]
  %v55 = vld [vmem:[%s0 + $0x58] sm:$0x7f]
  %v56 = vld [vmem:[%s0 + $0x60] sm:$0x7f]
  %v57 = vld [vmem:[%s0 + $0x68] sm:$0x7f]
  %v58 = vld [vmem:[%s0 + $0x70] sm:$0x7f]
  %60 = vset.pattern.permute.xlu0 0
  %61 = vperm.xlu0 %60, %v45
  %v62 = vpop.permute.xlu0 %61
  %65 = vset.pattern.permute.xlu0 0
  %66 = vperm.xlu0 %65, %v46
  %v67 = vpop.permute.xlu0 %66
  %70 = vset.pattern.permute.xlu0 0
  %71 = vperm.xlu0 %70, %v47
  %v72 = vpop.permute.xlu0 %71
  %75 = vset.pattern.permute.xlu0 0
  %76 = vperm.xlu0 %75, %v48
  %v77 = vpop.permute.xlu0 %76
  %80 = vset.pattern.permute.xlu0 0
  %81 = vperm.xlu0 %80, %v49
  %v82 = vpop.permute.xlu0 %81
  %85 = vset.pattern.permute.xlu0 0
  %86 = vperm.xlu0 %85, %v50
  %v87 = vpop.permute.xlu0 %86
  %90 = vset.pattern.permute.xlu0 0
  %91 = vperm.xlu0 %90, %v51
  %v92 = vpop.permute.xlu0 %91
  %95 = vset.pattern.permute.xlu0 0
  %96 = vperm.xlu0 %95, %v52
  %v97 = vpop.permute.xlu0 %96
  %100 = vset.pattern.permute.xlu0 0
  %101 = vperm.xlu0 %100, %v53
  %v102 = vpop.permute.xlu0 %101
  %105 = vset.pattern.permute.xlu0 0
  %106 = vperm.xlu0 %105, %v54
  %v107 = vpop.permute.xlu0 %106
  %110 = vset.pattern.permute.xlu0 0
  %111 = vperm.xlu0 %110, %v55
  %v112 = vpop.permute.xlu0 %111
  %115 = vset.pattern.permute.xlu0 0
  %116 = vperm.xlu0 %115, %v56
  %v117 = vpop.permute.xlu0 %116
  %120 = vset.pattern.permute.xlu0 0
  %121 = vperm.xlu0 %120, %v57
  %v122 = vpop.permute.xlu0 %121
  %125 = vset.pattern.permute.xlu0 0
  %126 = vperm.xlu0 %125, %v58
  %v127 = vpop.permute.xlu0 %126
  %v129 = vlaneseq
  %v130 = vshrl.u32 %v129, 7
  %v131 = vsub.s32 0, %v130
  %v132 = vrot.slane %v25, %v131
  %v133 = vmul.f32 %v62, %v132
  %v134 = vmul.f32 %v67, %v132
  %v135 = vmul.f32 %v72, %v132
  %v136 = vmul.f32 %v77, %v132
  %v137 = vmul.f32 %v82, %v132
  %v138 = vmul.f32 %v87, %v132
  %v139 = vmul.f32 %v92, %v132
  %v140 = vmul.f32 %v97, %v132
  %v141 = vmul.f32 %v102, %v132
  %v142 = vmul.f32 %v107, %v132
  %v143 = vmul.f32 %v112, %v132
  %v144 = vmul.f32 %v117, %v132
  %v145 = vmul.f32 %v122, %v132
  %v146 = vmul.f32 %v127, %v132
  %147 = vset.pattern.permute.xlu0 1
  %148 = vperm.xlu0 %147, %v45
  %v149 = vpop.permute.xlu0 %148
  %151 = vset.pattern.permute.xlu0 1
  %152 = vperm.xlu0 %151, %v46
  %v153 = vpop.permute.xlu0 %152
  %155 = vset.pattern.permute.xlu0 1
  %156 = vperm.xlu0 %155, %v47
  %v157 = vpop.permute.xlu0 %156
  %159 = vset.pattern.permute.xlu0 1
  %160 = vperm.xlu0 %159, %v48
  %v161 = vpop.permute.xlu0 %160
  %163 = vset.pattern.permute.xlu0 1
  %164 = vperm.xlu0 %163, %v49
  %v165 = vpop.permute.xlu0 %164
  %167 = vset.pattern.permute.xlu0 1
  %168 = vperm.xlu0 %167, %v50
  %v169 = vpop.permute.xlu0 %168
  %171 = vset.pattern.permute.xlu0 1
  %172 = vperm.xlu0 %171, %v51
  %v173 = vpop.permute.xlu0 %172
  %175 = vset.pattern.permute.xlu0 1
  %176 = vperm.xlu0 %175, %v52
  %v177 = vpop.permute.xlu0 %176
  %179 = vset.pattern.permute.xlu0 1
  %180 = vperm.xlu0 %179, %v53
  %v181 = vpop.permute.xlu0 %180
  %183 = vset.pattern.permute.xlu0 1
  %184 = vperm.xlu0 %183, %v54
  %v185 = vpop.permute.xlu0 %184
  %187 = vset.pattern.permute.xlu0 1
  %188 = vperm.xlu0 %187, %v55
  %v189 = vpop.permute.xlu0 %188
  %191 = vset.pattern.permute.xlu0 1
  %192 = vperm.xlu0 %191, %v56
  %v193 = vpop.permute.xlu0 %192
  %195 = vset.pattern.permute.xlu0 1
  %196 = vperm.xlu0 %195, %v57
  %v197 = vpop.permute.xlu0 %196
  %199 = vset.pattern.permute.xlu0 1
  %200 = vperm.xlu0 %199, %v58
  %v201 = vpop.permute.xlu0 %200
  %v203 = vlaneseq
  %v204 = vshrl.u32 %v203, 7
  %v205 = vsub.s32 1, %v204
  %v206 = vrot.slane %v25, %v205
  %v207 = vmul.f32 %v149, %v206
  %v208 = vmul.f32 %v153, %v206
  %v209 = vmul.f32 %v157, %v206
  %v210 = vmul.f32 %v161, %v206
  %v211 = vmul.f32 %v165, %v206
  %v212 = vmul.f32 %v169, %v206
  %v213 = vmul.f32 %v173, %v206
  %v214 = vmul.f32 %v177, %v206
  %v215 = vmul.f32 %v181, %v206
  %v216 = vmul.f32 %v185, %v206
  %v217 = vmul.f32 %v189, %v206
  %v218 = vmul.f32 %v193, %v206
  %v219 = vmul.f32 %v197, %v206
  %v220 = vmul.f32 %v201, %v206
  %v221 = vadd.f32 %v133, %v207
  %v222 = vadd.f32 %v134, %v208
  %v223 = vadd.f32 %v135, %v209
  %v224 = vadd.f32 %v136, %v210
  %v225 = vadd.f32 %v137, %v211
  %v226 = vadd.f32 %v138, %v212
  %v227 = vadd.f32 %v139, %v213
  %v228 = vadd.f32 %v140, %v214
  %v229 = vadd.f32 %v141, %v215
  %v230 = vadd.f32 %v142, %v216
  %v231 = vadd.f32 %v143, %v217
  %v232 = vadd.f32 %v144, %v218
  %v233 = vadd.f32 %v145, %v219
  %v234 = vadd.f32 %v146, %v220
  %235 = vset.pattern.permute.xlu0 2
  %236 = vperm.xlu0 %235, %v45
  %v237 = vpop.permute.xlu0 %236
  %239 = vset.pattern.permute.xlu0 2
  %240 = vperm.xlu0 %239, %v46
  %v241 = vpop.permute.xlu0 %240
  %243 = vset.pattern.permute.xlu0 2
  %244 = vperm.xlu0 %243, %v47
  %v245 = vpop.permute.xlu0 %244
  %247 = vset.pattern.permute.xlu0 2
  %248 = vperm.xlu0 %247, %v48
  %v249 = vpop.permute.xlu0 %248
  %251 = vset.pattern.permute.xlu0 2
  %252 = vperm.xlu0 %251, %v49
  %v253 = vpop.permute.xlu0 %252
  %255 = vset.pattern.permute.xlu0 2
  %256 = vperm.xlu0 %255, %v50
  %v257 = vpop.permute.xlu0 %256
  %259 = vset.pattern.permute.xlu0 2
  %260 = vperm.xlu0 %259, %v51
  %v261 = vpop.permute.xlu0 %260
  %263 = vset.pattern.permute.xlu0 2
  %264 = vperm.xlu0 %263, %v52
  %v265 = vpop.permute.xlu0 %264
  %267 = vset.pattern.permute.xlu0 2
  %268 = vperm.xlu0 %267, %v53
  %v269 = vpop.permute.xlu0 %268
  %271 = vset.pattern.permute.xlu0 2
  %272 = vperm.xlu0 %271, %v54
  %v273 = vpop.permute.xlu0 %272
  %275 = vset.pattern.permute.xlu0 2
  %276 = vperm.xlu0 %275, %v55
  %v277 = vpop.permute.xlu0 %276
  %279 = vset.pattern.permute.xlu0 2
  %280 = vperm.xlu0 %279, %v56
  %v281 = vpop.permute.xlu0 %280
  %283 = vset.pattern.permute.xlu0 2
  %284 = vperm.xlu0 %283, %v57
  %v285 = vpop.permute.xlu0 %284
  %287 = vset.pattern.permute.xlu0 2
  %288 = vperm.xlu0 %287, %v58
  %v289 = vpop.permute.xlu0 %288
  %v291 = vlaneseq
  %v292 = vshrl.u32 %v291, 7
  %v293 = vsub.s32 2, %v292
  %v294 = vrot.slane %v25, %v293
  %v295 = vmul.f32 %v237, %v294
  %v296 = vmul.f32 %v241, %v294
  %v297 = vmul.f32 %v245, %v294
  %v298 = vmul.f32 %v249, %v294
  %v299 = vmul.f32 %v253, %v294
  %v300 = vmul.f32 %v257, %v294
  %v301 = vmul.f32 %v261, %v294
  %v302 = vmul.f32 %v265, %v294
  %v303 = vmul.f32 %v269, %v294
  %v304 = vmul.f32 %v273, %v294
  %v305 = vmul.f32 %v277, %v294
  %v306 = vmul.f32 %v281, %v294
  %v307 = vmul.f32 %v285, %v294
  %v308 = vmul.f32 %v289, %v294
  %v309 = vadd.f32 %v221, %v295
  %v310 = vadd.f32 %v222, %v296
  %v311 = vadd.f32 %v223, %v297
  %v312 = vadd.f32 %v224, %v298
  %v313 = vadd.f32 %v225, %v299
  %v314 = vadd.f32 %v226, %v300
  %v315 = vadd.f32 %v227, %v301
  %v316 = vadd.f32 %v228, %v302
  %v317 = vadd.f32 %v229, %v303
  %v318 = vadd.f32 %v230, %v304
  %v319 = vadd.f32 %v231, %v305
  %v320 = vadd.f32 %v232, %v306
  %v321 = vadd.f32 %v233, %v307
  %v322 = vadd.f32 %v234, %v308
  %323 = vset.pattern.permute.xlu0 3
  %324 = vperm.xlu0 %323, %v45
  %v325 = vpop.permute.xlu0 %324
  %327 = vset.pattern.permute.xlu0 3
  %328 = vperm.xlu0 %327, %v46
  %v329 = vpop.permute.xlu0 %328
  %331 = vset.pattern.permute.xlu0 3
  %332 = vperm.xlu0 %331, %v47
  %v333 = vpop.permute.xlu0 %332
  %335 = vset.pattern.permute.xlu0 3
  %336 = vperm.xlu0 %335, %v48
  %v337 = vpop.permute.xlu0 %336
  %339 = vset.pattern.permute.xlu0 3
  %340 = vperm.xlu0 %339, %v49
  %v341 = vpop.permute.xlu0 %340
  %343 = vset.pattern.permute.xlu0 3
  %344 = vperm.xlu0 %343, %v50
  %v345 = vpop.permute.xlu0 %344
  %347 = vset.pattern.permute.xlu0 3
  %348 = vperm.xlu0 %347, %v51
  %v349 = vpop.permute.xlu0 %348
  %351 = vset.pattern.permute.xlu0 3
  %352 = vperm.xlu0 %351, %v52
  %v353 = vpop.permute.xlu0 %352
  %355 = vset.pattern.permute.xlu0 3
  %356 = vperm.xlu0 %355, %v53
  %v357 = vpop.permute.xlu0 %356
  %359 = vset.pattern.permute.xlu0 3
  %360 = vperm.xlu0 %359, %v54
  %v361 = vpop.permute.xlu0 %360
  %363 = vset.pattern.permute.xlu0 3
  %364 = vperm.xlu0 %363, %v55
  %v365 = vpop.permute.xlu0 %364
  %367 = vset.pattern.permute.xlu0 3
  %368 = vperm.xlu0 %367, %v56
  %v369 = vpop.permute.xlu0 %368
  %371 = vset.pattern.permute.xlu0 3
  %372 = vperm.xlu0 %371, %v57
  %v373 = vpop.permute.xlu0 %372
  %375 = vset.pattern.permute.xlu0 3
  %376 = vperm.xlu0 %375, %v58
  %v377 = vpop.permute.xlu0 %376
  %v379 = vlaneseq
  %v380 = vshrl.u32 %v379, 7
  %v381 = vsub.s32 3, %v380
  %v382 = vrot.slane %v25, %v381
  %v383 = vmul.f32 %v325, %v382
  %v384 = vmul.f32 %v329, %v382
  %v385 = vmul.f32 %v333, %v382
  %v386 = vmul.f32 %v337, %v382
  %v387 = vmul.f32 %v341, %v382
  %v388 = vmul.f32 %v345, %v382
  %v389 = vmul.f32 %v349, %v382
  %v390 = vmul.f32 %v353, %v382
  %v391 = vmul.f32 %v357, %v382
  %v392 = vmul.f32 %v361, %v382
  %v393 = vmul.f32 %v365, %v382
  %v394 = vmul.f32 %v369, %v382
  %v395 = vmul.f32 %v373, %v382
  %v396 = vmul.f32 %v377, %v382
  %v397 = vadd.f32 %v309, %v383
  %v398 = vadd.f32 %v310, %v384
  %v399 = vadd.f32 %v311, %v385
  %v400 = vadd.f32 %v312, %v386
  %v401 = vadd.f32 %v313, %v387
  %v402 = vadd.f32 %v314, %v388
  %v403 = vadd.f32 %v315, %v389
  %v404 = vadd.f32 %v316, %v390
  %v405 = vadd.f32 %v317, %v391
  %v406 = vadd.f32 %v318, %v392
  %v407 = vadd.f32 %v319, %v393
  %v408 = vadd.f32 %v320, %v394
  %v409 = vadd.f32 %v321, %v395
  %v410 = vadd.f32 %v322, %v396
  %s411 = scalar_lea.vmem %s0, 128
  %v412 = vld [vmem:[%s411] sm:$0x7f]
  %v413 = vld [vmem:[%s411 + $0x8] sm:$0x7f]
  %v414 = vld [vmem:[%s411 + $0x10] sm:$0x7f]
  %v415 = vld [vmem:[%s411 + $0x18] sm:$0x7f]
  %v416 = vld [vmem:[%s411 + $0x20] sm:$0x7f]
  %v417 = vld [vmem:[%s411 + $0x28] sm:$0x7f]
  %v418 = vld [vmem:[%s411 + $0x30] sm:$0x7f]
  %v419 = vld [vmem:[%s411 + $0x40] sm:$0x7f]
  %v420 = vld [vmem:[%s411 + $0x48] sm:$0x7f]
  %v421 = vld [vmem:[%s411 + $0x50] sm:$0x7f]
  %v422 = vld [vmem:[%s411 + $0x58] sm:$0x7f]
  %v423 = vld [vmem:[%s411 + $0x60] sm:$0x7f]
  %v424 = vld [vmem:[%s411 + $0x68] sm:$0x7f]
  %v425 = vld [vmem:[%s411 + $0x70] sm:$0x7f]
  %427 = vset.pattern.permute.xlu0 0
  %428 = vperm.xlu0 %427, %v412
  %v429 = vpop.permute.xlu0 %428
  %432 = vset.pattern.permute.xlu0 0
  %433 = vperm.xlu0 %432, %v413
  %v434 = vpop.permute.xlu0 %433
  %437 = vset.pattern.permute.xlu0 0
  %438 = vperm.xlu0 %437, %v414
  %v439 = vpop.permute.xlu0 %438
  %442 = vset.pattern.permute.xlu0 0
  %443 = vperm.xlu0 %442, %v415
  %v444 = vpop.permute.xlu0 %443
  %447 = vset.pattern.permute.xlu0 0
  %448 = vperm.xlu0 %447, %v416
  %v449 = vpop.permute.xlu0 %448
  %452 = vset.pattern.permute.xlu0 0
  %453 = vperm.xlu0 %452, %v417
  %v454 = vpop.permute.xlu0 %453
  %457 = vset.pattern.permute.xlu0 0
  %458 = vperm.xlu0 %457, %v418
  %v459 = vpop.permute.xlu0 %458
  %462 = vset.pattern.permute.xlu0 0
  %463 = vperm.xlu0 %462, %v419
  %v464 = vpop.permute.xlu0 %463
  %467 = vset.pattern.permute.xlu0 0
  %468 = vperm.xlu0 %467, %v420
  %v469 = vpop.permute.xlu0 %468
  %472 = vset.pattern.permute.xlu0 0
  %473 = vperm.xlu0 %472, %v421
  %v474 = vpop.permute.xlu0 %473
  %477 = vset.pattern.permute.xlu0 0
  %478 = vperm.xlu0 %477, %v422
  %v479 = vpop.permute.xlu0 %478
  %482 = vset.pattern.permute.xlu0 0
  %483 = vperm.xlu0 %482, %v423
  %v484 = vpop.permute.xlu0 %483
  %487 = vset.pattern.permute.xlu0 0
  %488 = vperm.xlu0 %487, %v424
  %v489 = vpop.permute.xlu0 %488
  %492 = vset.pattern.permute.xlu0 0
  %493 = vperm.xlu0 %492, %v425
  %v494 = vpop.permute.xlu0 %493
  %v496 = vlaneseq
  %v497 = vshrl.u32 %v496, 7
  %v498 = vsub.s32 4, %v497
  %v499 = vrot.slane %v25, %v498
  %v500 = vmul.f32 %v429, %v499
  %v501 = vmul.f32 %v434, %v499
  %v502 = vmul.f32 %v439, %v499
  %v503 = vmul.f32 %v444, %v499
  %v504 = vmul.f32 %v449, %v499
  %v505 = vmul.f32 %v454, %v499
  %v506 = vmul.f32 %v459, %v499
  %v507 = vmul.f32 %v464, %v499
  %v508 = vmul.f32 %v469, %v499
  %v509 = vmul.f32 %v474, %v499
  %v510 = vmul.f32 %v479, %v499
  %v511 = vmul.f32 %v484, %v499
  %v512 = vmul.f32 %v489, %v499
  %v513 = vmul.f32 %v494, %v499
  %v514 = vadd.f32 %v397, %v500
  %v515 = vadd.f32 %v398, %v501
  %v516 = vadd.f32 %v399, %v502
  %v517 = vadd.f32 %v400, %v503
  %v518 = vadd.f32 %v401, %v504
  %v519 = vadd.f32 %v402, %v505
  %v520 = vadd.f32 %v403, %v506
  %v521 = vadd.f32 %v404, %v507
  %v522 = vadd.f32 %v405, %v508
  %v523 = vadd.f32 %v406, %v509
  %v524 = vadd.f32 %v407, %v510
  %v525 = vadd.f32 %v408, %v511
  %v526 = vadd.f32 %v409, %v512
  %v527 = vadd.f32 %v410, %v513
  %528 = vset.pattern.permute.xlu0 1
  %529 = vperm.xlu0 %528, %v412
  %v530 = vpop.permute.xlu0 %529
  %532 = vset.pattern.permute.xlu0 1
  %533 = vperm.xlu0 %532, %v413
  %v534 = vpop.permute.xlu0 %533
  %536 = vset.pattern.permute.xlu0 1
  %537 = vperm.xlu0 %536, %v414
  %v538 = vpop.permute.xlu0 %537
  %540 = vset.pattern.permute.xlu0 1
  %541 = vperm.xlu0 %540, %v415
  %v542 = vpop.permute.xlu0 %541
  %544 = vset.pattern.permute.xlu0 1
  %545 = vperm.xlu0 %544, %v416
  %v546 = vpop.permute.xlu0 %545
  %548 = vset.pattern.permute.xlu0 1
  %549 = vperm.xlu0 %548, %v417
  %v550 = vpop.permute.xlu0 %549
  %552 = vset.pattern.permute.xlu0 1
  %553 = vperm.xlu0 %552, %v418
  %v554 = vpop.permute.xlu0 %553
  %556 = vset.pattern.permute.xlu0 1
  %557 = vperm.xlu0 %556, %v419
  %v558 = vpop.permute.xlu0 %557
  %560 = vset.pattern.permute.xlu0 1
  %561 = vperm.xlu0 %560, %v420
  %v562 = vpop.permute.xlu0 %561
  %564 = vset.pattern.permute.xlu0 1
  %565 = vperm.xlu0 %564, %v421
  %v566 = vpop.permute.xlu0 %565
  %568 = vset.pattern.permute.xlu0 1
  %569 = vperm.xlu0 %568, %v422
  %v570 = vpop.permute.xlu0 %569
  %572 = vset.pattern.permute.xlu0 1
  %573 = vperm.xlu0 %572, %v423
  %v574 = vpop.permute.xlu0 %573
  %576 = vset.pattern.permute.xlu0 1
  %577 = vperm.xlu0 %576, %v424
  %v578 = vpop.permute.xlu0 %577
  %580 = vset.pattern.permute.xlu0 1
  %581 = vperm.xlu0 %580, %v425
  %v582 = vpop.permute.xlu0 %581
  %v584 = vlaneseq
  %v585 = vshrl.u32 %v584, 7
  %v586 = vsub.s32 5, %v585
  %v587 = vrot.slane %v25, %v586
  %v588 = vmul.f32 %v530, %v587
  %v589 = vmul.f32 %v534, %v587
  %v590 = vmul.f32 %v538, %v587
  %v591 = vmul.f32 %v542, %v587
  %v592 = vmul.f32 %v546, %v587
  %v593 = vmul.f32 %v550, %v587
  %v594 = vmul.f32 %v554, %v587
  %v595 = vmul.f32 %v558, %v587
  %v596 = vmul.f32 %v562, %v587
  %v597 = vmul.f32 %v566, %v587
  %v598 = vmul.f32 %v570, %v587
  %v599 = vmul.f32 %v574, %v587
  %v600 = vmul.f32 %v578, %v587
  %v601 = vmul.f32 %v582, %v587
  %v602 = vadd.f32 %v514, %v588
  %v603 = vadd.f32 %v515, %v589
  %v604 = vadd.f32 %v516, %v590
  %v605 = vadd.f32 %v517, %v591
  %v606 = vadd.f32 %v518, %v592
  %v607 = vadd.f32 %v519, %v593
  %v608 = vadd.f32 %v520, %v594
  %v609 = vadd.f32 %v521, %v595
  %v610 = vadd.f32 %v522, %v596
  %v611 = vadd.f32 %v523, %v597
  %v612 = vadd.f32 %v524, %v598
  %v613 = vadd.f32 %v525, %v599
  %v614 = vadd.f32 %v526, %v600
  %v615 = vadd.f32 %v527, %v601
  %616 = vset.pattern.permute.xlu0 2
  %617 = vperm.xlu0 %616, %v412
  %v618 = vpop.permute.xlu0 %617
  %620 = vset.pattern.permute.xlu0 2
  %621 = vperm.xlu0 %620, %v413
  %v622 = vpop.permute.xlu0 %621
  %624 = vset.pattern.permute.xlu0 2
  %625 = vperm.xlu0 %624, %v414
  %v626 = vpop.permute.xlu0 %625
  %628 = vset.pattern.permute.xlu0 2
  %629 = vperm.xlu0 %628, %v415
  %v630 = vpop.permute.xlu0 %629
  %632 = vset.pattern.permute.xlu0 2
  %633 = vperm.xlu0 %632, %v416
  %v634 = vpop.permute.xlu0 %633
  %636 = vset.pattern.permute.xlu0 2
  %637 = vperm.xlu0 %636, %v417
  %v638 = vpop.permute.xlu0 %637
  %640 = vset.pattern.permute.xlu0 2
  %641 = vperm.xlu0 %640, %v418
  %v642 = vpop.permute.xlu0 %641
  %644 = vset.pattern.permute.xlu0 2
  %645 = vperm.xlu0 %644, %v419
  %v646 = vpop.permute.xlu0 %645
  %648 = vset.pattern.permute.xlu0 2
  %649 = vperm.xlu0 %648, %v420
  %v650 = vpop.permute.xlu0 %649
  %652 = vset.pattern.permute.xlu0 2
  %653 = vperm.xlu0 %652, %v421
  %v654 = vpop.permute.xlu0 %653
  %656 = vset.pattern.permute.xlu0 2
  %657 = vperm.xlu0 %656, %v422
  %v658 = vpop.permute.xlu0 %657
  %660 = vset.pattern.permute.xlu0 2
  %661 = vperm.xlu0 %660, %v423
  %v662 = vpop.permute.xlu0 %661
  %664 = vset.pattern.permute.xlu0 2
  %665 = vperm.xlu0 %664, %v424
  %v666 = vpop.permute.xlu0 %665
  %668 = vset.pattern.permute.xlu0 2
  %669 = vperm.xlu0 %668, %v425
  %v670 = vpop.permute.xlu0 %669
  %v672 = vlaneseq
  %v673 = vshrl.u32 %v672, 7
  %v674 = vsub.s32 6, %v673
  %v675 = vrot.slane %v25, %v674
  %v676 = vmul.f32 %v618, %v675
  %v677 = vmul.f32 %v622, %v675
  %v678 = vmul.f32 %v626, %v675
  %v679 = vmul.f32 %v630, %v675
  %v680 = vmul.f32 %v634, %v675
  %v681 = vmul.f32 %v638, %v675
  %v682 = vmul.f32 %v642, %v675
  %v683 = vmul.f32 %v646, %v675
  %v684 = vmul.f32 %v650, %v675
  %v685 = vmul.f32 %v654, %v675
  %v686 = vmul.f32 %v658, %v675
  %v687 = vmul.f32 %v662, %v675
  %v688 = vmul.f32 %v666, %v675
  %v689 = vmul.f32 %v670, %v675
  %v690 = vadd.f32 %v602, %v676
  %v691 = vadd.f32 %v603, %v677
  %v692 = vadd.f32 %v604, %v678
  %v693 = vadd.f32 %v605, %v679
  %v694 = vadd.f32 %v606, %v680
  %v695 = vadd.f32 %v607, %v681
  %v696 = vadd.f32 %v608, %v682
  %v697 = vadd.f32 %v609, %v683
  %v698 = vadd.f32 %v610, %v684
  %v699 = vadd.f32 %v611, %v685
  %v700 = vadd.f32 %v612, %v686
  %v701 = vadd.f32 %v613, %v687
  %v702 = vadd.f32 %v614, %v688
  %v703 = vadd.f32 %v615, %v689
  %704 = vset.pattern.permute.xlu0 3
  %705 = vperm.xlu0 %704, %v412
  %v706 = vpop.permute.xlu0 %705
  %708 = vset.pattern.permute.xlu0 3
  %709 = vperm.xlu0 %708, %v413
  %v710 = vpop.permute.xlu0 %709
  %712 = vset.pattern.permute.xlu0 3
  %713 = vperm.xlu0 %712, %v414
  %v714 = vpop.permute.xlu0 %713
  %716 = vset.pattern.permute.xlu0 3
  %717 = vperm.xlu0 %716, %v415
  %v718 = vpop.permute.xlu0 %717
  %720 = vset.pattern.permute.xlu0 3
  %721 = vperm.xlu0 %720, %v416
  %v722 = vpop.permute.xlu0 %721
  %724 = vset.pattern.permute.xlu0 3
  %725 = vperm.xlu0 %724, %v417
  %v726 = vpop.permute.xlu0 %725
  %728 = vset.pattern.permute.xlu0 3
  %729 = vperm.xlu0 %728, %v418
  %v730 = vpop.permute.xlu0 %729
  %732 = vset.pattern.permute.xlu0 3
  %733 = vperm.xlu0 %732, %v419
  %v734 = vpop.permute.xlu0 %733
  %736 = vset.pattern.permute.xlu0 3
  %737 = vperm.xlu0 %736, %v420
  %v738 = vpop.permute.xlu0 %737
  %740 = vset.pattern.permute.xlu0 3
  %741 = vperm.xlu0 %740, %v421
  %v742 = vpop.permute.xlu0 %741
  %744 = vset.pattern.permute.xlu0 3
  %745 = vperm.xlu0 %744, %v422
  %v746 = vpop.permute.xlu0 %745
  %748 = vset.pattern.permute.xlu0 3
  %749 = vperm.xlu0 %748, %v423
  %v750 = vpop.permute.xlu0 %749
  %752 = vset.pattern.permute.xlu0 3
  %753 = vperm.xlu0 %752, %v424
  %v754 = vpop.permute.xlu0 %753
  %756 = vset.pattern.permute.xlu0 3
  %757 = vperm.xlu0 %756, %v425
  %v758 = vpop.permute.xlu0 %757
  %v760 = vlaneseq
  %v761 = vshrl.u32 %v760, 7
  %v762 = vsub.s32 7, %v761
  %v763 = vrot.slane %v25, %v762
  %v764 = vmul.f32 %v706, %v763
  %v765 = vmul.f32 %v710, %v763
  %v766 = vmul.f32 %v714, %v763
  %v767 = vmul.f32 %v718, %v763
  %v768 = vmul.f32 %v722, %v763
  %v769 = vmul.f32 %v726, %v763
  %v770 = vmul.f32 %v730, %v763
  %v771 = vmul.f32 %v734, %v763
  %v772 = vmul.f32 %v738, %v763
  %v773 = vmul.f32 %v742, %v763
  %v774 = vmul.f32 %v746, %v763
  %v775 = vmul.f32 %v750, %v763
  %v776 = vmul.f32 %v754, %v763
  %v777 = vmul.f32 %v758, %v763
  %v778 = vadd.f32 %v690, %v764
  %v779 = vadd.f32 %v691, %v765
  %v780 = vadd.f32 %v692, %v766
  %v781 = vadd.f32 %v693, %v767
  %v782 = vadd.f32 %v694, %v768
  %v783 = vadd.f32 %v695, %v769
  %v784 = vadd.f32 %v696, %v770
  %v785 = vadd.f32 %v697, %v771
  %v786 = vadd.f32 %v698, %v772
  %v787 = vadd.f32 %v699, %v773
  %v788 = vadd.f32 %v700, %v774
  %v789 = vadd.f32 %v701, %v775
  %v790 = vadd.f32 %v702, %v776
  %v791 = vadd.f32 %v703, %v777
  %v792 = vld [vmem:[%s0 + $0x1] sm:$0x7f]
  %v793 = vld [vmem:[%s0 + $0x9] sm:$0x7f]
  %v794 = vld [vmem:[%s0 + $0x11] sm:$0x7f]
  %v795 = vld [vmem:[%s0 + $0x19] sm:$0x7f]
  %v796 = vld [vmem:[%s0 + $0x21] sm:$0x7f]
  %v797 = vld [vmem:[%s0 + $0x29] sm:$0x7f]
  %v798 = vld [vmem:[%s0 + $0x31] sm:$0x7f]
  %v799 = vld [vmem:[%s0 + $0x41] sm:$0x7f]
  %v800 = vld [vmem:[%s0 + $0x49] sm:$0x7f]
  %v801 = vld [vmem:[%s0 + $0x51] sm:$0x7f]
  %v802 = vld [vmem:[%s0 + $0x59] sm:$0x7f]
  %v803 = vld [vmem:[%s0 + $0x61] sm:$0x7f]
  %v804 = vld [vmem:[%s0 + $0x69] sm:$0x7f]
  %v805 = vld [vmem:[%s0 + $0x71] sm:$0x7f]
  %807 = vset.pattern.permute.xlu0 0
  %808 = vperm.xlu0 %807, %v792
  %v809 = vpop.permute.xlu0 %808
  %812 = vset.pattern.permute.xlu0 0
  %813 = vperm.xlu0 %812, %v793
  %v814 = vpop.permute.xlu0 %813
  %817 = vset.pattern.permute.xlu0 0
  %818 = vperm.xlu0 %817, %v794
  %v819 = vpop.permute.xlu0 %818
  %822 = vset.pattern.permute.xlu0 0
  %823 = vperm.xlu0 %822, %v795
  %v824 = vpop.permute.xlu0 %823
  %827 = vset.pattern.permute.xlu0 0
  %828 = vperm.xlu0 %827, %v796
  %v829 = vpop.permute.xlu0 %828
  %832 = vset.pattern.permute.xlu0 0
  %833 = vperm.xlu0 %832, %v797
  %v834 = vpop.permute.xlu0 %833
  %837 = vset.pattern.permute.xlu0 0
  %838 = vperm.xlu0 %837, %v798
  %v839 = vpop.permute.xlu0 %838
  %842 = vset.pattern.permute.xlu0 0
  %843 = vperm.xlu0 %842, %v799
  %v844 = vpop.permute.xlu0 %843
  %847 = vset.pattern.permute.xlu0 0
  %848 = vperm.xlu0 %847, %v800
  %v849 = vpop.permute.xlu0 %848
  %852 = vset.pattern.permute.xlu0 0
  %853 = vperm.xlu0 %852, %v801
  %v854 = vpop.permute.xlu0 %853
  %857 = vset.pattern.permute.xlu0 0
  %858 = vperm.xlu0 %857, %v802
  %v859 = vpop.permute.xlu0 %858
  %862 = vset.pattern.permute.xlu0 0
  %863 = vperm.xlu0 %862, %v803
  %v864 = vpop.permute.xlu0 %863
  %867 = vset.pattern.permute.xlu0 0
  %868 = vperm.xlu0 %867, %v804
  %v869 = vpop.permute.xlu0 %868
  %872 = vset.pattern.permute.xlu0 0
  %873 = vperm.xlu0 %872, %v805
  %v874 = vpop.permute.xlu0 %873
  %v876 = vlaneseq
  %v877 = vshrl.u32 %v876, 7
  %v878 = vsub.s32 0, %v877
  %v879 = vrot.slane %v26, %v878
  %v880 = vmul.f32 %v809, %v879
  %v881 = vmul.f32 %v814, %v879
  %v882 = vmul.f32 %v819, %v879
  %v883 = vmul.f32 %v824, %v879
  %v884 = vmul.f32 %v829, %v879
  %v885 = vmul.f32 %v834, %v879
  %v886 = vmul.f32 %v839, %v879
  %v887 = vmul.f32 %v844, %v879
  %v888 = vmul.f32 %v849, %v879
  %v889 = vmul.f32 %v854, %v879
  %v890 = vmul.f32 %v859, %v879
  %v891 = vmul.f32 %v864, %v879
  %v892 = vmul.f32 %v869, %v879
  %v893 = vmul.f32 %v874, %v879
  %v894 = vadd.f32 %v778, %v880
  %v895 = vadd.f32 %v779, %v881
  %v896 = vadd.f32 %v780, %v882
  %v897 = vadd.f32 %v781, %v883
  %v898 = vadd.f32 %v782, %v884
  %v899 = vadd.f32 %v783, %v885
  %v900 = vadd.f32 %v784, %v886
  %v901 = vadd.f32 %v785, %v887
  %v902 = vadd.f32 %v786, %v888
  %v903 = vadd.f32 %v787, %v889
  %v904 = vadd.f32 %v788, %v890
  %v905 = vadd.f32 %v789, %v891
  %v906 = vadd.f32 %v790, %v892
  %v907 = vadd.f32 %v791, %v893
  %908 = vset.pattern.permute.xlu0 1
  %909 = vperm.xlu0 %908, %v792
  %v910 = vpop.permute.xlu0 %909
  %912 = vset.pattern.permute.xlu0 1
  %913 = vperm.xlu0 %912, %v793
  %v914 = vpop.permute.xlu0 %913
  %916 = vset.pattern.permute.xlu0 1
  %917 = vperm.xlu0 %916, %v794
  %v918 = vpop.permute.xlu0 %917
  %920 = vset.pattern.permute.xlu0 1
  %921 = vperm.xlu0 %920, %v795
  %v922 = vpop.permute.xlu0 %921
  %924 = vset.pattern.permute.xlu0 1
  %925 = vperm.xlu0 %924, %v796
  %v926 = vpop.permute.xlu0 %925
  %928 = vset.pattern.permute.xlu0 1
  %929 = vperm.xlu0 %928, %v797
  %v930 = vpop.permute.xlu0 %929
  %932 = vset.pattern.permute.xlu0 1
  %933 = vperm.xlu0 %932, %v798
  %v934 = vpop.permute.xlu0 %933
  %936 = vset.pattern.permute.xlu0 1
  %937 = vperm.xlu0 %936, %v799
  %v938 = vpop.permute.xlu0 %937
  %940 = vset.pattern.permute.xlu0 1
  %941 = vperm.xlu0 %940, %v800
  %v942 = vpop.permute.xlu0 %941
  %944 = vset.pattern.permute.xlu0 1
  %945 = vperm.xlu0 %944, %v801
  %v946 = vpop.permute.xlu0 %945
  %948 = vset.pattern.permute.xlu0 1
  %949 = vperm.xlu0 %948, %v802
  %v950 = vpop.permute.xlu0 %949
  %952 = vset.pattern.permute.xlu0 1
  %953 = vperm.xlu0 %952, %v803
  %v954 = vpop.permute.xlu0 %953
  %956 = vset.pattern.permute.xlu0 1
  %957 = vperm.xlu0 %956, %v804
  %v958 = vpop.permute.xlu0 %957
  %960 = vset.pattern.permute.xlu0 1
  %961 = vperm.xlu0 %960, %v805
  %v962 = vpop.permute.xlu0 %961
  %v964 = vlaneseq
  %v965 = vshrl.u32 %v964, 7
  %v966 = vsub.s32 1, %v965
  %v967 = vrot.slane %v26, %v966
  %v968 = vmul.f32 %v910, %v967
  %v969 = vmul.f32 %v914, %v967
  %v970 = vmul.f32 %v918, %v967
  %v971 = vmul.f32 %v922, %v967
  %v972 = vmul.f32 %v926, %v967
  %v973 = vmul.f32 %v930, %v967
  %v974 = vmul.f32 %v934, %v967
  %v975 = vmul.f32 %v938, %v967
  %v976 = vmul.f32 %v942, %v967
  %v977 = vmul.f32 %v946, %v967
  %v978 = vmul.f32 %v950, %v967
  %v979 = vmul.f32 %v954, %v967
  %v980 = vmul.f32 %v958, %v967
  %v981 = vmul.f32 %v962, %v967
  %v982 = vadd.f32 %v894, %v968
  %v983 = vadd.f32 %v895, %v969
  %v984 = vadd.f32 %v896, %v970
  %v985 = vadd.f32 %v897, %v971
  %v986 = vadd.f32 %v898, %v972
  %v987 = vadd.f32 %v899, %v973
  %v988 = vadd.f32 %v900, %v974
  %v989 = vadd.f32 %v901, %v975
  %v990 = vadd.f32 %v902, %v976
  %v991 = vadd.f32 %v903, %v977
  %v992 = vadd.f32 %v904, %v978
  %v993 = vadd.f32 %v905, %v979
  %v994 = vadd.f32 %v906, %v980
  %v995 = vadd.f32 %v907, %v981
  %996 = vset.pattern.permute.xlu0 2
  %997 = vperm.xlu0 %996, %v792
  %v998 = vpop.permute.xlu0 %997
  %1000 = vset.pattern.permute.xlu0 2
  %1001 = vperm.xlu0 %1000, %v793
  %v1002 = vpop.permute.xlu0 %1001
  %1004 = vset.pattern.permute.xlu0 2
  %1005 = vperm.xlu0 %1004, %v794
  %v1006 = vpop.permute.xlu0 %1005
  %1008 = vset.pattern.permute.xlu0 2
  %1009 = vperm.xlu0 %1008, %v795
  %v1010 = vpop.permute.xlu0 %1009
  %1012 = vset.pattern.permute.xlu0 2
  %1013 = vperm.xlu0 %1012, %v796
  %v1014 = vpop.permute.xlu0 %1013
  %1016 = vset.pattern.permute.xlu0 2
  %1017 = vperm.xlu0 %1016, %v797
  %v1018 = vpop.permute.xlu0 %1017
  %1020 = vset.pattern.permute.xlu0 2
  %1021 = vperm.xlu0 %1020, %v798
  %v1022 = vpop.permute.xlu0 %1021
  %1024 = vset.pattern.permute.xlu0 2
  %1025 = vperm.xlu0 %1024, %v799
  %v1026 = vpop.permute.xlu0 %1025
  %1028 = vset.pattern.permute.xlu0 2
  %1029 = vperm.xlu0 %1028, %v800
  %v1030 = vpop.permute.xlu0 %1029
  %1032 = vset.pattern.permute.xlu0 2
  %1033 = vperm.xlu0 %1032, %v801
  %v1034 = vpop.permute.xlu0 %1033
  %1036 = vset.pattern.permute.xlu0 2
  %1037 = vperm.xlu0 %1036, %v802
  %v1038 = vpop.permute.xlu0 %1037
  %1040 = vset.pattern.permute.xlu0 2
  %1041 = vperm.xlu0 %1040, %v803
  %v1042 = vpop.permute.xlu0 %1041
  %1044 = vset.pattern.permute.xlu0 2
  %1045 = vperm.xlu0 %1044, %v804
  %v1046 = vpop.permute.xlu0 %1045
  %1048 = vset.pattern.permute.xlu0 2
  %1049 = vperm.xlu0 %1048, %v805
  %v1050 = vpop.permute.xlu0 %1049
  %v1052 = vlaneseq
  %v1053 = vshrl.u32 %v1052, 7
  %v1054 = vsub.s32 2, %v1053
  %v1055 = vrot.slane %v26, %v1054
  %v1056 = vmul.f32 %v998, %v1055
  %v1057 = vmul.f32 %v1002, %v1055
  %v1058 = vmul.f32 %v1006, %v1055
  %v1059 = vmul.f32 %v1010, %v1055
  %v1060 = vmul.f32 %v1014, %v1055
  %v1061 = vmul.f32 %v1018, %v1055
  %v1062 = vmul.f32 %v1022, %v1055
  %v1063 = vmul.f32 %v1026, %v1055
  %v1064 = vmul.f32 %v1030, %v1055
  %v1065 = vmul.f32 %v1034, %v1055
  %v1066 = vmul.f32 %v1038, %v1055
  %v1067 = vmul.f32 %v1042, %v1055
  %v1068 = vmul.f32 %v1046, %v1055
  %v1069 = vmul.f32 %v1050, %v1055
  %v1070 = vadd.f32 %v982, %v1056
  %v1071 = vadd.f32 %v983, %v1057
  %v1072 = vadd.f32 %v984, %v1058
  %v1073 = vadd.f32 %v985, %v1059
  %v1074 = vadd.f32 %v986, %v1060
  %v1075 = vadd.f32 %v987, %v1061
  %v1076 = vadd.f32 %v988, %v1062
  %v1077 = vadd.f32 %v989, %v1063
  %v1078 = vadd.f32 %v990, %v1064
  %v1079 = vadd.f32 %v991, %v1065
  %v1080 = vadd.f32 %v992, %v1066
  %v1081 = vadd.f32 %v993, %v1067
  %v1082 = vadd.f32 %v994, %v1068
  %v1083 = vadd.f32 %v995, %v1069
  %1084 = vset.pattern.permute.xlu0 3
  %1085 = vperm.xlu0 %1084, %v792
  %v1086 = vpop.permute.xlu0 %1085
  %1088 = vset.pattern.permute.xlu0 3
  %1089 = vperm.xlu0 %1088, %v793
  %v1090 = vpop.permute.xlu0 %1089
  %1092 = vset.pattern.permute.xlu0 3
  %1093 = vperm.xlu0 %1092, %v794
  %v1094 = vpop.permute.xlu0 %1093
  %1096 = vset.pattern.permute.xlu0 3
  %1097 = vperm.xlu0 %1096, %v795
  %v1098 = vpop.permute.xlu0 %1097
  %1100 = vset.pattern.permute.xlu0 3
  %1101 = vperm.xlu0 %1100, %v796
  %v1102 = vpop.permute.xlu0 %1101
  %1104 = vset.pattern.permute.xlu0 3
  %1105 = vperm.xlu0 %1104, %v797
  %v1106 = vpop.permute.xlu0 %1105
  %1108 = vset.pattern.permute.xlu0 3
  %1109 = vperm.xlu0 %1108, %v798
  %v1110 = vpop.permute.xlu0 %1109
  %1112 = vset.pattern.permute.xlu0 3
  %1113 = vperm.xlu0 %1112, %v799
  %v1114 = vpop.permute.xlu0 %1113
  %1116 = vset.pattern.permute.xlu0 3
  %1117 = vperm.xlu0 %1116, %v800
  %v1118 = vpop.permute.xlu0 %1117
  %1120 = vset.pattern.permute.xlu0 3
  %1121 = vperm.xlu0 %1120, %v801
  %v1122 = vpop.permute.xlu0 %1121
  %1124 = vset.pattern.permute.xlu0 3
  %1125 = vperm.xlu0 %1124, %v802
  %v1126 = vpop.permute.xlu0 %1125
  %1128 = vset.pattern.permute.xlu0 3
  %1129 = vperm.xlu0 %1128, %v803
  %v1130 = vpop.permute.xlu0 %1129
  %1132 = vset.pattern.permute.xlu0 3
  %1133 = vperm.xlu0 %1132, %v804
  %v1134 = vpop.permute.xlu0 %1133
  %1136 = vset.pattern.permute.xlu0 3
  %1137 = vperm.xlu0 %1136, %v805
  %v1138 = vpop.permute.xlu0 %1137
  %v1140 = vlaneseq
  %v1141 = vshrl.u32 %v1140, 7
  %v1142 = vsub.s32 3, %v1141
  %v1143 = vrot.slane %v26, %v1142
  %v1144 = vmul.f32 %v1086, %v1143
  %v1145 = vmul.f32 %v1090, %v1143
  %v1146 = vmul.f32 %v1094, %v1143
  %v1147 = vmul.f32 %v1098, %v1143
  %v1148 = vmul.f32 %v1102, %v1143
  %v1149 = vmul.f32 %v1106, %v1143
  %v1150 = vmul.f32 %v1110, %v1143
  %v1151 = vmul.f32 %v1114, %v1143
  %v1152 = vmul.f32 %v1118, %v1143
  %v1153 = vmul.f32 %v1122, %v1143
  %v1154 = vmul.f32 %v1126, %v1143
  %v1155 = vmul.f32 %v1130, %v1143
  %v1156 = vmul.f32 %v1134, %v1143
  %v1157 = vmul.f32 %v1138, %v1143
  %v1158 = vadd.f32 %v1070, %v1144
  %v1159 = vadd.f32 %v1071, %v1145
  %v1160 = vadd.f32 %v1072, %v1146
  %v1161 = vadd.f32 %v1073, %v1147
  %v1162 = vadd.f32 %v1074, %v1148
  %v1163 = vadd.f32 %v1075, %v1149
  %v1164 = vadd.f32 %v1076, %v1150
  %v1165 = vadd.f32 %v1077, %v1151
  %v1166 = vadd.f32 %v1078, %v1152
  %v1167 = vadd.f32 %v1079, %v1153
  %v1168 = vadd.f32 %v1080, %v1154
  %v1169 = vadd.f32 %v1081, %v1155
  %v1170 = vadd.f32 %v1082, %v1156
  %v1171 = vadd.f32 %v1083, %v1157
  %s1172 = scalar_lea.vmem %s0, 256
  %v1173 = vld [vmem:[%s1172] sm:$0x7f]
  %v1174 = vld [vmem:[%s1172 + $0x8] sm:$0x7f]
  %v1175 = vld [vmem:[%s1172 + $0x10] sm:$0x7f]
  %v1176 = vld [vmem:[%s1172 + $0x18] sm:$0x7f]
  %v1177 = vld [vmem:[%s1172 + $0x20] sm:$0x7f]
  %v1178 = vld [vmem:[%s1172 + $0x28] sm:$0x7f]
  %v1179 = vld [vmem:[%s1172 + $0x30] sm:$0x7f]
  %v1180 = vld [vmem:[%s1172 + $0x40] sm:$0x7f]
  %v1181 = vld [vmem:[%s1172 + $0x48] sm:$0x7f]
  %v1182 = vld [vmem:[%s1172 + $0x50] sm:$0x7f]
  %v1183 = vld [vmem:[%s1172 + $0x58] sm:$0x7f]
  %v1184 = vld [vmem:[%s1172 + $0x60] sm:$0x7f]
  %v1185 = vld [vmem:[%s1172 + $0x68] sm:$0x7f]
  %v1186 = vld [vmem:[%s1172 + $0x70] sm:$0x7f]
  %1188 = vset.pattern.permute.xlu0 0
  %1189 = vperm.xlu0 %1188, %v1173
  %v1190 = vpop.permute.xlu0 %1189
  %1193 = vset.pattern.permute.xlu0 0
  %1194 = vperm.xlu0 %1193, %v1174
  %v1195 = vpop.permute.xlu0 %1194
  %1198 = vset.pattern.permute.xlu0 0
  %1199 = vperm.xlu0 %1198, %v1175
  %v1200 = vpop.permute.xlu0 %1199
  %1203 = vset.pattern.permute.xlu0 0
  %1204 = vperm.xlu0 %1203, %v1176
  %v1205 = vpop.permute.xlu0 %1204
  %1208 = vset.pattern.permute.xlu0 0
  %1209 = vperm.xlu0 %1208, %v1177
  %v1210 = vpop.permute.xlu0 %1209
  %1213 = vset.pattern.permute.xlu0 0
  %1214 = vperm.xlu0 %1213, %v1178
  %v1215 = vpop.permute.xlu0 %1214
  %1218 = vset.pattern.permute.xlu0 0
  %1219 = vperm.xlu0 %1218, %v1179
  %v1220 = vpop.permute.xlu0 %1219
  %1223 = vset.pattern.permute.xlu0 0
  %1224 = vperm.xlu0 %1223, %v1180
  %v1225 = vpop.permute.xlu0 %1224
  %1228 = vset.pattern.permute.xlu0 0
  %1229 = vperm.xlu0 %1228, %v1181
  %v1230 = vpop.permute.xlu0 %1229
  %1233 = vset.pattern.permute.xlu0 0
  %1234 = vperm.xlu0 %1233, %v1182
  %v1235 = vpop.permute.xlu0 %1234
  %1238 = vset.pattern.permute.xlu0 0
  %1239 = vperm.xlu0 %1238, %v1183
  %v1240 = vpop.permute.xlu0 %1239
  %1243 = vset.pattern.permute.xlu0 0
  %1244 = vperm.xlu0 %1243, %v1184
  %v1245 = vpop.permute.xlu0 %1244
  %1248 = vset.pattern.permute.xlu0 0
  %1249 = vperm.xlu0 %1248, %v1185
  %v1250 = vpop.permute.xlu0 %1249
  %1253 = vset.pattern.permute.xlu0 0
  %1254 = vperm.xlu0 %1253, %v1186
  %v1255 = vpop.permute.xlu0 %1254
  %v1257 = vlaneseq
  %v1258 = vshrl.u32 %v1257, 7
  %v1259 = vsub.s32 4, %v1258
  %v1260 = vrot.slane %v26, %v1259
  %v1261 = vmul.f32 %v1190, %v1260
  %v1262 = vmul.f32 %v1195, %v1260
  %v1263 = vmul.f32 %v1200, %v1260
  %v1264 = vmul.f32 %v1205, %v1260
  %v1265 = vmul.f32 %v1210, %v1260
  %v1266 = vmul.f32 %v1215, %v1260
  %v1267 = vmul.f32 %v1220, %v1260
  %v1268 = vmul.f32 %v1225, %v1260
  %v1269 = vmul.f32 %v1230, %v1260
  %v1270 = vmul.f32 %v1235, %v1260
  %v1271 = vmul.f32 %v1240, %v1260
  %v1272 = vmul.f32 %v1245, %v1260
  %v1273 = vmul.f32 %v1250, %v1260
  %v1274 = vmul.f32 %v1255, %v1260
  %v1275 = vadd.f32 %v1158, %v1261
  %v1276 = vadd.f32 %v1159, %v1262
  %v1277 = vadd.f32 %v1160, %v1263
  %v1278 = vadd.f32 %v1161, %v1264
  %v1279 = vadd.f32 %v1162, %v1265
  %v1280 = vadd.f32 %v1163, %v1266
  %v1281 = vadd.f32 %v1164, %v1267
  %v1282 = vadd.f32 %v1165, %v1268
  %v1283 = vadd.f32 %v1166, %v1269
  %v1284 = vadd.f32 %v1167, %v1270
  %v1285 = vadd.f32 %v1168, %v1271
  %v1286 = vadd.f32 %v1169, %v1272
  %v1287 = vadd.f32 %v1170, %v1273
  %v1288 = vadd.f32 %v1171, %v1274
  %1289 = vset.pattern.permute.xlu0 1
  %1290 = vperm.xlu0 %1289, %v1173
  %v1291 = vpop.permute.xlu0 %1290
  %1293 = vset.pattern.permute.xlu0 1
  %1294 = vperm.xlu0 %1293, %v1174
  %v1295 = vpop.permute.xlu0 %1294
  %1297 = vset.pattern.permute.xlu0 1
  %1298 = vperm.xlu0 %1297, %v1175
  %v1299 = vpop.permute.xlu0 %1298
  %1301 = vset.pattern.permute.xlu0 1
  %1302 = vperm.xlu0 %1301, %v1176
  %v1303 = vpop.permute.xlu0 %1302
  %1305 = vset.pattern.permute.xlu0 1
  %1306 = vperm.xlu0 %1305, %v1177
  %v1307 = vpop.permute.xlu0 %1306
  %1309 = vset.pattern.permute.xlu0 1
  %1310 = vperm.xlu0 %1309, %v1178
  %v1311 = vpop.permute.xlu0 %1310
  %1313 = vset.pattern.permute.xlu0 1
  %1314 = vperm.xlu0 %1313, %v1179
  %v1315 = vpop.permute.xlu0 %1314
  %1317 = vset.pattern.permute.xlu0 1
  %1318 = vperm.xlu0 %1317, %v1180
  %v1319 = vpop.permute.xlu0 %1318
  %1321 = vset.pattern.permute.xlu0 1
  %1322 = vperm.xlu0 %1321, %v1181
  %v1323 = vpop.permute.xlu0 %1322
  %1325 = vset.pattern.permute.xlu0 1
  %1326 = vperm.xlu0 %1325, %v1182
  %v1327 = vpop.permute.xlu0 %1326
  %1329 = vset.pattern.permute.xlu0 1
  %1330 = vperm.xlu0 %1329, %v1183
  %v1331 = vpop.permute.xlu0 %1330
  %1333 = vset.pattern.permute.xlu0 1
  %1334 = vperm.xlu0 %1333, %v1184
  %v1335 = vpop.permute.xlu0 %1334
  %1337 = vset.pattern.permute.xlu0 1
  %1338 = vperm.xlu0 %1337, %v1185
  %v1339 = vpop.permute.xlu0 %1338
  %1341 = vset.pattern.permute.xlu0 1
  %1342 = vperm.xlu0 %1341, %v1186
  %v1343 = vpop.permute.xlu0 %1342
  %v1345 = vlaneseq
  %v1346 = vshrl.u32 %v1345, 7
  %v1347 = vsub.s32 5, %v1346
  %v1348 = vrot.slane %v26, %v1347
  %v1349 = vmul.f32 %v1291, %v1348
  %v1350 = vmul.f32 %v1295, %v1348
  %v1351 = vmul.f32 %v1299, %v1348
  %v1352 = vmul.f32 %v1303, %v1348
  %v1353 = vmul.f32 %v1307, %v1348
  %v1354 = vmul.f32 %v1311, %v1348
  %v1355 = vmul.f32 %v1315, %v1348
  %v1356 = vmul.f32 %v1319, %v1348
  %v1357 = vmul.f32 %v1323, %v1348
  %v1358 = vmul.f32 %v1327, %v1348
  %v1359 = vmul.f32 %v1331, %v1348
  %v1360 = vmul.f32 %v1335, %v1348
  %v1361 = vmul.f32 %v1339, %v1348
  %v1362 = vmul.f32 %v1343, %v1348
  %v1363 = vadd.f32 %v1275, %v1349
  %v1364 = vadd.f32 %v1276, %v1350
  %v1365 = vadd.f32 %v1277, %v1351
  %v1366 = vadd.f32 %v1278, %v1352
  %v1367 = vadd.f32 %v1279, %v1353
  %v1368 = vadd.f32 %v1280, %v1354
  %v1369 = vadd.f32 %v1281, %v1355
  %v1370 = vadd.f32 %v1282, %v1356
  %v1371 = vadd.f32 %v1283, %v1357
  %v1372 = vadd.f32 %v1284, %v1358
  %v1373 = vadd.f32 %v1285, %v1359
  %v1374 = vadd.f32 %v1286, %v1360
  %v1375 = vadd.f32 %v1287, %v1361
  %v1376 = vadd.f32 %v1288, %v1362
  %1377 = vset.pattern.permute.xlu0 2
  %1378 = vperm.xlu0 %1377, %v1173
  %v1379 = vpop.permute.xlu0 %1378
  %1381 = vset.pattern.permute.xlu0 2
  %1382 = vperm.xlu0 %1381, %v1174
  %v1383 = vpop.permute.xlu0 %1382
  %1385 = vset.pattern.permute.xlu0 2
  %1386 = vperm.xlu0 %1385, %v1175
  %v1387 = vpop.permute.xlu0 %1386
  %1389 = vset.pattern.permute.xlu0 2
  %1390 = vperm.xlu0 %1389, %v1176
  %v1391 = vpop.permute.xlu0 %1390
  %1393 = vset.pattern.permute.xlu0 2
  %1394 = vperm.xlu0 %1393, %v1177
  %v1395 = vpop.permute.xlu0 %1394
  %1397 = vset.pattern.permute.xlu0 2
  %1398 = vperm.xlu0 %1397, %v1178
  %v1399 = vpop.permute.xlu0 %1398
  %1401 = vset.pattern.permute.xlu0 2
  %1402 = vperm.xlu0 %1401, %v1179
  %v1403 = vpop.permute.xlu0 %1402
  %1405 = vset.pattern.permute.xlu0 2
  %1406 = vperm.xlu0 %1405, %v1180
  %v1407 = vpop.permute.xlu0 %1406
  %1409 = vset.pattern.permute.xlu0 2
  %1410 = vperm.xlu0 %1409, %v1181
  %v1411 = vpop.permute.xlu0 %1410
  %1413 = vset.pattern.permute.xlu0 2
  %1414 = vperm.xlu0 %1413, %v1182
  %v1415 = vpop.permute.xlu0 %1414
  %1417 = vset.pattern.permute.xlu0 2
  %1418 = vperm.xlu0 %1417, %v1183
  %v1419 = vpop.permute.xlu0 %1418
  %1421 = vset.pattern.permute.xlu0 2
  %1422 = vperm.xlu0 %1421, %v1184
  %v1423 = vpop.permute.xlu0 %1422
  %1425 = vset.pattern.permute.xlu0 2
  %1426 = vperm.xlu0 %1425, %v1185
  %v1427 = vpop.permute.xlu0 %1426
  %1429 = vset.pattern.permute.xlu0 2
  %1430 = vperm.xlu0 %1429, %v1186
  %v1431 = vpop.permute.xlu0 %1430
  %v1433 = vlaneseq
  %v1434 = vshrl.u32 %v1433, 7
  %v1435 = vsub.s32 6, %v1434
  %v1436 = vrot.slane %v26, %v1435
  %v1437 = vmul.f32 %v1379, %v1436
  %v1438 = vmul.f32 %v1383, %v1436
  %v1439 = vmul.f32 %v1387, %v1436
  %v1440 = vmul.f32 %v1391, %v1436
  %v1441 = vmul.f32 %v1395, %v1436
  %v1442 = vmul.f32 %v1399, %v1436
  %v1443 = vmul.f32 %v1403, %v1436
  %v1444 = vmul.f32 %v1407, %v1436
  %v1445 = vmul.f32 %v1411, %v1436
  %v1446 = vmul.f32 %v1415, %v1436
  %v1447 = vmul.f32 %v1419, %v1436
  %v1448 = vmul.f32 %v1423, %v1436
  %v1449 = vmul.f32 %v1427, %v1436
  %v1450 = vmul.f32 %v1431, %v1436
  %v1451 = vadd.f32 %v1363, %v1437
  %v1452 = vadd.f32 %v1364, %v1438
  %v1453 = vadd.f32 %v1365, %v1439
  %v1454 = vadd.f32 %v1366, %v1440
  %v1455 = vadd.f32 %v1367, %v1441
  %v1456 = vadd.f32 %v1368, %v1442
  %v1457 = vadd.f32 %v1369, %v1443
  %v1458 = vadd.f32 %v1370, %v1444
  %v1459 = vadd.f32 %v1371, %v1445
  %v1460 = vadd.f32 %v1372, %v1446
  %v1461 = vadd.f32 %v1373, %v1447
  %v1462 = vadd.f32 %v1374, %v1448
  %v1463 = vadd.f32 %v1375, %v1449
  %v1464 = vadd.f32 %v1376, %v1450
  %1465 = vset.pattern.permute.xlu0 3
  %1466 = vperm.xlu0 %1465, %v1173
  %v1467 = vpop.permute.xlu0 %1466
  %1469 = vset.pattern.permute.xlu0 3
  %1470 = vperm.xlu0 %1469, %v1174
  %v1471 = vpop.permute.xlu0 %1470
  %1473 = vset.pattern.permute.xlu0 3
  %1474 = vperm.xlu0 %1473, %v1175
  %v1475 = vpop.permute.xlu0 %1474
  %1477 = vset.pattern.permute.xlu0 3
  %1478 = vperm.xlu0 %1477, %v1176
  %v1479 = vpop.permute.xlu0 %1478
  %1481 = vset.pattern.permute.xlu0 3
  %1482 = vperm.xlu0 %1481, %v1177
  %v1483 = vpop.permute.xlu0 %1482
  %1485 = vset.pattern.permute.xlu0 3
  %1486 = vperm.xlu0 %1485, %v1178
  %v1487 = vpop.permute.xlu0 %1486
  %1489 = vset.pattern.permute.xlu0 3
  %1490 = vperm.xlu0 %1489, %v1179
  %v1491 = vpop.permute.xlu0 %1490
  %1493 = vset.pattern.permute.xlu0 3
  %1494 = vperm.xlu0 %1493, %v1180
  %v1495 = vpop.permute.xlu0 %1494
  %1497 = vset.pattern.permute.xlu0 3
  %1498 = vperm.xlu0 %1497, %v1181
  %v1499 = vpop.permute.xlu0 %1498
  %1501 = vset.pattern.permute.xlu0 3
  %1502 = vperm.xlu0 %1501, %v1182
  %v1503 = vpop.permute.xlu0 %1502
  %1505 = vset.pattern.permute.xlu0 3
  %1506 = vperm.xlu0 %1505, %v1183
  %v1507 = vpop.permute.xlu0 %1506
  %1509 = vset.pattern.permute.xlu0 3
  %1510 = vperm.xlu0 %1509, %v1184
  %v1511 = vpop.permute.xlu0 %1510
  %1513 = vset.pattern.permute.xlu0 3
  %1514 = vperm.xlu0 %1513, %v1185
  %v1515 = vpop.permute.xlu0 %1514
  %1517 = vset.pattern.permute.xlu0 3
  %1518 = vperm.xlu0 %1517, %v1186
  %v1519 = vpop.permute.xlu0 %1518
  %v1521 = vlaneseq
  %v1522 = vshrl.u32 %v1521, 7
  %v1523 = vsub.s32 7, %v1522
  %v1524 = vrot.slane %v26, %v1523
  %v1525 = vmul.f32 %v1467, %v1524
  %v1526 = vmul.f32 %v1471, %v1524
  %v1527 = vmul.f32 %v1475, %v1524
  %v1528 = vmul.f32 %v1479, %v1524
  %v1529 = vmul.f32 %v1483, %v1524
  %v1530 = vmul.f32 %v1487, %v1524
  %v1531 = vmul.f32 %v1491, %v1524
  %v1532 = vmul.f32 %v1495, %v1524
  %v1533 = vmul.f32 %v1499, %v1524
  %v1534 = vmul.f32 %v1503, %v1524
  %v1535 = vmul.f32 %v1507, %v1524
  %v1536 = vmul.f32 %v1511, %v1524
  %v1537 = vmul.f32 %v1515, %v1524
  %v1538 = vmul.f32 %v1519, %v1524
  %v1539 = vadd.f32 %v1451, %v1525
  %v1540 = vadd.f32 %v1452, %v1526
  %v1541 = vadd.f32 %v1453, %v1527
  %v1542 = vadd.f32 %v1454, %v1528
  %v1543 = vadd.f32 %v1455, %v1529
  %v1544 = vadd.f32 %v1456, %v1530
  %v1545 = vadd.f32 %v1457, %v1531
  %v1546 = vadd.f32 %v1458, %v1532
  %v1547 = vadd.f32 %v1459, %v1533
  %v1548 = vadd.f32 %v1460, %v1534
  %v1549 = vadd.f32 %v1461, %v1535
  %v1550 = vadd.f32 %v1462, %v1536
  %v1551 = vadd.f32 %v1463, %v1537
  %v1552 = vadd.f32 %v1464, %v1538
  %s1553 = scalar_lea.vmem %s0, 384
  %v1554 = vld [vmem:[%s1553] sm:$0x7f]
  %v1555 = vld [vmem:[%s1553 + $0x8] sm:$0x7f]
  %v1556 = vld [vmem:[%s1553 + $0x10] sm:$0x7f]
  %v1557 = vld [vmem:[%s1553 + $0x18] sm:$0x7f]
  %v1558 = vld [vmem:[%s1553 + $0x20] sm:$0x7f]
  %v1559 = vld [vmem:[%s1553 + $0x28] sm:$0x7f]
  %v1560 = vld [vmem:[%s1553 + $0x30] sm:$0x7f]
  %v1561 = vld [vmem:[%s1553 + $0x40] sm:$0x7f]
  %v1562 = vld [vmem:[%s1553 + $0x48] sm:$0x7f]
  %v1563 = vld [vmem:[%s1553 + $0x50] sm:$0x7f]
  %v1564 = vld [vmem:[%s1553 + $0x58] sm:$0x7f]
  %v1565 = vld [vmem:[%s1553 + $0x60] sm:$0x7f]
  %v1566 = vld [vmem:[%s1553 + $0x68] sm:$0x7f]
  %v1567 = vld [vmem:[%s1553 + $0x70] sm:$0x7f]
  %1569 = vset.pattern.permute.xlu0 0
  %1570 = vperm.xlu0 %1569, %v1554
  %v1571 = vpop.permute.xlu0 %1570
  %1574 = vset.pattern.permute.xlu0 0
  %1575 = vperm.xlu0 %1574, %v1555
  %v1576 = vpop.permute.xlu0 %1575
  %1579 = vset.pattern.permute.xlu0 0
  %1580 = vperm.xlu0 %1579, %v1556
  %v1581 = vpop.permute.xlu0 %1580
  %1584 = vset.pattern.permute.xlu0 0
  %1585 = vperm.xlu0 %1584, %v1557
  %v1586 = vpop.permute.xlu0 %1585
  %1589 = vset.pattern.permute.xlu0 0
  %1590 = vperm.xlu0 %1589, %v1558
  %v1591 = vpop.permute.xlu0 %1590
  %1594 = vset.pattern.permute.xlu0 0
  %1595 = vperm.xlu0 %1594, %v1559
  %v1596 = vpop.permute.xlu0 %1595
  %1599 = vset.pattern.permute.xlu0 0
  %1600 = vperm.xlu0 %1599, %v1560
  %v1601 = vpop.permute.xlu0 %1600
  %1604 = vset.pattern.permute.xlu0 0
  %1605 = vperm.xlu0 %1604, %v1561
  %v1606 = vpop.permute.xlu0 %1605
  %1609 = vset.pattern.permute.xlu0 0
  %1610 = vperm.xlu0 %1609, %v1562
  %v1611 = vpop.permute.xlu0 %1610
  %1614 = vset.pattern.permute.xlu0 0
  %1615 = vperm.xlu0 %1614, %v1563
  %v1616 = vpop.permute.xlu0 %1615
  %1619 = vset.pattern.permute.xlu0 0
  %1620 = vperm.xlu0 %1619, %v1564
  %v1621 = vpop.permute.xlu0 %1620
  %1624 = vset.pattern.permute.xlu0 0
  %1625 = vperm.xlu0 %1624, %v1565
  %v1626 = vpop.permute.xlu0 %1625
  %1629 = vset.pattern.permute.xlu0 0
  %1630 = vperm.xlu0 %1629, %v1566
  %v1631 = vpop.permute.xlu0 %1630
  %1634 = vset.pattern.permute.xlu0 0
  %1635 = vperm.xlu0 %1634, %v1567
  %v1636 = vpop.permute.xlu0 %1635
  %v1638 = vlaneseq
  %v1639 = vshrl.u32 %v1638, 7
  %v1640 = vsub.s32 0, %v1639
  %v1641 = vrot.slane %v27, %v1640
  %v1642 = vmul.f32 %v1571, %v1641
  %v1643 = vmul.f32 %v1576, %v1641
  %v1644 = vmul.f32 %v1581, %v1641
  %v1645 = vmul.f32 %v1586, %v1641
  %v1646 = vmul.f32 %v1591, %v1641
  %v1647 = vmul.f32 %v1596, %v1641
  %v1648 = vmul.f32 %v1601, %v1641
  %v1649 = vmul.f32 %v1606, %v1641
  %v1650 = vmul.f32 %v1611, %v1641
  %v1651 = vmul.f32 %v1616, %v1641
  %v1652 = vmul.f32 %v1621, %v1641
  %v1653 = vmul.f32 %v1626, %v1641
  %v1654 = vmul.f32 %v1631, %v1641
  %v1655 = vmul.f32 %v1636, %v1641
  %v1656 = vadd.f32 %v1539, %v1642
  %v1657 = vadd.f32 %v1540, %v1643
  %v1658 = vadd.f32 %v1541, %v1644
  %v1659 = vadd.f32 %v1542, %v1645
  %v1660 = vadd.f32 %v1543, %v1646
  %v1661 = vadd.f32 %v1544, %v1647
  %v1662 = vadd.f32 %v1545, %v1648
  %v1663 = vadd.f32 %v1546, %v1649
  %v1664 = vadd.f32 %v1547, %v1650
  %v1665 = vadd.f32 %v1548, %v1651
  %v1666 = vadd.f32 %v1549, %v1652
  %v1667 = vadd.f32 %v1550, %v1653
  %v1668 = vadd.f32 %v1551, %v1654
  %v1669 = vadd.f32 %v1552, %v1655
  %1670 = vset.pattern.permute.xlu0 1
  %1671 = vperm.xlu0 %1670, %v1554
  %v1672 = vpop.permute.xlu0 %1671
  %1674 = vset.pattern.permute.xlu0 1
  %1675 = vperm.xlu0 %1674, %v1555
  %v1676 = vpop.permute.xlu0 %1675
  %1678 = vset.pattern.permute.xlu0 1
  %1679 = vperm.xlu0 %1678, %v1556
  %v1680 = vpop.permute.xlu0 %1679
  %1682 = vset.pattern.permute.xlu0 1
  %1683 = vperm.xlu0 %1682, %v1557
  %v1684 = vpop.permute.xlu0 %1683
  %1686 = vset.pattern.permute.xlu0 1
  %1687 = vperm.xlu0 %1686, %v1558
  %v1688 = vpop.permute.xlu0 %1687
  %1690 = vset.pattern.permute.xlu0 1
  %1691 = vperm.xlu0 %1690, %v1559
  %v1692 = vpop.permute.xlu0 %1691
  %1694 = vset.pattern.permute.xlu0 1
  %1695 = vperm.xlu0 %1694, %v1560
  %v1696 = vpop.permute.xlu0 %1695
  %1698 = vset.pattern.permute.xlu0 1
  %1699 = vperm.xlu0 %1698, %v1561
  %v1700 = vpop.permute.xlu0 %1699
  %1702 = vset.pattern.permute.xlu0 1
  %1703 = vperm.xlu0 %1702, %v1562
  %v1704 = vpop.permute.xlu0 %1703
  %1706 = vset.pattern.permute.xlu0 1
  %1707 = vperm.xlu0 %1706, %v1563
  %v1708 = vpop.permute.xlu0 %1707
  %1710 = vset.pattern.permute.xlu0 1
  %1711 = vperm.xlu0 %1710, %v1564
  %v1712 = vpop.permute.xlu0 %1711
  %1714 = vset.pattern.permute.xlu0 1
  %1715 = vperm.xlu0 %1714, %v1565
  %v1716 = vpop.permute.xlu0 %1715
  %1718 = vset.pattern.permute.xlu0 1
  %1719 = vperm.xlu0 %1718, %v1566
  %v1720 = vpop.permute.xlu0 %1719
  %1722 = vset.pattern.permute.xlu0 1
  %1723 = vperm.xlu0 %1722, %v1567
  %v1724 = vpop.permute.xlu0 %1723
  %v1726 = vlaneseq
  %v1727 = vshrl.u32 %v1726, 7
  %v1728 = vsub.s32 1, %v1727
  %v1729 = vrot.slane %v27, %v1728
  %v1730 = vmul.f32 %v1672, %v1729
  %v1731 = vmul.f32 %v1676, %v1729
  %v1732 = vmul.f32 %v1680, %v1729
  %v1733 = vmul.f32 %v1684, %v1729
  %v1734 = vmul.f32 %v1688, %v1729
  %v1735 = vmul.f32 %v1692, %v1729
  %v1736 = vmul.f32 %v1696, %v1729
  %v1737 = vmul.f32 %v1700, %v1729
  %v1738 = vmul.f32 %v1704, %v1729
  %v1739 = vmul.f32 %v1708, %v1729
  %v1740 = vmul.f32 %v1712, %v1729
  %v1741 = vmul.f32 %v1716, %v1729
  %v1742 = vmul.f32 %v1720, %v1729
  %v1743 = vmul.f32 %v1724, %v1729
  %v1744 = vadd.f32 %v1656, %v1730
  %v1745 = vadd.f32 %v1657, %v1731
  %v1746 = vadd.f32 %v1658, %v1732
  %v1747 = vadd.f32 %v1659, %v1733
  %v1748 = vadd.f32 %v1660, %v1734
  %v1749 = vadd.f32 %v1661, %v1735
  %v1750 = vadd.f32 %v1662, %v1736
  %v1751 = vadd.f32 %v1663, %v1737
  %v1752 = vadd.f32 %v1664, %v1738
  %v1753 = vadd.f32 %v1665, %v1739
  %v1754 = vadd.f32 %v1666, %v1740
  %v1755 = vadd.f32 %v1667, %v1741
  %v1756 = vadd.f32 %v1668, %v1742
  %v1757 = vadd.f32 %v1669, %v1743
  %1758 = vset.pattern.permute.xlu0 2
  %1759 = vperm.xlu0 %1758, %v1554
  %v1760 = vpop.permute.xlu0 %1759
  %1762 = vset.pattern.permute.xlu0 2
  %1763 = vperm.xlu0 %1762, %v1555
  %v1764 = vpop.permute.xlu0 %1763
  %1766 = vset.pattern.permute.xlu0 2
  %1767 = vperm.xlu0 %1766, %v1556
  %v1768 = vpop.permute.xlu0 %1767
  %1770 = vset.pattern.permute.xlu0 2
  %1771 = vperm.xlu0 %1770, %v1557
  %v1772 = vpop.permute.xlu0 %1771
  %1774 = vset.pattern.permute.xlu0 2
  %1775 = vperm.xlu0 %1774, %v1558
  %v1776 = vpop.permute.xlu0 %1775
  %1778 = vset.pattern.permute.xlu0 2
  %1779 = vperm.xlu0 %1778, %v1559
  %v1780 = vpop.permute.xlu0 %1779
  %1782 = vset.pattern.permute.xlu0 2
  %1783 = vperm.xlu0 %1782, %v1560
  %v1784 = vpop.permute.xlu0 %1783
  %1786 = vset.pattern.permute.xlu0 2
  %1787 = vperm.xlu0 %1786, %v1561
  %v1788 = vpop.permute.xlu0 %1787
  %1790 = vset.pattern.permute.xlu0 2
  %1791 = vperm.xlu0 %1790, %v1562
  %v1792 = vpop.permute.xlu0 %1791
  %1794 = vset.pattern.permute.xlu0 2
  %1795 = vperm.xlu0 %1794, %v1563
  %v1796 = vpop.permute.xlu0 %1795
  %1798 = vset.pattern.permute.xlu0 2
  %1799 = vperm.xlu0 %1798, %v1564
  %v1800 = vpop.permute.xlu0 %1799
  %1802 = vset.pattern.permute.xlu0 2
  %1803 = vperm.xlu0 %1802, %v1565
  %v1804 = vpop.permute.xlu0 %1803
  %1806 = vset.pattern.permute.xlu0 2
  %1807 = vperm.xlu0 %1806, %v1566
  %v1808 = vpop.permute.xlu0 %1807
  %1810 = vset.pattern.permute.xlu0 2
  %1811 = vperm.xlu0 %1810, %v1567
  %v1812 = vpop.permute.xlu0 %1811
  %v1814 = vlaneseq
  %v1815 = vshrl.u32 %v1814, 7
  %v1816 = vsub.s32 2, %v1815
  %v1817 = vrot.slane %v27, %v1816
  %v1818 = vmul.f32 %v1760, %v1817
  %v1819 = vmul.f32 %v1764, %v1817
  %v1820 = vmul.f32 %v1768, %v1817
  %v1821 = vmul.f32 %v1772, %v1817
  %v1822 = vmul.f32 %v1776, %v1817
  %v1823 = vmul.f32 %v1780, %v1817
  %v1824 = vmul.f32 %v1784, %v1817
  %v1825 = vmul.f32 %v1788, %v1817
  %v1826 = vmul.f32 %v1792, %v1817
  %v1827 = vmul.f32 %v1796, %v1817
  %v1828 = vmul.f32 %v1800, %v1817
  %v1829 = vmul.f32 %v1804, %v1817
  %v1830 = vmul.f32 %v1808, %v1817
  %v1831 = vmul.f32 %v1812, %v1817
  %v1832 = vadd.f32 %v1744, %v1818
  %v1833 = vadd.f32 %v1745, %v1819
  %v1834 = vadd.f32 %v1746, %v1820
  %v1835 = vadd.f32 %v1747, %v1821
  %v1836 = vadd.f32 %v1748, %v1822
  %v1837 = vadd.f32 %v1749, %v1823
  %v1838 = vadd.f32 %v1750, %v1824
  %v1839 = vadd.f32 %v1751, %v1825
  %v1840 = vadd.f32 %v1752, %v1826
  %v1841 = vadd.f32 %v1753, %v1827
  %v1842 = vadd.f32 %v1754, %v1828
  %v1843 = vadd.f32 %v1755, %v1829
  %v1844 = vadd.f32 %v1756, %v1830
  %v1845 = vadd.f32 %v1757, %v1831
  %1846 = vset.pattern.permute.xlu0 3
  %1847 = vperm.xlu0 %1846, %v1554
  %v1848 = vpop.permute.xlu0 %1847
  %1850 = vset.pattern.permute.xlu0 3
  %1851 = vperm.xlu0 %1850, %v1555
  %v1852 = vpop.permute.xlu0 %1851
  %1854 = vset.pattern.permute.xlu0 3
  %1855 = vperm.xlu0 %1854, %v1556
  %v1856 = vpop.permute.xlu0 %1855
  %1858 = vset.pattern.permute.xlu0 3
  %1859 = vperm.xlu0 %1858, %v1557
  %v1860 = vpop.permute.xlu0 %1859
  %1862 = vset.pattern.permute.xlu0 3
  %1863 = vperm.xlu0 %1862, %v1558
  %v1864 = vpop.permute.xlu0 %1863
  %1866 = vset.pattern.permute.xlu0 3
  %1867 = vperm.xlu0 %1866, %v1559
  %v1868 = vpop.permute.xlu0 %1867
  %1870 = vset.pattern.permute.xlu0 3
  %1871 = vperm.xlu0 %1870, %v1560
  %v1872 = vpop.permute.xlu0 %1871
  %1874 = vset.pattern.permute.xlu0 3
  %1875 = vperm.xlu0 %1874, %v1561
  %v1876 = vpop.permute.xlu0 %1875
  %1878 = vset.pattern.permute.xlu0 3
  %1879 = vperm.xlu0 %1878, %v1562
  %v1880 = vpop.permute.xlu0 %1879
  %1882 = vset.pattern.permute.xlu0 3
  %1883 = vperm.xlu0 %1882, %v1563
  %v1884 = vpop.permute.xlu0 %1883
  %1886 = vset.pattern.permute.xlu0 3
  %1887 = vperm.xlu0 %1886, %v1564
  %v1888 = vpop.permute.xlu0 %1887
  %1890 = vset.pattern.permute.xlu0 3
  %1891 = vperm.xlu0 %1890, %v1565
  %v1892 = vpop.permute.xlu0 %1891
  %1894 = vset.pattern.permute.xlu0 3
  %1895 = vperm.xlu0 %1894, %v1566
  %v1896 = vpop.permute.xlu0 %1895
  %1898 = vset.pattern.permute.xlu0 3
  %1899 = vperm.xlu0 %1898, %v1567
  %v1900 = vpop.permute.xlu0 %1899
  %v1902 = vlaneseq
  %v1903 = vshrl.u32 %v1902, 7
  %v1904 = vsub.s32 3, %v1903
  %v1905 = vrot.slane %v27, %v1904
  %v1906 = vmul.f32 %v1848, %v1905
  %v1907 = vmul.f32 %v1852, %v1905
  %v1908 = vmul.f32 %v1856, %v1905
  %v1909 = vmul.f32 %v1860, %v1905
  %v1910 = vmul.f32 %v1864, %v1905
  %v1911 = vmul.f32 %v1868, %v1905
  %v1912 = vmul.f32 %v1872, %v1905
  %v1913 = vmul.f32 %v1876, %v1905
  %v1914 = vmul.f32 %v1880, %v1905
  %v1915 = vmul.f32 %v1884, %v1905
  %v1916 = vmul.f32 %v1888, %v1905
  %v1917 = vmul.f32 %v1892, %v1905
  %v1918 = vmul.f32 %v1896, %v1905
  %v1919 = vmul.f32 %v1900, %v1905
  %v1920 = vadd.f32 %v1832, %v1906
  %v1921 = vadd.f32 %v1833, %v1907
  %v1922 = vadd.f32 %v1834, %v1908
  %v1923 = vadd.f32 %v1835, %v1909
  %v1924 = vadd.f32 %v1836, %v1910
  %v1925 = vadd.f32 %v1837, %v1911
  %v1926 = vadd.f32 %v1838, %v1912
  %v1927 = vadd.f32 %v1839, %v1913
  %v1928 = vadd.f32 %v1840, %v1914
  %v1929 = vadd.f32 %v1841, %v1915
  %v1930 = vadd.f32 %v1842, %v1916
  %v1931 = vadd.f32 %v1843, %v1917
  %v1932 = vadd.f32 %v1844, %v1918
  %v1933 = vadd.f32 %v1845, %v1919
  %v1934 = vld [vmem:[%s1172 + $0x1] sm:$0x7f]
  %v1935 = vld [vmem:[%s1172 + $0x9] sm:$0x7f]
  %v1936 = vld [vmem:[%s1172 + $0x11] sm:$0x7f]
  %v1937 = vld [vmem:[%s1172 + $0x19] sm:$0x7f]
  %v1938 = vld [vmem:[%s1172 + $0x21] sm:$0x7f]
  %v1939 = vld [vmem:[%s1172 + $0x29] sm:$0x7f]
  %v1940 = vld [vmem:[%s1172 + $0x31] sm:$0x7f]
  %v1941 = vld [vmem:[%s1172 + $0x41] sm:$0x7f]
  %v1942 = vld [vmem:[%s1172 + $0x49] sm:$0x7f]
  %v1943 = vld [vmem:[%s1172 + $0x51] sm:$0x7f]
  %v1944 = vld [vmem:[%s1172 + $0x59] sm:$0x7f]
  %v1945 = vld [vmem:[%s1172 + $0x61] sm:$0x7f]
  %v1946 = vld [vmem:[%s1172 + $0x69] sm:$0x7f]
  %v1947 = vld [vmem:[%s1172 + $0x71] sm:$0x7f]
  %1949 = vset.pattern.permute.xlu0 0
  %1950 = vperm.xlu0 %1949, %v1934
  %v1951 = vpop.permute.xlu0 %1950
  %1954 = vset.pattern.permute.xlu0 0
  %1955 = vperm.xlu0 %1954, %v1935
  %v1956 = vpop.permute.xlu0 %1955
  %1959 = vset.pattern.permute.xlu0 0
  %1960 = vperm.xlu0 %1959, %v1936
  %v1961 = vpop.permute.xlu0 %1960
  %1964 = vset.pattern.permute.xlu0 0
  %1965 = vperm.xlu0 %1964, %v1937
  %v1966 = vpop.permute.xlu0 %1965
  %1969 = vset.pattern.permute.xlu0 0
  %1970 = vperm.xlu0 %1969, %v1938
  %v1971 = vpop.permute.xlu0 %1970
  %1974 = vset.pattern.permute.xlu0 0
  %1975 = vperm.xlu0 %1974, %v1939
  %v1976 = vpop.permute.xlu0 %1975
  %1979 = vset.pattern.permute.xlu0 0
  %1980 = vperm.xlu0 %1979, %v1940
  %v1981 = vpop.permute.xlu0 %1980
  %1984 = vset.pattern.permute.xlu0 0
  %1985 = vperm.xlu0 %1984, %v1941
  %v1986 = vpop.permute.xlu0 %1985
  %1989 = vset.pattern.permute.xlu0 0
  %1990 = vperm.xlu0 %1989, %v1942
  %v1991 = vpop.permute.xlu0 %1990
  %1994 = vset.pattern.permute.xlu0 0
  %1995 = vperm.xlu0 %1994, %v1943
  %v1996 = vpop.permute.xlu0 %1995
  %1999 = vset.pattern.permute.xlu0 0
  %2000 = vperm.xlu0 %1999, %v1944
  %v2001 = vpop.permute.xlu0 %2000
  %2004 = vset.pattern.permute.xlu0 0
  %2005 = vperm.xlu0 %2004, %v1945
  %v2006 = vpop.permute.xlu0 %2005
  %2009 = vset.pattern.permute.xlu0 0
  %2010 = vperm.xlu0 %2009, %v1946
  %v2011 = vpop.permute.xlu0 %2010
  %2014 = vset.pattern.permute.xlu0 0
  %2015 = vperm.xlu0 %2014, %v1947
  %v2016 = vpop.permute.xlu0 %2015
  %v2018 = vlaneseq
  %v2019 = vshrl.u32 %v2018, 7
  %v2020 = vsub.s32 4, %v2019
  %v2021 = vrot.slane %v27, %v2020
  %v2022 = vmul.f32 %v1951, %v2021
  %v2023 = vmul.f32 %v1956, %v2021
  %v2024 = vmul.f32 %v1961, %v2021
  %v2025 = vmul.f32 %v1966, %v2021
  %v2026 = vmul.f32 %v1971, %v2021
  %v2027 = vmul.f32 %v1976, %v2021
  %v2028 = vmul.f32 %v1981, %v2021
  %v2029 = vmul.f32 %v1986, %v2021
  %v2030 = vmul.f32 %v1991, %v2021
  %v2031 = vmul.f32 %v1996, %v2021
  %v2032 = vmul.f32 %v2001, %v2021
  %v2033 = vmul.f32 %v2006, %v2021
  %v2034 = vmul.f32 %v2011, %v2021
  %v2035 = vmul.f32 %v2016, %v2021
  %v2036 = vadd.f32 %v1920, %v2022
  %v2037 = vadd.f32 %v1921, %v2023
  %v2038 = vadd.f32 %v1922, %v2024
  %v2039 = vadd.f32 %v1923, %v2025
  %v2040 = vadd.f32 %v1924, %v2026
  %v2041 = vadd.f32 %v1925, %v2027
  %v2042 = vadd.f32 %v1926, %v2028
  %v2043 = vadd.f32 %v1927, %v2029
  %v2044 = vadd.f32 %v1928, %v2030
  %v2045 = vadd.f32 %v1929, %v2031
  %v2046 = vadd.f32 %v1930, %v2032
  %v2047 = vadd.f32 %v1931, %v2033
  %v2048 = vadd.f32 %v1932, %v2034
  %v2049 = vadd.f32 %v1933, %v2035
  %2050 = vset.pattern.permute.xlu0 1
  %2051 = vperm.xlu0 %2050, %v1934
  %v2052 = vpop.permute.xlu0 %2051
  %2054 = vset.pattern.permute.xlu0 1
  %2055 = vperm.xlu0 %2054, %v1935
  %v2056 = vpop.permute.xlu0 %2055
  %2058 = vset.pattern.permute.xlu0 1
  %2059 = vperm.xlu0 %2058, %v1936
  %v2060 = vpop.permute.xlu0 %2059
  %2062 = vset.pattern.permute.xlu0 1
  %2063 = vperm.xlu0 %2062, %v1937
  %v2064 = vpop.permute.xlu0 %2063
  %2066 = vset.pattern.permute.xlu0 1
  %2067 = vperm.xlu0 %2066, %v1938
  %v2068 = vpop.permute.xlu0 %2067
  %2070 = vset.pattern.permute.xlu0 1
  %2071 = vperm.xlu0 %2070, %v1939
  %v2072 = vpop.permute.xlu0 %2071
  %2074 = vset.pattern.permute.xlu0 1
  %2075 = vperm.xlu0 %2074, %v1940
  %v2076 = vpop.permute.xlu0 %2075
  %2078 = vset.pattern.permute.xlu0 1
  %2079 = vperm.xlu0 %2078, %v1941
  %v2080 = vpop.permute.xlu0 %2079
  %2082 = vset.pattern.permute.xlu0 1
  %2083 = vperm.xlu0 %2082, %v1942
  %v2084 = vpop.permute.xlu0 %2083
  %2086 = vset.pattern.permute.xlu0 1
  %2087 = vperm.xlu0 %2086, %v1943
  %v2088 = vpop.permute.xlu0 %2087
  %2090 = vset.pattern.permute.xlu0 1
  %2091 = vperm.xlu0 %2090, %v1944
  %v2092 = vpop.permute.xlu0 %2091
  %2094 = vset.pattern.permute.xlu0 1
  %2095 = vperm.xlu0 %2094, %v1945
  %v2096 = vpop.permute.xlu0 %2095
  %2098 = vset.pattern.permute.xlu0 1
  %2099 = vperm.xlu0 %2098, %v1946
  %v2100 = vpop.permute.xlu0 %2099
  %2102 = vset.pattern.permute.xlu0 1
  %2103 = vperm.xlu0 %2102, %v1947
  %v2104 = vpop.permute.xlu0 %2103
  %v2106 = vlaneseq
  %v2107 = vshrl.u32 %v2106, 7
  %v2108 = vsub.s32 5, %v2107
  %v2109 = vrot.slane %v27, %v2108
  %v2110 = vmul.f32 %v2052, %v2109
  %v2111 = vmul.f32 %v2056, %v2109
  %v2112 = vmul.f32 %v2060, %v2109
  %v2113 = vmul.f32 %v2064, %v2109
  %v2114 = vmul.f32 %v2068, %v2109
  %v2115 = vmul.f32 %v2072, %v2109
  %v2116 = vmul.f32 %v2076, %v2109
  %v2117 = vmul.f32 %v2080, %v2109
  %v2118 = vmul.f32 %v2084, %v2109
  %v2119 = vmul.f32 %v2088, %v2109
  %v2120 = vmul.f32 %v2092, %v2109
  %v2121 = vmul.f32 %v2096, %v2109
  %v2122 = vmul.f32 %v2100, %v2109
  %v2123 = vmul.f32 %v2104, %v2109
  %v2124 = vadd.f32 %v2036, %v2110
  %v2125 = vadd.f32 %v2037, %v2111
  %v2126 = vadd.f32 %v2038, %v2112
  %v2127 = vadd.f32 %v2039, %v2113
  %v2128 = vadd.f32 %v2040, %v2114
  %v2129 = vadd.f32 %v2041, %v2115
  %v2130 = vadd.f32 %v2042, %v2116
  %v2131 = vadd.f32 %v2043, %v2117
  %v2132 = vadd.f32 %v2044, %v2118
  %v2133 = vadd.f32 %v2045, %v2119
  %v2134 = vadd.f32 %v2046, %v2120
  %v2135 = vadd.f32 %v2047, %v2121
  %v2136 = vadd.f32 %v2048, %v2122
  %v2137 = vadd.f32 %v2049, %v2123
  %2138 = vset.pattern.permute.xlu0 2
  %2139 = vperm.xlu0 %2138, %v1934
  %v2140 = vpop.permute.xlu0 %2139
  %2142 = vset.pattern.permute.xlu0 2
  %2143 = vperm.xlu0 %2142, %v1935
  %v2144 = vpop.permute.xlu0 %2143
  %2146 = vset.pattern.permute.xlu0 2
  %2147 = vperm.xlu0 %2146, %v1936
  %v2148 = vpop.permute.xlu0 %2147
  %2150 = vset.pattern.permute.xlu0 2
  %2151 = vperm.xlu0 %2150, %v1937
  %v2152 = vpop.permute.xlu0 %2151
  %2154 = vset.pattern.permute.xlu0 2
  %2155 = vperm.xlu0 %2154, %v1938
  %v2156 = vpop.permute.xlu0 %2155
  %2158 = vset.pattern.permute.xlu0 2
  %2159 = vperm.xlu0 %2158, %v1939
  %v2160 = vpop.permute.xlu0 %2159
  %2162 = vset.pattern.permute.xlu0 2
  %2163 = vperm.xlu0 %2162, %v1940
  %v2164 = vpop.permute.xlu0 %2163
  %2166 = vset.pattern.permute.xlu0 2
  %2167 = vperm.xlu0 %2166, %v1941
  %v2168 = vpop.permute.xlu0 %2167
  %2170 = vset.pattern.permute.xlu0 2
  %2171 = vperm.xlu0 %2170, %v1942
  %v2172 = vpop.permute.xlu0 %2171
  %2174 = vset.pattern.permute.xlu0 2
  %2175 = vperm.xlu0 %2174, %v1943
  %v2176 = vpop.permute.xlu0 %2175
  %2178 = vset.pattern.permute.xlu0 2
  %2179 = vperm.xlu0 %2178, %v1944
  %v2180 = vpop.permute.xlu0 %2179
  %2182 = vset.pattern.permute.xlu0 2
  %2183 = vperm.xlu0 %2182, %v1945
  %v2184 = vpop.permute.xlu0 %2183
  %2186 = vset.pattern.permute.xlu0 2
  %2187 = vperm.xlu0 %2186, %v1946
  %v2188 = vpop.permute.xlu0 %2187
  %2190 = vset.pattern.permute.xlu0 2
  %2191 = vperm.xlu0 %2190, %v1947
  %v2192 = vpop.permute.xlu0 %2191
  %v2194 = vlaneseq
  %v2195 = vshrl.u32 %v2194, 7
  %v2196 = vsub.s32 6, %v2195
  %v2197 = vrot.slane %v27, %v2196
  %v2198 = vmul.f32 %v2140, %v2197
  %v2199 = vmul.f32 %v2144, %v2197
  %v2200 = vmul.f32 %v2148, %v2197
  %v2201 = vmul.f32 %v2152, %v2197
  %v2202 = vmul.f32 %v2156, %v2197
  %v2203 = vmul.f32 %v2160, %v2197
  %v2204 = vmul.f32 %v2164, %v2197
  %v2205 = vmul.f32 %v2168, %v2197
  %v2206 = vmul.f32 %v2172, %v2197
  %v2207 = vmul.f32 %v2176, %v2197
  %v2208 = vmul.f32 %v2180, %v2197
  %v2209 = vmul.f32 %v2184, %v2197
  %v2210 = vmul.f32 %v2188, %v2197
  %v2211 = vmul.f32 %v2192, %v2197
  %v2212 = vadd.f32 %v2124, %v2198
  %v2213 = vadd.f32 %v2125, %v2199
  %v2214 = vadd.f32 %v2126, %v2200
  %v2215 = vadd.f32 %v2127, %v2201
  %v2216 = vadd.f32 %v2128, %v2202
  %v2217 = vadd.f32 %v2129, %v2203
  %v2218 = vadd.f32 %v2130, %v2204
  %v2219 = vadd.f32 %v2131, %v2205
  %v2220 = vadd.f32 %v2132, %v2206
  %v2221 = vadd.f32 %v2133, %v2207
  %v2222 = vadd.f32 %v2134, %v2208
  %v2223 = vadd.f32 %v2135, %v2209
  %v2224 = vadd.f32 %v2136, %v2210
  %v2225 = vadd.f32 %v2137, %v2211
  %2226 = vset.pattern.permute.xlu0 3
  %2227 = vperm.xlu0 %2226, %v1934
  %v2228 = vpop.permute.xlu0 %2227
  %2230 = vset.pattern.permute.xlu0 3
  %2231 = vperm.xlu0 %2230, %v1935
  %v2232 = vpop.permute.xlu0 %2231
  %2234 = vset.pattern.permute.xlu0 3
  %2235 = vperm.xlu0 %2234, %v1936
  %v2236 = vpop.permute.xlu0 %2235
  %2238 = vset.pattern.permute.xlu0 3
  %2239 = vperm.xlu0 %2238, %v1937
  %v2240 = vpop.permute.xlu0 %2239
  %2242 = vset.pattern.permute.xlu0 3
  %2243 = vperm.xlu0 %2242, %v1938
  %v2244 = vpop.permute.xlu0 %2243
  %2246 = vset.pattern.permute.xlu0 3
  %2247 = vperm.xlu0 %2246, %v1939
  %v2248 = vpop.permute.xlu0 %2247
  %2250 = vset.pattern.permute.xlu0 3
  %2251 = vperm.xlu0 %2250, %v1940
  %v2252 = vpop.permute.xlu0 %2251
  %2254 = vset.pattern.permute.xlu0 3
  %2255 = vperm.xlu0 %2254, %v1941
  %v2256 = vpop.permute.xlu0 %2255
  %2258 = vset.pattern.permute.xlu0 3
  %2259 = vperm.xlu0 %2258, %v1942
  %v2260 = vpop.permute.xlu0 %2259
  %2262 = vset.pattern.permute.xlu0 3
  %2263 = vperm.xlu0 %2262, %v1943
  %v2264 = vpop.permute.xlu0 %2263
  %2266 = vset.pattern.permute.xlu0 3
  %2267 = vperm.xlu0 %2266, %v1944
  %v2268 = vpop.permute.xlu0 %2267
  %2270 = vset.pattern.permute.xlu0 3
  %2271 = vperm.xlu0 %2270, %v1945
  %v2272 = vpop.permute.xlu0 %2271
  %2274 = vset.pattern.permute.xlu0 3
  %2275 = vperm.xlu0 %2274, %v1946
  %v2276 = vpop.permute.xlu0 %2275
  %2278 = vset.pattern.permute.xlu0 3
  %2279 = vperm.xlu0 %2278, %v1947
  %v2280 = vpop.permute.xlu0 %2279
  %v2282 = vlaneseq
  %v2283 = vshrl.u32 %v2282, 7
  %v2284 = vsub.s32 7, %v2283
  %v2285 = vrot.slane %v27, %v2284
  %v2286 = vmul.f32 %v2228, %v2285
  %v2287 = vmul.f32 %v2232, %v2285
  %v2288 = vmul.f32 %v2236, %v2285
  %v2289 = vmul.f32 %v2240, %v2285
  %v2290 = vmul.f32 %v2244, %v2285
  %v2291 = vmul.f32 %v2248, %v2285
  %v2292 = vmul.f32 %v2252, %v2285
  %v2293 = vmul.f32 %v2256, %v2285
  %v2294 = vmul.f32 %v2260, %v2285
  %v2295 = vmul.f32 %v2264, %v2285
  %v2296 = vmul.f32 %v2268, %v2285
  %v2297 = vmul.f32 %v2272, %v2285
  %v2298 = vmul.f32 %v2276, %v2285
  %v2299 = vmul.f32 %v2280, %v2285
  %v2300 = vadd.f32 %v2212, %v2286
  %v2301 = vadd.f32 %v2213, %v2287
  %v2302 = vadd.f32 %v2214, %v2288
  %v2303 = vadd.f32 %v2215, %v2289
  %v2304 = vadd.f32 %v2216, %v2290
  %v2305 = vadd.f32 %v2217, %v2291
  %v2306 = vadd.f32 %v2218, %v2292
  %v2307 = vadd.f32 %v2219, %v2293
  %v2308 = vadd.f32 %v2220, %v2294
  %v2309 = vadd.f32 %v2221, %v2295
  %v2310 = vadd.f32 %v2222, %v2296
  %v2311 = vadd.f32 %v2223, %v2297
  %v2312 = vadd.f32 %v2224, %v2298
  %v2313 = vadd.f32 %v2225, %v2299
  %s2314 = scalar_lea.vmem %s0, 8
  %v2315 = vld [vmem:[%s2314] sm:$0x7f]
  %v2316 = vld [vmem:[%s2314 + $0x8] sm:$0x7f]
  %v2317 = vld [vmem:[%s2314 + $0x10] sm:$0x7f]
  %v2318 = vld [vmem:[%s2314 + $0x18] sm:$0x7f]
  %v2319 = vld [vmem:[%s2314 + $0x20] sm:$0x7f]
  %v2320 = vld [vmem:[%s2314 + $0x28] sm:$0x7f]
  %v2321 = vld [vmem:[%s2314 + $0x30] sm:$0x7f]
  %v2322 = vld [vmem:[%s2314 + $0x40] sm:$0x7f]
  %v2323 = vld [vmem:[%s2314 + $0x48] sm:$0x7f]
  %v2324 = vld [vmem:[%s2314 + $0x50] sm:$0x7f]
  %v2325 = vld [vmem:[%s2314 + $0x58] sm:$0x7f]
  %v2326 = vld [vmem:[%s2314 + $0x60] sm:$0x7f]
  %v2327 = vld [vmem:[%s2314 + $0x68] sm:$0x7f]
  %v2328 = vld [vmem:[%s2314 + $0x70] sm:$0x7f]
  %2330 = vset.pattern.permute.xlu0 0
  %2331 = vperm.xlu0 %2330, %v2315
  %v2332 = vpop.permute.xlu0 %2331
  %2335 = vset.pattern.permute.xlu0 0
  %2336 = vperm.xlu0 %2335, %v2316
  %v2337 = vpop.permute.xlu0 %2336
  %2340 = vset.pattern.permute.xlu0 0
  %2341 = vperm.xlu0 %2340, %v2317
  %v2342 = vpop.permute.xlu0 %2341
  %2345 = vset.pattern.permute.xlu0 0
  %2346 = vperm.xlu0 %2345, %v2318
  %v2347 = vpop.permute.xlu0 %2346
  %2350 = vset.pattern.permute.xlu0 0
  %2351 = vperm.xlu0 %2350, %v2319
  %v2352 = vpop.permute.xlu0 %2351
  %2355 = vset.pattern.permute.xlu0 0
  %2356 = vperm.xlu0 %2355, %v2320
  %v2357 = vpop.permute.xlu0 %2356
  %2360 = vset.pattern.permute.xlu0 0
  %2361 = vperm.xlu0 %2360, %v2321
  %v2362 = vpop.permute.xlu0 %2361
  %2365 = vset.pattern.permute.xlu0 0
  %2366 = vperm.xlu0 %2365, %v2322
  %v2367 = vpop.permute.xlu0 %2366
  %2370 = vset.pattern.permute.xlu0 0
  %2371 = vperm.xlu0 %2370, %v2323
  %v2372 = vpop.permute.xlu0 %2371
  %2375 = vset.pattern.permute.xlu0 0
  %2376 = vperm.xlu0 %2375, %v2324
  %v2377 = vpop.permute.xlu0 %2376
  %2380 = vset.pattern.permute.xlu0 0
  %2381 = vperm.xlu0 %2380, %v2325
  %v2382 = vpop.permute.xlu0 %2381
  %2385 = vset.pattern.permute.xlu0 0
  %2386 = vperm.xlu0 %2385, %v2326
  %v2387 = vpop.permute.xlu0 %2386
  %2390 = vset.pattern.permute.xlu0 0
  %2391 = vperm.xlu0 %2390, %v2327
  %v2392 = vpop.permute.xlu0 %2391
  %2395 = vset.pattern.permute.xlu0 0
  %2396 = vperm.xlu0 %2395, %v2328
  %v2397 = vpop.permute.xlu0 %2396
  %v2399 = vlaneseq
  %v2400 = vshrl.u32 %v2399, 7
  %v2401 = vsub.s32 0, %v2400
  %v2402 = vrot.slane %v28, %v2401
  %v2403 = vmul.f32 %v2332, %v2402
  %v2404 = vmul.f32 %v2337, %v2402
  %v2405 = vmul.f32 %v2342, %v2402
  %v2406 = vmul.f32 %v2347, %v2402
  %v2407 = vmul.f32 %v2352, %v2402
  %v2408 = vmul.f32 %v2357, %v2402
  %v2409 = vmul.f32 %v2362, %v2402
  %v2410 = vmul.f32 %v2367, %v2402
  %v2411 = vmul.f32 %v2372, %v2402
  %v2412 = vmul.f32 %v2377, %v2402
  %v2413 = vmul.f32 %v2382, %v2402
  %v2414 = vmul.f32 %v2387, %v2402
  %v2415 = vmul.f32 %v2392, %v2402
  %v2416 = vmul.f32 %v2397, %v2402
  %v2417 = vadd.f32 %v2300, %v2403
  %v2418 = vadd.f32 %v2301, %v2404
  %v2419 = vadd.f32 %v2302, %v2405
  %v2420 = vadd.f32 %v2303, %v2406
  %v2421 = vadd.f32 %v2304, %v2407
  %v2422 = vadd.f32 %v2305, %v2408
  %v2423 = vadd.f32 %v2306, %v2409
  %v2424 = vadd.f32 %v2307, %v2410
  %v2425 = vadd.f32 %v2308, %v2411
  %v2426 = vadd.f32 %v2309, %v2412
  %v2427 = vadd.f32 %v2310, %v2413
  %v2428 = vadd.f32 %v2311, %v2414
  %v2429 = vadd.f32 %v2312, %v2415
  %v2430 = vadd.f32 %v2313, %v2416
  %2431 = vset.pattern.permute.xlu0 1
  %2432 = vperm.xlu0 %2431, %v2315
  %v2433 = vpop.permute.xlu0 %2432
  %2435 = vset.pattern.permute.xlu0 1
  %2436 = vperm.xlu0 %2435, %v2316
  %v2437 = vpop.permute.xlu0 %2436
  %2439 = vset.pattern.permute.xlu0 1
  %2440 = vperm.xlu0 %2439, %v2317
  %v2441 = vpop.permute.xlu0 %2440
  %2443 = vset.pattern.permute.xlu0 1
  %2444 = vperm.xlu0 %2443, %v2318
  %v2445 = vpop.permute.xlu0 %2444
  %2447 = vset.pattern.permute.xlu0 1
  %2448 = vperm.xlu0 %2447, %v2319
  %v2449 = vpop.permute.xlu0 %2448
  %2451 = vset.pattern.permute.xlu0 1
  %2452 = vperm.xlu0 %2451, %v2320
  %v2453 = vpop.permute.xlu0 %2452
  %2455 = vset.pattern.permute.xlu0 1
  %2456 = vperm.xlu0 %2455, %v2321
  %v2457 = vpop.permute.xlu0 %2456
  %2459 = vset.pattern.permute.xlu0 1
  %2460 = vperm.xlu0 %2459, %v2322
  %v2461 = vpop.permute.xlu0 %2460
  %2463 = vset.pattern.permute.xlu0 1
  %2464 = vperm.xlu0 %2463, %v2323
  %v2465 = vpop.permute.xlu0 %2464
  %2467 = vset.pattern.permute.xlu0 1
  %2468 = vperm.xlu0 %2467, %v2324
  %v2469 = vpop.permute.xlu0 %2468
  %2471 = vset.pattern.permute.xlu0 1
  %2472 = vperm.xlu0 %2471, %v2325
  %v2473 = vpop.permute.xlu0 %2472
  %2475 = vset.pattern.permute.xlu0 1
  %2476 = vperm.xlu0 %2475, %v2326
  %v2477 = vpop.permute.xlu0 %2476
  %2479 = vset.pattern.permute.xlu0 1
  %2480 = vperm.xlu0 %2479, %v2327
  %v2481 = vpop.permute.xlu0 %2480
  %2483 = vset.pattern.permute.xlu0 1
  %2484 = vperm.xlu0 %2483, %v2328
  %v2485 = vpop.permute.xlu0 %2484
  %v2487 = vlaneseq
  %v2488 = vshrl.u32 %v2487, 7
  %v2489 = vsub.s32 1, %v2488
  %v2490 = vrot.slane %v28, %v2489
  %v2491 = vmul.f32 %v2433, %v2490
  %v2492 = vmul.f32 %v2437, %v2490
  %v2493 = vmul.f32 %v2441, %v2490
  %v2494 = vmul.f32 %v2445, %v2490
  %v2495 = vmul.f32 %v2449, %v2490
  %v2496 = vmul.f32 %v2453, %v2490
  %v2497 = vmul.f32 %v2457, %v2490
  %v2498 = vmul.f32 %v2461, %v2490
  %v2499 = vmul.f32 %v2465, %v2490
  %v2500 = vmul.f32 %v2469, %v2490
  %v2501 = vmul.f32 %v2473, %v2490
  %v2502 = vmul.f32 %v2477, %v2490
  %v2503 = vmul.f32 %v2481, %v2490
  %v2504 = vmul.f32 %v2485, %v2490
  %v2505 = vadd.f32 %v2417, %v2491
  %v2506 = vadd.f32 %v2418, %v2492
  %v2507 = vadd.f32 %v2419, %v2493
  %v2508 = vadd.f32 %v2420, %v2494
  %v2509 = vadd.f32 %v2421, %v2495
  %v2510 = vadd.f32 %v2422, %v2496
  %v2511 = vadd.f32 %v2423, %v2497
  %v2512 = vadd.f32 %v2424, %v2498
  %v2513 = vadd.f32 %v2425, %v2499
  %v2514 = vadd.f32 %v2426, %v2500
  %v2515 = vadd.f32 %v2427, %v2501
  %v2516 = vadd.f32 %v2428, %v2502
  %v2517 = vadd.f32 %v2429, %v2503
  %v2518 = vadd.f32 %v2430, %v2504
  %2519 = vset.pattern.permute.xlu0 2
  %2520 = vperm.xlu0 %2519, %v2315
  %v2521 = vpop.permute.xlu0 %2520
  %2523 = vset.pattern.permute.xlu0 2
  %2524 = vperm.xlu0 %2523, %v2316
  %v2525 = vpop.permute.xlu0 %2524
  %2527 = vset.pattern.permute.xlu0 2
  %2528 = vperm.xlu0 %2527, %v2317
  %v2529 = vpop.permute.xlu0 %2528
  %2531 = vset.pattern.permute.xlu0 2
  %2532 = vperm.xlu0 %2531, %v2318
  %v2533 = vpop.permute.xlu0 %2532
  %2535 = vset.pattern.permute.xlu0 2
  %2536 = vperm.xlu0 %2535, %v2319
  %v2537 = vpop.permute.xlu0 %2536
  %2539 = vset.pattern.permute.xlu0 2
  %2540 = vperm.xlu0 %2539, %v2320
  %v2541 = vpop.permute.xlu0 %2540
  %2543 = vset.pattern.permute.xlu0 2
  %2544 = vperm.xlu0 %2543, %v2321
  %v2545 = vpop.permute.xlu0 %2544
  %2547 = vset.pattern.permute.xlu0 2
  %2548 = vperm.xlu0 %2547, %v2322
  %v2549 = vpop.permute.xlu0 %2548
  %2551 = vset.pattern.permute.xlu0 2
  %2552 = vperm.xlu0 %2551, %v2323
  %v2553 = vpop.permute.xlu0 %2552
  %2555 = vset.pattern.permute.xlu0 2
  %2556 = vperm.xlu0 %2555, %v2324
  %v2557 = vpop.permute.xlu0 %2556
  %2559 = vset.pattern.permute.xlu0 2
  %2560 = vperm.xlu0 %2559, %v2325
  %v2561 = vpop.permute.xlu0 %2560
  %2563 = vset.pattern.permute.xlu0 2
  %2564 = vperm.xlu0 %2563, %v2326
  %v2565 = vpop.permute.xlu0 %2564
  %2567 = vset.pattern.permute.xlu0 2
  %2568 = vperm.xlu0 %2567, %v2327
  %v2569 = vpop.permute.xlu0 %2568
  %2571 = vset.pattern.permute.xlu0 2
  %2572 = vperm.xlu0 %2571, %v2328
  %v2573 = vpop.permute.xlu0 %2572
  %v2575 = vlaneseq
  %v2576 = vshrl.u32 %v2575, 7
  %v2577 = vsub.s32 2, %v2576
  %v2578 = vrot.slane %v28, %v2577
  %v2579 = vmul.f32 %v2521, %v2578
  %v2580 = vmul.f32 %v2525, %v2578
  %v2581 = vmul.f32 %v2529, %v2578
  %v2582 = vmul.f32 %v2533, %v2578
  %v2583 = vmul.f32 %v2537, %v2578
  %v2584 = vmul.f32 %v2541, %v2578
  %v2585 = vmul.f32 %v2545, %v2578
  %v2586 = vmul.f32 %v2549, %v2578
  %v2587 = vmul.f32 %v2553, %v2578
  %v2588 = vmul.f32 %v2557, %v2578
  %v2589 = vmul.f32 %v2561, %v2578
  %v2590 = vmul.f32 %v2565, %v2578
  %v2591 = vmul.f32 %v2569, %v2578
  %v2592 = vmul.f32 %v2573, %v2578
  %v2593 = vadd.f32 %v2505, %v2579
  %v2594 = vadd.f32 %v2506, %v2580
  %v2595 = vadd.f32 %v2507, %v2581
  %v2596 = vadd.f32 %v2508, %v2582
  %v2597 = vadd.f32 %v2509, %v2583
  %v2598 = vadd.f32 %v2510, %v2584
  %v2599 = vadd.f32 %v2511, %v2585
  %v2600 = vadd.f32 %v2512, %v2586
  %v2601 = vadd.f32 %v2513, %v2587
  %v2602 = vadd.f32 %v2514, %v2588
  %v2603 = vadd.f32 %v2515, %v2589
  %v2604 = vadd.f32 %v2516, %v2590
  %v2605 = vadd.f32 %v2517, %v2591
  %v2606 = vadd.f32 %v2518, %v2592
  %2607 = vset.pattern.permute.xlu0 3
  %2608 = vperm.xlu0 %2607, %v2315
  %v2609 = vpop.permute.xlu0 %2608
  %2611 = vset.pattern.permute.xlu0 3
  %2612 = vperm.xlu0 %2611, %v2316
  %v2613 = vpop.permute.xlu0 %2612
  %2615 = vset.pattern.permute.xlu0 3
  %2616 = vperm.xlu0 %2615, %v2317
  %v2617 = vpop.permute.xlu0 %2616
  %2619 = vset.pattern.permute.xlu0 3
  %2620 = vperm.xlu0 %2619, %v2318
  %v2621 = vpop.permute.xlu0 %2620
  %2623 = vset.pattern.permute.xlu0 3
  %2624 = vperm.xlu0 %2623, %v2319
  %v2625 = vpop.permute.xlu0 %2624
  %2627 = vset.pattern.permute.xlu0 3
  %2628 = vperm.xlu0 %2627, %v2320
  %v2629 = vpop.permute.xlu0 %2628
  %2631 = vset.pattern.permute.xlu0 3
  %2632 = vperm.xlu0 %2631, %v2321
  %v2633 = vpop.permute.xlu0 %2632
  %2635 = vset.pattern.permute.xlu0 3
  %2636 = vperm.xlu0 %2635, %v2322
  %v2637 = vpop.permute.xlu0 %2636
  %2639 = vset.pattern.permute.xlu0 3
  %2640 = vperm.xlu0 %2639, %v2323
  %v2641 = vpop.permute.xlu0 %2640
  %2643 = vset.pattern.permute.xlu0 3
  %2644 = vperm.xlu0 %2643, %v2324
  %v2645 = vpop.permute.xlu0 %2644
  %2647 = vset.pattern.permute.xlu0 3
  %2648 = vperm.xlu0 %2647, %v2325
  %v2649 = vpop.permute.xlu0 %2648
  %2651 = vset.pattern.permute.xlu0 3
  %2652 = vperm.xlu0 %2651, %v2326
  %v2653 = vpop.permute.xlu0 %2652
  %2655 = vset.pattern.permute.xlu0 3
  %2656 = vperm.xlu0 %2655, %v2327
  %v2657 = vpop.permute.xlu0 %2656
  %2659 = vset.pattern.permute.xlu0 3
  %2660 = vperm.xlu0 %2659, %v2328
  %v2661 = vpop.permute.xlu0 %2660
  %v2663 = vlaneseq
  %v2664 = vshrl.u32 %v2663, 7
  %v2665 = vsub.s32 3, %v2664
  %v2666 = vrot.slane %v28, %v2665
  %v2667 = vmul.f32 %v2609, %v2666
  %v2668 = vmul.f32 %v2613, %v2666
  %v2669 = vmul.f32 %v2617, %v2666
  %v2670 = vmul.f32 %v2621, %v2666
  %v2671 = vmul.f32 %v2625, %v2666
  %v2672 = vmul.f32 %v2629, %v2666
  %v2673 = vmul.f32 %v2633, %v2666
  %v2674 = vmul.f32 %v2637, %v2666
  %v2675 = vmul.f32 %v2641, %v2666
  %v2676 = vmul.f32 %v2645, %v2666
  %v2677 = vmul.f32 %v2649, %v2666
  %v2678 = vmul.f32 %v2653, %v2666
  %v2679 = vmul.f32 %v2657, %v2666
  %v2680 = vmul.f32 %v2661, %v2666
  %v2681 = vadd.f32 %v2593, %v2667
  %v2682 = vadd.f32 %v2594, %v2668
  %v2683 = vadd.f32 %v2595, %v2669
  %v2684 = vadd.f32 %v2596, %v2670
  %v2685 = vadd.f32 %v2597, %v2671
  %v2686 = vadd.f32 %v2598, %v2672
  %v2687 = vadd.f32 %v2599, %v2673
  %v2688 = vadd.f32 %v2600, %v2674
  %v2689 = vadd.f32 %v2601, %v2675
  %v2690 = vadd.f32 %v2602, %v2676
  %v2691 = vadd.f32 %v2603, %v2677
  %v2692 = vadd.f32 %v2604, %v2678
  %v2693 = vadd.f32 %v2605, %v2679
  %v2694 = vadd.f32 %v2606, %v2680
  %s2695 = scalar_lea.vmem %s0, 136
  %v2696 = vld [vmem:[%s2695] sm:$0x7f]
  %v2697 = vld [vmem:[%s2695 + $0x8] sm:$0x7f]
  %v2698 = vld [vmem:[%s2695 + $0x10] sm:$0x7f]
  %v2699 = vld [vmem:[%s2695 + $0x18] sm:$0x7f]
  %v2700 = vld [vmem:[%s2695 + $0x20] sm:$0x7f]
  %v2701 = vld [vmem:[%s2695 + $0x28] sm:$0x7f]
  %v2702 = vld [vmem:[%s2695 + $0x30] sm:$0x7f]
  %v2703 = vld [vmem:[%s2695 + $0x40] sm:$0x7f]
  %v2704 = vld [vmem:[%s2695 + $0x48] sm:$0x7f]
  %v2705 = vld [vmem:[%s2695 + $0x50] sm:$0x7f]
  %v2706 = vld [vmem:[%s2695 + $0x58] sm:$0x7f]
  %v2707 = vld [vmem:[%s2695 + $0x60] sm:$0x7f]
  %v2708 = vld [vmem:[%s2695 + $0x68] sm:$0x7f]
  %v2709 = vld [vmem:[%s2695 + $0x70] sm:$0x7f]
  %2711 = vset.pattern.permute.xlu0 0
  %2712 = vperm.xlu0 %2711, %v2696
  %v2713 = vpop.permute.xlu0 %2712
  %2716 = vset.pattern.permute.xlu0 0
  %2717 = vperm.xlu0 %2716, %v2697
  %v2718 = vpop.permute.xlu0 %2717
  %2721 = vset.pattern.permute.xlu0 0
  %2722 = vperm.xlu0 %2721, %v2698
  %v2723 = vpop.permute.xlu0 %2722
  %2726 = vset.pattern.permute.xlu0 0
  %2727 = vperm.xlu0 %2726, %v2699
  %v2728 = vpop.permute.xlu0 %2727
  %2731 = vset.pattern.permute.xlu0 0
  %2732 = vperm.xlu0 %2731, %v2700
  %v2733 = vpop.permute.xlu0 %2732
  %2736 = vset.pattern.permute.xlu0 0
  %2737 = vperm.xlu0 %2736, %v2701
  %v2738 = vpop.permute.xlu0 %2737
  %2741 = vset.pattern.permute.xlu0 0
  %2742 = vperm.xlu0 %2741, %v2702
  %v2743 = vpop.permute.xlu0 %2742
  %2746 = vset.pattern.permute.xlu0 0
  %2747 = vperm.xlu0 %2746, %v2703
  %v2748 = vpop.permute.xlu0 %2747
  %2751 = vset.pattern.permute.xlu0 0
  %2752 = vperm.xlu0 %2751, %v2704
  %v2753 = vpop.permute.xlu0 %2752
  %2756 = vset.pattern.permute.xlu0 0
  %2757 = vperm.xlu0 %2756, %v2705
  %v2758 = vpop.permute.xlu0 %2757
  %2761 = vset.pattern.permute.xlu0 0
  %2762 = vperm.xlu0 %2761, %v2706
  %v2763 = vpop.permute.xlu0 %2762
  %2766 = vset.pattern.permute.xlu0 0
  %2767 = vperm.xlu0 %2766, %v2707
  %v2768 = vpop.permute.xlu0 %2767
  %2771 = vset.pattern.permute.xlu0 0
  %2772 = vperm.xlu0 %2771, %v2708
  %v2773 = vpop.permute.xlu0 %2772
  %2776 = vset.pattern.permute.xlu0 0
  %2777 = vperm.xlu0 %2776, %v2709
  %v2778 = vpop.permute.xlu0 %2777
  %v2780 = vlaneseq
  %v2781 = vshrl.u32 %v2780, 7
  %v2782 = vsub.s32 4, %v2781
  %v2783 = vrot.slane %v28, %v2782
  %v2784 = vmul.f32 %v2713, %v2783
  %v2785 = vmul.f32 %v2718, %v2783
  %v2786 = vmul.f32 %v2723, %v2783
  %v2787 = vmul.f32 %v2728, %v2783
  %v2788 = vmul.f32 %v2733, %v2783
  %v2789 = vmul.f32 %v2738, %v2783
  %v2790 = vmul.f32 %v2743, %v2783
  %v2791 = vmul.f32 %v2748, %v2783
  %v2792 = vmul.f32 %v2753, %v2783
  %v2793 = vmul.f32 %v2758, %v2783
  %v2794 = vmul.f32 %v2763, %v2783
  %v2795 = vmul.f32 %v2768, %v2783
  %v2796 = vmul.f32 %v2773, %v2783
  %v2797 = vmul.f32 %v2778, %v2783
  %v2798 = vadd.f32 %v2681, %v2784
  %v2799 = vadd.f32 %v2682, %v2785
  %v2800 = vadd.f32 %v2683, %v2786
  %v2801 = vadd.f32 %v2684, %v2787
  %v2802 = vadd.f32 %v2685, %v2788
  %v2803 = vadd.f32 %v2686, %v2789
  %v2804 = vadd.f32 %v2687, %v2790
  %v2805 = vadd.f32 %v2688, %v2791
  %v2806 = vadd.f32 %v2689, %v2792
  %v2807 = vadd.f32 %v2690, %v2793
  %v2808 = vadd.f32 %v2691, %v2794
  %v2809 = vadd.f32 %v2692, %v2795
  %v2810 = vadd.f32 %v2693, %v2796
  %v2811 = vadd.f32 %v2694, %v2797
  %2812 = vset.pattern.permute.xlu0 1
  %2813 = vperm.xlu0 %2812, %v2696
  %v2814 = vpop.permute.xlu0 %2813
  %2816 = vset.pattern.permute.xlu0 1
  %2817 = vperm.xlu0 %2816, %v2697
  %v2818 = vpop.permute.xlu0 %2817
  %2820 = vset.pattern.permute.xlu0 1
  %2821 = vperm.xlu0 %2820, %v2698
  %v2822 = vpop.permute.xlu0 %2821
  %2824 = vset.pattern.permute.xlu0 1
  %2825 = vperm.xlu0 %2824, %v2699
  %v2826 = vpop.permute.xlu0 %2825
  %2828 = vset.pattern.permute.xlu0 1
  %2829 = vperm.xlu0 %2828, %v2700
  %v2830 = vpop.permute.xlu0 %2829
  %2832 = vset.pattern.permute.xlu0 1
  %2833 = vperm.xlu0 %2832, %v2701
  %v2834 = vpop.permute.xlu0 %2833
  %2836 = vset.pattern.permute.xlu0 1
  %2837 = vperm.xlu0 %2836, %v2702
  %v2838 = vpop.permute.xlu0 %2837
  %2840 = vset.pattern.permute.xlu0 1
  %2841 = vperm.xlu0 %2840, %v2703
  %v2842 = vpop.permute.xlu0 %2841
  %2844 = vset.pattern.permute.xlu0 1
  %2845 = vperm.xlu0 %2844, %v2704
  %v2846 = vpop.permute.xlu0 %2845
  %2848 = vset.pattern.permute.xlu0 1
  %2849 = vperm.xlu0 %2848, %v2705
  %v2850 = vpop.permute.xlu0 %2849
  %2852 = vset.pattern.permute.xlu0 1
  %2853 = vperm.xlu0 %2852, %v2706
  %v2854 = vpop.permute.xlu0 %2853
  %2856 = vset.pattern.permute.xlu0 1
  %2857 = vperm.xlu0 %2856, %v2707
  %v2858 = vpop.permute.xlu0 %2857
  %2860 = vset.pattern.permute.xlu0 1
  %2861 = vperm.xlu0 %2860, %v2708
  %v2862 = vpop.permute.xlu0 %2861
  %2864 = vset.pattern.permute.xlu0 1
  %2865 = vperm.xlu0 %2864, %v2709
  %v2866 = vpop.permute.xlu0 %2865
  %v2868 = vlaneseq
  %v2869 = vshrl.u32 %v2868, 7
  %v2870 = vsub.s32 5, %v2869
  %v2871 = vrot.slane %v28, %v2870
  %v2872 = vmul.f32 %v2814, %v2871
  %v2873 = vmul.f32 %v2818, %v2871
  %v2874 = vmul.f32 %v2822, %v2871
  %v2875 = vmul.f32 %v2826, %v2871
  %v2876 = vmul.f32 %v2830, %v2871
  %v2877 = vmul.f32 %v2834, %v2871
  %v2878 = vmul.f32 %v2838, %v2871
  %v2879 = vmul.f32 %v2842, %v2871
  %v2880 = vmul.f32 %v2846, %v2871
  %v2881 = vmul.f32 %v2850, %v2871
  %v2882 = vmul.f32 %v2854, %v2871
  %v2883 = vmul.f32 %v2858, %v2871
  %v2884 = vmul.f32 %v2862, %v2871
  %v2885 = vmul.f32 %v2866, %v2871
  %v2886 = vadd.f32 %v2798, %v2872
  %v2887 = vadd.f32 %v2799, %v2873
  %v2888 = vadd.f32 %v2800, %v2874
  %v2889 = vadd.f32 %v2801, %v2875
  %v2890 = vadd.f32 %v2802, %v2876
  %v2891 = vadd.f32 %v2803, %v2877
  %v2892 = vadd.f32 %v2804, %v2878
  %v2893 = vadd.f32 %v2805, %v2879
  %v2894 = vadd.f32 %v2806, %v2880
  %v2895 = vadd.f32 %v2807, %v2881
  %v2896 = vadd.f32 %v2808, %v2882
  %v2897 = vadd.f32 %v2809, %v2883
  %v2898 = vadd.f32 %v2810, %v2884
  %v2899 = vadd.f32 %v2811, %v2885
  %2900 = vset.pattern.permute.xlu0 2
  %2901 = vperm.xlu0 %2900, %v2696
  %v2902 = vpop.permute.xlu0 %2901
  %2904 = vset.pattern.permute.xlu0 2
  %2905 = vperm.xlu0 %2904, %v2697
  %v2906 = vpop.permute.xlu0 %2905
  %2908 = vset.pattern.permute.xlu0 2
  %2909 = vperm.xlu0 %2908, %v2698
  %v2910 = vpop.permute.xlu0 %2909
  %2912 = vset.pattern.permute.xlu0 2
  %2913 = vperm.xlu0 %2912, %v2699
  %v2914 = vpop.permute.xlu0 %2913
  %2916 = vset.pattern.permute.xlu0 2
  %2917 = vperm.xlu0 %2916, %v2700
  %v2918 = vpop.permute.xlu0 %2917
  %2920 = vset.pattern.permute.xlu0 2
  %2921 = vperm.xlu0 %2920, %v2701
  %v2922 = vpop.permute.xlu0 %2921
  %2924 = vset.pattern.permute.xlu0 2
  %2925 = vperm.xlu0 %2924, %v2702
  %v2926 = vpop.permute.xlu0 %2925
  %2928 = vset.pattern.permute.xlu0 2
  %2929 = vperm.xlu0 %2928, %v2703
  %v2930 = vpop.permute.xlu0 %2929
  %2932 = vset.pattern.permute.xlu0 2
  %2933 = vperm.xlu0 %2932, %v2704
  %v2934 = vpop.permute.xlu0 %2933
  %2936 = vset.pattern.permute.xlu0 2
  %2937 = vperm.xlu0 %2936, %v2705
  %v2938 = vpop.permute.xlu0 %2937
  %2940 = vset.pattern.permute.xlu0 2
  %2941 = vperm.xlu0 %2940, %v2706
  %v2942 = vpop.permute.xlu0 %2941
  %2944 = vset.pattern.permute.xlu0 2
  %2945 = vperm.xlu0 %2944, %v2707
  %v2946 = vpop.permute.xlu0 %2945
  %2948 = vset.pattern.permute.xlu0 2
  %2949 = vperm.xlu0 %2948, %v2708
  %v2950 = vpop.permute.xlu0 %2949
  %2952 = vset.pattern.permute.xlu0 2
  %2953 = vperm.xlu0 %2952, %v2709
  %v2954 = vpop.permute.xlu0 %2953
  %v2956 = vlaneseq
  %v2957 = vshrl.u32 %v2956, 7
  %v2958 = vsub.s32 6, %v2957
  %v2959 = vrot.slane %v28, %v2958
  %v2960 = vmul.f32 %v2902, %v2959
  %v2961 = vmul.f32 %v2906, %v2959
  %v2962 = vmul.f32 %v2910, %v2959
  %v2963 = vmul.f32 %v2914, %v2959
  %v2964 = vmul.f32 %v2918, %v2959
  %v2965 = vmul.f32 %v2922, %v2959
  %v2966 = vmul.f32 %v2926, %v2959
  %v2967 = vmul.f32 %v2930, %v2959
  %v2968 = vmul.f32 %v2934, %v2959
  %v2969 = vmul.f32 %v2938, %v2959
  %v2970 = vmul.f32 %v2942, %v2959
  %v2971 = vmul.f32 %v2946, %v2959
  %v2972 = vmul.f32 %v2950, %v2959
  %v2973 = vmul.f32 %v2954, %v2959
  %v2974 = vadd.f32 %v2886, %v2960
  %v2975 = vadd.f32 %v2887, %v2961
  %v2976 = vadd.f32 %v2888, %v2962
  %v2977 = vadd.f32 %v2889, %v2963
  %v2978 = vadd.f32 %v2890, %v2964
  %v2979 = vadd.f32 %v2891, %v2965
  %v2980 = vadd.f32 %v2892, %v2966
  %v2981 = vadd.f32 %v2893, %v2967
  %v2982 = vadd.f32 %v2894, %v2968
  %v2983 = vadd.f32 %v2895, %v2969
  %v2984 = vadd.f32 %v2896, %v2970
  %v2985 = vadd.f32 %v2897, %v2971
  %v2986 = vadd.f32 %v2898, %v2972
  %v2987 = vadd.f32 %v2899, %v2973
  %2988 = vset.pattern.permute.xlu0 3
  %2989 = vperm.xlu0 %2988, %v2696
  %v2990 = vpop.permute.xlu0 %2989
  %2992 = vset.pattern.permute.xlu0 3
  %2993 = vperm.xlu0 %2992, %v2697
  %v2994 = vpop.permute.xlu0 %2993
  %2996 = vset.pattern.permute.xlu0 3
  %2997 = vperm.xlu0 %2996, %v2698
  %v2998 = vpop.permute.xlu0 %2997
  %3000 = vset.pattern.permute.xlu0 3
  %3001 = vperm.xlu0 %3000, %v2699
  %v3002 = vpop.permute.xlu0 %3001
  %3004 = vset.pattern.permute.xlu0 3
  %3005 = vperm.xlu0 %3004, %v2700
  %v3006 = vpop.permute.xlu0 %3005
  %3008 = vset.pattern.permute.xlu0 3
  %3009 = vperm.xlu0 %3008, %v2701
  %v3010 = vpop.permute.xlu0 %3009
  %3012 = vset.pattern.permute.xlu0 3
  %3013 = vperm.xlu0 %3012, %v2702
  %v3014 = vpop.permute.xlu0 %3013
  %3016 = vset.pattern.permute.xlu0 3
  %3017 = vperm.xlu0 %3016, %v2703
  %v3018 = vpop.permute.xlu0 %3017
  %3020 = vset.pattern.permute.xlu0 3
  %3021 = vperm.xlu0 %3020, %v2704
  %v3022 = vpop.permute.xlu0 %3021
  %3024 = vset.pattern.permute.xlu0 3
  %3025 = vperm.xlu0 %3024, %v2705
  %v3026 = vpop.permute.xlu0 %3025
  %3028 = vset.pattern.permute.xlu0 3
  %3029 = vperm.xlu0 %3028, %v2706
  %v3030 = vpop.permute.xlu0 %3029
  %3032 = vset.pattern.permute.xlu0 3
  %3033 = vperm.xlu0 %3032, %v2707
  %v3034 = vpop.permute.xlu0 %3033
  %3036 = vset.pattern.permute.xlu0 3
  %3037 = vperm.xlu0 %3036, %v2708
  %v3038 = vpop.permute.xlu0 %3037
  %3040 = vset.pattern.permute.xlu0 3
  %3041 = vperm.xlu0 %3040, %v2709
  %v3042 = vpop.permute.xlu0 %3041
  %v3044 = vlaneseq
  %v3045 = vshrl.u32 %v3044, 7
  %v3046 = vsub.s32 7, %v3045
  %v3047 = vrot.slane %v28, %v3046
  %v3048 = vmul.f32 %v2990, %v3047
  %v3049 = vmul.f32 %v2994, %v3047
  %v3050 = vmul.f32 %v2998, %v3047
  %v3051 = vmul.f32 %v3002, %v3047
  %v3052 = vmul.f32 %v3006, %v3047
  %v3053 = vmul.f32 %v3010, %v3047
  %v3054 = vmul.f32 %v3014, %v3047
  %v3055 = vmul.f32 %v3018, %v3047
  %v3056 = vmul.f32 %v3022, %v3047
  %v3057 = vmul.f32 %v3026, %v3047
  %v3058 = vmul.f32 %v3030, %v3047
  %v3059 = vmul.f32 %v3034, %v3047
  %v3060 = vmul.f32 %v3038, %v3047
  %v3061 = vmul.f32 %v3042, %v3047
  %v3062 = vadd.f32 %v2974, %v3048
  %v3063 = vadd.f32 %v2975, %v3049
  %v3064 = vadd.f32 %v2976, %v3050
  %v3065 = vadd.f32 %v2977, %v3051
  %v3066 = vadd.f32 %v2978, %v3052
  %v3067 = vadd.f32 %v2979, %v3053
  %v3068 = vadd.f32 %v2980, %v3054
  %v3069 = vadd.f32 %v2981, %v3055
  %v3070 = vadd.f32 %v2982, %v3056
  %v3071 = vadd.f32 %v2983, %v3057
  %v3072 = vadd.f32 %v2984, %v3058
  %v3073 = vadd.f32 %v2985, %v3059
  %v3074 = vadd.f32 %v2986, %v3060
  %v3075 = vadd.f32 %v2987, %v3061
  %v3076 = vld [vmem:[%s2314 + $0x1] sm:$0x7f]
  %v3077 = vld [vmem:[%s2314 + $0x9] sm:$0x7f]
  %v3078 = vld [vmem:[%s2314 + $0x11] sm:$0x7f]
  %v3079 = vld [vmem:[%s2314 + $0x19] sm:$0x7f]
  %v3080 = vld [vmem:[%s2314 + $0x21] sm:$0x7f]
  %v3081 = vld [vmem:[%s2314 + $0x29] sm:$0x7f]
  %v3082 = vld [vmem:[%s2314 + $0x31] sm:$0x7f]
  %v3083 = vld [vmem:[%s2314 + $0x41] sm:$0x7f]
  %v3084 = vld [vmem:[%s2314 + $0x49] sm:$0x7f]
  %v3085 = vld [vmem:[%s2314 + $0x51] sm:$0x7f]
  %v3086 = vld [vmem:[%s2314 + $0x59] sm:$0x7f]
  %v3087 = vld [vmem:[%s2314 + $0x61] sm:$0x7f]
  %v3088 = vld [vmem:[%s2314 + $0x69] sm:$0x7f]
  %v3089 = vld [vmem:[%s2314 + $0x71] sm:$0x7f]
  %3091 = vset.pattern.permute.xlu0 0
  %3092 = vperm.xlu0 %3091, %v3076
  %v3093 = vpop.permute.xlu0 %3092
  %3096 = vset.pattern.permute.xlu0 0
  %3097 = vperm.xlu0 %3096, %v3077
  %v3098 = vpop.permute.xlu0 %3097
  %3101 = vset.pattern.permute.xlu0 0
  %3102 = vperm.xlu0 %3101, %v3078
  %v3103 = vpop.permute.xlu0 %3102
  %3106 = vset.pattern.permute.xlu0 0
  %3107 = vperm.xlu0 %3106, %v3079
  %v3108 = vpop.permute.xlu0 %3107
  %3111 = vset.pattern.permute.xlu0 0
  %3112 = vperm.xlu0 %3111, %v3080
  %v3113 = vpop.permute.xlu0 %3112
  %3116 = vset.pattern.permute.xlu0 0
  %3117 = vperm.xlu0 %3116, %v3081
  %v3118 = vpop.permute.xlu0 %3117
  %3121 = vset.pattern.permute.xlu0 0
  %3122 = vperm.xlu0 %3121, %v3082
  %v3123 = vpop.permute.xlu0 %3122
  %3126 = vset.pattern.permute.xlu0 0
  %3127 = vperm.xlu0 %3126, %v3083
  %v3128 = vpop.permute.xlu0 %3127
  %3131 = vset.pattern.permute.xlu0 0
  %3132 = vperm.xlu0 %3131, %v3084
  %v3133 = vpop.permute.xlu0 %3132
  %3136 = vset.pattern.permute.xlu0 0
  %3137 = vperm.xlu0 %3136, %v3085
  %v3138 = vpop.permute.xlu0 %3137
  %3141 = vset.pattern.permute.xlu0 0
  %3142 = vperm.xlu0 %3141, %v3086
  %v3143 = vpop.permute.xlu0 %3142
  %3146 = vset.pattern.permute.xlu0 0
  %3147 = vperm.xlu0 %3146, %v3087
  %v3148 = vpop.permute.xlu0 %3147
  %3151 = vset.pattern.permute.xlu0 0
  %3152 = vperm.xlu0 %3151, %v3088
  %v3153 = vpop.permute.xlu0 %3152
  %3156 = vset.pattern.permute.xlu0 0
  %3157 = vperm.xlu0 %3156, %v3089
  %v3158 = vpop.permute.xlu0 %3157
  %v3160 = vlaneseq
  %v3161 = vshrl.u32 %v3160, 7
  %v3162 = vsub.s32 0, %v3161
  %v3163 = vrot.slane %v29, %v3162
  %v3164 = vmul.f32 %v3093, %v3163
  %v3165 = vmul.f32 %v3098, %v3163
  %v3166 = vmul.f32 %v3103, %v3163
  %v3167 = vmul.f32 %v3108, %v3163
  %v3168 = vmul.f32 %v3113, %v3163
  %v3169 = vmul.f32 %v3118, %v3163
  %v3170 = vmul.f32 %v3123, %v3163
  %v3171 = vmul.f32 %v3128, %v3163
  %v3172 = vmul.f32 %v3133, %v3163
  %v3173 = vmul.f32 %v3138, %v3163
  %v3174 = vmul.f32 %v3143, %v3163
  %v3175 = vmul.f32 %v3148, %v3163
  %v3176 = vmul.f32 %v3153, %v3163
  %v3177 = vmul.f32 %v3158, %v3163
  %v3178 = vadd.f32 %v3062, %v3164
  %v3179 = vadd.f32 %v3063, %v3165
  %v3180 = vadd.f32 %v3064, %v3166
  %v3181 = vadd.f32 %v3065, %v3167
  %v3182 = vadd.f32 %v3066, %v3168
  %v3183 = vadd.f32 %v3067, %v3169
  %v3184 = vadd.f32 %v3068, %v3170
  %v3185 = vadd.f32 %v3069, %v3171
  %v3186 = vadd.f32 %v3070, %v3172
  %v3187 = vadd.f32 %v3071, %v3173
  %v3188 = vadd.f32 %v3072, %v3174
  %v3189 = vadd.f32 %v3073, %v3175
  %v3190 = vadd.f32 %v3074, %v3176
  %v3191 = vadd.f32 %v3075, %v3177
  %3192 = vset.pattern.permute.xlu0 1
  %3193 = vperm.xlu0 %3192, %v3076
  %v3194 = vpop.permute.xlu0 %3193
  %3196 = vset.pattern.permute.xlu0 1
  %3197 = vperm.xlu0 %3196, %v3077
  %v3198 = vpop.permute.xlu0 %3197
  %3200 = vset.pattern.permute.xlu0 1
  %3201 = vperm.xlu0 %3200, %v3078
  %v3202 = vpop.permute.xlu0 %3201
  %3204 = vset.pattern.permute.xlu0 1
  %3205 = vperm.xlu0 %3204, %v3079
  %v3206 = vpop.permute.xlu0 %3205
  %3208 = vset.pattern.permute.xlu0 1
  %3209 = vperm.xlu0 %3208, %v3080
  %v3210 = vpop.permute.xlu0 %3209
  %3212 = vset.pattern.permute.xlu0 1
  %3213 = vperm.xlu0 %3212, %v3081
  %v3214 = vpop.permute.xlu0 %3213
  %3216 = vset.pattern.permute.xlu0 1
  %3217 = vperm.xlu0 %3216, %v3082
  %v3218 = vpop.permute.xlu0 %3217
  %3220 = vset.pattern.permute.xlu0 1
  %3221 = vperm.xlu0 %3220, %v3083
  %v3222 = vpop.permute.xlu0 %3221
  %3224 = vset.pattern.permute.xlu0 1
  %3225 = vperm.xlu0 %3224, %v3084
  %v3226 = vpop.permute.xlu0 %3225
  %3228 = vset.pattern.permute.xlu0 1
  %3229 = vperm.xlu0 %3228, %v3085
  %v3230 = vpop.permute.xlu0 %3229
  %3232 = vset.pattern.permute.xlu0 1
  %3233 = vperm.xlu0 %3232, %v3086
  %v3234 = vpop.permute.xlu0 %3233
  %3236 = vset.pattern.permute.xlu0 1
  %3237 = vperm.xlu0 %3236, %v3087
  %v3238 = vpop.permute.xlu0 %3237
  %3240 = vset.pattern.permute.xlu0 1
  %3241 = vperm.xlu0 %3240, %v3088
  %v3242 = vpop.permute.xlu0 %3241
  %3244 = vset.pattern.permute.xlu0 1
  %3245 = vperm.xlu0 %3244, %v3089
  %v3246 = vpop.permute.xlu0 %3245
  %v3248 = vlaneseq
  %v3249 = vshrl.u32 %v3248, 7
  %v3250 = vsub.s32 1, %v3249
  %v3251 = vrot.slane %v29, %v3250
  %v3252 = vmul.f32 %v3194, %v3251
  %v3253 = vmul.f32 %v3198, %v3251
  %v3254 = vmul.f32 %v3202, %v3251
  %v3255 = vmul.f32 %v3206, %v3251
  %v3256 = vmul.f32 %v3210, %v3251
  %v3257 = vmul.f32 %v3214, %v3251
  %v3258 = vmul.f32 %v3218, %v3251
  %v3259 = vmul.f32 %v3222, %v3251
  %v3260 = vmul.f32 %v3226, %v3251
  %v3261 = vmul.f32 %v3230, %v3251
  %v3262 = vmul.f32 %v3234, %v3251
  %v3263 = vmul.f32 %v3238, %v3251
  %v3264 = vmul.f32 %v3242, %v3251
  %v3265 = vmul.f32 %v3246, %v3251
  %v3266 = vadd.f32 %v3178, %v3252
  %v3267 = vadd.f32 %v3179, %v3253
  %v3268 = vadd.f32 %v3180, %v3254
  %v3269 = vadd.f32 %v3181, %v3255
  %v3270 = vadd.f32 %v3182, %v3256
  %v3271 = vadd.f32 %v3183, %v3257
  %v3272 = vadd.f32 %v3184, %v3258
  %v3273 = vadd.f32 %v3185, %v3259
  %v3274 = vadd.f32 %v3186, %v3260
  %v3275 = vadd.f32 %v3187, %v3261
  %v3276 = vadd.f32 %v3188, %v3262
  %v3277 = vadd.f32 %v3189, %v3263
  %v3278 = vadd.f32 %v3190, %v3264
  %v3279 = vadd.f32 %v3191, %v3265
  %3280 = vset.pattern.permute.xlu0 2
  %3281 = vperm.xlu0 %3280, %v3076
  %v3282 = vpop.permute.xlu0 %3281
  %3284 = vset.pattern.permute.xlu0 2
  %3285 = vperm.xlu0 %3284, %v3077
  %v3286 = vpop.permute.xlu0 %3285
  %3288 = vset.pattern.permute.xlu0 2
  %3289 = vperm.xlu0 %3288, %v3078
  %v3290 = vpop.permute.xlu0 %3289
  %3292 = vset.pattern.permute.xlu0 2
  %3293 = vperm.xlu0 %3292, %v3079
  %v3294 = vpop.permute.xlu0 %3293
  %3296 = vset.pattern.permute.xlu0 2
  %3297 = vperm.xlu0 %3296, %v3080
  %v3298 = vpop.permute.xlu0 %3297
  %3300 = vset.pattern.permute.xlu0 2
  %3301 = vperm.xlu0 %3300, %v3081
  %v3302 = vpop.permute.xlu0 %3301
  %3304 = vset.pattern.permute.xlu0 2
  %3305 = vperm.xlu0 %3304, %v3082
  %v3306 = vpop.permute.xlu0 %3305
  %3308 = vset.pattern.permute.xlu0 2
  %3309 = vperm.xlu0 %3308, %v3083
  %v3310 = vpop.permute.xlu0 %3309
  %3312 = vset.pattern.permute.xlu0 2
  %3313 = vperm.xlu0 %3312, %v3084
  %v3314 = vpop.permute.xlu0 %3313
  %3316 = vset.pattern.permute.xlu0 2
  %3317 = vperm.xlu0 %3316, %v3085
  %v3318 = vpop.permute.xlu0 %3317
  %3320 = vset.pattern.permute.xlu0 2
  %3321 = vperm.xlu0 %3320, %v3086
  %v3322 = vpop.permute.xlu0 %3321
  %3324 = vset.pattern.permute.xlu0 2
  %3325 = vperm.xlu0 %3324, %v3087
  %v3326 = vpop.permute.xlu0 %3325
  %3328 = vset.pattern.permute.xlu0 2
  %3329 = vperm.xlu0 %3328, %v3088
  %v3330 = vpop.permute.xlu0 %3329
  %3332 = vset.pattern.permute.xlu0 2
  %3333 = vperm.xlu0 %3332, %v3089
  %v3334 = vpop.permute.xlu0 %3333
  %v3336 = vlaneseq
  %v3337 = vshrl.u32 %v3336, 7
  %v3338 = vsub.s32 2, %v3337
  %v3339 = vrot.slane %v29, %v3338
  %v3340 = vmul.f32 %v3282, %v3339
  %v3341 = vmul.f32 %v3286, %v3339
  %v3342 = vmul.f32 %v3290, %v3339
  %v3343 = vmul.f32 %v3294, %v3339
  %v3344 = vmul.f32 %v3298, %v3339
  %v3345 = vmul.f32 %v3302, %v3339
  %v3346 = vmul.f32 %v3306, %v3339
  %v3347 = vmul.f32 %v3310, %v3339
  %v3348 = vmul.f32 %v3314, %v3339
  %v3349 = vmul.f32 %v3318, %v3339
  %v3350 = vmul.f32 %v3322, %v3339
  %v3351 = vmul.f32 %v3326, %v3339
  %v3352 = vmul.f32 %v3330, %v3339
  %v3353 = vmul.f32 %v3334, %v3339
  %v3354 = vadd.f32 %v3266, %v3340
  %v3355 = vadd.f32 %v3267, %v3341
  %v3356 = vadd.f32 %v3268, %v3342
  %v3357 = vadd.f32 %v3269, %v3343
  %v3358 = vadd.f32 %v3270, %v3344
  %v3359 = vadd.f32 %v3271, %v3345
  %v3360 = vadd.f32 %v3272, %v3346
  %v3361 = vadd.f32 %v3273, %v3347
  %v3362 = vadd.f32 %v3274, %v3348
  %v3363 = vadd.f32 %v3275, %v3349
  %v3364 = vadd.f32 %v3276, %v3350
  %v3365 = vadd.f32 %v3277, %v3351
  %v3366 = vadd.f32 %v3278, %v3352
  %v3367 = vadd.f32 %v3279, %v3353
  %3368 = vset.pattern.permute.xlu0 3
  %3369 = vperm.xlu0 %3368, %v3076
  %v3370 = vpop.permute.xlu0 %3369
  %3372 = vset.pattern.permute.xlu0 3
  %3373 = vperm.xlu0 %3372, %v3077
  %v3374 = vpop.permute.xlu0 %3373
  %3376 = vset.pattern.permute.xlu0 3
  %3377 = vperm.xlu0 %3376, %v3078
  %v3378 = vpop.permute.xlu0 %3377
  %3380 = vset.pattern.permute.xlu0 3
  %3381 = vperm.xlu0 %3380, %v3079
  %v3382 = vpop.permute.xlu0 %3381
  %3384 = vset.pattern.permute.xlu0 3
  %3385 = vperm.xlu0 %3384, %v3080
  %v3386 = vpop.permute.xlu0 %3385
  %3388 = vset.pattern.permute.xlu0 3
  %3389 = vperm.xlu0 %3388, %v3081
  %v3390 = vpop.permute.xlu0 %3389
  %3392 = vset.pattern.permute.xlu0 3
  %3393 = vperm.xlu0 %3392, %v3082
  %v3394 = vpop.permute.xlu0 %3393
  %3396 = vset.pattern.permute.xlu0 3
  %3397 = vperm.xlu0 %3396, %v3083
  %v3398 = vpop.permute.xlu0 %3397
  %3400 = vset.pattern.permute.xlu0 3
  %3401 = vperm.xlu0 %3400, %v3084
  %v3402 = vpop.permute.xlu0 %3401
  %3404 = vset.pattern.permute.xlu0 3
  %3405 = vperm.xlu0 %3404, %v3085
  %v3406 = vpop.permute.xlu0 %3405
  %3408 = vset.pattern.permute.xlu0 3
  %3409 = vperm.xlu0 %3408, %v3086
  %v3410 = vpop.permute.xlu0 %3409
  %3412 = vset.pattern.permute.xlu0 3
  %3413 = vperm.xlu0 %3412, %v3087
  %v3414 = vpop.permute.xlu0 %3413
  %3416 = vset.pattern.permute.xlu0 3
  %3417 = vperm.xlu0 %3416, %v3088
  %v3418 = vpop.permute.xlu0 %3417
  %3420 = vset.pattern.permute.xlu0 3
  %3421 = vperm.xlu0 %3420, %v3089
  %v3422 = vpop.permute.xlu0 %3421
  %v3424 = vlaneseq
  %v3425 = vshrl.u32 %v3424, 7
  %v3426 = vsub.s32 3, %v3425
  %v3427 = vrot.slane %v29, %v3426
  %v3428 = vmul.f32 %v3370, %v3427
  %v3429 = vmul.f32 %v3374, %v3427
  %v3430 = vmul.f32 %v3378, %v3427
  %v3431 = vmul.f32 %v3382, %v3427
  %v3432 = vmul.f32 %v3386, %v3427
  %v3433 = vmul.f32 %v3390, %v3427
  %v3434 = vmul.f32 %v3394, %v3427
  %v3435 = vmul.f32 %v3398, %v3427
  %v3436 = vmul.f32 %v3402, %v3427
  %v3437 = vmul.f32 %v3406, %v3427
  %v3438 = vmul.f32 %v3410, %v3427
  %v3439 = vmul.f32 %v3414, %v3427
  %v3440 = vmul.f32 %v3418, %v3427
  %v3441 = vmul.f32 %v3422, %v3427
  %v3442 = vadd.f32 %v3354, %v3428
  %v3443 = vadd.f32 %v3355, %v3429
  %v3444 = vadd.f32 %v3356, %v3430
  %v3445 = vadd.f32 %v3357, %v3431
  %v3446 = vadd.f32 %v3358, %v3432
  %v3447 = vadd.f32 %v3359, %v3433
  %v3448 = vadd.f32 %v3360, %v3434
  %v3449 = vadd.f32 %v3361, %v3435
  %v3450 = vadd.f32 %v3362, %v3436
  %v3451 = vadd.f32 %v3363, %v3437
  %v3452 = vadd.f32 %v3364, %v3438
  %v3453 = vadd.f32 %v3365, %v3439
  %v3454 = vadd.f32 %v3366, %v3440
  %v3455 = vadd.f32 %v3367, %v3441
  %v3457 = vlaneseq
  %v3458 = vshrl.u32 %v3457, 7
  %v3459 = vsub.s32 0, %v3458
  %v3460 = vrot.slane %v30, %v3459
  %v3462 = vadd.f32 %v3442, %v3460
  %v3463 = vadd.f32 %v3443, %v3460
  %v3464 = vadd.f32 %v3444, %v3460
  %v3465 = vadd.f32 %v3445, %v3460
  %v3466 = vadd.f32 %v3446, %v3460
  %v3467 = vadd.f32 %v3447, %v3460
  %v3468 = vadd.f32 %v3448, %v3460
  %v3469 = vadd.f32 %v3449, %v3460
  %v3470 = vadd.f32 %v3450, %v3460
  %v3471 = vadd.f32 %v3451, %v3460
  %v3472 = vadd.f32 %v3452, %v3460
  %v3473 = vadd.f32 %v3453, %v3460
  %v3474 = vadd.f32 %v3454, %v3460
  %v3475 = vadd.f32 %v3455, %v3460
  %3476 = vset.pattern.permute.xlu0 0
  %3477 = vperm.xlu0 %3476, %v31
  %v3478 = vpop.permute.xlu0 %3477
  %3479 = vset.pattern.permute.xlu0 0
  %3480 = vperm.xlu0 %3479, %v32
  %v3481 = vpop.permute.xlu0 %3480
  %3482 = vset.pattern.permute.xlu0 0
  %3483 = vperm.xlu0 %3482, %v33
  %v3484 = vpop.permute.xlu0 %3483
  %3485 = vset.pattern.permute.xlu0 0
  %3486 = vperm.xlu0 %3485, %v34
  %v3487 = vpop.permute.xlu0 %3486
  %3488 = vset.pattern.permute.xlu0 0
  %3489 = vperm.xlu0 %3488, %v35
  %v3490 = vpop.permute.xlu0 %3489
  %3491 = vset.pattern.permute.xlu0 0
  %3492 = vperm.xlu0 %3491, %v36
  %v3493 = vpop.permute.xlu0 %3492
  %3494 = vset.pattern.permute.xlu0 0
  %3495 = vperm.xlu0 %3494, %v37
  %v3496 = vpop.permute.xlu0 %3495
  %3497 = vset.pattern.permute.xlu0 0
  %3498 = vperm.xlu0 %3497, %v38
  %v3499 = vpop.permute.xlu0 %3498
  %3500 = vset.pattern.permute.xlu0 0
  %3501 = vperm.xlu0 %3500, %v39
  %v3502 = vpop.permute.xlu0 %3501
  %3503 = vset.pattern.permute.xlu0 0
  %3504 = vperm.xlu0 %3503, %v40
  %v3505 = vpop.permute.xlu0 %3504
  %3506 = vset.pattern.permute.xlu0 0
  %3507 = vperm.xlu0 %3506, %v41
  %v3508 = vpop.permute.xlu0 %3507
  %3509 = vset.pattern.permute.xlu0 0
  %3510 = vperm.xlu0 %3509, %v42
  %v3511 = vpop.permute.xlu0 %3510
  %3512 = vset.pattern.permute.xlu0 0
  %3513 = vperm.xlu0 %3512, %v43
  %v3514 = vpop.permute.xlu0 %3513
  %3515 = vset.pattern.permute.xlu0 0
  %3516 = vperm.xlu0 %3515, %v44
  %v3517 = vpop.permute.xlu0 %3516
  %v3518 = vmul.f32 %v429, %v132
  %v3519 = vmul.f32 %v434, %v132
  %v3520 = vmul.f32 %v439, %v132
  %v3521 = vmul.f32 %v444, %v132
  %v3522 = vmul.f32 %v449, %v132
  %v3523 = vmul.f32 %v454, %v132
  %v3524 = vmul.f32 %v459, %v132
  %v3525 = vmul.f32 %v464, %v132
  %v3526 = vmul.f32 %v469, %v132
  %v3527 = vmul.f32 %v474, %v132
  %v3528 = vmul.f32 %v479, %v132
  %v3529 = vmul.f32 %v484, %v132
  %v3530 = vmul.f32 %v489, %v132
  %v3531 = vmul.f32 %v494, %v132
  %v3532 = vmul.f32 %v530, %v206
  %v3533 = vmul.f32 %v534, %v206
  %v3534 = vmul.f32 %v538, %v206
  %v3535 = vmul.f32 %v542, %v206
  %v3536 = vmul.f32 %v546, %v206
  %v3537 = vmul.f32 %v550, %v206
  %v3538 = vmul.f32 %v554, %v206
  %v3539 = vmul.f32 %v558, %v206
  %v3540 = vmul.f32 %v562, %v206
  %v3541 = vmul.f32 %v566, %v206
  %v3542 = vmul.f32 %v570, %v206
  %v3543 = vmul.f32 %v574, %v206
  %v3544 = vmul.f32 %v578, %v206
  %v3545 = vmul.f32 %v582, %v206
  %v3546 = vadd.f32 %v3518, %v3532
  %v3547 = vadd.f32 %v3519, %v3533
  %v3548 = vadd.f32 %v3520, %v3534
  %v3549 = vadd.f32 %v3521, %v3535
  %v3550 = vadd.f32 %v3522, %v3536
  %v3551 = vadd.f32 %v3523, %v3537
  %v3552 = vadd.f32 %v3524, %v3538
  %v3553 = vadd.f32 %v3525, %v3539
  %v3554 = vadd.f32 %v3526, %v3540
  %v3555 = vadd.f32 %v3527, %v3541
  %v3556 = vadd.f32 %v3528, %v3542
  %v3557 = vadd.f32 %v3529, %v3543
  %v3558 = vadd.f32 %v3530, %v3544
  %v3559 = vadd.f32 %v3531, %v3545
  %v3560 = vmul.f32 %v618, %v294
  %v3561 = vmul.f32 %v622, %v294
  %v3562 = vmul.f32 %v626, %v294
  %v3563 = vmul.f32 %v630, %v294
  %v3564 = vmul.f32 %v634, %v294
  %v3565 = vmul.f32 %v638, %v294
  %v3566 = vmul.f32 %v642, %v294
  %v3567 = vmul.f32 %v646, %v294
  %v3568 = vmul.f32 %v650, %v294
  %v3569 = vmul.f32 %v654, %v294
  %v3570 = vmul.f32 %v658, %v294
  %v3571 = vmul.f32 %v662, %v294
  %v3572 = vmul.f32 %v666, %v294
  %v3573 = vmul.f32 %v670, %v294
  %v3574 = vadd.f32 %v3546, %v3560
  %v3575 = vadd.f32 %v3547, %v3561
  %v3576 = vadd.f32 %v3548, %v3562
  %v3577 = vadd.f32 %v3549, %v3563
  %v3578 = vadd.f32 %v3550, %v3564
  %v3579 = vadd.f32 %v3551, %v3565
  %v3580 = vadd.f32 %v3552, %v3566
  %v3581 = vadd.f32 %v3553, %v3567
  %v3582 = vadd.f32 %v3554, %v3568
  %v3583 = vadd.f32 %v3555, %v3569
  %v3584 = vadd.f32 %v3556, %v3570
  %v3585 = vadd.f32 %v3557, %v3571
  %v3586 = vadd.f32 %v3558, %v3572
  %v3587 = vadd.f32 %v3559, %v3573
  %v3588 = vmul.f32 %v706, %v382
  %v3589 = vmul.f32 %v710, %v382
  %v3590 = vmul.f32 %v714, %v382
  %v3591 = vmul.f32 %v718, %v382
  %v3592 = vmul.f32 %v722, %v382
  %v3593 = vmul.f32 %v726, %v382
  %v3594 = vmul.f32 %v730, %v382
  %v3595 = vmul.f32 %v734, %v382
  %v3596 = vmul.f32 %v738, %v382
  %v3597 = vmul.f32 %v742, %v382
  %v3598 = vmul.f32 %v746, %v382
  %v3599 = vmul.f32 %v750, %v382
  %v3600 = vmul.f32 %v754, %v382
  %v3601 = vmul.f32 %v758, %v382
  %v3602 = vadd.f32 %v3574, %v3588
  %v3603 = vadd.f32 %v3575, %v3589
  %v3604 = vadd.f32 %v3576, %v3590
  %v3605 = vadd.f32 %v3577, %v3591
  %v3606 = vadd.f32 %v3578, %v3592
  %v3607 = vadd.f32 %v3579, %v3593
  %v3608 = vadd.f32 %v3580, %v3594
  %v3609 = vadd.f32 %v3581, %v3595
  %v3610 = vadd.f32 %v3582, %v3596
  %v3611 = vadd.f32 %v3583, %v3597
  %v3612 = vadd.f32 %v3584, %v3598
  %v3613 = vadd.f32 %v3585, %v3599
  %v3614 = vadd.f32 %v3586, %v3600
  %v3615 = vadd.f32 %v3587, %v3601
  %v3616 = vmul.f32 %v809, %v499
  %v3617 = vmul.f32 %v814, %v499
  %v3618 = vmul.f32 %v819, %v499
  %v3619 = vmul.f32 %v824, %v499
  %v3620 = vmul.f32 %v829, %v499
  %v3621 = vmul.f32 %v834, %v499
  %v3622 = vmul.f32 %v839, %v499
  %v3623 = vmul.f32 %v844, %v499
  %v3624 = vmul.f32 %v849, %v499
  %v3625 = vmul.f32 %v854, %v499
  %v3626 = vmul.f32 %v859, %v499
  %v3627 = vmul.f32 %v864, %v499
  %v3628 = vmul.f32 %v869, %v499
  %v3629 = vmul.f32 %v874, %v499
  %v3630 = vadd.f32 %v3602, %v3616
  %v3631 = vadd.f32 %v3603, %v3617
  %v3632 = vadd.f32 %v3604, %v3618
  %v3633 = vadd.f32 %v3605, %v3619
  %v3634 = vadd.f32 %v3606, %v3620
  %v3635 = vadd.f32 %v3607, %v3621
  %v3636 = vadd.f32 %v3608, %v3622
  %v3637 = vadd.f32 %v3609, %v3623
  %v3638 = vadd.f32 %v3610, %v3624
  %v3639 = vadd.f32 %v3611, %v3625
  %v3640 = vadd.f32 %v3612, %v3626
  %v3641 = vadd.f32 %v3613, %v3627
  %v3642 = vadd.f32 %v3614, %v3628
  %v3643 = vadd.f32 %v3615, %v3629
  %v3644 = vmul.f32 %v910, %v587
  %v3645 = vmul.f32 %v914, %v587
  %v3646 = vmul.f32 %v918, %v587
  %v3647 = vmul.f32 %v922, %v587
  %v3648 = vmul.f32 %v926, %v587
  %v3649 = vmul.f32 %v930, %v587
  %v3650 = vmul.f32 %v934, %v587
  %v3651 = vmul.f32 %v938, %v587
  %v3652 = vmul.f32 %v942, %v587
  %v3653 = vmul.f32 %v946, %v587
  %v3654 = vmul.f32 %v950, %v587
  %v3655 = vmul.f32 %v954, %v587
  %v3656 = vmul.f32 %v958, %v587
  %v3657 = vmul.f32 %v962, %v587
  %v3658 = vadd.f32 %v3630, %v3644
  %v3659 = vadd.f32 %v3631, %v3645
  %v3660 = vadd.f32 %v3632, %v3646
  %v3661 = vadd.f32 %v3633, %v3647
  %v3662 = vadd.f32 %v3634, %v3648
  %v3663 = vadd.f32 %v3635, %v3649
  %v3664 = vadd.f32 %v3636, %v3650
  %v3665 = vadd.f32 %v3637, %v3651
  %v3666 = vadd.f32 %v3638, %v3652
  %v3667 = vadd.f32 %v3639, %v3653
  %v3668 = vadd.f32 %v3640, %v3654
  %v3669 = vadd.f32 %v3641, %v3655
  %v3670 = vadd.f32 %v3642, %v3656
  %v3671 = vadd.f32 %v3643, %v3657
  %v3672 = vmul.f32 %v998, %v675
  %v3673 = vmul.f32 %v1002, %v675
  %v3674 = vmul.f32 %v1006, %v675
  %v3675 = vmul.f32 %v1010, %v675
  %v3676 = vmul.f32 %v1014, %v675
  %v3677 = vmul.f32 %v1018, %v675
  %v3678 = vmul.f32 %v1022, %v675
  %v3679 = vmul.f32 %v1026, %v675
  %v3680 = vmul.f32 %v1030, %v675
  %v3681 = vmul.f32 %v1034, %v675
  %v3682 = vmul.f32 %v1038, %v675
  %v3683 = vmul.f32 %v1042, %v675
  %v3684 = vmul.f32 %v1046, %v675
  %v3685 = vmul.f32 %v1050, %v675
  %v3686 = vadd.f32 %v3658, %v3672
  %v3687 = vadd.f32 %v3659, %v3673
  %v3688 = vadd.f32 %v3660, %v3674
  %v3689 = vadd.f32 %v3661, %v3675
  %v3690 = vadd.f32 %v3662, %v3676
  %v3691 = vadd.f32 %v3663, %v3677
  %v3692 = vadd.f32 %v3664, %v3678
  %v3693 = vadd.f32 %v3665, %v3679
  %v3694 = vadd.f32 %v3666, %v3680
  %v3695 = vadd.f32 %v3667, %v3681
  %v3696 = vadd.f32 %v3668, %v3682
  %v3697 = vadd.f32 %v3669, %v3683
  %v3698 = vadd.f32 %v3670, %v3684
  %v3699 = vadd.f32 %v3671, %v3685
  %v3700 = vmul.f32 %v1086, %v763
  %v3701 = vmul.f32 %v1090, %v763
  %v3702 = vmul.f32 %v1094, %v763
  %v3703 = vmul.f32 %v1098, %v763
  %v3704 = vmul.f32 %v1102, %v763
  %v3705 = vmul.f32 %v1106, %v763
  %v3706 = vmul.f32 %v1110, %v763
  %v3707 = vmul.f32 %v1114, %v763
  %v3708 = vmul.f32 %v1118, %v763
  %v3709 = vmul.f32 %v1122, %v763
  %v3710 = vmul.f32 %v1126, %v763
  %v3711 = vmul.f32 %v1130, %v763
  %v3712 = vmul.f32 %v1134, %v763
  %v3713 = vmul.f32 %v1138, %v763
  %v3714 = vadd.f32 %v3686, %v3700
  %v3715 = vadd.f32 %v3687, %v3701
  %v3716 = vadd.f32 %v3688, %v3702
  %v3717 = vadd.f32 %v3689, %v3703
  %v3718 = vadd.f32 %v3690, %v3704
  %v3719 = vadd.f32 %v3691, %v3705
  %v3720 = vadd.f32 %v3692, %v3706
  %v3721 = vadd.f32 %v3693, %v3707
  %v3722 = vadd.f32 %v3694, %v3708
  %v3723 = vadd.f32 %v3695, %v3709
  %v3724 = vadd.f32 %v3696, %v3710
  %v3725 = vadd.f32 %v3697, %v3711
  %v3726 = vadd.f32 %v3698, %v3712
  %v3727 = vadd.f32 %v3699, %v3713
  %v3728 = vld [vmem:[%s411 + $0x1] sm:$0x7f]
  %v3729 = vld [vmem:[%s411 + $0x9] sm:$0x7f]
  %v3730 = vld [vmem:[%s411 + $0x11] sm:$0x7f]
  %v3731 = vld [vmem:[%s411 + $0x19] sm:$0x7f]
  %v3732 = vld [vmem:[%s411 + $0x21] sm:$0x7f]
  %v3733 = vld [vmem:[%s411 + $0x29] sm:$0x7f]
  %v3734 = vld [vmem:[%s411 + $0x31] sm:$0x7f]
  %v3735 = vld [vmem:[%s411 + $0x41] sm:$0x7f]
  %v3736 = vld [vmem:[%s411 + $0x49] sm:$0x7f]
  %v3737 = vld [vmem:[%s411 + $0x51] sm:$0x7f]
  %v3738 = vld [vmem:[%s411 + $0x59] sm:$0x7f]
  %v3739 = vld [vmem:[%s411 + $0x61] sm:$0x7f]
  %v3740 = vld [vmem:[%s411 + $0x69] sm:$0x7f]
  %v3741 = vld [vmem:[%s411 + $0x71] sm:$0x7f]
  %3743 = vset.pattern.permute.xlu0 0
  %3744 = vperm.xlu0 %3743, %v3728
  %v3745 = vpop.permute.xlu0 %3744
  %3748 = vset.pattern.permute.xlu0 0
  %3749 = vperm.xlu0 %3748, %v3729
  %v3750 = vpop.permute.xlu0 %3749
  %3753 = vset.pattern.permute.xlu0 0
  %3754 = vperm.xlu0 %3753, %v3730
  %v3755 = vpop.permute.xlu0 %3754
  %3758 = vset.pattern.permute.xlu0 0
  %3759 = vperm.xlu0 %3758, %v3731
  %v3760 = vpop.permute.xlu0 %3759
  %3763 = vset.pattern.permute.xlu0 0
  %3764 = vperm.xlu0 %3763, %v3732
  %v3765 = vpop.permute.xlu0 %3764
  %3768 = vset.pattern.permute.xlu0 0
  %3769 = vperm.xlu0 %3768, %v3733
  %v3770 = vpop.permute.xlu0 %3769
  %3773 = vset.pattern.permute.xlu0 0
  %3774 = vperm.xlu0 %3773, %v3734
  %v3775 = vpop.permute.xlu0 %3774
  %3778 = vset.pattern.permute.xlu0 0
  %3779 = vperm.xlu0 %3778, %v3735
  %v3780 = vpop.permute.xlu0 %3779
  %3783 = vset.pattern.permute.xlu0 0
  %3784 = vperm.xlu0 %3783, %v3736
  %v3785 = vpop.permute.xlu0 %3784
  %3788 = vset.pattern.permute.xlu0 0
  %3789 = vperm.xlu0 %3788, %v3737
  %v3790 = vpop.permute.xlu0 %3789
  %3793 = vset.pattern.permute.xlu0 0
  %3794 = vperm.xlu0 %3793, %v3738
  %v3795 = vpop.permute.xlu0 %3794
  %3798 = vset.pattern.permute.xlu0 0
  %3799 = vperm.xlu0 %3798, %v3739
  %v3800 = vpop.permute.xlu0 %3799
  %3803 = vset.pattern.permute.xlu0 0
  %3804 = vperm.xlu0 %3803, %v3740
  %v3805 = vpop.permute.xlu0 %3804
  %3808 = vset.pattern.permute.xlu0 0
  %3809 = vperm.xlu0 %3808, %v3741
  %v3810 = vpop.permute.xlu0 %3809
  %v3812 = vmul.f32 %v3745, %v879
  %v3813 = vmul.f32 %v3750, %v879
  %v3814 = vmul.f32 %v3755, %v879
  %v3815 = vmul.f32 %v3760, %v879
  %v3816 = vmul.f32 %v3765, %v879
  %v3817 = vmul.f32 %v3770, %v879
  %v3818 = vmul.f32 %v3775, %v879
  %v3819 = vmul.f32 %v3780, %v879
  %v3820 = vmul.f32 %v3785, %v879
  %v3821 = vmul.f32 %v3790, %v879
  %v3822 = vmul.f32 %v3795, %v879
  %v3823 = vmul.f32 %v3800, %v879
  %v3824 = vmul.f32 %v3805, %v879
  %v3825 = vmul.f32 %v3810, %v879
  %v3826 = vadd.f32 %v3714, %v3812
  %v3827 = vadd.f32 %v3715, %v3813
  %v3828 = vadd.f32 %v3716, %v3814
  %v3829 = vadd.f32 %v3717, %v3815
  %v3830 = vadd.f32 %v3718, %v3816
  %v3831 = vadd.f32 %v3719, %v3817
  %v3832 = vadd.f32 %v3720, %v3818
  %v3833 = vadd.f32 %v3721, %v3819
  %v3834 = vadd.f32 %v3722, %v3820
  %v3835 = vadd.f32 %v3723, %v3821
  %v3836 = vadd.f32 %v3724, %v3822
  %v3837 = vadd.f32 %v3725, %v3823
  %v3838 = vadd.f32 %v3726, %v3824
  %v3839 = vadd.f32 %v3727, %v3825
  %3840 = vset.pattern.permute.xlu0 1
  %3841 = vperm.xlu0 %3840, %v3728
  %v3842 = vpop.permute.xlu0 %3841
  %3844 = vset.pattern.permute.xlu0 1
  %3845 = vperm.xlu0 %3844, %v3729
  %v3846 = vpop.permute.xlu0 %3845
  %3848 = vset.pattern.permute.xlu0 1
  %3849 = vperm.xlu0 %3848, %v3730
  %v3850 = vpop.permute.xlu0 %3849
  %3852 = vset.pattern.permute.xlu0 1
  %3853 = vperm.xlu0 %3852, %v3731
  %v3854 = vpop.permute.xlu0 %3853
  %3856 = vset.pattern.permute.xlu0 1
  %3857 = vperm.xlu0 %3856, %v3732
  %v3858 = vpop.permute.xlu0 %3857
  %3860 = vset.pattern.permute.xlu0 1
  %3861 = vperm.xlu0 %3860, %v3733
  %v3862 = vpop.permute.xlu0 %3861
  %3864 = vset.pattern.permute.xlu0 1
  %3865 = vperm.xlu0 %3864, %v3734
  %v3866 = vpop.permute.xlu0 %3865
  %3868 = vset.pattern.permute.xlu0 1
  %3869 = vperm.xlu0 %3868, %v3735
  %v3870 = vpop.permute.xlu0 %3869
  %3872 = vset.pattern.permute.xlu0 1
  %3873 = vperm.xlu0 %3872, %v3736
  %v3874 = vpop.permute.xlu0 %3873
  %3876 = vset.pattern.permute.xlu0 1
  %3877 = vperm.xlu0 %3876, %v3737
  %v3878 = vpop.permute.xlu0 %3877
  %3880 = vset.pattern.permute.xlu0 1
  %3881 = vperm.xlu0 %3880, %v3738
  %v3882 = vpop.permute.xlu0 %3881
  %3884 = vset.pattern.permute.xlu0 1
  %3885 = vperm.xlu0 %3884, %v3739
  %v3886 = vpop.permute.xlu0 %3885
  %3888 = vset.pattern.permute.xlu0 1
  %3889 = vperm.xlu0 %3888, %v3740
  %v3890 = vpop.permute.xlu0 %3889
  %3892 = vset.pattern.permute.xlu0 1
  %3893 = vperm.xlu0 %3892, %v3741
  %v3894 = vpop.permute.xlu0 %3893
  %v3896 = vmul.f32 %v3842, %v967
  %v3897 = vmul.f32 %v3846, %v967
  %v3898 = vmul.f32 %v3850, %v967
  %v3899 = vmul.f32 %v3854, %v967
  %v3900 = vmul.f32 %v3858, %v967
  %v3901 = vmul.f32 %v3862, %v967
  %v3902 = vmul.f32 %v3866, %v967
  %v3903 = vmul.f32 %v3870, %v967
  %v3904 = vmul.f32 %v3874, %v967
  %v3905 = vmul.f32 %v3878, %v967
  %v3906 = vmul.f32 %v3882, %v967
  %v3907 = vmul.f32 %v3886, %v967
  %v3908 = vmul.f32 %v3890, %v967
  %v3909 = vmul.f32 %v3894, %v967
  %v3910 = vadd.f32 %v3826, %v3896
  %v3911 = vadd.f32 %v3827, %v3897
  %v3912 = vadd.f32 %v3828, %v3898
  %v3913 = vadd.f32 %v3829, %v3899
  %v3914 = vadd.f32 %v3830, %v3900
  %v3915 = vadd.f32 %v3831, %v3901
  %v3916 = vadd.f32 %v3832, %v3902
  %v3917 = vadd.f32 %v3833, %v3903
  %v3918 = vadd.f32 %v3834, %v3904
  %v3919 = vadd.f32 %v3835, %v3905
  %v3920 = vadd.f32 %v3836, %v3906
  %v3921 = vadd.f32 %v3837, %v3907
  %v3922 = vadd.f32 %v3838, %v3908
  %v3923 = vadd.f32 %v3839, %v3909
  %3924 = vset.pattern.permute.xlu0 2
  %3925 = vperm.xlu0 %3924, %v3728
  %v3926 = vpop.permute.xlu0 %3925
  %3928 = vset.pattern.permute.xlu0 2
  %3929 = vperm.xlu0 %3928, %v3729
  %v3930 = vpop.permute.xlu0 %3929
  %3932 = vset.pattern.permute.xlu0 2
  %3933 = vperm.xlu0 %3932, %v3730
  %v3934 = vpop.permute.xlu0 %3933
  %3936 = vset.pattern.permute.xlu0 2
  %3937 = vperm.xlu0 %3936, %v3731
  %v3938 = vpop.permute.xlu0 %3937
  %3940 = vset.pattern.permute.xlu0 2
  %3941 = vperm.xlu0 %3940, %v3732
  %v3942 = vpop.permute.xlu0 %3941
  %3944 = vset.pattern.permute.xlu0 2
  %3945 = vperm.xlu0 %3944, %v3733
  %v3946 = vpop.permute.xlu0 %3945
  %3948 = vset.pattern.permute.xlu0 2
  %3949 = vperm.xlu0 %3948, %v3734
  %v3950 = vpop.permute.xlu0 %3949
  %3952 = vset.pattern.permute.xlu0 2
  %3953 = vperm.xlu0 %3952, %v3735
  %v3954 = vpop.permute.xlu0 %3953
  %3956 = vset.pattern.permute.xlu0 2
  %3957 = vperm.xlu0 %3956, %v3736
  %v3958 = vpop.permute.xlu0 %3957
  %3960 = vset.pattern.permute.xlu0 2
  %3961 = vperm.xlu0 %3960, %v3737
  %v3962 = vpop.permute.xlu0 %3961
  %3964 = vset.pattern.permute.xlu0 2
  %3965 = vperm.xlu0 %3964, %v3738
  %v3966 = vpop.permute.xlu0 %3965
  %3968 = vset.pattern.permute.xlu0 2
  %3969 = vperm.xlu0 %3968, %v3739
  %v3970 = vpop.permute.xlu0 %3969
  %3972 = vset.pattern.permute.xlu0 2
  %3973 = vperm.xlu0 %3972, %v3740
  %v3974 = vpop.permute.xlu0 %3973
  %3976 = vset.pattern.permute.xlu0 2
  %3977 = vperm.xlu0 %3976, %v3741
  %v3978 = vpop.permute.xlu0 %3977
  %v3980 = vmul.f32 %v3926, %v1055
  %v3981 = vmul.f32 %v3930, %v1055
  %v3982 = vmul.f32 %v3934, %v1055
  %v3983 = vmul.f32 %v3938, %v1055
  %v3984 = vmul.f32 %v3942, %v1055
  %v3985 = vmul.f32 %v3946, %v1055
  %v3986 = vmul.f32 %v3950, %v1055
  %v3987 = vmul.f32 %v3954, %v1055
  %v3988 = vmul.f32 %v3958, %v1055
  %v3989 = vmul.f32 %v3962, %v1055
  %v3990 = vmul.f32 %v3966, %v1055
  %v3991 = vmul.f32 %v3970, %v1055
  %v3992 = vmul.f32 %v3974, %v1055
  %v3993 = vmul.f32 %v3978, %v1055
  %v3994 = vadd.f32 %v3910, %v3980
  %v3995 = vadd.f32 %v3911, %v3981
  %v3996 = vadd.f32 %v3912, %v3982
  %v3997 = vadd.f32 %v3913, %v3983
  %v3998 = vadd.f32 %v3914, %v3984
  %v3999 = vadd.f32 %v3915, %v3985
  %v4000 = vadd.f32 %v3916, %v3986
  %v4001 = vadd.f32 %v3917, %v3987
  %v4002 = vadd.f32 %v3918, %v3988
  %v4003 = vadd.f32 %v3919, %v3989
  %v4004 = vadd.f32 %v3920, %v3990
  %v4005 = vadd.f32 %v3921, %v3991
  %v4006 = vadd.f32 %v3922, %v3992
  %v4007 = vadd.f32 %v3923, %v3993
  %4008 = vset.pattern.permute.xlu0 3
  %4009 = vperm.xlu0 %4008, %v3728
  %v4010 = vpop.permute.xlu0 %4009
  %4012 = vset.pattern.permute.xlu0 3
  %4013 = vperm.xlu0 %4012, %v3729
  %v4014 = vpop.permute.xlu0 %4013
  %4016 = vset.pattern.permute.xlu0 3
  %4017 = vperm.xlu0 %4016, %v3730
  %v4018 = vpop.permute.xlu0 %4017
  %4020 = vset.pattern.permute.xlu0 3
  %4021 = vperm.xlu0 %4020, %v3731
  %v4022 = vpop.permute.xlu0 %4021
  %4024 = vset.pattern.permute.xlu0 3
  %4025 = vperm.xlu0 %4024, %v3732
  %v4026 = vpop.permute.xlu0 %4025
  %4028 = vset.pattern.permute.xlu0 3
  %4029 = vperm.xlu0 %4028, %v3733
  %v4030 = vpop.permute.xlu0 %4029
  %4032 = vset.pattern.permute.xlu0 3
  %4033 = vperm.xlu0 %4032, %v3734
  %v4034 = vpop.permute.xlu0 %4033
  %4036 = vset.pattern.permute.xlu0 3
  %4037 = vperm.xlu0 %4036, %v3735
  %v4038 = vpop.permute.xlu0 %4037
  %4040 = vset.pattern.permute.xlu0 3
  %4041 = vperm.xlu0 %4040, %v3736
  %v4042 = vpop.permute.xlu0 %4041
  %4044 = vset.pattern.permute.xlu0 3
  %4045 = vperm.xlu0 %4044, %v3737
  %v4046 = vpop.permute.xlu0 %4045
  %4048 = vset.pattern.permute.xlu0 3
  %4049 = vperm.xlu0 %4048, %v3738
  %v4050 = vpop.permute.xlu0 %4049
  %4052 = vset.pattern.permute.xlu0 3
  %4053 = vperm.xlu0 %4052, %v3739
  %v4054 = vpop.permute.xlu0 %4053
  %4056 = vset.pattern.permute.xlu0 3
  %4057 = vperm.xlu0 %4056, %v3740
  %v4058 = vpop.permute.xlu0 %4057
  %4060 = vset.pattern.permute.xlu0 3
  %4061 = vperm.xlu0 %4060, %v3741
  %v4062 = vpop.permute.xlu0 %4061
  %v4064 = vmul.f32 %v4010, %v1143
  %v4065 = vmul.f32 %v4014, %v1143
  %v4066 = vmul.f32 %v4018, %v1143
  %v4067 = vmul.f32 %v4022, %v1143
  %v4068 = vmul.f32 %v4026, %v1143
  %v4069 = vmul.f32 %v4030, %v1143
  %v4070 = vmul.f32 %v4034, %v1143
  %v4071 = vmul.f32 %v4038, %v1143
  %v4072 = vmul.f32 %v4042, %v1143
  %v4073 = vmul.f32 %v4046, %v1143
  %v4074 = vmul.f32 %v4050, %v1143
  %v4075 = vmul.f32 %v4054, %v1143
  %v4076 = vmul.f32 %v4058, %v1143
  %v4077 = vmul.f32 %v4062, %v1143
  %v4078 = vadd.f32 %v3994, %v4064
  %v4079 = vadd.f32 %v3995, %v4065
  %v4080 = vadd.f32 %v3996, %v4066
  %v4081 = vadd.f32 %v3997, %v4067
  %v4082 = vadd.f32 %v3998, %v4068
  %v4083 = vadd.f32 %v3999, %v4069
  %v4084 = vadd.f32 %v4000, %v4070
  %v4085 = vadd.f32 %v4001, %v4071
  %v4086 = vadd.f32 %v4002, %v4072
  %v4087 = vadd.f32 %v4003, %v4073
  %v4088 = vadd.f32 %v4004, %v4074
  %v4089 = vadd.f32 %v4005, %v4075
  %v4090 = vadd.f32 %v4006, %v4076
  %v4091 = vadd.f32 %v4007, %v4077
  %v4092 = vmul.f32 %v1571, %v1260
  %v4093 = vmul.f32 %v1576, %v1260
  %v4094 = vmul.f32 %v1581, %v1260
  %v4095 = vmul.f32 %v1586, %v1260
  %v4096 = vmul.f32 %v1591, %v1260
  %v4097 = vmul.f32 %v1596, %v1260
  %v4098 = vmul.f32 %v1601, %v1260
  %v4099 = vmul.f32 %v1606, %v1260
  %v4100 = vmul.f32 %v1611, %v1260
  %v4101 = vmul.f32 %v1616, %v1260
  %v4102 = vmul.f32 %v1621, %v1260
  %v4103 = vmul.f32 %v1626, %v1260
  %v4104 = vmul.f32 %v1631, %v1260
  %v4105 = vmul.f32 %v1636, %v1260
  %v4106 = vadd.f32 %v4078, %v4092
  %v4107 = vadd.f32 %v4079, %v4093
  %v4108 = vadd.f32 %v4080, %v4094
  %v4109 = vadd.f32 %v4081, %v4095
  %v4110 = vadd.f32 %v4082, %v4096
  %v4111 = vadd.f32 %v4083, %v4097
  %v4112 = vadd.f32 %v4084, %v4098
  %v4113 = vadd.f32 %v4085, %v4099
  %v4114 = vadd.f32 %v4086, %v4100
  %v4115 = vadd.f32 %v4087, %v4101
  %v4116 = vadd.f32 %v4088, %v4102
  %v4117 = vadd.f32 %v4089, %v4103
  %v4118 = vadd.f32 %v4090, %v4104
  %v4119 = vadd.f32 %v4091, %v4105
  %v4120 = vmul.f32 %v1672, %v1348
  %v4121 = vmul.f32 %v1676, %v1348
  %v4122 = vmul.f32 %v1680, %v1348
  %v4123 = vmul.f32 %v1684, %v1348
  %v4124 = vmul.f32 %v1688, %v1348
  %v4125 = vmul.f32 %v1692, %v1348
  %v4126 = vmul.f32 %v1696, %v1348
  %v4127 = vmul.f32 %v1700, %v1348
  %v4128 = vmul.f32 %v1704, %v1348
  %v4129 = vmul.f32 %v1708, %v1348
  %v4130 = vmul.f32 %v1712, %v1348
  %v4131 = vmul.f32 %v1716, %v1348
  %v4132 = vmul.f32 %v1720, %v1348
  %v4133 = vmul.f32 %v1724, %v1348
  %v4134 = vadd.f32 %v4106, %v4120
  %v4135 = vadd.f32 %v4107, %v4121
  %v4136 = vadd.f32 %v4108, %v4122
  %v4137 = vadd.f32 %v4109, %v4123
  %v4138 = vadd.f32 %v4110, %v4124
  %v4139 = vadd.f32 %v4111, %v4125
  %v4140 = vadd.f32 %v4112, %v4126
  %v4141 = vadd.f32 %v4113, %v4127
  %v4142 = vadd.f32 %v4114, %v4128
  %v4143 = vadd.f32 %v4115, %v4129
  %v4144 = vadd.f32 %v4116, %v4130
  %v4145 = vadd.f32 %v4117, %v4131
  %v4146 = vadd.f32 %v4118, %v4132
  %v4147 = vadd.f32 %v4119, %v4133
  %v4148 = vmul.f32 %v1760, %v1436
  %v4149 = vmul.f32 %v1764, %v1436
  %v4150 = vmul.f32 %v1768, %v1436
  %v4151 = vmul.f32 %v1772, %v1436
  %v4152 = vmul.f32 %v1776, %v1436
  %v4153 = vmul.f32 %v1780, %v1436
  %v4154 = vmul.f32 %v1784, %v1436
  %v4155 = vmul.f32 %v1788, %v1436
  %v4156 = vmul.f32 %v1792, %v1436
  %v4157 = vmul.f32 %v1796, %v1436
  %v4158 = vmul.f32 %v1800, %v1436
  %v4159 = vmul.f32 %v1804, %v1436
  %v4160 = vmul.f32 %v1808, %v1436
  %v4161 = vmul.f32 %v1812, %v1436
  %v4162 = vadd.f32 %v4134, %v4148
  %v4163 = vadd.f32 %v4135, %v4149
  %v4164 = vadd.f32 %v4136, %v4150
  %v4165 = vadd.f32 %v4137, %v4151
  %v4166 = vadd.f32 %v4138, %v4152
  %v4167 = vadd.f32 %v4139, %v4153
  %v4168 = vadd.f32 %v4140, %v4154
  %v4169 = vadd.f32 %v4141, %v4155
  %v4170 = vadd.f32 %v4142, %v4156
  %v4171 = vadd.f32 %v4143, %v4157
  %v4172 = vadd.f32 %v4144, %v4158
  %v4173 = vadd.f32 %v4145, %v4159
  %v4174 = vadd.f32 %v4146, %v4160
  %v4175 = vadd.f32 %v4147, %v4161
  %v4176 = vmul.f32 %v1848, %v1524
  %v4177 = vmul.f32 %v1852, %v1524
  %v4178 = vmul.f32 %v1856, %v1524
  %v4179 = vmul.f32 %v1860, %v1524
  %v4180 = vmul.f32 %v1864, %v1524
  %v4181 = vmul.f32 %v1868, %v1524
  %v4182 = vmul.f32 %v1872, %v1524
  %v4183 = vmul.f32 %v1876, %v1524
  %v4184 = vmul.f32 %v1880, %v1524
  %v4185 = vmul.f32 %v1884, %v1524
  %v4186 = vmul.f32 %v1888, %v1524
  %v4187 = vmul.f32 %v1892, %v1524
  %v4188 = vmul.f32 %v1896, %v1524
  %v4189 = vmul.f32 %v1900, %v1524
  %v4190 = vadd.f32 %v4162, %v4176
  %v4191 = vadd.f32 %v4163, %v4177
  %v4192 = vadd.f32 %v4164, %v4178
  %v4193 = vadd.f32 %v4165, %v4179
  %v4194 = vadd.f32 %v4166, %v4180
  %v4195 = vadd.f32 %v4167, %v4181
  %v4196 = vadd.f32 %v4168, %v4182
  %v4197 = vadd.f32 %v4169, %v4183
  %v4198 = vadd.f32 %v4170, %v4184
  %v4199 = vadd.f32 %v4171, %v4185
  %v4200 = vadd.f32 %v4172, %v4186
  %v4201 = vadd.f32 %v4173, %v4187
  %v4202 = vadd.f32 %v4174, %v4188
  %v4203 = vadd.f32 %v4175, %v4189
  %v4204 = vmul.f32 %v1951, %v1641
  %v4205 = vmul.f32 %v1956, %v1641
  %v4206 = vmul.f32 %v1961, %v1641
  %v4207 = vmul.f32 %v1966, %v1641
  %v4208 = vmul.f32 %v1971, %v1641
  %v4209 = vmul.f32 %v1976, %v1641
  %v4210 = vmul.f32 %v1981, %v1641
  %v4211 = vmul.f32 %v1986, %v1641
  %v4212 = vmul.f32 %v1991, %v1641
  %v4213 = vmul.f32 %v1996, %v1641
  %v4214 = vmul.f32 %v2001, %v1641
  %v4215 = vmul.f32 %v2006, %v1641
  %v4216 = vmul.f32 %v2011, %v1641
  %v4217 = vmul.f32 %v2016, %v1641
  %v4218 = vadd.f32 %v4190, %v4204
  %v4219 = vadd.f32 %v4191, %v4205
  %v4220 = vadd.f32 %v4192, %v4206
  %v4221 = vadd.f32 %v4193, %v4207
  %v4222 = vadd.f32 %v4194, %v4208
  %v4223 = vadd.f32 %v4195, %v4209
  %v4224 = vadd.f32 %v4196, %v4210
  %v4225 = vadd.f32 %v4197, %v4211
  %v4226 = vadd.f32 %v4198, %v4212
  %v4227 = vadd.f32 %v4199, %v4213
  %v4228 = vadd.f32 %v4200, %v4214
  %v4229 = vadd.f32 %v4201, %v4215
  %v4230 = vadd.f32 %v4202, %v4216
  %v4231 = vadd.f32 %v4203, %v4217
  %v4232 = vmul.f32 %v2052, %v1729
  %v4233 = vmul.f32 %v2056, %v1729
  %v4234 = vmul.f32 %v2060, %v1729
  %v4235 = vmul.f32 %v2064, %v1729
  %v4236 = vmul.f32 %v2068, %v1729
  %v4237 = vmul.f32 %v2072, %v1729
  %v4238 = vmul.f32 %v2076, %v1729
  %v4239 = vmul.f32 %v2080, %v1729
  %v4240 = vmul.f32 %v2084, %v1729
  %v4241 = vmul.f32 %v2088, %v1729
  %v4242 = vmul.f32 %v2092, %v1729
  %v4243 = vmul.f32 %v2096, %v1729
  %v4244 = vmul.f32 %v2100, %v1729
  %v4245 = vmul.f32 %v2104, %v1729
  %v4246 = vadd.f32 %v4218, %v4232
  %v4247 = vadd.f32 %v4219, %v4233
  %v4248 = vadd.f32 %v4220, %v4234
  %v4249 = vadd.f32 %v4221, %v4235
  %v4250 = vadd.f32 %v4222, %v4236
  %v4251 = vadd.f32 %v4223, %v4237
  %v4252 = vadd.f32 %v4224, %v4238
  %v4253 = vadd.f32 %v4225, %v4239
  %v4254 = vadd.f32 %v4226, %v4240
  %v4255 = vadd.f32 %v4227, %v4241
  %v4256 = vadd.f32 %v4228, %v4242
  %v4257 = vadd.f32 %v4229, %v4243
  %v4258 = vadd.f32 %v4230, %v4244
  %v4259 = vadd.f32 %v4231, %v4245
  %v4260 = vmul.f32 %v2140, %v1817
  %v4261 = vmul.f32 %v2144, %v1817
  %v4262 = vmul.f32 %v2148, %v1817
  %v4263 = vmul.f32 %v2152, %v1817
  %v4264 = vmul.f32 %v2156, %v1817
  %v4265 = vmul.f32 %v2160, %v1817
  %v4266 = vmul.f32 %v2164, %v1817
  %v4267 = vmul.f32 %v2168, %v1817
  %v4268 = vmul.f32 %v2172, %v1817
  %v4269 = vmul.f32 %v2176, %v1817
  %v4270 = vmul.f32 %v2180, %v1817
  %v4271 = vmul.f32 %v2184, %v1817
  %v4272 = vmul.f32 %v2188, %v1817
  %v4273 = vmul.f32 %v2192, %v1817
  %v4274 = vadd.f32 %v4246, %v4260
  %v4275 = vadd.f32 %v4247, %v4261
  %v4276 = vadd.f32 %v4248, %v4262
  %v4277 = vadd.f32 %v4249, %v4263
  %v4278 = vadd.f32 %v4250, %v4264
  %v4279 = vadd.f32 %v4251, %v4265
  %v4280 = vadd.f32 %v4252, %v4266
  %v4281 = vadd.f32 %v4253, %v4267
  %v4282 = vadd.f32 %v4254, %v4268
  %v4283 = vadd.f32 %v4255, %v4269
  %v4284 = vadd.f32 %v4256, %v4270
  %v4285 = vadd.f32 %v4257, %v4271
  %v4286 = vadd.f32 %v4258, %v4272
  %v4287 = vadd.f32 %v4259, %v4273
  %v4288 = vmul.f32 %v2228, %v1905
  %v4289 = vmul.f32 %v2232, %v1905
  %v4290 = vmul.f32 %v2236, %v1905
  %v4291 = vmul.f32 %v2240, %v1905
  %v4292 = vmul.f32 %v2244, %v1905
  %v4293 = vmul.f32 %v2248, %v1905
  %v4294 = vmul.f32 %v2252, %v1905
  %v4295 = vmul.f32 %v2256, %v1905
  %v4296 = vmul.f32 %v2260, %v1905
  %v4297 = vmul.f32 %v2264, %v1905
  %v4298 = vmul.f32 %v2268, %v1905
  %v4299 = vmul.f32 %v2272, %v1905
  %v4300 = vmul.f32 %v2276, %v1905
  %v4301 = vmul.f32 %v2280, %v1905
  %v4302 = vadd.f32 %v4274, %v4288
  %v4303 = vadd.f32 %v4275, %v4289
  %v4304 = vadd.f32 %v4276, %v4290
  %v4305 = vadd.f32 %v4277, %v4291
  %v4306 = vadd.f32 %v4278, %v4292
  %v4307 = vadd.f32 %v4279, %v4293
  %v4308 = vadd.f32 %v4280, %v4294
  %v4309 = vadd.f32 %v4281, %v4295
  %v4310 = vadd.f32 %v4282, %v4296
  %v4311 = vadd.f32 %v4283, %v4297
  %v4312 = vadd.f32 %v4284, %v4298
  %v4313 = vadd.f32 %v4285, %v4299
  %v4314 = vadd.f32 %v4286, %v4300
  %v4315 = vadd.f32 %v4287, %v4301
  %v4316 = vld [vmem:[%s1553 + $0x1] sm:$0x7f]
  %v4317 = vld [vmem:[%s1553 + $0x9] sm:$0x7f]
  %v4318 = vld [vmem:[%s1553 + $0x11] sm:$0x7f]
  %v4319 = vld [vmem:[%s1553 + $0x19] sm:$0x7f]
  %v4320 = vld [vmem:[%s1553 + $0x21] sm:$0x7f]
  %v4321 = vld [vmem:[%s1553 + $0x29] sm:$0x7f]
  %v4322 = vld [vmem:[%s1553 + $0x31] sm:$0x7f]
  %v4323 = vld [vmem:[%s1553 + $0x41] sm:$0x7f]
  %v4324 = vld [vmem:[%s1553 + $0x49] sm:$0x7f]
  %v4325 = vld [vmem:[%s1553 + $0x51] sm:$0x7f]
  %v4326 = vld [vmem:[%s1553 + $0x59] sm:$0x7f]
  %v4327 = vld [vmem:[%s1553 + $0x61] sm:$0x7f]
  %v4328 = vld [vmem:[%s1553 + $0x69] sm:$0x7f]
  %v4329 = vld [vmem:[%s1553 + $0x71] sm:$0x7f]
  %4331 = vset.pattern.permute.xlu0 0
  %4332 = vperm.xlu0 %4331, %v4316
  %v4333 = vpop.permute.xlu0 %4332
  %4336 = vset.pattern.permute.xlu0 0
  %4337 = vperm.xlu0 %4336, %v4317
  %v4338 = vpop.permute.xlu0 %4337
  %4341 = vset.pattern.permute.xlu0 0
  %4342 = vperm.xlu0 %4341, %v4318
  %v4343 = vpop.permute.xlu0 %4342
  %4346 = vset.pattern.permute.xlu0 0
  %4347 = vperm.xlu0 %4346, %v4319
  %v4348 = vpop.permute.xlu0 %4347
  %4351 = vset.pattern.permute.xlu0 0
  %4352 = vperm.xlu0 %4351, %v4320
  %v4353 = vpop.permute.xlu0 %4352
  %4356 = vset.pattern.permute.xlu0 0
  %4357 = vperm.xlu0 %4356, %v4321
  %v4358 = vpop.permute.xlu0 %4357
  %4361 = vset.pattern.permute.xlu0 0
  %4362 = vperm.xlu0 %4361, %v4322
  %v4363 = vpop.permute.xlu0 %4362
  %4366 = vset.pattern.permute.xlu0 0
  %4367 = vperm.xlu0 %4366, %v4323
  %v4368 = vpop.permute.xlu0 %4367
  %4371 = vset.pattern.permute.xlu0 0
  %4372 = vperm.xlu0 %4371, %v4324
  %v4373 = vpop.permute.xlu0 %4372
  %4376 = vset.pattern.permute.xlu0 0
  %4377 = vperm.xlu0 %4376, %v4325
  %v4378 = vpop.permute.xlu0 %4377
  %4381 = vset.pattern.permute.xlu0 0
  %4382 = vperm.xlu0 %4381, %v4326
  %v4383 = vpop.permute.xlu0 %4382
  %4386 = vset.pattern.permute.xlu0 0
  %4387 = vperm.xlu0 %4386, %v4327
  %v4388 = vpop.permute.xlu0 %4387
  %4391 = vset.pattern.permute.xlu0 0
  %4392 = vperm.xlu0 %4391, %v4328
  %v4393 = vpop.permute.xlu0 %4392
  %4396 = vset.pattern.permute.xlu0 0
  %4397 = vperm.xlu0 %4396, %v4329
  %v4398 = vpop.permute.xlu0 %4397
  %v4400 = vmul.f32 %v4333, %v2021
  %v4401 = vmul.f32 %v4338, %v2021
  %v4402 = vmul.f32 %v4343, %v2021
  %v4403 = vmul.f32 %v4348, %v2021
  %v4404 = vmul.f32 %v4353, %v2021
  %v4405 = vmul.f32 %v4358, %v2021
  %v4406 = vmul.f32 %v4363, %v2021
  %v4407 = vmul.f32 %v4368, %v2021
  %v4408 = vmul.f32 %v4373, %v2021
  %v4409 = vmul.f32 %v4378, %v2021
  %v4410 = vmul.f32 %v4383, %v2021
  %v4411 = vmul.f32 %v4388, %v2021
  %v4412 = vmul.f32 %v4393, %v2021
  %v4413 = vmul.f32 %v4398, %v2021
  %v4414 = vadd.f32 %v4302, %v4400
  %v4415 = vadd.f32 %v4303, %v4401
  %v4416 = vadd.f32 %v4304, %v4402
  %v4417 = vadd.f32 %v4305, %v4403
  %v4418 = vadd.f32 %v4306, %v4404
  %v4419 = vadd.f32 %v4307, %v4405
  %v4420 = vadd.f32 %v4308, %v4406
  %v4421 = vadd.f32 %v4309, %v4407
  %v4422 = vadd.f32 %v4310, %v4408
  %v4423 = vadd.f32 %v4311, %v4409
  %v4424 = vadd.f32 %v4312, %v4410
  %v4425 = vadd.f32 %v4313, %v4411
  %v4426 = vadd.f32 %v4314, %v4412
  %v4427 = vadd.f32 %v4315, %v4413
  %4428 = vset.pattern.permute.xlu0 1
  %4429 = vperm.xlu0 %4428, %v4316
  %v4430 = vpop.permute.xlu0 %4429
  %4432 = vset.pattern.permute.xlu0 1
  %4433 = vperm.xlu0 %4432, %v4317
  %v4434 = vpop.permute.xlu0 %4433
  %4436 = vset.pattern.permute.xlu0 1
  %4437 = vperm.xlu0 %4436, %v4318
  %v4438 = vpop.permute.xlu0 %4437
  %4440 = vset.pattern.permute.xlu0 1
  %4441 = vperm.xlu0 %4440, %v4319
  %v4442 = vpop.permute.xlu0 %4441
  %4444 = vset.pattern.permute.xlu0 1
  %4445 = vperm.xlu0 %4444, %v4320
  %v4446 = vpop.permute.xlu0 %4445
  %4448 = vset.pattern.permute.xlu0 1
  %4449 = vperm.xlu0 %4448, %v4321
  %v4450 = vpop.permute.xlu0 %4449
  %4452 = vset.pattern.permute.xlu0 1
  %4453 = vperm.xlu0 %4452, %v4322
  %v4454 = vpop.permute.xlu0 %4453
  %4456 = vset.pattern.permute.xlu0 1
  %4457 = vperm.xlu0 %4456, %v4323
  %v4458 = vpop.permute.xlu0 %4457
  %4460 = vset.pattern.permute.xlu0 1
  %4461 = vperm.xlu0 %4460, %v4324
  %v4462 = vpop.permute.xlu0 %4461
  %4464 = vset.pattern.permute.xlu0 1
  %4465 = vperm.xlu0 %4464, %v4325
  %v4466 = vpop.permute.xlu0 %4465
  %4468 = vset.pattern.permute.xlu0 1
  %4469 = vperm.xlu0 %4468, %v4326
  %v4470 = vpop.permute.xlu0 %4469
  %4472 = vset.pattern.permute.xlu0 1
  %4473 = vperm.xlu0 %4472, %v4327
  %v4474 = vpop.permute.xlu0 %4473
  %4476 = vset.pattern.permute.xlu0 1
  %4477 = vperm.xlu0 %4476, %v4328
  %v4478 = vpop.permute.xlu0 %4477
  %4480 = vset.pattern.permute.xlu0 1
  %4481 = vperm.xlu0 %4480, %v4329
  %v4482 = vpop.permute.xlu0 %4481
  %v4484 = vmul.f32 %v4430, %v2109
  %v4485 = vmul.f32 %v4434, %v2109
  %v4486 = vmul.f32 %v4438, %v2109
  %v4487 = vmul.f32 %v4442, %v2109
  %v4488 = vmul.f32 %v4446, %v2109
  %v4489 = vmul.f32 %v4450, %v2109
  %v4490 = vmul.f32 %v4454, %v2109
  %v4491 = vmul.f32 %v4458, %v2109
  %v4492 = vmul.f32 %v4462, %v2109
  %v4493 = vmul.f32 %v4466, %v2109
  %v4494 = vmul.f32 %v4470, %v2109
  %v4495 = vmul.f32 %v4474, %v2109
  %v4496 = vmul.f32 %v4478, %v2109
  %v4497 = vmul.f32 %v4482, %v2109
  %v4498 = vadd.f32 %v4414, %v4484
  %v4499 = vadd.f32 %v4415, %v4485
  %v4500 = vadd.f32 %v4416, %v4486
  %v4501 = vadd.f32 %v4417, %v4487
  %v4502 = vadd.f32 %v4418, %v4488
  %v4503 = vadd.f32 %v4419, %v4489
  %v4504 = vadd.f32 %v4420, %v4490
  %v4505 = vadd.f32 %v4421, %v4491
  %v4506 = vadd.f32 %v4422, %v4492
  %v4507 = vadd.f32 %v4423, %v4493
  %v4508 = vadd.f32 %v4424, %v4494
  %v4509 = vadd.f32 %v4425, %v4495
  %v4510 = vadd.f32 %v4426, %v4496
  %v4511 = vadd.f32 %v4427, %v4497
  %4512 = vset.pattern.permute.xlu0 2
  %4513 = vperm.xlu0 %4512, %v4316
  %v4514 = vpop.permute.xlu0 %4513
  %4516 = vset.pattern.permute.xlu0 2
  %4517 = vperm.xlu0 %4516, %v4317
  %v4518 = vpop.permute.xlu0 %4517
  %4520 = vset.pattern.permute.xlu0 2
  %4521 = vperm.xlu0 %4520, %v4318
  %v4522 = vpop.permute.xlu0 %4521
  %4524 = vset.pattern.permute.xlu0 2
  %4525 = vperm.xlu0 %4524, %v4319
  %v4526 = vpop.permute.xlu0 %4525
  %4528 = vset.pattern.permute.xlu0 2
  %4529 = vperm.xlu0 %4528, %v4320
  %v4530 = vpop.permute.xlu0 %4529
  %4532 = vset.pattern.permute.xlu0 2
  %4533 = vperm.xlu0 %4532, %v4321
  %v4534 = vpop.permute.xlu0 %4533
  %4536 = vset.pattern.permute.xlu0 2
  %4537 = vperm.xlu0 %4536, %v4322
  %v4538 = vpop.permute.xlu0 %4537
  %4540 = vset.pattern.permute.xlu0 2
  %4541 = vperm.xlu0 %4540, %v4323
  %v4542 = vpop.permute.xlu0 %4541
  %4544 = vset.pattern.permute.xlu0 2
  %4545 = vperm.xlu0 %4544, %v4324
  %v4546 = vpop.permute.xlu0 %4545
  %4548 = vset.pattern.permute.xlu0 2
  %4549 = vperm.xlu0 %4548, %v4325
  %v4550 = vpop.permute.xlu0 %4549
  %4552 = vset.pattern.permute.xlu0 2
  %4553 = vperm.xlu0 %4552, %v4326
  %v4554 = vpop.permute.xlu0 %4553
  %4556 = vset.pattern.permute.xlu0 2
  %4557 = vperm.xlu0 %4556, %v4327
  %v4558 = vpop.permute.xlu0 %4557
  %4560 = vset.pattern.permute.xlu0 2
  %4561 = vperm.xlu0 %4560, %v4328
  %v4562 = vpop.permute.xlu0 %4561
  %4564 = vset.pattern.permute.xlu0 2
  %4565 = vperm.xlu0 %4564, %v4329
  %v4566 = vpop.permute.xlu0 %4565
  %v4568 = vmul.f32 %v4514, %v2197
  %v4569 = vmul.f32 %v4518, %v2197
  %v4570 = vmul.f32 %v4522, %v2197
  %v4571 = vmul.f32 %v4526, %v2197
  %v4572 = vmul.f32 %v4530, %v2197
  %v4573 = vmul.f32 %v4534, %v2197
  %v4574 = vmul.f32 %v4538, %v2197
  %v4575 = vmul.f32 %v4542, %v2197
  %v4576 = vmul.f32 %v4546, %v2197
  %v4577 = vmul.f32 %v4550, %v2197
  %v4578 = vmul.f32 %v4554, %v2197
  %v4579 = vmul.f32 %v4558, %v2197
  %v4580 = vmul.f32 %v4562, %v2197
  %v4581 = vmul.f32 %v4566, %v2197
  %v4582 = vadd.f32 %v4498, %v4568
  %v4583 = vadd.f32 %v4499, %v4569
  %v4584 = vadd.f32 %v4500, %v4570
  %v4585 = vadd.f32 %v4501, %v4571
  %v4586 = vadd.f32 %v4502, %v4572
  %v4587 = vadd.f32 %v4503, %v4573
  %v4588 = vadd.f32 %v4504, %v4574
  %v4589 = vadd.f32 %v4505, %v4575
  %v4590 = vadd.f32 %v4506, %v4576
  %v4591 = vadd.f32 %v4507, %v4577
  %v4592 = vadd.f32 %v4508, %v4578
  %v4593 = vadd.f32 %v4509, %v4579
  %v4594 = vadd.f32 %v4510, %v4580
  %v4595 = vadd.f32 %v4511, %v4581
  %4596 = vset.pattern.permute.xlu0 3
  %4597 = vperm.xlu0 %4596, %v4316
  %v4598 = vpop.permute.xlu0 %4597
  %4600 = vset.pattern.permute.xlu0 3
  %4601 = vperm.xlu0 %4600, %v4317
  %v4602 = vpop.permute.xlu0 %4601
  %4604 = vset.pattern.permute.xlu0 3
  %4605 = vperm.xlu0 %4604, %v4318
  %v4606 = vpop.permute.xlu0 %4605
  %4608 = vset.pattern.permute.xlu0 3
  %4609 = vperm.xlu0 %4608, %v4319
  %v4610 = vpop.permute.xlu0 %4609
  %4612 = vset.pattern.permute.xlu0 3
  %4613 = vperm.xlu0 %4612, %v4320
  %v4614 = vpop.permute.xlu0 %4613
  %4616 = vset.pattern.permute.xlu0 3
  %4617 = vperm.xlu0 %4616, %v4321
  %v4618 = vpop.permute.xlu0 %4617
  %4620 = vset.pattern.permute.xlu0 3
  %4621 = vperm.xlu0 %4620, %v4322
  %v4622 = vpop.permute.xlu0 %4621
  %4624 = vset.pattern.permute.xlu0 3
  %4625 = vperm.xlu0 %4624, %v4323
  %v4626 = vpop.permute.xlu0 %4625
  %4628 = vset.pattern.permute.xlu0 3
  %4629 = vperm.xlu0 %4628, %v4324
  %v4630 = vpop.permute.xlu0 %4629
  %4632 = vset.pattern.permute.xlu0 3
  %4633 = vperm.xlu0 %4632, %v4325
  %v4634 = vpop.permute.xlu0 %4633
  %4636 = vset.pattern.permute.xlu0 3
  %4637 = vperm.xlu0 %4636, %v4326
  %v4638 = vpop.permute.xlu0 %4637
  %4640 = vset.pattern.permute.xlu0 3
  %4641 = vperm.xlu0 %4640, %v4327
  %v4642 = vpop.permute.xlu0 %4641
  %4644 = vset.pattern.permute.xlu0 3
  %4645 = vperm.xlu0 %4644, %v4328
  %v4646 = vpop.permute.xlu0 %4645
  %4648 = vset.pattern.permute.xlu0 3
  %4649 = vperm.xlu0 %4648, %v4329
  %v4650 = vpop.permute.xlu0 %4649
  %v4652 = vmul.f32 %v4598, %v2285
  %v4653 = vmul.f32 %v4602, %v2285
  %v4654 = vmul.f32 %v4606, %v2285
  %v4655 = vmul.f32 %v4610, %v2285
  %v4656 = vmul.f32 %v4614, %v2285
  %v4657 = vmul.f32 %v4618, %v2285
  %v4658 = vmul.f32 %v4622, %v2285
  %v4659 = vmul.f32 %v4626, %v2285
  %v4660 = vmul.f32 %v4630, %v2285
  %v4661 = vmul.f32 %v4634, %v2285
  %v4662 = vmul.f32 %v4638, %v2285
  %v4663 = vmul.f32 %v4642, %v2285
  %v4664 = vmul.f32 %v4646, %v2285
  %v4665 = vmul.f32 %v4650, %v2285
  %v4666 = vadd.f32 %v4582, %v4652
  %v4667 = vadd.f32 %v4583, %v4653
  %v4668 = vadd.f32 %v4584, %v4654
  %v4669 = vadd.f32 %v4585, %v4655
  %v4670 = vadd.f32 %v4586, %v4656
  %v4671 = vadd.f32 %v4587, %v4657
  %v4672 = vadd.f32 %v4588, %v4658
  %v4673 = vadd.f32 %v4589, %v4659
  %v4674 = vadd.f32 %v4590, %v4660
  %v4675 = vadd.f32 %v4591, %v4661
  %v4676 = vadd.f32 %v4592, %v4662
  %v4677 = vadd.f32 %v4593, %v4663
  %v4678 = vadd.f32 %v4594, %v4664
  %v4679 = vadd.f32 %v4595, %v4665
  %v4680 = vmul.f32 %v2713, %v2402
  %v4681 = vmul.f32 %v2718, %v2402
  %v4682 = vmul.f32 %v2723, %v2402
  %v4683 = vmul.f32 %v2728, %v2402
  %v4684 = vmul.f32 %v2733, %v2402
  %v4685 = vmul.f32 %v2738, %v2402
  %v4686 = vmul.f32 %v2743, %v2402
  %v4687 = vmul.f32 %v2748, %v2402
  %v4688 = vmul.f32 %v2753, %v2402
  %v4689 = vmul.f32 %v2758, %v2402
  %v4690 = vmul.f32 %v2763, %v2402
  %v4691 = vmul.f32 %v2768, %v2402
  %v4692 = vmul.f32 %v2773, %v2402
  %v4693 = vmul.f32 %v2778, %v2402
  %v4694 = vadd.f32 %v4666, %v4680
  %v4695 = vadd.f32 %v4667, %v4681
  %v4696 = vadd.f32 %v4668, %v4682
  %v4697 = vadd.f32 %v4669, %v4683
  %v4698 = vadd.f32 %v4670, %v4684
  %v4699 = vadd.f32 %v4671, %v4685
  %v4700 = vadd.f32 %v4672, %v4686
  %v4701 = vadd.f32 %v4673, %v4687
  %v4702 = vadd.f32 %v4674, %v4688
  %v4703 = vadd.f32 %v4675, %v4689
  %v4704 = vadd.f32 %v4676, %v4690
  %v4705 = vadd.f32 %v4677, %v4691
  %v4706 = vadd.f32 %v4678, %v4692
  %v4707 = vadd.f32 %v4679, %v4693
  %v4708 = vmul.f32 %v2814, %v2490
  %v4709 = vmul.f32 %v2818, %v2490
  %v4710 = vmul.f32 %v2822, %v2490
  %v4711 = vmul.f32 %v2826, %v2490
  %v4712 = vmul.f32 %v2830, %v2490
  %v4713 = vmul.f32 %v2834, %v2490
  %v4714 = vmul.f32 %v2838, %v2490
  %v4715 = vmul.f32 %v2842, %v2490
  %v4716 = vmul.f32 %v2846, %v2490
  %v4717 = vmul.f32 %v2850, %v2490
  %v4718 = vmul.f32 %v2854, %v2490
  %v4719 = vmul.f32 %v2858, %v2490
  %v4720 = vmul.f32 %v2862, %v2490
  %v4721 = vmul.f32 %v2866, %v2490
  %v4722 = vadd.f32 %v4694, %v4708
  %v4723 = vadd.f32 %v4695, %v4709
  %v4724 = vadd.f32 %v4696, %v4710
  %v4725 = vadd.f32 %v4697, %v4711
  %v4726 = vadd.f32 %v4698, %v4712
  %v4727 = vadd.f32 %v4699, %v4713
  %v4728 = vadd.f32 %v4700, %v4714
  %v4729 = vadd.f32 %v4701, %v4715
  %v4730 = vadd.f32 %v4702, %v4716
  %v4731 = vadd.f32 %v4703, %v4717
  %v4732 = vadd.f32 %v4704, %v4718
  %v4733 = vadd.f32 %v4705, %v4719
  %v4734 = vadd.f32 %v4706, %v4720
  %v4735 = vadd.f32 %v4707, %v4721
  %v4736 = vmul.f32 %v2902, %v2578
  %v4737 = vmul.f32 %v2906, %v2578
  %v4738 = vmul.f32 %v2910, %v2578
  %v4739 = vmul.f32 %v2914, %v2578
  %v4740 = vmul.f32 %v2918, %v2578
  %v4741 = vmul.f32 %v2922, %v2578
  %v4742 = vmul.f32 %v2926, %v2578
  %v4743 = vmul.f32 %v2930, %v2578
  %v4744 = vmul.f32 %v2934, %v2578
  %v4745 = vmul.f32 %v2938, %v2578
  %v4746 = vmul.f32 %v2942, %v2578
  %v4747 = vmul.f32 %v2946, %v2578
  %v4748 = vmul.f32 %v2950, %v2578
  %v4749 = vmul.f32 %v2954, %v2578
  %v4750 = vadd.f32 %v4722, %v4736
  %v4751 = vadd.f32 %v4723, %v4737
  %v4752 = vadd.f32 %v4724, %v4738
  %v4753 = vadd.f32 %v4725, %v4739
  %v4754 = vadd.f32 %v4726, %v4740
  %v4755 = vadd.f32 %v4727, %v4741
  %v4756 = vadd.f32 %v4728, %v4742
  %v4757 = vadd.f32 %v4729, %v4743
  %v4758 = vadd.f32 %v4730, %v4744
  %v4759 = vadd.f32 %v4731, %v4745
  %v4760 = vadd.f32 %v4732, %v4746
  %v4761 = vadd.f32 %v4733, %v4747
  %v4762 = vadd.f32 %v4734, %v4748
  %v4763 = vadd.f32 %v4735, %v4749
  %v4764 = vmul.f32 %v2990, %v2666
  %v4765 = vmul.f32 %v2994, %v2666
  %v4766 = vmul.f32 %v2998, %v2666
  %v4767 = vmul.f32 %v3002, %v2666
  %v4768 = vmul.f32 %v3006, %v2666
  %v4769 = vmul.f32 %v3010, %v2666
  %v4770 = vmul.f32 %v3014, %v2666
  %v4771 = vmul.f32 %v3018, %v2666
  %v4772 = vmul.f32 %v3022, %v2666
  %v4773 = vmul.f32 %v3026, %v2666
  %v4774 = vmul.f32 %v3030, %v2666
  %v4775 = vmul.f32 %v3034, %v2666
  %v4776 = vmul.f32 %v3038, %v2666
  %v4777 = vmul.f32 %v3042, %v2666
  %v4778 = vadd.f32 %v4750, %v4764
  %v4779 = vadd.f32 %v4751, %v4765
  %v4780 = vadd.f32 %v4752, %v4766
  %v4781 = vadd.f32 %v4753, %v4767
  %v4782 = vadd.f32 %v4754, %v4768
  %v4783 = vadd.f32 %v4755, %v4769
  %v4784 = vadd.f32 %v4756, %v4770
  %v4785 = vadd.f32 %v4757, %v4771
  %v4786 = vadd.f32 %v4758, %v4772
  %v4787 = vadd.f32 %v4759, %v4773
  %v4788 = vadd.f32 %v4760, %v4774
  %v4789 = vadd.f32 %v4761, %v4775
  %v4790 = vadd.f32 %v4762, %v4776
  %v4791 = vadd.f32 %v4763, %v4777
  %v4792 = vmul.f32 %v3093, %v2783
  %v4793 = vmul.f32 %v3098, %v2783
  %v4794 = vmul.f32 %v3103, %v2783
  %v4795 = vmul.f32 %v3108, %v2783
  %v4796 = vmul.f32 %v3113, %v2783
  %v4797 = vmul.f32 %v3118, %v2783
  %v4798 = vmul.f32 %v3123, %v2783
  %v4799 = vmul.f32 %v3128, %v2783
  %v4800 = vmul.f32 %v3133, %v2783
  %v4801 = vmul.f32 %v3138, %v2783
  %v4802 = vmul.f32 %v3143, %v2783
  %v4803 = vmul.f32 %v3148, %v2783
  %v4804 = vmul.f32 %v3153, %v2783
  %v4805 = vmul.f32 %v3158, %v2783
  %v4806 = vadd.f32 %v4778, %v4792
  %v4807 = vadd.f32 %v4779, %v4793
  %v4808 = vadd.f32 %v4780, %v4794
  %v4809 = vadd.f32 %v4781, %v4795
  %v4810 = vadd.f32 %v4782, %v4796
  %v4811 = vadd.f32 %v4783, %v4797
  %v4812 = vadd.f32 %v4784, %v4798
  %v4813 = vadd.f32 %v4785, %v4799
  %v4814 = vadd.f32 %v4786, %v4800
  %v4815 = vadd.f32 %v4787, %v4801
  %v4816 = vadd.f32 %v4788, %v4802
  %v4817 = vadd.f32 %v4789, %v4803
  %v4818 = vadd.f32 %v4790, %v4804
  %v4819 = vadd.f32 %v4791, %v4805
  %v4820 = vmul.f32 %v3194, %v2871
  %v4821 = vmul.f32 %v3198, %v2871
  %v4822 = vmul.f32 %v3202, %v2871
  %v4823 = vmul.f32 %v3206, %v2871
  %v4824 = vmul.f32 %v3210, %v2871
  %v4825 = vmul.f32 %v3214, %v2871
  %v4826 = vmul.f32 %v3218, %v2871
  %v4827 = vmul.f32 %v3222, %v2871
  %v4828 = vmul.f32 %v3226, %v2871
  %v4829 = vmul.f32 %v3230, %v2871
  %v4830 = vmul.f32 %v3234, %v2871
  %v4831 = vmul.f32 %v3238, %v2871
  %v4832 = vmul.f32 %v3242, %v2871
  %v4833 = vmul.f32 %v3246, %v2871
  %v4834 = vadd.f32 %v4806, %v4820
  %v4835 = vadd.f32 %v4807, %v4821
  %v4836 = vadd.f32 %v4808, %v4822
  %v4837 = vadd.f32 %v4809, %v4823
  %v4838 = vadd.f32 %v4810, %v4824
  %v4839 = vadd.f32 %v4811, %v4825
  %v4840 = vadd.f32 %v4812, %v4826
  %v4841 = vadd.f32 %v4813, %v4827
  %v4842 = vadd.f32 %v4814, %v4828
  %v4843 = vadd.f32 %v4815, %v4829
  %v4844 = vadd.f32 %v4816, %v4830
  %v4845 = vadd.f32 %v4817, %v4831
  %v4846 = vadd.f32 %v4818, %v4832
  %v4847 = vadd.f32 %v4819, %v4833
  %v4848 = vmul.f32 %v3282, %v2959
  %v4849 = vmul.f32 %v3286, %v2959
  %v4850 = vmul.f32 %v3290, %v2959
  %v4851 = vmul.f32 %v3294, %v2959
  %v4852 = vmul.f32 %v3298, %v2959
  %v4853 = vmul.f32 %v3302, %v2959
  %v4854 = vmul.f32 %v3306, %v2959
  %v4855 = vmul.f32 %v3310, %v2959
  %v4856 = vmul.f32 %v3314, %v2959
  %v4857 = vmul.f32 %v3318, %v2959
  %v4858 = vmul.f32 %v3322, %v2959
  %v4859 = vmul.f32 %v3326, %v2959
  %v4860 = vmul.f32 %v3330, %v2959
  %v4861 = vmul.f32 %v3334, %v2959
  %v4862 = vadd.f32 %v4834, %v4848
  %v4863 = vadd.f32 %v4835, %v4849
  %v4864 = vadd.f32 %v4836, %v4850
  %v4865 = vadd.f32 %v4837, %v4851
  %v4866 = vadd.f32 %v4838, %v4852
  %v4867 = vadd.f32 %v4839, %v4853
  %v4868 = vadd.f32 %v4840, %v4854
  %v4869 = vadd.f32 %v4841, %v4855
  %v4870 = vadd.f32 %v4842, %v4856
  %v4871 = vadd.f32 %v4843, %v4857
  %v4872 = vadd.f32 %v4844, %v4858
  %v4873 = vadd.f32 %v4845, %v4859
  %v4874 = vadd.f32 %v4846, %v4860
  %v4875 = vadd.f32 %v4847, %v4861
  %v4876 = vmul.f32 %v3370, %v3047
  %v4877 = vmul.f32 %v3374, %v3047
  %v4878 = vmul.f32 %v3378, %v3047
  %v4879 = vmul.f32 %v3382, %v3047
  %v4880 = vmul.f32 %v3386, %v3047
  %v4881 = vmul.f32 %v3390, %v3047
  %v4882 = vmul.f32 %v3394, %v3047
  %v4883 = vmul.f32 %v3398, %v3047
  %v4884 = vmul.f32 %v3402, %v3047
  %v4885 = vmul.f32 %v3406, %v3047
  %v4886 = vmul.f32 %v3410, %v3047
  %v4887 = vmul.f32 %v3414, %v3047
  %v4888 = vmul.f32 %v3418, %v3047
  %v4889 = vmul.f32 %v3422, %v3047
  %v4890 = vadd.f32 %v4862, %v4876
  %v4891 = vadd.f32 %v4863, %v4877
  %v4892 = vadd.f32 %v4864, %v4878
  %v4893 = vadd.f32 %v4865, %v4879
  %v4894 = vadd.f32 %v4866, %v4880
  %v4895 = vadd.f32 %v4867, %v4881
  %v4896 = vadd.f32 %v4868, %v4882
  %v4897 = vadd.f32 %v4869, %v4883
  %v4898 = vadd.f32 %v4870, %v4884
  %v4899 = vadd.f32 %v4871, %v4885
  %v4900 = vadd.f32 %v4872, %v4886
  %v4901 = vadd.f32 %v4873, %v4887
  %v4902 = vadd.f32 %v4874, %v4888
  %v4903 = vadd.f32 %v4875, %v4889
  %v4904 = vld [vmem:[%s2695 + $0x1] sm:$0x7f]
  %v4905 = vld [vmem:[%s2695 + $0x9] sm:$0x7f]
  %v4906 = vld [vmem:[%s2695 + $0x11] sm:$0x7f]
  %v4907 = vld [vmem:[%s2695 + $0x19] sm:$0x7f]
  %v4908 = vld [vmem:[%s2695 + $0x21] sm:$0x7f]
  %v4909 = vld [vmem:[%s2695 + $0x29] sm:$0x7f]
  %v4910 = vld [vmem:[%s2695 + $0x31] sm:$0x7f]
  %v4911 = vld [vmem:[%s2695 + $0x41] sm:$0x7f]
  %v4912 = vld [vmem:[%s2695 + $0x49] sm:$0x7f]
  %v4913 = vld [vmem:[%s2695 + $0x51] sm:$0x7f]
  %v4914 = vld [vmem:[%s2695 + $0x59] sm:$0x7f]
  %v4915 = vld [vmem:[%s2695 + $0x61] sm:$0x7f]
  %v4916 = vld [vmem:[%s2695 + $0x69] sm:$0x7f]
  %v4917 = vld [vmem:[%s2695 + $0x71] sm:$0x7f]
  %4919 = vset.pattern.permute.xlu0 0
  %4920 = vperm.xlu0 %4919, %v4904
  %v4921 = vpop.permute.xlu0 %4920
  %4924 = vset.pattern.permute.xlu0 0
  %4925 = vperm.xlu0 %4924, %v4905
  %v4926 = vpop.permute.xlu0 %4925
  %4929 = vset.pattern.permute.xlu0 0
  %4930 = vperm.xlu0 %4929, %v4906
  %v4931 = vpop.permute.xlu0 %4930
  %4934 = vset.pattern.permute.xlu0 0
  %4935 = vperm.xlu0 %4934, %v4907
  %v4936 = vpop.permute.xlu0 %4935
  %4939 = vset.pattern.permute.xlu0 0
  %4940 = vperm.xlu0 %4939, %v4908
  %v4941 = vpop.permute.xlu0 %4940
  %4944 = vset.pattern.permute.xlu0 0
  %4945 = vperm.xlu0 %4944, %v4909
  %v4946 = vpop.permute.xlu0 %4945
  %4949 = vset.pattern.permute.xlu0 0
  %4950 = vperm.xlu0 %4949, %v4910
  %v4951 = vpop.permute.xlu0 %4950
  %4954 = vset.pattern.permute.xlu0 0
  %4955 = vperm.xlu0 %4954, %v4911
  %v4956 = vpop.permute.xlu0 %4955
  %4959 = vset.pattern.permute.xlu0 0
  %4960 = vperm.xlu0 %4959, %v4912
  %v4961 = vpop.permute.xlu0 %4960
  %4964 = vset.pattern.permute.xlu0 0
  %4965 = vperm.xlu0 %4964, %v4913
  %v4966 = vpop.permute.xlu0 %4965
  %4969 = vset.pattern.permute.xlu0 0
  %4970 = vperm.xlu0 %4969, %v4914
  %v4971 = vpop.permute.xlu0 %4970
  %4974 = vset.pattern.permute.xlu0 0
  %4975 = vperm.xlu0 %4974, %v4915
  %v4976 = vpop.permute.xlu0 %4975
  %4979 = vset.pattern.permute.xlu0 0
  %4980 = vperm.xlu0 %4979, %v4916
  %v4981 = vpop.permute.xlu0 %4980
  %4984 = vset.pattern.permute.xlu0 0
  %4985 = vperm.xlu0 %4984, %v4917
  %v4986 = vpop.permute.xlu0 %4985
  %v4988 = vmul.f32 %v4921, %v3163
  %v4989 = vmul.f32 %v4926, %v3163
  %v4990 = vmul.f32 %v4931, %v3163
  %v4991 = vmul.f32 %v4936, %v3163
  %v4992 = vmul.f32 %v4941, %v3163
  %v4993 = vmul.f32 %v4946, %v3163
  %v4994 = vmul.f32 %v4951, %v3163
  %v4995 = vmul.f32 %v4956, %v3163
  %v4996 = vmul.f32 %v4961, %v3163
  %v4997 = vmul.f32 %v4966, %v3163
  %v4998 = vmul.f32 %v4971, %v3163
  %v4999 = vmul.f32 %v4976, %v3163
  %v5000 = vmul.f32 %v4981, %v3163
  %v5001 = vmul.f32 %v4986, %v3163
  %v5002 = vadd.f32 %v4890, %v4988
  %v5003 = vadd.f32 %v4891, %v4989
  %v5004 = vadd.f32 %v4892, %v4990
  %v5005 = vadd.f32 %v4893, %v4991
  %v5006 = vadd.f32 %v4894, %v4992
  %v5007 = vadd.f32 %v4895, %v4993
  %v5008 = vadd.f32 %v4896, %v4994
  %v5009 = vadd.f32 %v4897, %v4995
  %v5010 = vadd.f32 %v4898, %v4996
  %v5011 = vadd.f32 %v4899, %v4997
  %v5012 = vadd.f32 %v4900, %v4998
  %v5013 = vadd.f32 %v4901, %v4999
  %v5014 = vadd.f32 %v4902, %v5000
  %v5015 = vadd.f32 %v4903, %v5001
  %5016 = vset.pattern.permute.xlu0 1
  %5017 = vperm.xlu0 %5016, %v4904
  %v5018 = vpop.permute.xlu0 %5017
  %5020 = vset.pattern.permute.xlu0 1
  %5021 = vperm.xlu0 %5020, %v4905
  %v5022 = vpop.permute.xlu0 %5021
  %5024 = vset.pattern.permute.xlu0 1
  %5025 = vperm.xlu0 %5024, %v4906
  %v5026 = vpop.permute.xlu0 %5025
  %5028 = vset.pattern.permute.xlu0 1
  %5029 = vperm.xlu0 %5028, %v4907
  %v5030 = vpop.permute.xlu0 %5029
  %5032 = vset.pattern.permute.xlu0 1
  %5033 = vperm.xlu0 %5032, %v4908
  %v5034 = vpop.permute.xlu0 %5033
  %5036 = vset.pattern.permute.xlu0 1
  %5037 = vperm.xlu0 %5036, %v4909
  %v5038 = vpop.permute.xlu0 %5037
  %5040 = vset.pattern.permute.xlu0 1
  %5041 = vperm.xlu0 %5040, %v4910
  %v5042 = vpop.permute.xlu0 %5041
  %5044 = vset.pattern.permute.xlu0 1
  %5045 = vperm.xlu0 %5044, %v4911
  %v5046 = vpop.permute.xlu0 %5045
  %5048 = vset.pattern.permute.xlu0 1
  %5049 = vperm.xlu0 %5048, %v4912
  %v5050 = vpop.permute.xlu0 %5049
  %5052 = vset.pattern.permute.xlu0 1
  %5053 = vperm.xlu0 %5052, %v4913
  %v5054 = vpop.permute.xlu0 %5053
  %5056 = vset.pattern.permute.xlu0 1
  %5057 = vperm.xlu0 %5056, %v4914
  %v5058 = vpop.permute.xlu0 %5057
  %5060 = vset.pattern.permute.xlu0 1
  %5061 = vperm.xlu0 %5060, %v4915
  %v5062 = vpop.permute.xlu0 %5061
  %5064 = vset.pattern.permute.xlu0 1
  %5065 = vperm.xlu0 %5064, %v4916
  %v5066 = vpop.permute.xlu0 %5065
  %5068 = vset.pattern.permute.xlu0 1
  %5069 = vperm.xlu0 %5068, %v4917
  %v5070 = vpop.permute.xlu0 %5069
  %v5072 = vmul.f32 %v5018, %v3251
  %v5073 = vmul.f32 %v5022, %v3251
  %v5074 = vmul.f32 %v5026, %v3251
  %v5075 = vmul.f32 %v5030, %v3251
  %v5076 = vmul.f32 %v5034, %v3251
  %v5077 = vmul.f32 %v5038, %v3251
  %v5078 = vmul.f32 %v5042, %v3251
  %v5079 = vmul.f32 %v5046, %v3251
  %v5080 = vmul.f32 %v5050, %v3251
  %v5081 = vmul.f32 %v5054, %v3251
  %v5082 = vmul.f32 %v5058, %v3251
  %v5083 = vmul.f32 %v5062, %v3251
  %v5084 = vmul.f32 %v5066, %v3251
  %v5085 = vmul.f32 %v5070, %v3251
  %v5086 = vadd.f32 %v5002, %v5072
  %v5087 = vadd.f32 %v5003, %v5073
  %v5088 = vadd.f32 %v5004, %v5074
  %v5089 = vadd.f32 %v5005, %v5075
  %v5090 = vadd.f32 %v5006, %v5076
  %v5091 = vadd.f32 %v5007, %v5077
  %v5092 = vadd.f32 %v5008, %v5078
  %v5093 = vadd.f32 %v5009, %v5079
  %v5094 = vadd.f32 %v5010, %v5080
  %v5095 = vadd.f32 %v5011, %v5081
  %v5096 = vadd.f32 %v5012, %v5082
  %v5097 = vadd.f32 %v5013, %v5083
  %v5098 = vadd.f32 %v5014, %v5084
  %v5099 = vadd.f32 %v5015, %v5085
  %5100 = vset.pattern.permute.xlu0 2
  %5101 = vperm.xlu0 %5100, %v4904
  %v5102 = vpop.permute.xlu0 %5101
  %5104 = vset.pattern.permute.xlu0 2
  %5105 = vperm.xlu0 %5104, %v4905
  %v5106 = vpop.permute.xlu0 %5105
  %5108 = vset.pattern.permute.xlu0 2
  %5109 = vperm.xlu0 %5108, %v4906
  %v5110 = vpop.permute.xlu0 %5109
  %5112 = vset.pattern.permute.xlu0 2
  %5113 = vperm.xlu0 %5112, %v4907
  %v5114 = vpop.permute.xlu0 %5113
  %5116 = vset.pattern.permute.xlu0 2
  %5117 = vperm.xlu0 %5116, %v4908
  %v5118 = vpop.permute.xlu0 %5117
  %5120 = vset.pattern.permute.xlu0 2
  %5121 = vperm.xlu0 %5120, %v4909
  %v5122 = vpop.permute.xlu0 %5121
  %5124 = vset.pattern.permute.xlu0 2
  %5125 = vperm.xlu0 %5124, %v4910
  %v5126 = vpop.permute.xlu0 %5125
  %5128 = vset.pattern.permute.xlu0 2
  %5129 = vperm.xlu0 %5128, %v4911
  %v5130 = vpop.permute.xlu0 %5129
  %5132 = vset.pattern.permute.xlu0 2
  %5133 = vperm.xlu0 %5132, %v4912
  %v5134 = vpop.permute.xlu0 %5133
  %5136 = vset.pattern.permute.xlu0 2
  %5137 = vperm.xlu0 %5136, %v4913
  %v5138 = vpop.permute.xlu0 %5137
  %5140 = vset.pattern.permute.xlu0 2
  %5141 = vperm.xlu0 %5140, %v4914
  %v5142 = vpop.permute.xlu0 %5141
  %5144 = vset.pattern.permute.xlu0 2
  %5145 = vperm.xlu0 %5144, %v4915
  %v5146 = vpop.permute.xlu0 %5145
  %5148 = vset.pattern.permute.xlu0 2
  %5149 = vperm.xlu0 %5148, %v4916
  %v5150 = vpop.permute.xlu0 %5149
  %5152 = vset.pattern.permute.xlu0 2
  %5153 = vperm.xlu0 %5152, %v4917
  %v5154 = vpop.permute.xlu0 %5153
  %v5156 = vmul.f32 %v5102, %v3339
  %v5157 = vmul.f32 %v5106, %v3339
  %v5158 = vmul.f32 %v5110, %v3339
  %v5159 = vmul.f32 %v5114, %v3339
  %v5160 = vmul.f32 %v5118, %v3339
  %v5161 = vmul.f32 %v5122, %v3339
  %v5162 = vmul.f32 %v5126, %v3339
  %v5163 = vmul.f32 %v5130, %v3339
  %v5164 = vmul.f32 %v5134, %v3339
  %v5165 = vmul.f32 %v5138, %v3339
  %v5166 = vmul.f32 %v5142, %v3339
  %v5167 = vmul.f32 %v5146, %v3339
  %v5168 = vmul.f32 %v5150, %v3339
  %v5169 = vmul.f32 %v5154, %v3339
  %v5170 = vadd.f32 %v5086, %v5156
  %v5171 = vadd.f32 %v5087, %v5157
  %v5172 = vadd.f32 %v5088, %v5158
  %v5173 = vadd.f32 %v5089, %v5159
  %v5174 = vadd.f32 %v5090, %v5160
  %v5175 = vadd.f32 %v5091, %v5161
  %v5176 = vadd.f32 %v5092, %v5162
  %v5177 = vadd.f32 %v5093, %v5163
  %v5178 = vadd.f32 %v5094, %v5164
  %v5179 = vadd.f32 %v5095, %v5165
  %v5180 = vadd.f32 %v5096, %v5166
  %v5181 = vadd.f32 %v5097, %v5167
  %v5182 = vadd.f32 %v5098, %v5168
  %v5183 = vadd.f32 %v5099, %v5169
  %5184 = vset.pattern.permute.xlu0 3
  %5185 = vperm.xlu0 %5184, %v4904
  %v5186 = vpop.permute.xlu0 %5185
  %5188 = vset.pattern.permute.xlu0 3
  %5189 = vperm.xlu0 %5188, %v4905
  %v5190 = vpop.permute.xlu0 %5189
  %5192 = vset.pattern.permute.xlu0 3
  %5193 = vperm.xlu0 %5192, %v4906
  %v5194 = vpop.permute.xlu0 %5193
  %5196 = vset.pattern.permute.xlu0 3
  %5197 = vperm.xlu0 %5196, %v4907
  %v5198 = vpop.permute.xlu0 %5197
  %5200 = vset.pattern.permute.xlu0 3
  %5201 = vperm.xlu0 %5200, %v4908
  %v5202 = vpop.permute.xlu0 %5201
  %5204 = vset.pattern.permute.xlu0 3
  %5205 = vperm.xlu0 %5204, %v4909
  %v5206 = vpop.permute.xlu0 %5205
  %5208 = vset.pattern.permute.xlu0 3
  %5209 = vperm.xlu0 %5208, %v4910
  %v5210 = vpop.permute.xlu0 %5209
  %5212 = vset.pattern.permute.xlu0 3
  %5213 = vperm.xlu0 %5212, %v4911
  %v5214 = vpop.permute.xlu0 %5213
  %5216 = vset.pattern.permute.xlu0 3
  %5217 = vperm.xlu0 %5216, %v4912
  %v5218 = vpop.permute.xlu0 %5217
  %5220 = vset.pattern.permute.xlu0 3
  %5221 = vperm.xlu0 %5220, %v4913
  %v5222 = vpop.permute.xlu0 %5221
  %5224 = vset.pattern.permute.xlu0 3
  %5225 = vperm.xlu0 %5224, %v4914
  %v5226 = vpop.permute.xlu0 %5225
  %5228 = vset.pattern.permute.xlu0 3
  %5229 = vperm.xlu0 %5228, %v4915
  %v5230 = vpop.permute.xlu0 %5229
  %5232 = vset.pattern.permute.xlu0 3
  %5233 = vperm.xlu0 %5232, %v4916
  %v5234 = vpop.permute.xlu0 %5233
  %5236 = vset.pattern.permute.xlu0 3
  %5237 = vperm.xlu0 %5236, %v4917
  %v5238 = vpop.permute.xlu0 %5237
  %v5240 = vmul.f32 %v5186, %v3427
  %v5241 = vmul.f32 %v5190, %v3427
  %v5242 = vmul.f32 %v5194, %v3427
  %v5243 = vmul.f32 %v5198, %v3427
  %v5244 = vmul.f32 %v5202, %v3427
  %v5245 = vmul.f32 %v5206, %v3427
  %v5246 = vmul.f32 %v5210, %v3427
  %v5247 = vmul.f32 %v5214, %v3427
  %v5248 = vmul.f32 %v5218, %v3427
  %v5249 = vmul.f32 %v5222, %v3427
  %v5250 = vmul.f32 %v5226, %v3427
  %v5251 = vmul.f32 %v5230, %v3427
  %v5252 = vmul.f32 %v5234, %v3427
  %v5253 = vmul.f32 %v5238, %v3427
  %v5254 = vadd.f32 %v5170, %v5240
  %v5255 = vadd.f32 %v5171, %v5241
  %v5256 = vadd.f32 %v5172, %v5242
  %v5257 = vadd.f32 %v5173, %v5243
  %v5258 = vadd.f32 %v5174, %v5244
  %v5259 = vadd.f32 %v5175, %v5245
  %v5260 = vadd.f32 %v5176, %v5246
  %v5261 = vadd.f32 %v5177, %v5247
  %v5262 = vadd.f32 %v5178, %v5248
  %v5263 = vadd.f32 %v5179, %v5249
  %v5264 = vadd.f32 %v5180, %v5250
  %v5265 = vadd.f32 %v5181, %v5251
  %v5266 = vadd.f32 %v5182, %v5252
  %v5267 = vadd.f32 %v5183, %v5253
  %v5268 = vadd.f32 %v5254, %v3460
  %v5269 = vadd.f32 %v5255, %v3460
  %v5270 = vadd.f32 %v5256, %v3460
  %v5271 = vadd.f32 %v5257, %v3460
  %v5272 = vadd.f32 %v5258, %v3460
  %v5273 = vadd.f32 %v5259, %v3460
  %v5274 = vadd.f32 %v5260, %v3460
  %v5275 = vadd.f32 %v5261, %v3460
  %v5276 = vadd.f32 %v5262, %v3460
  %v5277 = vadd.f32 %v5263, %v3460
  %v5278 = vadd.f32 %v5264, %v3460
  %v5279 = vadd.f32 %v5265, %v3460
  %v5280 = vadd.f32 %v5266, %v3460
  %v5281 = vadd.f32 %v5267, %v3460
  %v5282 = vadd.s32 %v31, 1
  %v5283 = vadd.s32 %v32, 1
  %v5284 = vadd.s32 %v33, 1
  %v5285 = vadd.s32 %v34, 1
  %v5286 = vadd.s32 %v35, 1
  %v5287 = vadd.s32 %v36, 1
  %v5288 = vadd.s32 %v37, 1
  %v5289 = vadd.s32 %v38, 1
  %v5290 = vadd.s32 %v39, 1
  %v5291 = vadd.s32 %v40, 1
  %v5292 = vadd.s32 %v41, 1
  %v5293 = vadd.s32 %v42, 1
  %v5294 = vadd.s32 %v43, 1
  %v5295 = vadd.s32 %v44, 1
  %vm5296 = vcmp.gt.f32.partialorder %v5268, %v3462
  %vm5297 = vcmp.gt.f32.partialorder %v5269, %v3463
  %vm5298 = vcmp.gt.f32.partialorder %v5270, %v3464
  %vm5299 = vcmp.gt.f32.partialorder %v5271, %v3465
  %vm5300 = vcmp.gt.f32.partialorder %v5272, %v3466
  %vm5301 = vcmp.gt.f32.partialorder %v5273, %v3467
  %vm5302 = vcmp.gt.f32.partialorder %v5274, %v3468
  %vm5303 = vcmp.gt.f32.partialorder %v5275, %v3469
  %vm5304 = vcmp.gt.f32.partialorder %v5276, %v3470
  %vm5305 = vcmp.gt.f32.partialorder %v5277, %v3471
  %vm5306 = vcmp.gt.f32.partialorder %v5278, %v3472
  %vm5307 = vcmp.gt.f32.partialorder %v5279, %v3473
  %vm5308 = vcmp.gt.f32.partialorder %v5280, %v3474
  %vm5309 = vcmp.gt.f32.partialorder %v5281, %v3475
  %v5310 = vmax.f32 %v3462, %v5268
  %v5311 = vmax.f32 %v3463, %v5269
  %v5312 = vmax.f32 %v3464, %v5270
  %v5313 = vmax.f32 %v3465, %v5271
  %v5314 = vmax.f32 %v3466, %v5272
  %v5315 = vmax.f32 %v3467, %v5273
  %v5316 = vmax.f32 %v3468, %v5274
  %v5317 = vmax.f32 %v3469, %v5275
  %v5318 = vmax.f32 %v3470, %v5276
  %v5319 = vmax.f32 %v3471, %v5277
  %v5320 = vmax.f32 %v3472, %v5278
  %v5321 = vmax.f32 %v3473, %v5279
  %v5322 = vmax.f32 %v3474, %v5280
  %v5323 = vmax.f32 %v3475, %v5281
  %5324 = vset.pattern.permute.xlu0 0
  %5325 = vperm.xlu0 %5324, %v5282
  %v5326 = vpop.permute.xlu0 %5325
  %5327 = vset.pattern.permute.xlu0 0
  %5328 = vperm.xlu0 %5327, %v5283
  %v5329 = vpop.permute.xlu0 %5328
  %5330 = vset.pattern.permute.xlu0 0
  %5331 = vperm.xlu0 %5330, %v5284
  %v5332 = vpop.permute.xlu0 %5331
  %5333 = vset.pattern.permute.xlu0 0
  %5334 = vperm.xlu0 %5333, %v5285
  %v5335 = vpop.permute.xlu0 %5334
  %5336 = vset.pattern.permute.xlu0 0
  %5337 = vperm.xlu0 %5336, %v5286
  %v5338 = vpop.permute.xlu0 %5337
  %5339 = vset.pattern.permute.xlu0 0
  %5340 = vperm.xlu0 %5339, %v5287
  %v5341 = vpop.permute.xlu0 %5340
  %5342 = vset.pattern.permute.xlu0 0
  %5343 = vperm.xlu0 %5342, %v5288
  %v5344 = vpop.permute.xlu0 %5343
  %5345 = vset.pattern.permute.xlu0 0
  %5346 = vperm.xlu0 %5345, %v5289
  %v5347 = vpop.permute.xlu0 %5346
  %5348 = vset.pattern.permute.xlu0 0
  %5349 = vperm.xlu0 %5348, %v5290
  %v5350 = vpop.permute.xlu0 %5349
  %5351 = vset.pattern.permute.xlu0 0
  %5352 = vperm.xlu0 %5351, %v5291
  %v5353 = vpop.permute.xlu0 %5352
  %5354 = vset.pattern.permute.xlu0 0
  %5355 = vperm.xlu0 %5354, %v5292
  %v5356 = vpop.permute.xlu0 %5355
  %5357 = vset.pattern.permute.xlu0 0
  %5358 = vperm.xlu0 %5357, %v5293
  %v5359 = vpop.permute.xlu0 %5358
  %5360 = vset.pattern.permute.xlu0 0
  %5361 = vperm.xlu0 %5360, %v5294
  %v5362 = vpop.permute.xlu0 %5361
  %5363 = vset.pattern.permute.xlu0 0
  %5364 = vperm.xlu0 %5363, %v5295
  %v5365 = vpop.permute.xlu0 %5364
  %v5366 = vsel %vm5296, %v5326, %v3478
  %v5367 = vsel %vm5297, %v5329, %v3481
  %v5368 = vsel %vm5298, %v5332, %v3484
  %v5369 = vsel %vm5299, %v5335, %v3487
  %v5370 = vsel %vm5300, %v5338, %v3490
  %v5371 = vsel %vm5301, %v5341, %v3493
  %v5372 = vsel %vm5302, %v5344, %v3496
  %v5373 = vsel %vm5303, %v5347, %v3499
  %v5374 = vsel %vm5304, %v5350, %v3502
  %v5375 = vsel %vm5305, %v5353, %v3505
  %v5376 = vsel %vm5306, %v5356, %v3508
  %v5377 = vsel %vm5307, %v5359, %v3511
  %v5378 = vsel %vm5308, %v5362, %v3514
  %v5379 = vsel %vm5309, %v5365, %v3517
  %v5380 = vmul.f32 %v1190, %v132
  %v5381 = vmul.f32 %v1195, %v132
  %v5382 = vmul.f32 %v1200, %v132
  %v5383 = vmul.f32 %v1205, %v132
  %v5384 = vmul.f32 %v1210, %v132
  %v5385 = vmul.f32 %v1215, %v132
  %v5386 = vmul.f32 %v1220, %v132
  %v5387 = vmul.f32 %v1225, %v132
  %v5388 = vmul.f32 %v1230, %v132
  %v5389 = vmul.f32 %v1235, %v132
  %v5390 = vmul.f32 %v1240, %v132
  %v5391 = vmul.f32 %v1245, %v132
  %v5392 = vmul.f32 %v1250, %v132
  %v5393 = vmul.f32 %v1255, %v132
  %v5394 = vmul.f32 %v1291, %v206
  %v5395 = vmul.f32 %v1295, %v206
  %v5396 = vmul.f32 %v1299, %v206
  %v5397 = vmul.f32 %v1303, %v206
  %v5398 = vmul.f32 %v1307, %v206
  %v5399 = vmul.f32 %v1311, %v206
  %v5400 = vmul.f32 %v1315, %v206
  %v5401 = vmul.f32 %v1319, %v206
  %v5402 = vmul.f32 %v1323, %v206
  %v5403 = vmul.f32 %v1327, %v206
  %v5404 = vmul.f32 %v1331, %v206
  %v5405 = vmul.f32 %v1335, %v206
  %v5406 = vmul.f32 %v1339, %v206
  %v5407 = vmul.f32 %v1343, %v206
  %v5408 = vadd.f32 %v5380, %v5394
  %v5409 = vadd.f32 %v5381, %v5395
  %v5410 = vadd.f32 %v5382, %v5396
  %v5411 = vadd.f32 %v5383, %v5397
  %v5412 = vadd.f32 %v5384, %v5398
  %v5413 = vadd.f32 %v5385, %v5399
  %v5414 = vadd.f32 %v5386, %v5400
  %v5415 = vadd.f32 %v5387, %v5401
  %v5416 = vadd.f32 %v5388, %v5402
  %v5417 = vadd.f32 %v5389, %v5403
  %v5418 = vadd.f32 %v5390, %v5404
  %v5419 = vadd.f32 %v5391, %v5405
  %v5420 = vadd.f32 %v5392, %v5406
  %v5421 = vadd.f32 %v5393, %v5407
  %v5422 = vmul.f32 %v1379, %v294
  %v5423 = vmul.f32 %v1383, %v294
  %v5424 = vmul.f32 %v1387, %v294
  %v5425 = vmul.f32 %v1391, %v294
  %v5426 = vmul.f32 %v1395, %v294
  %v5427 = vmul.f32 %v1399, %v294
  %v5428 = vmul.f32 %v1403, %v294
  %v5429 = vmul.f32 %v1407, %v294
  %v5430 = vmul.f32 %v1411, %v294
  %v5431 = vmul.f32 %v1415, %v294
  %v5432 = vmul.f32 %v1419, %v294
  %v5433 = vmul.f32 %v1423, %v294
  %v5434 = vmul.f32 %v1427, %v294
  %v5435 = vmul.f32 %v1431, %v294
  %v5436 = vadd.f32 %v5408, %v5422
  %v5437 = vadd.f32 %v5409, %v5423
  %v5438 = vadd.f32 %v5410, %v5424
  %v5439 = vadd.f32 %v5411, %v5425
  %v5440 = vadd.f32 %v5412, %v5426
  %v5441 = vadd.f32 %v5413, %v5427
  %v5442 = vadd.f32 %v5414, %v5428
  %v5443 = vadd.f32 %v5415, %v5429
  %v5444 = vadd.f32 %v5416, %v5430
  %v5445 = vadd.f32 %v5417, %v5431
  %v5446 = vadd.f32 %v5418, %v5432
  %v5447 = vadd.f32 %v5419, %v5433
  %v5448 = vadd.f32 %v5420, %v5434
  %v5449 = vadd.f32 %v5421, %v5435
  %v5450 = vmul.f32 %v1467, %v382
  %v5451 = vmul.f32 %v1471, %v382
  %v5452 = vmul.f32 %v1475, %v382
  %v5453 = vmul.f32 %v1479, %v382
  %v5454 = vmul.f32 %v1483, %v382
  %v5455 = vmul.f32 %v1487, %v382
  %v5456 = vmul.f32 %v1491, %v382
  %v5457 = vmul.f32 %v1495, %v382
  %v5458 = vmul.f32 %v1499, %v382
  %v5459 = vmul.f32 %v1503, %v382
  %v5460 = vmul.f32 %v1507, %v382
  %v5461 = vmul.f32 %v1511, %v382
  %v5462 = vmul.f32 %v1515, %v382
  %v5463 = vmul.f32 %v1519, %v382
  %v5464 = vadd.f32 %v5436, %v5450
  %v5465 = vadd.f32 %v5437, %v5451
  %v5466 = vadd.f32 %v5438, %v5452
  %v5467 = vadd.f32 %v5439, %v5453
  %v5468 = vadd.f32 %v5440, %v5454
  %v5469 = vadd.f32 %v5441, %v5455
  %v5470 = vadd.f32 %v5442, %v5456
  %v5471 = vadd.f32 %v5443, %v5457
  %v5472 = vadd.f32 %v5444, %v5458
  %v5473 = vadd.f32 %v5445, %v5459
  %v5474 = vadd.f32 %v5446, %v5460
  %v5475 = vadd.f32 %v5447, %v5461
  %v5476 = vadd.f32 %v5448, %v5462
  %v5477 = vadd.f32 %v5449, %v5463
  %v5478 = vmul.f32 %v1571, %v499
  %v5479 = vmul.f32 %v1576, %v499
  %v5480 = vmul.f32 %v1581, %v499
  %v5481 = vmul.f32 %v1586, %v499
  %v5482 = vmul.f32 %v1591, %v499
  %v5483 = vmul.f32 %v1596, %v499
  %v5484 = vmul.f32 %v1601, %v499
  %v5485 = vmul.f32 %v1606, %v499
  %v5486 = vmul.f32 %v1611, %v499
  %v5487 = vmul.f32 %v1616, %v499
  %v5488 = vmul.f32 %v1621, %v499
  %v5489 = vmul.f32 %v1626, %v499
  %v5490 = vmul.f32 %v1631, %v499
  %v5491 = vmul.f32 %v1636, %v499
  %v5492 = vadd.f32 %v5464, %v5478
  %v5493 = vadd.f32 %v5465, %v5479
  %v5494 = vadd.f32 %v5466, %v5480
  %v5495 = vadd.f32 %v5467, %v5481
  %v5496 = vadd.f32 %v5468, %v5482
  %v5497 = vadd.f32 %v5469, %v5483
  %v5498 = vadd.f32 %v5470, %v5484
  %v5499 = vadd.f32 %v5471, %v5485
  %v5500 = vadd.f32 %v5472, %v5486
  %v5501 = vadd.f32 %v5473, %v5487
  %v5502 = vadd.f32 %v5474, %v5488
  %v5503 = vadd.f32 %v5475, %v5489
  %v5504 = vadd.f32 %v5476, %v5490
  %v5505 = vadd.f32 %v5477, %v5491
  %v5506 = vmul.f32 %v1672, %v587
  %v5507 = vmul.f32 %v1676, %v587
  %v5508 = vmul.f32 %v1680, %v587
  %v5509 = vmul.f32 %v1684, %v587
  %v5510 = vmul.f32 %v1688, %v587
  %v5511 = vmul.f32 %v1692, %v587
  %v5512 = vmul.f32 %v1696, %v587
  %v5513 = vmul.f32 %v1700, %v587
  %v5514 = vmul.f32 %v1704, %v587
  %v5515 = vmul.f32 %v1708, %v587
  %v5516 = vmul.f32 %v1712, %v587
  %v5517 = vmul.f32 %v1716, %v587
  %v5518 = vmul.f32 %v1720, %v587
  %v5519 = vmul.f32 %v1724, %v587
  %v5520 = vadd.f32 %v5492, %v5506
  %v5521 = vadd.f32 %v5493, %v5507
  %v5522 = vadd.f32 %v5494, %v5508
  %v5523 = vadd.f32 %v5495, %v5509
  %v5524 = vadd.f32 %v5496, %v5510
  %v5525 = vadd.f32 %v5497, %v5511
  %v5526 = vadd.f32 %v5498, %v5512
  %v5527 = vadd.f32 %v5499, %v5513
  %v5528 = vadd.f32 %v5500, %v5514
  %v5529 = vadd.f32 %v5501, %v5515
  %v5530 = vadd.f32 %v5502, %v5516
  %v5531 = vadd.f32 %v5503, %v5517
  %v5532 = vadd.f32 %v5504, %v5518
  %v5533 = vadd.f32 %v5505, %v5519
  %v5534 = vmul.f32 %v1760, %v675
  %v5535 = vmul.f32 %v1764, %v675
  %v5536 = vmul.f32 %v1768, %v675
  %v5537 = vmul.f32 %v1772, %v675
  %v5538 = vmul.f32 %v1776, %v675
  %v5539 = vmul.f32 %v1780, %v675
  %v5540 = vmul.f32 %v1784, %v675
  %v5541 = vmul.f32 %v1788, %v675
  %v5542 = vmul.f32 %v1792, %v675
  %v5543 = vmul.f32 %v1796, %v675
  %v5544 = vmul.f32 %v1800, %v675
  %v5545 = vmul.f32 %v1804, %v675
  %v5546 = vmul.f32 %v1808, %v675
  %v5547 = vmul.f32 %v1812, %v675
  %v5548 = vadd.f32 %v5520, %v5534
  %v5549 = vadd.f32 %v5521, %v5535
  %v5550 = vadd.f32 %v5522, %v5536
  %v5551 = vadd.f32 %v5523, %v5537
  %v5552 = vadd.f32 %v5524, %v5538
  %v5553 = vadd.f32 %v5525, %v5539
  %v5554 = vadd.f32 %v5526, %v5540
  %v5555 = vadd.f32 %v5527, %v5541
  %v5556 = vadd.f32 %v5528, %v5542
  %v5557 = vadd.f32 %v5529, %v5543
  %v5558 = vadd.f32 %v5530, %v5544
  %v5559 = vadd.f32 %v5531, %v5545
  %v5560 = vadd.f32 %v5532, %v5546
  %v5561 = vadd.f32 %v5533, %v5547
  %v5562 = vmul.f32 %v1848, %v763
  %v5563 = vmul.f32 %v1852, %v763
  %v5564 = vmul.f32 %v1856, %v763
  %v5565 = vmul.f32 %v1860, %v763
  %v5566 = vmul.f32 %v1864, %v763
  %v5567 = vmul.f32 %v1868, %v763
  %v5568 = vmul.f32 %v1872, %v763
  %v5569 = vmul.f32 %v1876, %v763
  %v5570 = vmul.f32 %v1880, %v763
  %v5571 = vmul.f32 %v1884, %v763
  %v5572 = vmul.f32 %v1888, %v763
  %v5573 = vmul.f32 %v1892, %v763
  %v5574 = vmul.f32 %v1896, %v763
  %v5575 = vmul.f32 %v1900, %v763
  %v5576 = vadd.f32 %v5548, %v5562
  %v5577 = vadd.f32 %v5549, %v5563
  %v5578 = vadd.f32 %v5550, %v5564
  %v5579 = vadd.f32 %v5551, %v5565
  %v5580 = vadd.f32 %v5552, %v5566
  %v5581 = vadd.f32 %v5553, %v5567
  %v5582 = vadd.f32 %v5554, %v5568
  %v5583 = vadd.f32 %v5555, %v5569
  %v5584 = vadd.f32 %v5556, %v5570
  %v5585 = vadd.f32 %v5557, %v5571
  %v5586 = vadd.f32 %v5558, %v5572
  %v5587 = vadd.f32 %v5559, %v5573
  %v5588 = vadd.f32 %v5560, %v5574
  %v5589 = vadd.f32 %v5561, %v5575
  %v5590 = vmul.f32 %v1951, %v879
  %v5591 = vmul.f32 %v1956, %v879
  %v5592 = vmul.f32 %v1961, %v879
  %v5593 = vmul.f32 %v1966, %v879
  %v5594 = vmul.f32 %v1971, %v879
  %v5595 = vmul.f32 %v1976, %v879
  %v5596 = vmul.f32 %v1981, %v879
  %v5597 = vmul.f32 %v1986, %v879
  %v5598 = vmul.f32 %v1991, %v879
  %v5599 = vmul.f32 %v1996, %v879
  %v5600 = vmul.f32 %v2001, %v879
  %v5601 = vmul.f32 %v2006, %v879
  %v5602 = vmul.f32 %v2011, %v879
  %v5603 = vmul.f32 %v2016, %v879
  %v5604 = vadd.f32 %v5576, %v5590
  %v5605 = vadd.f32 %v5577, %v5591
  %v5606 = vadd.f32 %v5578, %v5592
  %v5607 = vadd.f32 %v5579, %v5593
  %v5608 = vadd.f32 %v5580, %v5594
  %v5609 = vadd.f32 %v5581, %v5595
  %v5610 = vadd.f32 %v5582, %v5596
  %v5611 = vadd.f32 %v5583, %v5597
  %v5612 = vadd.f32 %v5584, %v5598
  %v5613 = vadd.f32 %v5585, %v5599
  %v5614 = vadd.f32 %v5586, %v5600
  %v5615 = vadd.f32 %v5587, %v5601
  %v5616 = vadd.f32 %v5588, %v5602
  %v5617 = vadd.f32 %v5589, %v5603
  %v5618 = vmul.f32 %v2052, %v967
  %v5619 = vmul.f32 %v2056, %v967
  %v5620 = vmul.f32 %v2060, %v967
  %v5621 = vmul.f32 %v2064, %v967
  %v5622 = vmul.f32 %v2068, %v967
  %v5623 = vmul.f32 %v2072, %v967
  %v5624 = vmul.f32 %v2076, %v967
  %v5625 = vmul.f32 %v2080, %v967
  %v5626 = vmul.f32 %v2084, %v967
  %v5627 = vmul.f32 %v2088, %v967
  %v5628 = vmul.f32 %v2092, %v967
  %v5629 = vmul.f32 %v2096, %v967
  %v5630 = vmul.f32 %v2100, %v967
  %v5631 = vmul.f32 %v2104, %v967
  %v5632 = vadd.f32 %v5604, %v5618
  %v5633 = vadd.f32 %v5605, %v5619
  %v5634 = vadd.f32 %v5606, %v5620
  %v5635 = vadd.f32 %v5607, %v5621
  %v5636 = vadd.f32 %v5608, %v5622
  %v5637 = vadd.f32 %v5609, %v5623
  %v5638 = vadd.f32 %v5610, %v5624
  %v5639 = vadd.f32 %v5611, %v5625
  %v5640 = vadd.f32 %v5612, %v5626
  %v5641 = vadd.f32 %v5613, %v5627
  %v5642 = vadd.f32 %v5614, %v5628
  %v5643 = vadd.f32 %v5615, %v5629
  %v5644 = vadd.f32 %v5616, %v5630
  %v5645 = vadd.f32 %v5617, %v5631
  %v5646 = vmul.f32 %v2140, %v1055
  %v5647 = vmul.f32 %v2144, %v1055
  %v5648 = vmul.f32 %v2148, %v1055
  %v5649 = vmul.f32 %v2152, %v1055
  %v5650 = vmul.f32 %v2156, %v1055
  %v5651 = vmul.f32 %v2160, %v1055
  %v5652 = vmul.f32 %v2164, %v1055
  %v5653 = vmul.f32 %v2168, %v1055
  %v5654 = vmul.f32 %v2172, %v1055
  %v5655 = vmul.f32 %v2176, %v1055
  %v5656 = vmul.f32 %v2180, %v1055
  %v5657 = vmul.f32 %v2184, %v1055
  %v5658 = vmul.f32 %v2188, %v1055
  %v5659 = vmul.f32 %v2192, %v1055
  %v5660 = vadd.f32 %v5632, %v5646
  %v5661 = vadd.f32 %v5633, %v5647
  %v5662 = vadd.f32 %v5634, %v5648
  %v5663 = vadd.f32 %v5635, %v5649
  %v5664 = vadd.f32 %v5636, %v5650
  %v5665 = vadd.f32 %v5637, %v5651
  %v5666 = vadd.f32 %v5638, %v5652
  %v5667 = vadd.f32 %v5639, %v5653
  %v5668 = vadd.f32 %v5640, %v5654
  %v5669 = vadd.f32 %v5641, %v5655
  %v5670 = vadd.f32 %v5642, %v5656
  %v5671 = vadd.f32 %v5643, %v5657
  %v5672 = vadd.f32 %v5644, %v5658
  %v5673 = vadd.f32 %v5645, %v5659
  %v5674 = vmul.f32 %v2228, %v1143
  %v5675 = vmul.f32 %v2232, %v1143
  %v5676 = vmul.f32 %v2236, %v1143
  %v5677 = vmul.f32 %v2240, %v1143
  %v5678 = vmul.f32 %v2244, %v1143
  %v5679 = vmul.f32 %v2248, %v1143
  %v5680 = vmul.f32 %v2252, %v1143
  %v5681 = vmul.f32 %v2256, %v1143
  %v5682 = vmul.f32 %v2260, %v1143
  %v5683 = vmul.f32 %v2264, %v1143
  %v5684 = vmul.f32 %v2268, %v1143
  %v5685 = vmul.f32 %v2272, %v1143
  %v5686 = vmul.f32 %v2276, %v1143
  %v5687 = vmul.f32 %v2280, %v1143
  %v5688 = vadd.f32 %v5660, %v5674
  %v5689 = vadd.f32 %v5661, %v5675
  %v5690 = vadd.f32 %v5662, %v5676
  %v5691 = vadd.f32 %v5663, %v5677
  %v5692 = vadd.f32 %v5664, %v5678
  %v5693 = vadd.f32 %v5665, %v5679
  %v5694 = vadd.f32 %v5666, %v5680
  %v5695 = vadd.f32 %v5667, %v5681
  %v5696 = vadd.f32 %v5668, %v5682
  %v5697 = vadd.f32 %v5669, %v5683
  %v5698 = vadd.f32 %v5670, %v5684
  %v5699 = vadd.f32 %v5671, %v5685
  %v5700 = vadd.f32 %v5672, %v5686
  %v5701 = vadd.f32 %v5673, %v5687
  %v5702 = vmul.f32 %v2332, %v1260
  %v5703 = vmul.f32 %v2337, %v1260
  %v5704 = vmul.f32 %v2342, %v1260
  %v5705 = vmul.f32 %v2347, %v1260
  %v5706 = vmul.f32 %v2352, %v1260
  %v5707 = vmul.f32 %v2357, %v1260
  %v5708 = vmul.f32 %v2362, %v1260
  %v5709 = vmul.f32 %v2367, %v1260
  %v5710 = vmul.f32 %v2372, %v1260
  %v5711 = vmul.f32 %v2377, %v1260
  %v5712 = vmul.f32 %v2382, %v1260
  %v5713 = vmul.f32 %v2387, %v1260
  %v5714 = vmul.f32 %v2392, %v1260
  %v5715 = vmul.f32 %v2397, %v1260
  %v5716 = vadd.f32 %v5688, %v5702
  %v5717 = vadd.f32 %v5689, %v5703
  %v5718 = vadd.f32 %v5690, %v5704
  %v5719 = vadd.f32 %v5691, %v5705
  %v5720 = vadd.f32 %v5692, %v5706
  %v5721 = vadd.f32 %v5693, %v5707
  %v5722 = vadd.f32 %v5694, %v5708
  %v5723 = vadd.f32 %v5695, %v5709
  %v5724 = vadd.f32 %v5696, %v5710
  %v5725 = vadd.f32 %v5697, %v5711
  %v5726 = vadd.f32 %v5698, %v5712
  %v5727 = vadd.f32 %v5699, %v5713
  %v5728 = vadd.f32 %v5700, %v5714
  %v5729 = vadd.f32 %v5701, %v5715
  %v5730 = vmul.f32 %v2433, %v1348
  %v5731 = vmul.f32 %v2437, %v1348
  %v5732 = vmul.f32 %v2441, %v1348
  %v5733 = vmul.f32 %v2445, %v1348
  %v5734 = vmul.f32 %v2449, %v1348
  %v5735 = vmul.f32 %v2453, %v1348
  %v5736 = vmul.f32 %v2457, %v1348
  %v5737 = vmul.f32 %v2461, %v1348
  %v5738 = vmul.f32 %v2465, %v1348
  %v5739 = vmul.f32 %v2469, %v1348
  %v5740 = vmul.f32 %v2473, %v1348
  %v5741 = vmul.f32 %v2477, %v1348
  %v5742 = vmul.f32 %v2481, %v1348
  %v5743 = vmul.f32 %v2485, %v1348
  %v5744 = vadd.f32 %v5716, %v5730
  %v5745 = vadd.f32 %v5717, %v5731
  %v5746 = vadd.f32 %v5718, %v5732
  %v5747 = vadd.f32 %v5719, %v5733
  %v5748 = vadd.f32 %v5720, %v5734
  %v5749 = vadd.f32 %v5721, %v5735
  %v5750 = vadd.f32 %v5722, %v5736
  %v5751 = vadd.f32 %v5723, %v5737
  %v5752 = vadd.f32 %v5724, %v5738
  %v5753 = vadd.f32 %v5725, %v5739
  %v5754 = vadd.f32 %v5726, %v5740
  %v5755 = vadd.f32 %v5727, %v5741
  %v5756 = vadd.f32 %v5728, %v5742
  %v5757 = vadd.f32 %v5729, %v5743
  %v5758 = vmul.f32 %v2521, %v1436
  %v5759 = vmul.f32 %v2525, %v1436
  %v5760 = vmul.f32 %v2529, %v1436
  %v5761 = vmul.f32 %v2533, %v1436
  %v5762 = vmul.f32 %v2537, %v1436
  %v5763 = vmul.f32 %v2541, %v1436
  %v5764 = vmul.f32 %v2545, %v1436
  %v5765 = vmul.f32 %v2549, %v1436
  %v5766 = vmul.f32 %v2553, %v1436
  %v5767 = vmul.f32 %v2557, %v1436
  %v5768 = vmul.f32 %v2561, %v1436
  %v5769 = vmul.f32 %v2565, %v1436
  %v5770 = vmul.f32 %v2569, %v1436
  %v5771 = vmul.f32 %v2573, %v1436
  %v5772 = vadd.f32 %v5744, %v5758
  %v5773 = vadd.f32 %v5745, %v5759
  %v5774 = vadd.f32 %v5746, %v5760
  %v5775 = vadd.f32 %v5747, %v5761
  %v5776 = vadd.f32 %v5748, %v5762
  %v5777 = vadd.f32 %v5749, %v5763
  %v5778 = vadd.f32 %v5750, %v5764
  %v5779 = vadd.f32 %v5751, %v5765
  %v5780 = vadd.f32 %v5752, %v5766
  %v5781 = vadd.f32 %v5753, %v5767
  %v5782 = vadd.f32 %v5754, %v5768
  %v5783 = vadd.f32 %v5755, %v5769
  %v5784 = vadd.f32 %v5756, %v5770
  %v5785 = vadd.f32 %v5757, %v5771
  %v5786 = vmul.f32 %v2609, %v1524
  %v5787 = vmul.f32 %v2613, %v1524
  %v5788 = vmul.f32 %v2617, %v1524
  %v5789 = vmul.f32 %v2621, %v1524
  %v5790 = vmul.f32 %v2625, %v1524
  %v5791 = vmul.f32 %v2629, %v1524
  %v5792 = vmul.f32 %v2633, %v1524
  %v5793 = vmul.f32 %v2637, %v1524
  %v5794 = vmul.f32 %v2641, %v1524
  %v5795 = vmul.f32 %v2645, %v1524
  %v5796 = vmul.f32 %v2649, %v1524
  %v5797 = vmul.f32 %v2653, %v1524
  %v5798 = vmul.f32 %v2657, %v1524
  %v5799 = vmul.f32 %v2661, %v1524
  %v5800 = vadd.f32 %v5772, %v5786
  %v5801 = vadd.f32 %v5773, %v5787
  %v5802 = vadd.f32 %v5774, %v5788
  %v5803 = vadd.f32 %v5775, %v5789
  %v5804 = vadd.f32 %v5776, %v5790
  %v5805 = vadd.f32 %v5777, %v5791
  %v5806 = vadd.f32 %v5778, %v5792
  %v5807 = vadd.f32 %v5779, %v5793
  %v5808 = vadd.f32 %v5780, %v5794
  %v5809 = vadd.f32 %v5781, %v5795
  %v5810 = vadd.f32 %v5782, %v5796
  %v5811 = vadd.f32 %v5783, %v5797
  %v5812 = vadd.f32 %v5784, %v5798
  %v5813 = vadd.f32 %v5785, %v5799
  %v5814 = vmul.f32 %v2713, %v1641
  %v5815 = vmul.f32 %v2718, %v1641
  %v5816 = vmul.f32 %v2723, %v1641
  %v5817 = vmul.f32 %v2728, %v1641
  %v5818 = vmul.f32 %v2733, %v1641
  %v5819 = vmul.f32 %v2738, %v1641
  %v5820 = vmul.f32 %v2743, %v1641
  %v5821 = vmul.f32 %v2748, %v1641
  %v5822 = vmul.f32 %v2753, %v1641
  %v5823 = vmul.f32 %v2758, %v1641
  %v5824 = vmul.f32 %v2763, %v1641
  %v5825 = vmul.f32 %v2768, %v1641
  %v5826 = vmul.f32 %v2773, %v1641
  %v5827 = vmul.f32 %v2778, %v1641
  %v5828 = vadd.f32 %v5800, %v5814
  %v5829 = vadd.f32 %v5801, %v5815
  %v5830 = vadd.f32 %v5802, %v5816
  %v5831 = vadd.f32 %v5803, %v5817
  %v5832 = vadd.f32 %v5804, %v5818
  %v5833 = vadd.f32 %v5805, %v5819
  %v5834 = vadd.f32 %v5806, %v5820
  %v5835 = vadd.f32 %v5807, %v5821
  %v5836 = vadd.f32 %v5808, %v5822
  %v5837 = vadd.f32 %v5809, %v5823
  %v5838 = vadd.f32 %v5810, %v5824
  %v5839 = vadd.f32 %v5811, %v5825
  %v5840 = vadd.f32 %v5812, %v5826
  %v5841 = vadd.f32 %v5813, %v5827
  %v5842 = vmul.f32 %v2814, %v1729
  %v5843 = vmul.f32 %v2818, %v1729
  %v5844 = vmul.f32 %v2822, %v1729
  %v5845 = vmul.f32 %v2826, %v1729
  %v5846 = vmul.f32 %v2830, %v1729
  %v5847 = vmul.f32 %v2834, %v1729
  %v5848 = vmul.f32 %v2838, %v1729
  %v5849 = vmul.f32 %v2842, %v1729
  %v5850 = vmul.f32 %v2846, %v1729
  %v5851 = vmul.f32 %v2850, %v1729
  %v5852 = vmul.f32 %v2854, %v1729
  %v5853 = vmul.f32 %v2858, %v1729
  %v5854 = vmul.f32 %v2862, %v1729
  %v5855 = vmul.f32 %v2866, %v1729
  %v5856 = vadd.f32 %v5828, %v5842
  %v5857 = vadd.f32 %v5829, %v5843
  %v5858 = vadd.f32 %v5830, %v5844
  %v5859 = vadd.f32 %v5831, %v5845
  %v5860 = vadd.f32 %v5832, %v5846
  %v5861 = vadd.f32 %v5833, %v5847
  %v5862 = vadd.f32 %v5834, %v5848
  %v5863 = vadd.f32 %v5835, %v5849
  %v5864 = vadd.f32 %v5836, %v5850
  %v5865 = vadd.f32 %v5837, %v5851
  %v5866 = vadd.f32 %v5838, %v5852
  %v5867 = vadd.f32 %v5839, %v5853
  %v5868 = vadd.f32 %v5840, %v5854
  %v5869 = vadd.f32 %v5841, %v5855
  %v5870 = vmul.f32 %v2902, %v1817
  %v5871 = vmul.f32 %v2906, %v1817
  %v5872 = vmul.f32 %v2910, %v1817
  %v5873 = vmul.f32 %v2914, %v1817
  %v5874 = vmul.f32 %v2918, %v1817
  %v5875 = vmul.f32 %v2922, %v1817
  %v5876 = vmul.f32 %v2926, %v1817
  %v5877 = vmul.f32 %v2930, %v1817
  %v5878 = vmul.f32 %v2934, %v1817
  %v5879 = vmul.f32 %v2938, %v1817
  %v5880 = vmul.f32 %v2942, %v1817
  %v5881 = vmul.f32 %v2946, %v1817
  %v5882 = vmul.f32 %v2950, %v1817
  %v5883 = vmul.f32 %v2954, %v1817
  %v5884 = vadd.f32 %v5856, %v5870
  %v5885 = vadd.f32 %v5857, %v5871
  %v5886 = vadd.f32 %v5858, %v5872
  %v5887 = vadd.f32 %v5859, %v5873
  %v5888 = vadd.f32 %v5860, %v5874
  %v5889 = vadd.f32 %v5861, %v5875
  %v5890 = vadd.f32 %v5862, %v5876
  %v5891 = vadd.f32 %v5863, %v5877
  %v5892 = vadd.f32 %v5864, %v5878
  %v5893 = vadd.f32 %v5865, %v5879
  %v5894 = vadd.f32 %v5866, %v5880
  %v5895 = vadd.f32 %v5867, %v5881
  %v5896 = vadd.f32 %v5868, %v5882
  %v5897 = vadd.f32 %v5869, %v5883
  %v5898 = vmul.f32 %v2990, %v1905
  %v5899 = vmul.f32 %v2994, %v1905
  %v5900 = vmul.f32 %v2998, %v1905
  %v5901 = vmul.f32 %v3002, %v1905
  %v5902 = vmul.f32 %v3006, %v1905
  %v5903 = vmul.f32 %v3010, %v1905
  %v5904 = vmul.f32 %v3014, %v1905
  %v5905 = vmul.f32 %v3018, %v1905
  %v5906 = vmul.f32 %v3022, %v1905
  %v5907 = vmul.f32 %v3026, %v1905
  %v5908 = vmul.f32 %v3030, %v1905
  %v5909 = vmul.f32 %v3034, %v1905
  %v5910 = vmul.f32 %v3038, %v1905
  %v5911 = vmul.f32 %v3042, %v1905
  %v5912 = vadd.f32 %v5884, %v5898
  %v5913 = vadd.f32 %v5885, %v5899
  %v5914 = vadd.f32 %v5886, %v5900
  %v5915 = vadd.f32 %v5887, %v5901
  %v5916 = vadd.f32 %v5888, %v5902
  %v5917 = vadd.f32 %v5889, %v5903
  %v5918 = vadd.f32 %v5890, %v5904
  %v5919 = vadd.f32 %v5891, %v5905
  %v5920 = vadd.f32 %v5892, %v5906
  %v5921 = vadd.f32 %v5893, %v5907
  %v5922 = vadd.f32 %v5894, %v5908
  %v5923 = vadd.f32 %v5895, %v5909
  %v5924 = vadd.f32 %v5896, %v5910
  %v5925 = vadd.f32 %v5897, %v5911
  %v5926 = vmul.f32 %v3093, %v2021
  %v5927 = vmul.f32 %v3098, %v2021
  %v5928 = vmul.f32 %v3103, %v2021
  %v5929 = vmul.f32 %v3108, %v2021
  %v5930 = vmul.f32 %v3113, %v2021
  %v5931 = vmul.f32 %v3118, %v2021
  %v5932 = vmul.f32 %v3123, %v2021
  %v5933 = vmul.f32 %v3128, %v2021
  %v5934 = vmul.f32 %v3133, %v2021
  %v5935 = vmul.f32 %v3138, %v2021
  %v5936 = vmul.f32 %v3143, %v2021
  %v5937 = vmul.f32 %v3148, %v2021
  %v5938 = vmul.f32 %v3153, %v2021
  %v5939 = vmul.f32 %v3158, %v2021
  %v5940 = vadd.f32 %v5912, %v5926
  %v5941 = vadd.f32 %v5913, %v5927
  %v5942 = vadd.f32 %v5914, %v5928
  %v5943 = vadd.f32 %v5915, %v5929
  %v5944 = vadd.f32 %v5916, %v5930
  %v5945 = vadd.f32 %v5917, %v5931
  %v5946 = vadd.f32 %v5918, %v5932
  %v5947 = vadd.f32 %v5919, %v5933
  %v5948 = vadd.f32 %v5920, %v5934
  %v5949 = vadd.f32 %v5921, %v5935
  %v5950 = vadd.f32 %v5922, %v5936
  %v5951 = vadd.f32 %v5923, %v5937
  %v5952 = vadd.f32 %v5924, %v5938
  %v5953 = vadd.f32 %v5925, %v5939
  %v5954 = vmul.f32 %v3194, %v2109
  %v5955 = vmul.f32 %v3198, %v2109
  %v5956 = vmul.f32 %v3202, %v2109
  %v5957 = vmul.f32 %v3206, %v2109
  %v5958 = vmul.f32 %v3210, %v2109
  %v5959 = vmul.f32 %v3214, %v2109
  %v5960 = vmul.f32 %v3218, %v2109
  %v5961 = vmul.f32 %v3222, %v2109
  %v5962 = vmul.f32 %v3226, %v2109
  %v5963 = vmul.f32 %v3230, %v2109
  %v5964 = vmul.f32 %v3234, %v2109
  %v5965 = vmul.f32 %v3238, %v2109
  %v5966 = vmul.f32 %v3242, %v2109
  %v5967 = vmul.f32 %v3246, %v2109
  %v5968 = vadd.f32 %v5940, %v5954
  %v5969 = vadd.f32 %v5941, %v5955
  %v5970 = vadd.f32 %v5942, %v5956
  %v5971 = vadd.f32 %v5943, %v5957
  %v5972 = vadd.f32 %v5944, %v5958
  %v5973 = vadd.f32 %v5945, %v5959
  %v5974 = vadd.f32 %v5946, %v5960
  %v5975 = vadd.f32 %v5947, %v5961
  %v5976 = vadd.f32 %v5948, %v5962
  %v5977 = vadd.f32 %v5949, %v5963
  %v5978 = vadd.f32 %v5950, %v5964
  %v5979 = vadd.f32 %v5951, %v5965
  %v5980 = vadd.f32 %v5952, %v5966
  %v5981 = vadd.f32 %v5953, %v5967
  %v5982 = vmul.f32 %v3282, %v2197
  %v5983 = vmul.f32 %v3286, %v2197
  %v5984 = vmul.f32 %v3290, %v2197
  %v5985 = vmul.f32 %v3294, %v2197
  %v5986 = vmul.f32 %v3298, %v2197
  %v5987 = vmul.f32 %v3302, %v2197
  %v5988 = vmul.f32 %v3306, %v2197
  %v5989 = vmul.f32 %v3310, %v2197
  %v5990 = vmul.f32 %v3314, %v2197
  %v5991 = vmul.f32 %v3318, %v2197
  %v5992 = vmul.f32 %v3322, %v2197
  %v5993 = vmul.f32 %v3326, %v2197
  %v5994 = vmul.f32 %v3330, %v2197
  %v5995 = vmul.f32 %v3334, %v2197
  %v5996 = vadd.f32 %v5968, %v5982
  %v5997 = vadd.f32 %v5969, %v5983
  %v5998 = vadd.f32 %v5970, %v5984
  %v5999 = vadd.f32 %v5971, %v5985
  %v6000 = vadd.f32 %v5972, %v5986
  %v6001 = vadd.f32 %v5973, %v5987
  %v6002 = vadd.f32 %v5974, %v5988
  %v6003 = vadd.f32 %v5975, %v5989
  %v6004 = vadd.f32 %v5976, %v5990
  %v6005 = vadd.f32 %v5977, %v5991
  %v6006 = vadd.f32 %v5978, %v5992
  %v6007 = vadd.f32 %v5979, %v5993
  %v6008 = vadd.f32 %v5980, %v5994
  %v6009 = vadd.f32 %v5981, %v5995
  %v6010 = vmul.f32 %v3370, %v2285
  %v6011 = vmul.f32 %v3374, %v2285
  %v6012 = vmul.f32 %v3378, %v2285
  %v6013 = vmul.f32 %v3382, %v2285
  %v6014 = vmul.f32 %v3386, %v2285
  %v6015 = vmul.f32 %v3390, %v2285
  %v6016 = vmul.f32 %v3394, %v2285
  %v6017 = vmul.f32 %v3398, %v2285
  %v6018 = vmul.f32 %v3402, %v2285
  %v6019 = vmul.f32 %v3406, %v2285
  %v6020 = vmul.f32 %v3410, %v2285
  %v6021 = vmul.f32 %v3414, %v2285
  %v6022 = vmul.f32 %v3418, %v2285
  %v6023 = vmul.f32 %v3422, %v2285
  %v6024 = vadd.f32 %v5996, %v6010
  %v6025 = vadd.f32 %v5997, %v6011
  %v6026 = vadd.f32 %v5998, %v6012
  %v6027 = vadd.f32 %v5999, %v6013
  %v6028 = vadd.f32 %v6000, %v6014
  %v6029 = vadd.f32 %v6001, %v6015
  %v6030 = vadd.f32 %v6002, %v6016
  %v6031 = vadd.f32 %v6003, %v6017
  %v6032 = vadd.f32 %v6004, %v6018
  %v6033 = vadd.f32 %v6005, %v6019
  %v6034 = vadd.f32 %v6006, %v6020
  %v6035 = vadd.f32 %v6007, %v6021
  %v6036 = vadd.f32 %v6008, %v6022
  %v6037 = vadd.f32 %v6009, %v6023
  %s6038 = scalar_lea.vmem %s0, 264
  %v6039 = vld [vmem:[%s6038] sm:$0x7f]
  %v6040 = vld [vmem:[%s6038 + $0x8] sm:$0x7f]
  %v6041 = vld [vmem:[%s6038 + $0x10] sm:$0x7f]
  %v6042 = vld [vmem:[%s6038 + $0x18] sm:$0x7f]
  %v6043 = vld [vmem:[%s6038 + $0x20] sm:$0x7f]
  %v6044 = vld [vmem:[%s6038 + $0x28] sm:$0x7f]
  %v6045 = vld [vmem:[%s6038 + $0x30] sm:$0x7f]
  %v6046 = vld [vmem:[%s6038 + $0x40] sm:$0x7f]
  %v6047 = vld [vmem:[%s6038 + $0x48] sm:$0x7f]
  %v6048 = vld [vmem:[%s6038 + $0x50] sm:$0x7f]
  %v6049 = vld [vmem:[%s6038 + $0x58] sm:$0x7f]
  %v6050 = vld [vmem:[%s6038 + $0x60] sm:$0x7f]
  %v6051 = vld [vmem:[%s6038 + $0x68] sm:$0x7f]
  %v6052 = vld [vmem:[%s6038 + $0x70] sm:$0x7f]
  %6054 = vset.pattern.permute.xlu0 0
  %6055 = vperm.xlu0 %6054, %v6039
  %v6056 = vpop.permute.xlu0 %6055
  %6059 = vset.pattern.permute.xlu0 0
  %6060 = vperm.xlu0 %6059, %v6040
  %v6061 = vpop.permute.xlu0 %6060
  %6064 = vset.pattern.permute.xlu0 0
  %6065 = vperm.xlu0 %6064, %v6041
  %v6066 = vpop.permute.xlu0 %6065
  %6069 = vset.pattern.permute.xlu0 0
  %6070 = vperm.xlu0 %6069, %v6042
  %v6071 = vpop.permute.xlu0 %6070
  %6074 = vset.pattern.permute.xlu0 0
  %6075 = vperm.xlu0 %6074, %v6043
  %v6076 = vpop.permute.xlu0 %6075
  %6079 = vset.pattern.permute.xlu0 0
  %6080 = vperm.xlu0 %6079, %v6044
  %v6081 = vpop.permute.xlu0 %6080
  %6084 = vset.pattern.permute.xlu0 0
  %6085 = vperm.xlu0 %6084, %v6045
  %v6086 = vpop.permute.xlu0 %6085
  %6089 = vset.pattern.permute.xlu0 0
  %6090 = vperm.xlu0 %6089, %v6046
  %v6091 = vpop.permute.xlu0 %6090
  %6094 = vset.pattern.permute.xlu0 0
  %6095 = vperm.xlu0 %6094, %v6047
  %v6096 = vpop.permute.xlu0 %6095
  %6099 = vset.pattern.permute.xlu0 0
  %6100 = vperm.xlu0 %6099, %v6048
  %v6101 = vpop.permute.xlu0 %6100
  %6104 = vset.pattern.permute.xlu0 0
  %6105 = vperm.xlu0 %6104, %v6049
  %v6106 = vpop.permute.xlu0 %6105
  %6109 = vset.pattern.permute.xlu0 0
  %6110 = vperm.xlu0 %6109, %v6050
  %v6111 = vpop.permute.xlu0 %6110
  %6114 = vset.pattern.permute.xlu0 0
  %6115 = vperm.xlu0 %6114, %v6051
  %v6116 = vpop.permute.xlu0 %6115
  %6119 = vset.pattern.permute.xlu0 0
  %6120 = vperm.xlu0 %6119, %v6052
  %v6121 = vpop.permute.xlu0 %6120
  %v6123 = vmul.f32 %v6056, %v2402
  %v6124 = vmul.f32 %v6061, %v2402
  %v6125 = vmul.f32 %v6066, %v2402
  %v6126 = vmul.f32 %v6071, %v2402
  %v6127 = vmul.f32 %v6076, %v2402
  %v6128 = vmul.f32 %v6081, %v2402
  %v6129 = vmul.f32 %v6086, %v2402
  %v6130 = vmul.f32 %v6091, %v2402
  %v6131 = vmul.f32 %v6096, %v2402
  %v6132 = vmul.f32 %v6101, %v2402
  %v6133 = vmul.f32 %v6106, %v2402
  %v6134 = vmul.f32 %v6111, %v2402
  %v6135 = vmul.f32 %v6116, %v2402
  %v6136 = vmul.f32 %v6121, %v2402
  %v6137 = vadd.f32 %v6024, %v6123
  %v6138 = vadd.f32 %v6025, %v6124
  %v6139 = vadd.f32 %v6026, %v6125
  %v6140 = vadd.f32 %v6027, %v6126
  %v6141 = vadd.f32 %v6028, %v6127
  %v6142 = vadd.f32 %v6029, %v6128
  %v6143 = vadd.f32 %v6030, %v6129
  %v6144 = vadd.f32 %v6031, %v6130
  %v6145 = vadd.f32 %v6032, %v6131
  %v6146 = vadd.f32 %v6033, %v6132
  %v6147 = vadd.f32 %v6034, %v6133
  %v6148 = vadd.f32 %v6035, %v6134
  %v6149 = vadd.f32 %v6036, %v6135
  %v6150 = vadd.f32 %v6037, %v6136
  %6151 = vset.pattern.permute.xlu0 1
  %6152 = vperm.xlu0 %6151, %v6039
  %v6153 = vpop.permute.xlu0 %6152
  %6155 = vset.pattern.permute.xlu0 1
  %6156 = vperm.xlu0 %6155, %v6040
  %v6157 = vpop.permute.xlu0 %6156
  %6159 = vset.pattern.permute.xlu0 1
  %6160 = vperm.xlu0 %6159, %v6041
  %v6161 = vpop.permute.xlu0 %6160
  %6163 = vset.pattern.permute.xlu0 1
  %6164 = vperm.xlu0 %6163, %v6042
  %v6165 = vpop.permute.xlu0 %6164
  %6167 = vset.pattern.permute.xlu0 1
  %6168 = vperm.xlu0 %6167, %v6043
  %v6169 = vpop.permute.xlu0 %6168
  %6171 = vset.pattern.permute.xlu0 1
  %6172 = vperm.xlu0 %6171, %v6044
  %v6173 = vpop.permute.xlu0 %6172
  %6175 = vset.pattern.permute.xlu0 1
  %6176 = vperm.xlu0 %6175, %v6045
  %v6177 = vpop.permute.xlu0 %6176
  %6179 = vset.pattern.permute.xlu0 1
  %6180 = vperm.xlu0 %6179, %v6046
  %v6181 = vpop.permute.xlu0 %6180
  %6183 = vset.pattern.permute.xlu0 1
  %6184 = vperm.xlu0 %6183, %v6047
  %v6185 = vpop.permute.xlu0 %6184
  %6187 = vset.pattern.permute.xlu0 1
  %6188 = vperm.xlu0 %6187, %v6048
  %v6189 = vpop.permute.xlu0 %6188
  %6191 = vset.pattern.permute.xlu0 1
  %6192 = vperm.xlu0 %6191, %v6049
  %v6193 = vpop.permute.xlu0 %6192
  %6195 = vset.pattern.permute.xlu0 1
  %6196 = vperm.xlu0 %6195, %v6050
  %v6197 = vpop.permute.xlu0 %6196
  %6199 = vset.pattern.permute.xlu0 1
  %6200 = vperm.xlu0 %6199, %v6051
  %v6201 = vpop.permute.xlu0 %6200
  %6203 = vset.pattern.permute.xlu0 1
  %6204 = vperm.xlu0 %6203, %v6052
  %v6205 = vpop.permute.xlu0 %6204
  %v6207 = vmul.f32 %v6153, %v2490
  %v6208 = vmul.f32 %v6157, %v2490
  %v6209 = vmul.f32 %v6161, %v2490
  %v6210 = vmul.f32 %v6165, %v2490
  %v6211 = vmul.f32 %v6169, %v2490
  %v6212 = vmul.f32 %v6173, %v2490
  %v6213 = vmul.f32 %v6177, %v2490
  %v6214 = vmul.f32 %v6181, %v2490
  %v6215 = vmul.f32 %v6185, %v2490
  %v6216 = vmul.f32 %v6189, %v2490
  %v6217 = vmul.f32 %v6193, %v2490
  %v6218 = vmul.f32 %v6197, %v2490
  %v6219 = vmul.f32 %v6201, %v2490
  %v6220 = vmul.f32 %v6205, %v2490
  %v6221 = vadd.f32 %v6137, %v6207
  %v6222 = vadd.f32 %v6138, %v6208
  %v6223 = vadd.f32 %v6139, %v6209
  %v6224 = vadd.f32 %v6140, %v6210
  %v6225 = vadd.f32 %v6141, %v6211
  %v6226 = vadd.f32 %v6142, %v6212
  %v6227 = vadd.f32 %v6143, %v6213
  %v6228 = vadd.f32 %v6144, %v6214
  %v6229 = vadd.f32 %v6145, %v6215
  %v6230 = vadd.f32 %v6146, %v6216
  %v6231 = vadd.f32 %v6147, %v6217
  %v6232 = vadd.f32 %v6148, %v6218
  %v6233 = vadd.f32 %v6149, %v6219
  %v6234 = vadd.f32 %v6150, %v6220
  %6235 = vset.pattern.permute.xlu0 2
  %6236 = vperm.xlu0 %6235, %v6039
  %v6237 = vpop.permute.xlu0 %6236
  %6239 = vset.pattern.permute.xlu0 2
  %6240 = vperm.xlu0 %6239, %v6040
  %v6241 = vpop.permute.xlu0 %6240
  %6243 = vset.pattern.permute.xlu0 2
  %6244 = vperm.xlu0 %6243, %v6041
  %v6245 = vpop.permute.xlu0 %6244
  %6247 = vset.pattern.permute.xlu0 2
  %6248 = vperm.xlu0 %6247, %v6042
  %v6249 = vpop.permute.xlu0 %6248
  %6251 = vset.pattern.permute.xlu0 2
  %6252 = vperm.xlu0 %6251, %v6043
  %v6253 = vpop.permute.xlu0 %6252
  %6255 = vset.pattern.permute.xlu0 2
  %6256 = vperm.xlu0 %6255, %v6044
  %v6257 = vpop.permute.xlu0 %6256
  %6259 = vset.pattern.permute.xlu0 2
  %6260 = vperm.xlu0 %6259, %v6045
  %v6261 = vpop.permute.xlu0 %6260
  %6263 = vset.pattern.permute.xlu0 2
  %6264 = vperm.xlu0 %6263, %v6046
  %v6265 = vpop.permute.xlu0 %6264
  %6267 = vset.pattern.permute.xlu0 2
  %6268 = vperm.xlu0 %6267, %v6047
  %v6269 = vpop.permute.xlu0 %6268
  %6271 = vset.pattern.permute.xlu0 2
  %6272 = vperm.xlu0 %6271, %v6048
  %v6273 = vpop.permute.xlu0 %6272
  %6275 = vset.pattern.permute.xlu0 2
  %6276 = vperm.xlu0 %6275, %v6049
  %v6277 = vpop.permute.xlu0 %6276
  %6279 = vset.pattern.permute.xlu0 2
  %6280 = vperm.xlu0 %6279, %v6050
  %v6281 = vpop.permute.xlu0 %6280
  %6283 = vset.pattern.permute.xlu0 2
  %6284 = vperm.xlu0 %6283, %v6051
  %v6285 = vpop.permute.xlu0 %6284
  %6287 = vset.pattern.permute.xlu0 2
  %6288 = vperm.xlu0 %6287, %v6052
  %v6289 = vpop.permute.xlu0 %6288
  %v6291 = vmul.f32 %v6237, %v2578
  %v6292 = vmul.f32 %v6241, %v2578
  %v6293 = vmul.f32 %v6245, %v2578
  %v6294 = vmul.f32 %v6249, %v2578
  %v6295 = vmul.f32 %v6253, %v2578
  %v6296 = vmul.f32 %v6257, %v2578
  %v6297 = vmul.f32 %v6261, %v2578
  %v6298 = vmul.f32 %v6265, %v2578
  %v6299 = vmul.f32 %v6269, %v2578
  %v6300 = vmul.f32 %v6273, %v2578
  %v6301 = vmul.f32 %v6277, %v2578
  %v6302 = vmul.f32 %v6281, %v2578
  %v6303 = vmul.f32 %v6285, %v2578
  %v6304 = vmul.f32 %v6289, %v2578
  %v6305 = vadd.f32 %v6221, %v6291
  %v6306 = vadd.f32 %v6222, %v6292
  %v6307 = vadd.f32 %v6223, %v6293
  %v6308 = vadd.f32 %v6224, %v6294
  %v6309 = vadd.f32 %v6225, %v6295
  %v6310 = vadd.f32 %v6226, %v6296
  %v6311 = vadd.f32 %v6227, %v6297
  %v6312 = vadd.f32 %v6228, %v6298
  %v6313 = vadd.f32 %v6229, %v6299
  %v6314 = vadd.f32 %v6230, %v6300
  %v6315 = vadd.f32 %v6231, %v6301
  %v6316 = vadd.f32 %v6232, %v6302
  %v6317 = vadd.f32 %v6233, %v6303
  %v6318 = vadd.f32 %v6234, %v6304
  %6319 = vset.pattern.permute.xlu0 3
  %6320 = vperm.xlu0 %6319, %v6039
  %v6321 = vpop.permute.xlu0 %6320
  %6323 = vset.pattern.permute.xlu0 3
  %6324 = vperm.xlu0 %6323, %v6040
  %v6325 = vpop.permute.xlu0 %6324
  %6327 = vset.pattern.permute.xlu0 3
  %6328 = vperm.xlu0 %6327, %v6041
  %v6329 = vpop.permute.xlu0 %6328
  %6331 = vset.pattern.permute.xlu0 3
  %6332 = vperm.xlu0 %6331, %v6042
  %v6333 = vpop.permute.xlu0 %6332
  %6335 = vset.pattern.permute.xlu0 3
  %6336 = vperm.xlu0 %6335, %v6043
  %v6337 = vpop.permute.xlu0 %6336
  %6339 = vset.pattern.permute.xlu0 3
  %6340 = vperm.xlu0 %6339, %v6044
  %v6341 = vpop.permute.xlu0 %6340
  %6343 = vset.pattern.permute.xlu0 3
  %6344 = vperm.xlu0 %6343, %v6045
  %v6345 = vpop.permute.xlu0 %6344
  %6347 = vset.pattern.permute.xlu0 3
  %6348 = vperm.xlu0 %6347, %v6046
  %v6349 = vpop.permute.xlu0 %6348
  %6351 = vset.pattern.permute.xlu0 3
  %6352 = vperm.xlu0 %6351, %v6047
  %v6353 = vpop.permute.xlu0 %6352
  %6355 = vset.pattern.permute.xlu0 3
  %6356 = vperm.xlu0 %6355, %v6048
  %v6357 = vpop.permute.xlu0 %6356
  %6359 = vset.pattern.permute.xlu0 3
  %6360 = vperm.xlu0 %6359, %v6049
  %v6361 = vpop.permute.xlu0 %6360
  %6363 = vset.pattern.permute.xlu0 3
  %6364 = vperm.xlu0 %6363, %v6050
  %v6365 = vpop.permute.xlu0 %6364
  %6367 = vset.pattern.permute.xlu0 3
  %6368 = vperm.xlu0 %6367, %v6051
  %v6369 = vpop.permute.xlu0 %6368
  %6371 = vset.pattern.permute.xlu0 3
  %6372 = vperm.xlu0 %6371, %v6052
  %v6373 = vpop.permute.xlu0 %6372
  %v6375 = vmul.f32 %v6321, %v2666
  %v6376 = vmul.f32 %v6325, %v2666
  %v6377 = vmul.f32 %v6329, %v2666
  %v6378 = vmul.f32 %v6333, %v2666
  %v6379 = vmul.f32 %v6337, %v2666
  %v6380 = vmul.f32 %v6341, %v2666
  %v6381 = vmul.f32 %v6345, %v2666
  %v6382 = vmul.f32 %v6349, %v2666
  %v6383 = vmul.f32 %v6353, %v2666
  %v6384 = vmul.f32 %v6357, %v2666
  %v6385 = vmul.f32 %v6361, %v2666
  %v6386 = vmul.f32 %v6365, %v2666
  %v6387 = vmul.f32 %v6369, %v2666
  %v6388 = vmul.f32 %v6373, %v2666
  %v6389 = vadd.f32 %v6305, %v6375
  %v6390 = vadd.f32 %v6306, %v6376
  %v6391 = vadd.f32 %v6307, %v6377
  %v6392 = vadd.f32 %v6308, %v6378
  %v6393 = vadd.f32 %v6309, %v6379
  %v6394 = vadd.f32 %v6310, %v6380
  %v6395 = vadd.f32 %v6311, %v6381
  %v6396 = vadd.f32 %v6312, %v6382
  %v6397 = vadd.f32 %v6313, %v6383
  %v6398 = vadd.f32 %v6314, %v6384
  %v6399 = vadd.f32 %v6315, %v6385
  %v6400 = vadd.f32 %v6316, %v6386
  %v6401 = vadd.f32 %v6317, %v6387
  %v6402 = vadd.f32 %v6318, %v6388
  %s6403 = scalar_lea.vmem %s0, 392
  %v6404 = vld [vmem:[%s6403] sm:$0x7f]
  %v6405 = vld [vmem:[%s6403 + $0x8] sm:$0x7f]
  %v6406 = vld [vmem:[%s6403 + $0x10] sm:$0x7f]
  %v6407 = vld [vmem:[%s6403 + $0x18] sm:$0x7f]
  %v6408 = vld [vmem:[%s6403 + $0x20] sm:$0x7f]
  %v6409 = vld [vmem:[%s6403 + $0x28] sm:$0x7f]
  %v6410 = vld [vmem:[%s6403 + $0x30] sm:$0x7f]
  %v6411 = vld [vmem:[%s6403 + $0x40] sm:$0x7f]
  %v6412 = vld [vmem:[%s6403 + $0x48] sm:$0x7f]
  %v6413 = vld [vmem:[%s6403 + $0x50] sm:$0x7f]
  %v6414 = vld [vmem:[%s6403 + $0x58] sm:$0x7f]
  %v6415 = vld [vmem:[%s6403 + $0x60] sm:$0x7f]
  %v6416 = vld [vmem:[%s6403 + $0x68] sm:$0x7f]
  %v6417 = vld [vmem:[%s6403 + $0x70] sm:$0x7f]
  %6419 = vset.pattern.permute.xlu0 0
  %6420 = vperm.xlu0 %6419, %v6404
  %v6421 = vpop.permute.xlu0 %6420
  %6424 = vset.pattern.permute.xlu0 0
  %6425 = vperm.xlu0 %6424, %v6405
  %v6426 = vpop.permute.xlu0 %6425
  %6429 = vset.pattern.permute.xlu0 0
  %6430 = vperm.xlu0 %6429, %v6406
  %v6431 = vpop.permute.xlu0 %6430
  %6434 = vset.pattern.permute.xlu0 0
  %6435 = vperm.xlu0 %6434, %v6407
  %v6436 = vpop.permute.xlu0 %6435
  %6439 = vset.pattern.permute.xlu0 0
  %6440 = vperm.xlu0 %6439, %v6408
  %v6441 = vpop.permute.xlu0 %6440
  %6444 = vset.pattern.permute.xlu0 0
  %6445 = vperm.xlu0 %6444, %v6409
  %v6446 = vpop.permute.xlu0 %6445
  %6449 = vset.pattern.permute.xlu0 0
  %6450 = vperm.xlu0 %6449, %v6410
  %v6451 = vpop.permute.xlu0 %6450
  %6454 = vset.pattern.permute.xlu0 0
  %6455 = vperm.xlu0 %6454, %v6411
  %v6456 = vpop.permute.xlu0 %6455
  %6459 = vset.pattern.permute.xlu0 0
  %6460 = vperm.xlu0 %6459, %v6412
  %v6461 = vpop.permute.xlu0 %6460
  %6464 = vset.pattern.permute.xlu0 0
  %6465 = vperm.xlu0 %6464, %v6413
  %v6466 = vpop.permute.xlu0 %6465
  %6469 = vset.pattern.permute.xlu0 0
  %6470 = vperm.xlu0 %6469, %v6414
  %v6471 = vpop.permute.xlu0 %6470
  %6474 = vset.pattern.permute.xlu0 0
  %6475 = vperm.xlu0 %6474, %v6415
  %v6476 = vpop.permute.xlu0 %6475
  %6479 = vset.pattern.permute.xlu0 0
  %6480 = vperm.xlu0 %6479, %v6416
  %v6481 = vpop.permute.xlu0 %6480
  %6484 = vset.pattern.permute.xlu0 0
  %6485 = vperm.xlu0 %6484, %v6417
  %v6486 = vpop.permute.xlu0 %6485
  %v6488 = vmul.f32 %v6421, %v2783
  %v6489 = vmul.f32 %v6426, %v2783
  %v6490 = vmul.f32 %v6431, %v2783
  %v6491 = vmul.f32 %v6436, %v2783
  %v6492 = vmul.f32 %v6441, %v2783
  %v6493 = vmul.f32 %v6446, %v2783
  %v6494 = vmul.f32 %v6451, %v2783
  %v6495 = vmul.f32 %v6456, %v2783
  %v6496 = vmul.f32 %v6461, %v2783
  %v6497 = vmul.f32 %v6466, %v2783
  %v6498 = vmul.f32 %v6471, %v2783
  %v6499 = vmul.f32 %v6476, %v2783
  %v6500 = vmul.f32 %v6481, %v2783
  %v6501 = vmul.f32 %v6486, %v2783
  %v6502 = vadd.f32 %v6389, %v6488
  %v6503 = vadd.f32 %v6390, %v6489
  %v6504 = vadd.f32 %v6391, %v6490
  %v6505 = vadd.f32 %v6392, %v6491
  %v6506 = vadd.f32 %v6393, %v6492
  %v6507 = vadd.f32 %v6394, %v6493
  %v6508 = vadd.f32 %v6395, %v6494
  %v6509 = vadd.f32 %v6396, %v6495
  %v6510 = vadd.f32 %v6397, %v6496
  %v6511 = vadd.f32 %v6398, %v6497
  %v6512 = vadd.f32 %v6399, %v6498
  %v6513 = vadd.f32 %v6400, %v6499
  %v6514 = vadd.f32 %v6401, %v6500
  %v6515 = vadd.f32 %v6402, %v6501
  %6516 = vset.pattern.permute.xlu0 1
  %6517 = vperm.xlu0 %6516, %v6404
  %v6518 = vpop.permute.xlu0 %6517
  %6520 = vset.pattern.permute.xlu0 1
  %6521 = vperm.xlu0 %6520, %v6405
  %v6522 = vpop.permute.xlu0 %6521
  %6524 = vset.pattern.permute.xlu0 1
  %6525 = vperm.xlu0 %6524, %v6406
  %v6526 = vpop.permute.xlu0 %6525
  %6528 = vset.pattern.permute.xlu0 1
  %6529 = vperm.xlu0 %6528, %v6407
  %v6530 = vpop.permute.xlu0 %6529
  %6532 = vset.pattern.permute.xlu0 1
  %6533 = vperm.xlu0 %6532, %v6408
  %v6534 = vpop.permute.xlu0 %6533
  %6536 = vset.pattern.permute.xlu0 1
  %6537 = vperm.xlu0 %6536, %v6409
  %v6538 = vpop.permute.xlu0 %6537
  %6540 = vset.pattern.permute.xlu0 1
  %6541 = vperm.xlu0 %6540, %v6410
  %v6542 = vpop.permute.xlu0 %6541
  %6544 = vset.pattern.permute.xlu0 1
  %6545 = vperm.xlu0 %6544, %v6411
  %v6546 = vpop.permute.xlu0 %6545
  %6548 = vset.pattern.permute.xlu0 1
  %6549 = vperm.xlu0 %6548, %v6412
  %v6550 = vpop.permute.xlu0 %6549
  %6552 = vset.pattern.permute.xlu0 1
  %6553 = vperm.xlu0 %6552, %v6413
  %v6554 = vpop.permute.xlu0 %6553
  %6556 = vset.pattern.permute.xlu0 1
  %6557 = vperm.xlu0 %6556, %v6414
  %v6558 = vpop.permute.xlu0 %6557
  %6560 = vset.pattern.permute.xlu0 1
  %6561 = vperm.xlu0 %6560, %v6415
  %v6562 = vpop.permute.xlu0 %6561
  %6564 = vset.pattern.permute.xlu0 1
  %6565 = vperm.xlu0 %6564, %v6416
  %v6566 = vpop.permute.xlu0 %6565
  %6568 = vset.pattern.permute.xlu0 1
  %6569 = vperm.xlu0 %6568, %v6417
  %v6570 = vpop.permute.xlu0 %6569
  %v6572 = vmul.f32 %v6518, %v2871
  %v6573 = vmul.f32 %v6522, %v2871
  %v6574 = vmul.f32 %v6526, %v2871
  %v6575 = vmul.f32 %v6530, %v2871
  %v6576 = vmul.f32 %v6534, %v2871
  %v6577 = vmul.f32 %v6538, %v2871
  %v6578 = vmul.f32 %v6542, %v2871
  %v6579 = vmul.f32 %v6546, %v2871
  %v6580 = vmul.f32 %v6550, %v2871
  %v6581 = vmul.f32 %v6554, %v2871
  %v6582 = vmul.f32 %v6558, %v2871
  %v6583 = vmul.f32 %v6562, %v2871
  %v6584 = vmul.f32 %v6566, %v2871
  %v6585 = vmul.f32 %v6570, %v2871
  %v6586 = vadd.f32 %v6502, %v6572
  %v6587 = vadd.f32 %v6503, %v6573
  %v6588 = vadd.f32 %v6504, %v6574
  %v6589 = vadd.f32 %v6505, %v6575
  %v6590 = vadd.f32 %v6506, %v6576
  %v6591 = vadd.f32 %v6507, %v6577
  %v6592 = vadd.f32 %v6508, %v6578
  %v6593 = vadd.f32 %v6509, %v6579
  %v6594 = vadd.f32 %v6510, %v6580
  %v6595 = vadd.f32 %v6511, %v6581
  %v6596 = vadd.f32 %v6512, %v6582
  %v6597 = vadd.f32 %v6513, %v6583
  %v6598 = vadd.f32 %v6514, %v6584
  %v6599 = vadd.f32 %v6515, %v6585
  %6600 = vset.pattern.permute.xlu0 2
  %6601 = vperm.xlu0 %6600, %v6404
  %v6602 = vpop.permute.xlu0 %6601
  %6604 = vset.pattern.permute.xlu0 2
  %6605 = vperm.xlu0 %6604, %v6405
  %v6606 = vpop.permute.xlu0 %6605
  %6608 = vset.pattern.permute.xlu0 2
  %6609 = vperm.xlu0 %6608, %v6406
  %v6610 = vpop.permute.xlu0 %6609
  %6612 = vset.pattern.permute.xlu0 2
  %6613 = vperm.xlu0 %6612, %v6407
  %v6614 = vpop.permute.xlu0 %6613
  %6616 = vset.pattern.permute.xlu0 2
  %6617 = vperm.xlu0 %6616, %v6408
  %v6618 = vpop.permute.xlu0 %6617
  %6620 = vset.pattern.permute.xlu0 2
  %6621 = vperm.xlu0 %6620, %v6409
  %v6622 = vpop.permute.xlu0 %6621
  %6624 = vset.pattern.permute.xlu0 2
  %6625 = vperm.xlu0 %6624, %v6410
  %v6626 = vpop.permute.xlu0 %6625
  %6628 = vset.pattern.permute.xlu0 2
  %6629 = vperm.xlu0 %6628, %v6411
  %v6630 = vpop.permute.xlu0 %6629
  %6632 = vset.pattern.permute.xlu0 2
  %6633 = vperm.xlu0 %6632, %v6412
  %v6634 = vpop.permute.xlu0 %6633
  %6636 = vset.pattern.permute.xlu0 2
  %6637 = vperm.xlu0 %6636, %v6413
  %v6638 = vpop.permute.xlu0 %6637
  %6640 = vset.pattern.permute.xlu0 2
  %6641 = vperm.xlu0 %6640, %v6414
  %v6642 = vpop.permute.xlu0 %6641
  %6644 = vset.pattern.permute.xlu0 2
  %6645 = vperm.xlu0 %6644, %v6415
  %v6646 = vpop.permute.xlu0 %6645
  %6648 = vset.pattern.permute.xlu0 2
  %6649 = vperm.xlu0 %6648, %v6416
  %v6650 = vpop.permute.xlu0 %6649
  %6652 = vset.pattern.permute.xlu0 2
  %6653 = vperm.xlu0 %6652, %v6417
  %v6654 = vpop.permute.xlu0 %6653
  %v6656 = vmul.f32 %v6602, %v2959
  %v6657 = vmul.f32 %v6606, %v2959
  %v6658 = vmul.f32 %v6610, %v2959
  %v6659 = vmul.f32 %v6614, %v2959
  %v6660 = vmul.f32 %v6618, %v2959
  %v6661 = vmul.f32 %v6622, %v2959
  %v6662 = vmul.f32 %v6626, %v2959
  %v6663 = vmul.f32 %v6630, %v2959
  %v6664 = vmul.f32 %v6634, %v2959
  %v6665 = vmul.f32 %v6638, %v2959
  %v6666 = vmul.f32 %v6642, %v2959
  %v6667 = vmul.f32 %v6646, %v2959
  %v6668 = vmul.f32 %v6650, %v2959
  %v6669 = vmul.f32 %v6654, %v2959
  %v6670 = vadd.f32 %v6586, %v6656
  %v6671 = vadd.f32 %v6587, %v6657
  %v6672 = vadd.f32 %v6588, %v6658
  %v6673 = vadd.f32 %v6589, %v6659
  %v6674 = vadd.f32 %v6590, %v6660
  %v6675 = vadd.f32 %v6591, %v6661
  %v6676 = vadd.f32 %v6592, %v6662
  %v6677 = vadd.f32 %v6593, %v6663
  %v6678 = vadd.f32 %v6594, %v6664
  %v6679 = vadd.f32 %v6595, %v6665
  %v6680 = vadd.f32 %v6596, %v6666
  %v6681 = vadd.f32 %v6597, %v6667
  %v6682 = vadd.f32 %v6598, %v6668
  %v6683 = vadd.f32 %v6599, %v6669
  %6684 = vset.pattern.permute.xlu0 3
  %6685 = vperm.xlu0 %6684, %v6404
  %v6686 = vpop.permute.xlu0 %6685
  %6688 = vset.pattern.permute.xlu0 3
  %6689 = vperm.xlu0 %6688, %v6405
  %v6690 = vpop.permute.xlu0 %6689
  %6692 = vset.pattern.permute.xlu0 3
  %6693 = vperm.xlu0 %6692, %v6406
  %v6694 = vpop.permute.xlu0 %6693
  %6696 = vset.pattern.permute.xlu0 3
  %6697 = vperm.xlu0 %6696, %v6407
  %v6698 = vpop.permute.xlu0 %6697
  %6700 = vset.pattern.permute.xlu0 3
  %6701 = vperm.xlu0 %6700, %v6408
  %v6702 = vpop.permute.xlu0 %6701
  %6704 = vset.pattern.permute.xlu0 3
  %6705 = vperm.xlu0 %6704, %v6409
  %v6706 = vpop.permute.xlu0 %6705
  %6708 = vset.pattern.permute.xlu0 3
  %6709 = vperm.xlu0 %6708, %v6410
  %v6710 = vpop.permute.xlu0 %6709
  %6712 = vset.pattern.permute.xlu0 3
  %6713 = vperm.xlu0 %6712, %v6411
  %v6714 = vpop.permute.xlu0 %6713
  %6716 = vset.pattern.permute.xlu0 3
  %6717 = vperm.xlu0 %6716, %v6412
  %v6718 = vpop.permute.xlu0 %6717
  %6720 = vset.pattern.permute.xlu0 3
  %6721 = vperm.xlu0 %6720, %v6413
  %v6722 = vpop.permute.xlu0 %6721
  %6724 = vset.pattern.permute.xlu0 3
  %6725 = vperm.xlu0 %6724, %v6414
  %v6726 = vpop.permute.xlu0 %6725
  %6728 = vset.pattern.permute.xlu0 3
  %6729 = vperm.xlu0 %6728, %v6415
  %v6730 = vpop.permute.xlu0 %6729
  %6732 = vset.pattern.permute.xlu0 3
  %6733 = vperm.xlu0 %6732, %v6416
  %v6734 = vpop.permute.xlu0 %6733
  %6736 = vset.pattern.permute.xlu0 3
  %6737 = vperm.xlu0 %6736, %v6417
  %v6738 = vpop.permute.xlu0 %6737
  %v6740 = vmul.f32 %v6686, %v3047
  %v6741 = vmul.f32 %v6690, %v3047
  %v6742 = vmul.f32 %v6694, %v3047
  %v6743 = vmul.f32 %v6698, %v3047
  %v6744 = vmul.f32 %v6702, %v3047
  %v6745 = vmul.f32 %v6706, %v3047
  %v6746 = vmul.f32 %v6710, %v3047
  %v6747 = vmul.f32 %v6714, %v3047
  %v6748 = vmul.f32 %v6718, %v3047
  %v6749 = vmul.f32 %v6722, %v3047
  %v6750 = vmul.f32 %v6726, %v3047
  %v6751 = vmul.f32 %v6730, %v3047
  %v6752 = vmul.f32 %v6734, %v3047
  %v6753 = vmul.f32 %v6738, %v3047
  %v6754 = vadd.f32 %v6670, %v6740
  %v6755 = vadd.f32 %v6671, %v6741
  %v6756 = vadd.f32 %v6672, %v6742
  %v6757 = vadd.f32 %v6673, %v6743
  %v6758 = vadd.f32 %v6674, %v6744
  %v6759 = vadd.f32 %v6675, %v6745
  %v6760 = vadd.f32 %v6676, %v6746
  %v6761 = vadd.f32 %v6677, %v6747
  %v6762 = vadd.f32 %v6678, %v6748
  %v6763 = vadd.f32 %v6679, %v6749
  %v6764 = vadd.f32 %v6680, %v6750
  %v6765 = vadd.f32 %v6681, %v6751
  %v6766 = vadd.f32 %v6682, %v6752
  %v6767 = vadd.f32 %v6683, %v6753
  %v6768 = vld [vmem:[%s6038 + $0x1] sm:$0x7f]
  %v6769 = vld [vmem:[%s6038 + $0x9] sm:$0x7f]
  %v6770 = vld [vmem:[%s6038 + $0x11] sm:$0x7f]
  %v6771 = vld [vmem:[%s6038 + $0x19] sm:$0x7f]
  %v6772 = vld [vmem:[%s6038 + $0x21] sm:$0x7f]
  %v6773 = vld [vmem:[%s6038 + $0x29] sm:$0x7f]
  %v6774 = vld [vmem:[%s6038 + $0x31] sm:$0x7f]
  %v6775 = vld [vmem:[%s6038 + $0x41] sm:$0x7f]
  %v6776 = vld [vmem:[%s6038 + $0x49] sm:$0x7f]
  %v6777 = vld [vmem:[%s6038 + $0x51] sm:$0x7f]
  %v6778 = vld [vmem:[%s6038 + $0x59] sm:$0x7f]
  %v6779 = vld [vmem:[%s6038 + $0x61] sm:$0x7f]
  %v6780 = vld [vmem:[%s6038 + $0x69] sm:$0x7f]
  %v6781 = vld [vmem:[%s6038 + $0x71] sm:$0x7f]
  %6783 = vset.pattern.permute.xlu0 0
  %6784 = vperm.xlu0 %6783, %v6768
  %v6785 = vpop.permute.xlu0 %6784
  %6788 = vset.pattern.permute.xlu0 0
  %6789 = vperm.xlu0 %6788, %v6769
  %v6790 = vpop.permute.xlu0 %6789
  %6793 = vset.pattern.permute.xlu0 0
  %6794 = vperm.xlu0 %6793, %v6770
  %v6795 = vpop.permute.xlu0 %6794
  %6798 = vset.pattern.permute.xlu0 0
  %6799 = vperm.xlu0 %6798, %v6771
  %v6800 = vpop.permute.xlu0 %6799
  %6803 = vset.pattern.permute.xlu0 0
  %6804 = vperm.xlu0 %6803, %v6772
  %v6805 = vpop.permute.xlu0 %6804
  %6808 = vset.pattern.permute.xlu0 0
  %6809 = vperm.xlu0 %6808, %v6773
  %v6810 = vpop.permute.xlu0 %6809
  %6813 = vset.pattern.permute.xlu0 0
  %6814 = vperm.xlu0 %6813, %v6774
  %v6815 = vpop.permute.xlu0 %6814
  %6818 = vset.pattern.permute.xlu0 0
  %6819 = vperm.xlu0 %6818, %v6775
  %v6820 = vpop.permute.xlu0 %6819
  %6823 = vset.pattern.permute.xlu0 0
  %6824 = vperm.xlu0 %6823, %v6776
  %v6825 = vpop.permute.xlu0 %6824
  %6828 = vset.pattern.permute.xlu0 0
  %6829 = vperm.xlu0 %6828, %v6777
  %v6830 = vpop.permute.xlu0 %6829
  %6833 = vset.pattern.permute.xlu0 0
  %6834 = vperm.xlu0 %6833, %v6778
  %v6835 = vpop.permute.xlu0 %6834
  %6838 = vset.pattern.permute.xlu0 0
  %6839 = vperm.xlu0 %6838, %v6779
  %v6840 = vpop.permute.xlu0 %6839
  %6843 = vset.pattern.permute.xlu0 0
  %6844 = vperm.xlu0 %6843, %v6780
  %v6845 = vpop.permute.xlu0 %6844
  %6848 = vset.pattern.permute.xlu0 0
  %6849 = vperm.xlu0 %6848, %v6781
  %v6850 = vpop.permute.xlu0 %6849
  %v6852 = vmul.f32 %v6785, %v3163
  %v6853 = vmul.f32 %v6790, %v3163
  %v6854 = vmul.f32 %v6795, %v3163
  %v6855 = vmul.f32 %v6800, %v3163
  %v6856 = vmul.f32 %v6805, %v3163
  %v6857 = vmul.f32 %v6810, %v3163
  %v6858 = vmul.f32 %v6815, %v3163
  %v6859 = vmul.f32 %v6820, %v3163
  %v6860 = vmul.f32 %v6825, %v3163
  %v6861 = vmul.f32 %v6830, %v3163
  %v6862 = vmul.f32 %v6835, %v3163
  %v6863 = vmul.f32 %v6840, %v3163
  %v6864 = vmul.f32 %v6845, %v3163
  %v6865 = vmul.f32 %v6850, %v3163
  %v6866 = vadd.f32 %v6754, %v6852
  %v6867 = vadd.f32 %v6755, %v6853
  %v6868 = vadd.f32 %v6756, %v6854
  %v6869 = vadd.f32 %v6757, %v6855
  %v6870 = vadd.f32 %v6758, %v6856
  %v6871 = vadd.f32 %v6759, %v6857
  %v6872 = vadd.f32 %v6760, %v6858
  %v6873 = vadd.f32 %v6761, %v6859
  %v6874 = vadd.f32 %v6762, %v6860
  %v6875 = vadd.f32 %v6763, %v6861
  %v6876 = vadd.f32 %v6764, %v6862
  %v6877 = vadd.f32 %v6765, %v6863
  %v6878 = vadd.f32 %v6766, %v6864
  %v6879 = vadd.f32 %v6767, %v6865
  %6880 = vset.pattern.permute.xlu0 1
  %6881 = vperm.xlu0 %6880, %v6768
  %v6882 = vpop.permute.xlu0 %6881
  %6884 = vset.pattern.permute.xlu0 1
  %6885 = vperm.xlu0 %6884, %v6769
  %v6886 = vpop.permute.xlu0 %6885
  %6888 = vset.pattern.permute.xlu0 1
  %6889 = vperm.xlu0 %6888, %v6770
  %v6890 = vpop.permute.xlu0 %6889
  %6892 = vset.pattern.permute.xlu0 1
  %6893 = vperm.xlu0 %6892, %v6771
  %v6894 = vpop.permute.xlu0 %6893
  %6896 = vset.pattern.permute.xlu0 1
  %6897 = vperm.xlu0 %6896, %v6772
  %v6898 = vpop.permute.xlu0 %6897
  %6900 = vset.pattern.permute.xlu0 1
  %6901 = vperm.xlu0 %6900, %v6773
  %v6902 = vpop.permute.xlu0 %6901
  %6904 = vset.pattern.permute.xlu0 1
  %6905 = vperm.xlu0 %6904, %v6774
  %v6906 = vpop.permute.xlu0 %6905
  %6908 = vset.pattern.permute.xlu0 1
  %6909 = vperm.xlu0 %6908, %v6775
  %v6910 = vpop.permute.xlu0 %6909
  %6912 = vset.pattern.permute.xlu0 1
  %6913 = vperm.xlu0 %6912, %v6776
  %v6914 = vpop.permute.xlu0 %6913
  %6916 = vset.pattern.permute.xlu0 1
  %6917 = vperm.xlu0 %6916, %v6777
  %v6918 = vpop.permute.xlu0 %6917
  %6920 = vset.pattern.permute.xlu0 1
  %6921 = vperm.xlu0 %6920, %v6778
  %v6922 = vpop.permute.xlu0 %6921
  %6924 = vset.pattern.permute.xlu0 1
  %6925 = vperm.xlu0 %6924, %v6779
  %v6926 = vpop.permute.xlu0 %6925
  %6928 = vset.pattern.permute.xlu0 1
  %6929 = vperm.xlu0 %6928, %v6780
  %v6930 = vpop.permute.xlu0 %6929
  %6932 = vset.pattern.permute.xlu0 1
  %6933 = vperm.xlu0 %6932, %v6781
  %v6934 = vpop.permute.xlu0 %6933
  %v6936 = vmul.f32 %v6882, %v3251
  %v6937 = vmul.f32 %v6886, %v3251
  %v6938 = vmul.f32 %v6890, %v3251
  %v6939 = vmul.f32 %v6894, %v3251
  %v6940 = vmul.f32 %v6898, %v3251
  %v6941 = vmul.f32 %v6902, %v3251
  %v6942 = vmul.f32 %v6906, %v3251
  %v6943 = vmul.f32 %v6910, %v3251
  %v6944 = vmul.f32 %v6914, %v3251
  %v6945 = vmul.f32 %v6918, %v3251
  %v6946 = vmul.f32 %v6922, %v3251
  %v6947 = vmul.f32 %v6926, %v3251
  %v6948 = vmul.f32 %v6930, %v3251
  %v6949 = vmul.f32 %v6934, %v3251
  %v6950 = vadd.f32 %v6866, %v6936
  %v6951 = vadd.f32 %v6867, %v6937
  %v6952 = vadd.f32 %v6868, %v6938
  %v6953 = vadd.f32 %v6869, %v6939
  %v6954 = vadd.f32 %v6870, %v6940
  %v6955 = vadd.f32 %v6871, %v6941
  %v6956 = vadd.f32 %v6872, %v6942
  %v6957 = vadd.f32 %v6873, %v6943
  %v6958 = vadd.f32 %v6874, %v6944
  %v6959 = vadd.f32 %v6875, %v6945
  %v6960 = vadd.f32 %v6876, %v6946
  %v6961 = vadd.f32 %v6877, %v6947
  %v6962 = vadd.f32 %v6878, %v6948
  %v6963 = vadd.f32 %v6879, %v6949
  %6964 = vset.pattern.permute.xlu0 2
  %6965 = vperm.xlu0 %6964, %v6768
  %v6966 = vpop.permute.xlu0 %6965
  %6968 = vset.pattern.permute.xlu0 2
  %6969 = vperm.xlu0 %6968, %v6769
  %v6970 = vpop.permute.xlu0 %6969
  %6972 = vset.pattern.permute.xlu0 2
  %6973 = vperm.xlu0 %6972, %v6770
  %v6974 = vpop.permute.xlu0 %6973
  %6976 = vset.pattern.permute.xlu0 2
  %6977 = vperm.xlu0 %6976, %v6771
  %v6978 = vpop.permute.xlu0 %6977
  %6980 = vset.pattern.permute.xlu0 2
  %6981 = vperm.xlu0 %6980, %v6772
  %v6982 = vpop.permute.xlu0 %6981
  %6984 = vset.pattern.permute.xlu0 2
  %6985 = vperm.xlu0 %6984, %v6773
  %v6986 = vpop.permute.xlu0 %6985
  %6988 = vset.pattern.permute.xlu0 2
  %6989 = vperm.xlu0 %6988, %v6774
  %v6990 = vpop.permute.xlu0 %6989
  %6992 = vset.pattern.permute.xlu0 2
  %6993 = vperm.xlu0 %6992, %v6775
  %v6994 = vpop.permute.xlu0 %6993
  %6996 = vset.pattern.permute.xlu0 2
  %6997 = vperm.xlu0 %6996, %v6776
  %v6998 = vpop.permute.xlu0 %6997
  %7000 = vset.pattern.permute.xlu0 2
  %7001 = vperm.xlu0 %7000, %v6777
  %v7002 = vpop.permute.xlu0 %7001
  %7004 = vset.pattern.permute.xlu0 2
  %7005 = vperm.xlu0 %7004, %v6778
  %v7006 = vpop.permute.xlu0 %7005
  %7008 = vset.pattern.permute.xlu0 2
  %7009 = vperm.xlu0 %7008, %v6779
  %v7010 = vpop.permute.xlu0 %7009
  %7012 = vset.pattern.permute.xlu0 2
  %7013 = vperm.xlu0 %7012, %v6780
  %v7014 = vpop.permute.xlu0 %7013
  %7016 = vset.pattern.permute.xlu0 2
  %7017 = vperm.xlu0 %7016, %v6781
  %v7018 = vpop.permute.xlu0 %7017
  %v7020 = vmul.f32 %v6966, %v3339
  %v7021 = vmul.f32 %v6970, %v3339
  %v7022 = vmul.f32 %v6974, %v3339
  %v7023 = vmul.f32 %v6978, %v3339
  %v7024 = vmul.f32 %v6982, %v3339
  %v7025 = vmul.f32 %v6986, %v3339
  %v7026 = vmul.f32 %v6990, %v3339
  %v7027 = vmul.f32 %v6994, %v3339
  %v7028 = vmul.f32 %v6998, %v3339
  %v7029 = vmul.f32 %v7002, %v3339
  %v7030 = vmul.f32 %v7006, %v3339
  %v7031 = vmul.f32 %v7010, %v3339
  %v7032 = vmul.f32 %v7014, %v3339
  %v7033 = vmul.f32 %v7018, %v3339
  %v7034 = vadd.f32 %v6950, %v7020
  %v7035 = vadd.f32 %v6951, %v7021
  %v7036 = vadd.f32 %v6952, %v7022
  %v7037 = vadd.f32 %v6953, %v7023
  %v7038 = vadd.f32 %v6954, %v7024
  %v7039 = vadd.f32 %v6955, %v7025
  %v7040 = vadd.f32 %v6956, %v7026
  %v7041 = vadd.f32 %v6957, %v7027
  %v7042 = vadd.f32 %v6958, %v7028
  %v7043 = vadd.f32 %v6959, %v7029
  %v7044 = vadd.f32 %v6960, %v7030
  %v7045 = vadd.f32 %v6961, %v7031
  %v7046 = vadd.f32 %v6962, %v7032
  %v7047 = vadd.f32 %v6963, %v7033
  %7048 = vset.pattern.permute.xlu0 3
  %7049 = vperm.xlu0 %7048, %v6768
  %v7050 = vpop.permute.xlu0 %7049
  %7052 = vset.pattern.permute.xlu0 3
  %7053 = vperm.xlu0 %7052, %v6769
  %v7054 = vpop.permute.xlu0 %7053
  %7056 = vset.pattern.permute.xlu0 3
  %7057 = vperm.xlu0 %7056, %v6770
  %v7058 = vpop.permute.xlu0 %7057
  %7060 = vset.pattern.permute.xlu0 3
  %7061 = vperm.xlu0 %7060, %v6771
  %v7062 = vpop.permute.xlu0 %7061
  %7064 = vset.pattern.permute.xlu0 3
  %7065 = vperm.xlu0 %7064, %v6772
  %v7066 = vpop.permute.xlu0 %7065
  %7068 = vset.pattern.permute.xlu0 3
  %7069 = vperm.xlu0 %7068, %v6773
  %v7070 = vpop.permute.xlu0 %7069
  %7072 = vset.pattern.permute.xlu0 3
  %7073 = vperm.xlu0 %7072, %v6774
  %v7074 = vpop.permute.xlu0 %7073
  %7076 = vset.pattern.permute.xlu0 3
  %7077 = vperm.xlu0 %7076, %v6775
  %v7078 = vpop.permute.xlu0 %7077
  %7080 = vset.pattern.permute.xlu0 3
  %7081 = vperm.xlu0 %7080, %v6776
  %v7082 = vpop.permute.xlu0 %7081
  %7084 = vset.pattern.permute.xlu0 3
  %7085 = vperm.xlu0 %7084, %v6777
  %v7086 = vpop.permute.xlu0 %7085
  %7088 = vset.pattern.permute.xlu0 3
  %7089 = vperm.xlu0 %7088, %v6778
  %v7090 = vpop.permute.xlu0 %7089
  %7092 = vset.pattern.permute.xlu0 3
  %7093 = vperm.xlu0 %7092, %v6779
  %v7094 = vpop.permute.xlu0 %7093
  %7096 = vset.pattern.permute.xlu0 3
  %7097 = vperm.xlu0 %7096, %v6780
  %v7098 = vpop.permute.xlu0 %7097
  %7100 = vset.pattern.permute.xlu0 3
  %7101 = vperm.xlu0 %7100, %v6781
  %v7102 = vpop.permute.xlu0 %7101
  %v7104 = vmul.f32 %v7050, %v3427
  %v7105 = vmul.f32 %v7054, %v3427
  %v7106 = vmul.f32 %v7058, %v3427
  %v7107 = vmul.f32 %v7062, %v3427
  %v7108 = vmul.f32 %v7066, %v3427
  %v7109 = vmul.f32 %v7070, %v3427
  %v7110 = vmul.f32 %v7074, %v3427
  %v7111 = vmul.f32 %v7078, %v3427
  %v7112 = vmul.f32 %v7082, %v3427
  %v7113 = vmul.f32 %v7086, %v3427
  %v7114 = vmul.f32 %v7090, %v3427
  %v7115 = vmul.f32 %v7094, %v3427
  %v7116 = vmul.f32 %v7098, %v3427
  %v7117 = vmul.f32 %v7102, %v3427
  %v7118 = vadd.f32 %v7034, %v7104
  %v7119 = vadd.f32 %v7035, %v7105
  %v7120 = vadd.f32 %v7036, %v7106
  %v7121 = vadd.f32 %v7037, %v7107
  %v7122 = vadd.f32 %v7038, %v7108
  %v7123 = vadd.f32 %v7039, %v7109
  %v7124 = vadd.f32 %v7040, %v7110
  %v7125 = vadd.f32 %v7041, %v7111
  %v7126 = vadd.f32 %v7042, %v7112
  %v7127 = vadd.f32 %v7043, %v7113
  %v7128 = vadd.f32 %v7044, %v7114
  %v7129 = vadd.f32 %v7045, %v7115
  %v7130 = vadd.f32 %v7046, %v7116
  %v7131 = vadd.f32 %v7047, %v7117
  %v7132 = vadd.f32 %v7118, %v3460
  %v7133 = vadd.f32 %v7119, %v3460
  %v7134 = vadd.f32 %v7120, %v3460
  %v7135 = vadd.f32 %v7121, %v3460
  %v7136 = vadd.f32 %v7122, %v3460
  %v7137 = vadd.f32 %v7123, %v3460
  %v7138 = vadd.f32 %v7124, %v3460
  %v7139 = vadd.f32 %v7125, %v3460
  %v7140 = vadd.f32 %v7126, %v3460
  %v7141 = vadd.f32 %v7127, %v3460
  %v7142 = vadd.f32 %v7128, %v3460
  %v7143 = vadd.f32 %v7129, %v3460
  %v7144 = vadd.f32 %v7130, %v3460
  %v7145 = vadd.f32 %v7131, %v3460
  %v7146 = vadd.s32 %v31, 14
  %v7147 = vadd.s32 %v32, 14
  %v7148 = vadd.s32 %v33, 14
  %v7149 = vadd.s32 %v34, 14
  %v7150 = vadd.s32 %v35, 14
  %v7151 = vadd.s32 %v36, 14
  %v7152 = vadd.s32 %v37, 14
  %v7153 = vadd.s32 %v38, 14
  %v7154 = vadd.s32 %v39, 14
  %v7155 = vadd.s32 %v40, 14
  %v7156 = vadd.s32 %v41, 14
  %v7157 = vadd.s32 %v42, 14
  %v7158 = vadd.s32 %v43, 14
  %v7159 = vadd.s32 %v44, 14
  %vm7160 = vcmp.gt.f32.partialorder %v7132, %v5310
  %vm7161 = vcmp.gt.f32.partialorder %v7133, %v5311
  %vm7162 = vcmp.gt.f32.partialorder %v7134, %v5312
  %vm7163 = vcmp.gt.f32.partialorder %v7135, %v5313
  %vm7164 = vcmp.gt.f32.partialorder %v7136, %v5314
  %vm7165 = vcmp.gt.f32.partialorder %v7137, %v5315
  %vm7166 = vcmp.gt.f32.partialorder %v7138, %v5316
  %vm7167 = vcmp.gt.f32.partialorder %v7139, %v5317
  %vm7168 = vcmp.gt.f32.partialorder %v7140, %v5318
  %vm7169 = vcmp.gt.f32.partialorder %v7141, %v5319
  %vm7170 = vcmp.gt.f32.partialorder %v7142, %v5320
  %vm7171 = vcmp.gt.f32.partialorder %v7143, %v5321
  %vm7172 = vcmp.gt.f32.partialorder %v7144, %v5322
  %vm7173 = vcmp.gt.f32.partialorder %v7145, %v5323
  %v7174 = vmax.f32 %v5310, %v7132
  %v7175 = vmax.f32 %v5311, %v7133
  %v7176 = vmax.f32 %v5312, %v7134
  %v7177 = vmax.f32 %v5313, %v7135
  %v7178 = vmax.f32 %v5314, %v7136
  %v7179 = vmax.f32 %v5315, %v7137
  %v7180 = vmax.f32 %v5316, %v7138
  %v7181 = vmax.f32 %v5317, %v7139
  %v7182 = vmax.f32 %v5318, %v7140
  %v7183 = vmax.f32 %v5319, %v7141
  %v7184 = vmax.f32 %v5320, %v7142
  %v7185 = vmax.f32 %v5321, %v7143
  %v7186 = vmax.f32 %v5322, %v7144
  %v7187 = vmax.f32 %v5323, %v7145
  %7188 = vset.pattern.permute.xlu0 0
  %7189 = vperm.xlu0 %7188, %v7146
  %v7190 = vpop.permute.xlu0 %7189
  %7191 = vset.pattern.permute.xlu0 0
  %7192 = vperm.xlu0 %7191, %v7147
  %v7193 = vpop.permute.xlu0 %7192
  %7194 = vset.pattern.permute.xlu0 0
  %7195 = vperm.xlu0 %7194, %v7148
  %v7196 = vpop.permute.xlu0 %7195
  %7197 = vset.pattern.permute.xlu0 0
  %7198 = vperm.xlu0 %7197, %v7149
  %v7199 = vpop.permute.xlu0 %7198
  %7200 = vset.pattern.permute.xlu0 0
  %7201 = vperm.xlu0 %7200, %v7150
  %v7202 = vpop.permute.xlu0 %7201
  %7203 = vset.pattern.permute.xlu0 0
  %7204 = vperm.xlu0 %7203, %v7151
  %v7205 = vpop.permute.xlu0 %7204
  %7206 = vset.pattern.permute.xlu0 0
  %7207 = vperm.xlu0 %7206, %v7152
  %v7208 = vpop.permute.xlu0 %7207
  %7209 = vset.pattern.permute.xlu0 0
  %7210 = vperm.xlu0 %7209, %v7153
  %v7211 = vpop.permute.xlu0 %7210
  %7212 = vset.pattern.permute.xlu0 0
  %7213 = vperm.xlu0 %7212, %v7154
  %v7214 = vpop.permute.xlu0 %7213
  %7215 = vset.pattern.permute.xlu0 0
  %7216 = vperm.xlu0 %7215, %v7155
  %v7217 = vpop.permute.xlu0 %7216
  %7218 = vset.pattern.permute.xlu0 0
  %7219 = vperm.xlu0 %7218, %v7156
  %v7220 = vpop.permute.xlu0 %7219
  %7221 = vset.pattern.permute.xlu0 0
  %7222 = vperm.xlu0 %7221, %v7157
  %v7223 = vpop.permute.xlu0 %7222
  %7224 = vset.pattern.permute.xlu0 0
  %7225 = vperm.xlu0 %7224, %v7158
  %v7226 = vpop.permute.xlu0 %7225
  %7227 = vset.pattern.permute.xlu0 0
  %7228 = vperm.xlu0 %7227, %v7159
  %v7229 = vpop.permute.xlu0 %7228
  %v7230 = vsel %vm7160, %v7190, %v5366
  %v7231 = vsel %vm7161, %v7193, %v5367
  %v7232 = vsel %vm7162, %v7196, %v5368
  %v7233 = vsel %vm7163, %v7199, %v5369
  %v7234 = vsel %vm7164, %v7202, %v5370
  %v7235 = vsel %vm7165, %v7205, %v5371
  %v7236 = vsel %vm7166, %v7208, %v5372
  %v7237 = vsel %vm7167, %v7211, %v5373
  %v7238 = vsel %vm7168, %v7214, %v5374
  %v7239 = vsel %vm7169, %v7217, %v5375
  %v7240 = vsel %vm7170, %v7220, %v5376
  %v7241 = vsel %vm7171, %v7223, %v5377
  %v7242 = vsel %vm7172, %v7226, %v5378
  %v7243 = vsel %vm7173, %v7229, %v5379
  %v7244 = vmul.f32 %v1571, %v132
  %v7245 = vmul.f32 %v1576, %v132
  %v7246 = vmul.f32 %v1581, %v132
  %v7247 = vmul.f32 %v1586, %v132
  %v7248 = vmul.f32 %v1591, %v132
  %v7249 = vmul.f32 %v1596, %v132
  %v7250 = vmul.f32 %v1601, %v132
  %v7251 = vmul.f32 %v1606, %v132
  %v7252 = vmul.f32 %v1611, %v132
  %v7253 = vmul.f32 %v1616, %v132
  %v7254 = vmul.f32 %v1621, %v132
  %v7255 = vmul.f32 %v1626, %v132
  %v7256 = vmul.f32 %v1631, %v132
  %v7257 = vmul.f32 %v1636, %v132
  %v7258 = vmul.f32 %v1672, %v206
  %v7259 = vmul.f32 %v1676, %v206
  %v7260 = vmul.f32 %v1680, %v206
  %v7261 = vmul.f32 %v1684, %v206
  %v7262 = vmul.f32 %v1688, %v206
  %v7263 = vmul.f32 %v1692, %v206
  %v7264 = vmul.f32 %v1696, %v206
  %v7265 = vmul.f32 %v1700, %v206
  %v7266 = vmul.f32 %v1704, %v206
  %v7267 = vmul.f32 %v1708, %v206
  %v7268 = vmul.f32 %v1712, %v206
  %v7269 = vmul.f32 %v1716, %v206
  %v7270 = vmul.f32 %v1720, %v206
  %v7271 = vmul.f32 %v1724, %v206
  %v7272 = vadd.f32 %v7244, %v7258
  %v7273 = vadd.f32 %v7245, %v7259
  %v7274 = vadd.f32 %v7246, %v7260
  %v7275 = vadd.f32 %v7247, %v7261
  %v7276 = vadd.f32 %v7248, %v7262
  %v7277 = vadd.f32 %v7249, %v7263
  %v7278 = vadd.f32 %v7250, %v7264
  %v7279 = vadd.f32 %v7251, %v7265
  %v7280 = vadd.f32 %v7252, %v7266
  %v7281 = vadd.f32 %v7253, %v7267
  %v7282 = vadd.f32 %v7254, %v7268
  %v7283 = vadd.f32 %v7255, %v7269
  %v7284 = vadd.f32 %v7256, %v7270
  %v7285 = vadd.f32 %v7257, %v7271
  %v7286 = vmul.f32 %v1760, %v294
  %v7287 = vmul.f32 %v1764, %v294
  %v7288 = vmul.f32 %v1768, %v294
  %v7289 = vmul.f32 %v1772, %v294
  %v7290 = vmul.f32 %v1776, %v294
  %v7291 = vmul.f32 %v1780, %v294
  %v7292 = vmul.f32 %v1784, %v294
  %v7293 = vmul.f32 %v1788, %v294
  %v7294 = vmul.f32 %v1792, %v294
  %v7295 = vmul.f32 %v1796, %v294
  %v7296 = vmul.f32 %v1800, %v294
  %v7297 = vmul.f32 %v1804, %v294
  %v7298 = vmul.f32 %v1808, %v294
  %v7299 = vmul.f32 %v1812, %v294
  %v7300 = vadd.f32 %v7272, %v7286
  %v7301 = vadd.f32 %v7273, %v7287
  %v7302 = vadd.f32 %v7274, %v7288
  %v7303 = vadd.f32 %v7275, %v7289
  %v7304 = vadd.f32 %v7276, %v7290
  %v7305 = vadd.f32 %v7277, %v7291
  %v7306 = vadd.f32 %v7278, %v7292
  %v7307 = vadd.f32 %v7279, %v7293
  %v7308 = vadd.f32 %v7280, %v7294
  %v7309 = vadd.f32 %v7281, %v7295
  %v7310 = vadd.f32 %v7282, %v7296
  %v7311 = vadd.f32 %v7283, %v7297
  %v7312 = vadd.f32 %v7284, %v7298
  %v7313 = vadd.f32 %v7285, %v7299
  %v7314 = vmul.f32 %v1848, %v382
  %v7315 = vmul.f32 %v1852, %v382
  %v7316 = vmul.f32 %v1856, %v382
  %v7317 = vmul.f32 %v1860, %v382
  %v7318 = vmul.f32 %v1864, %v382
  %v7319 = vmul.f32 %v1868, %v382
  %v7320 = vmul.f32 %v1872, %v382
  %v7321 = vmul.f32 %v1876, %v382
  %v7322 = vmul.f32 %v1880, %v382
  %v7323 = vmul.f32 %v1884, %v382
  %v7324 = vmul.f32 %v1888, %v382
  %v7325 = vmul.f32 %v1892, %v382
  %v7326 = vmul.f32 %v1896, %v382
  %v7327 = vmul.f32 %v1900, %v382
  %v7328 = vadd.f32 %v7300, %v7314
  %v7329 = vadd.f32 %v7301, %v7315
  %v7330 = vadd.f32 %v7302, %v7316
  %v7331 = vadd.f32 %v7303, %v7317
  %v7332 = vadd.f32 %v7304, %v7318
  %v7333 = vadd.f32 %v7305, %v7319
  %v7334 = vadd.f32 %v7306, %v7320
  %v7335 = vadd.f32 %v7307, %v7321
  %v7336 = vadd.f32 %v7308, %v7322
  %v7337 = vadd.f32 %v7309, %v7323
  %v7338 = vadd.f32 %v7310, %v7324
  %v7339 = vadd.f32 %v7311, %v7325
  %v7340 = vadd.f32 %v7312, %v7326
  %v7341 = vadd.f32 %v7313, %v7327
  %v7342 = vmul.f32 %v1951, %v499
  %v7343 = vmul.f32 %v1956, %v499
  %v7344 = vmul.f32 %v1961, %v499
  %v7345 = vmul.f32 %v1966, %v499
  %v7346 = vmul.f32 %v1971, %v499
  %v7347 = vmul.f32 %v1976, %v499
  %v7348 = vmul.f32 %v1981, %v499
  %v7349 = vmul.f32 %v1986, %v499
  %v7350 = vmul.f32 %v1991, %v499
  %v7351 = vmul.f32 %v1996, %v499
  %v7352 = vmul.f32 %v2001, %v499
  %v7353 = vmul.f32 %v2006, %v499
  %v7354 = vmul.f32 %v2011, %v499
  %v7355 = vmul.f32 %v2016, %v499
  %v7356 = vadd.f32 %v7328, %v7342
  %v7357 = vadd.f32 %v7329, %v7343
  %v7358 = vadd.f32 %v7330, %v7344
  %v7359 = vadd.f32 %v7331, %v7345
  %v7360 = vadd.f32 %v7332, %v7346
  %v7361 = vadd.f32 %v7333, %v7347
  %v7362 = vadd.f32 %v7334, %v7348
  %v7363 = vadd.f32 %v7335, %v7349
  %v7364 = vadd.f32 %v7336, %v7350
  %v7365 = vadd.f32 %v7337, %v7351
  %v7366 = vadd.f32 %v7338, %v7352
  %v7367 = vadd.f32 %v7339, %v7353
  %v7368 = vadd.f32 %v7340, %v7354
  %v7369 = vadd.f32 %v7341, %v7355
  %v7370 = vmul.f32 %v2052, %v587
  %v7371 = vmul.f32 %v2056, %v587
  %v7372 = vmul.f32 %v2060, %v587
  %v7373 = vmul.f32 %v2064, %v587
  %v7374 = vmul.f32 %v2068, %v587
  %v7375 = vmul.f32 %v2072, %v587
  %v7376 = vmul.f32 %v2076, %v587
  %v7377 = vmul.f32 %v2080, %v587
  %v7378 = vmul.f32 %v2084, %v587
  %v7379 = vmul.f32 %v2088, %v587
  %v7380 = vmul.f32 %v2092, %v587
  %v7381 = vmul.f32 %v2096, %v587
  %v7382 = vmul.f32 %v2100, %v587
  %v7383 = vmul.f32 %v2104, %v587
  %v7384 = vadd.f32 %v7356, %v7370
  %v7385 = vadd.f32 %v7357, %v7371
  %v7386 = vadd.f32 %v7358, %v7372
  %v7387 = vadd.f32 %v7359, %v7373
  %v7388 = vadd.f32 %v7360, %v7374
  %v7389 = vadd.f32 %v7361, %v7375
  %v7390 = vadd.f32 %v7362, %v7376
  %v7391 = vadd.f32 %v7363, %v7377
  %v7392 = vadd.f32 %v7364, %v7378
  %v7393 = vadd.f32 %v7365, %v7379
  %v7394 = vadd.f32 %v7366, %v7380
  %v7395 = vadd.f32 %v7367, %v7381
  %v7396 = vadd.f32 %v7368, %v7382
  %v7397 = vadd.f32 %v7369, %v7383
  %v7398 = vmul.f32 %v2140, %v675
  %v7399 = vmul.f32 %v2144, %v675
  %v7400 = vmul.f32 %v2148, %v675
  %v7401 = vmul.f32 %v2152, %v675
  %v7402 = vmul.f32 %v2156, %v675
  %v7403 = vmul.f32 %v2160, %v675
  %v7404 = vmul.f32 %v2164, %v675
  %v7405 = vmul.f32 %v2168, %v675
  %v7406 = vmul.f32 %v2172, %v675
  %v7407 = vmul.f32 %v2176, %v675
  %v7408 = vmul.f32 %v2180, %v675
  %v7409 = vmul.f32 %v2184, %v675
  %v7410 = vmul.f32 %v2188, %v675
  %v7411 = vmul.f32 %v2192, %v675
  %v7412 = vadd.f32 %v7384, %v7398
  %v7413 = vadd.f32 %v7385, %v7399
  %v7414 = vadd.f32 %v7386, %v7400
  %v7415 = vadd.f32 %v7387, %v7401
  %v7416 = vadd.f32 %v7388, %v7402
  %v7417 = vadd.f32 %v7389, %v7403
  %v7418 = vadd.f32 %v7390, %v7404
  %v7419 = vadd.f32 %v7391, %v7405
  %v7420 = vadd.f32 %v7392, %v7406
  %v7421 = vadd.f32 %v7393, %v7407
  %v7422 = vadd.f32 %v7394, %v7408
  %v7423 = vadd.f32 %v7395, %v7409
  %v7424 = vadd.f32 %v7396, %v7410
  %v7425 = vadd.f32 %v7397, %v7411
  %v7426 = vmul.f32 %v2228, %v763
  %v7427 = vmul.f32 %v2232, %v763
  %v7428 = vmul.f32 %v2236, %v763
  %v7429 = vmul.f32 %v2240, %v763
  %v7430 = vmul.f32 %v2244, %v763
  %v7431 = vmul.f32 %v2248, %v763
  %v7432 = vmul.f32 %v2252, %v763
  %v7433 = vmul.f32 %v2256, %v763
  %v7434 = vmul.f32 %v2260, %v763
  %v7435 = vmul.f32 %v2264, %v763
  %v7436 = vmul.f32 %v2268, %v763
  %v7437 = vmul.f32 %v2272, %v763
  %v7438 = vmul.f32 %v2276, %v763
  %v7439 = vmul.f32 %v2280, %v763
  %v7440 = vadd.f32 %v7412, %v7426
  %v7441 = vadd.f32 %v7413, %v7427
  %v7442 = vadd.f32 %v7414, %v7428
  %v7443 = vadd.f32 %v7415, %v7429
  %v7444 = vadd.f32 %v7416, %v7430
  %v7445 = vadd.f32 %v7417, %v7431
  %v7446 = vadd.f32 %v7418, %v7432
  %v7447 = vadd.f32 %v7419, %v7433
  %v7448 = vadd.f32 %v7420, %v7434
  %v7449 = vadd.f32 %v7421, %v7435
  %v7450 = vadd.f32 %v7422, %v7436
  %v7451 = vadd.f32 %v7423, %v7437
  %v7452 = vadd.f32 %v7424, %v7438
  %v7453 = vadd.f32 %v7425, %v7439
  %v7454 = vmul.f32 %v4333, %v879
  %v7455 = vmul.f32 %v4338, %v879
  %v7456 = vmul.f32 %v4343, %v879
  %v7457 = vmul.f32 %v4348, %v879
  %v7458 = vmul.f32 %v4353, %v879
  %v7459 = vmul.f32 %v4358, %v879
  %v7460 = vmul.f32 %v4363, %v879
  %v7461 = vmul.f32 %v4368, %v879
  %v7462 = vmul.f32 %v4373, %v879
  %v7463 = vmul.f32 %v4378, %v879
  %v7464 = vmul.f32 %v4383, %v879
  %v7465 = vmul.f32 %v4388, %v879
  %v7466 = vmul.f32 %v4393, %v879
  %v7467 = vmul.f32 %v4398, %v879
  %v7468 = vadd.f32 %v7440, %v7454
  %v7469 = vadd.f32 %v7441, %v7455
  %v7470 = vadd.f32 %v7442, %v7456
  %v7471 = vadd.f32 %v7443, %v7457
  %v7472 = vadd.f32 %v7444, %v7458
  %v7473 = vadd.f32 %v7445, %v7459
  %v7474 = vadd.f32 %v7446, %v7460
  %v7475 = vadd.f32 %v7447, %v7461
  %v7476 = vadd.f32 %v7448, %v7462
  %v7477 = vadd.f32 %v7449, %v7463
  %v7478 = vadd.f32 %v7450, %v7464
  %v7479 = vadd.f32 %v7451, %v7465
  %v7480 = vadd.f32 %v7452, %v7466
  %v7481 = vadd.f32 %v7453, %v7467
  %v7482 = vmul.f32 %v4430, %v967
  %v7483 = vmul.f32 %v4434, %v967
  %v7484 = vmul.f32 %v4438, %v967
  %v7485 = vmul.f32 %v4442, %v967
  %v7486 = vmul.f32 %v4446, %v967
  %v7487 = vmul.f32 %v4450, %v967
  %v7488 = vmul.f32 %v4454, %v967
  %v7489 = vmul.f32 %v4458, %v967
  %v7490 = vmul.f32 %v4462, %v967
  %v7491 = vmul.f32 %v4466, %v967
  %v7492 = vmul.f32 %v4470, %v967
  %v7493 = vmul.f32 %v4474, %v967
  %v7494 = vmul.f32 %v4478, %v967
  %v7495 = vmul.f32 %v4482, %v967
  %v7496 = vadd.f32 %v7468, %v7482
  %v7497 = vadd.f32 %v7469, %v7483
  %v7498 = vadd.f32 %v7470, %v7484
  %v7499 = vadd.f32 %v7471, %v7485
  %v7500 = vadd.f32 %v7472, %v7486
  %v7501 = vadd.f32 %v7473, %v7487
  %v7502 = vadd.f32 %v7474, %v7488
  %v7503 = vadd.f32 %v7475, %v7489
  %v7504 = vadd.f32 %v7476, %v7490
  %v7505 = vadd.f32 %v7477, %v7491
  %v7506 = vadd.f32 %v7478, %v7492
  %v7507 = vadd.f32 %v7479, %v7493
  %v7508 = vadd.f32 %v7480, %v7494
  %v7509 = vadd.f32 %v7481, %v7495
  %v7510 = vmul.f32 %v4514, %v1055
  %v7511 = vmul.f32 %v4518, %v1055
  %v7512 = vmul.f32 %v4522, %v1055
  %v7513 = vmul.f32 %v4526, %v1055
  %v7514 = vmul.f32 %v4530, %v1055
  %v7515 = vmul.f32 %v4534, %v1055
  %v7516 = vmul.f32 %v4538, %v1055
  %v7517 = vmul.f32 %v4542, %v1055
  %v7518 = vmul.f32 %v4546, %v1055
  %v7519 = vmul.f32 %v4550, %v1055
  %v7520 = vmul.f32 %v4554, %v1055
  %v7521 = vmul.f32 %v4558, %v1055
  %v7522 = vmul.f32 %v4562, %v1055
  %v7523 = vmul.f32 %v4566, %v1055
  %v7524 = vadd.f32 %v7496, %v7510
  %v7525 = vadd.f32 %v7497, %v7511
  %v7526 = vadd.f32 %v7498, %v7512
  %v7527 = vadd.f32 %v7499, %v7513
  %v7528 = vadd.f32 %v7500, %v7514
  %v7529 = vadd.f32 %v7501, %v7515
  %v7530 = vadd.f32 %v7502, %v7516
  %v7531 = vadd.f32 %v7503, %v7517
  %v7532 = vadd.f32 %v7504, %v7518
  %v7533 = vadd.f32 %v7505, %v7519
  %v7534 = vadd.f32 %v7506, %v7520
  %v7535 = vadd.f32 %v7507, %v7521
  %v7536 = vadd.f32 %v7508, %v7522
  %v7537 = vadd.f32 %v7509, %v7523
  %v7538 = vmul.f32 %v4598, %v1143
  %v7539 = vmul.f32 %v4602, %v1143
  %v7540 = vmul.f32 %v4606, %v1143
  %v7541 = vmul.f32 %v4610, %v1143
  %v7542 = vmul.f32 %v4614, %v1143
  %v7543 = vmul.f32 %v4618, %v1143
  %v7544 = vmul.f32 %v4622, %v1143
  %v7545 = vmul.f32 %v4626, %v1143
  %v7546 = vmul.f32 %v4630, %v1143
  %v7547 = vmul.f32 %v4634, %v1143
  %v7548 = vmul.f32 %v4638, %v1143
  %v7549 = vmul.f32 %v4642, %v1143
  %v7550 = vmul.f32 %v4646, %v1143
  %v7551 = vmul.f32 %v4650, %v1143
  %v7552 = vadd.f32 %v7524, %v7538
  %v7553 = vadd.f32 %v7525, %v7539
  %v7554 = vadd.f32 %v7526, %v7540
  %v7555 = vadd.f32 %v7527, %v7541
  %v7556 = vadd.f32 %v7528, %v7542
  %v7557 = vadd.f32 %v7529, %v7543
  %v7558 = vadd.f32 %v7530, %v7544
  %v7559 = vadd.f32 %v7531, %v7545
  %v7560 = vadd.f32 %v7532, %v7546
  %v7561 = vadd.f32 %v7533, %v7547
  %v7562 = vadd.f32 %v7534, %v7548
  %v7563 = vadd.f32 %v7535, %v7549
  %v7564 = vadd.f32 %v7536, %v7550
  %v7565 = vadd.f32 %v7537, %v7551
  %v7566 = vmul.f32 %v2713, %v1260
  %v7567 = vmul.f32 %v2718, %v1260
  %v7568 = vmul.f32 %v2723, %v1260
  %v7569 = vmul.f32 %v2728, %v1260
  %v7570 = vmul.f32 %v2733, %v1260
  %v7571 = vmul.f32 %v2738, %v1260
  %v7572 = vmul.f32 %v2743, %v1260
  %v7573 = vmul.f32 %v2748, %v1260
  %v7574 = vmul.f32 %v2753, %v1260
  %v7575 = vmul.f32 %v2758, %v1260
  %v7576 = vmul.f32 %v2763, %v1260
  %v7577 = vmul.f32 %v2768, %v1260
  %v7578 = vmul.f32 %v2773, %v1260
  %v7579 = vmul.f32 %v2778, %v1260
  %v7580 = vadd.f32 %v7552, %v7566
  %v7581 = vadd.f32 %v7553, %v7567
  %v7582 = vadd.f32 %v7554, %v7568
  %v7583 = vadd.f32 %v7555, %v7569
  %v7584 = vadd.f32 %v7556, %v7570
  %v7585 = vadd.f32 %v7557, %v7571
  %v7586 = vadd.f32 %v7558, %v7572
  %v7587 = vadd.f32 %v7559, %v7573
  %v7588 = vadd.f32 %v7560, %v7574
  %v7589 = vadd.f32 %v7561, %v7575
  %v7590 = vadd.f32 %v7562, %v7576
  %v7591 = vadd.f32 %v7563, %v7577
  %v7592 = vadd.f32 %v7564, %v7578
  %v7593 = vadd.f32 %v7565, %v7579
  %v7594 = vmul.f32 %v2814, %v1348
  %v7595 = vmul.f32 %v2818, %v1348
  %v7596 = vmul.f32 %v2822, %v1348
  %v7597 = vmul.f32 %v2826, %v1348
  %v7598 = vmul.f32 %v2830, %v1348
  %v7599 = vmul.f32 %v2834, %v1348
  %v7600 = vmul.f32 %v2838, %v1348
  %v7601 = vmul.f32 %v2842, %v1348
  %v7602 = vmul.f32 %v2846, %v1348
  %v7603 = vmul.f32 %v2850, %v1348
  %v7604 = vmul.f32 %v2854, %v1348
  %v7605 = vmul.f32 %v2858, %v1348
  %v7606 = vmul.f32 %v2862, %v1348
  %v7607 = vmul.f32 %v2866, %v1348
  %v7608 = vadd.f32 %v7580, %v7594
  %v7609 = vadd.f32 %v7581, %v7595
  %v7610 = vadd.f32 %v7582, %v7596
  %v7611 = vadd.f32 %v7583, %v7597
  %v7612 = vadd.f32 %v7584, %v7598
  %v7613 = vadd.f32 %v7585, %v7599
  %v7614 = vadd.f32 %v7586, %v7600
  %v7615 = vadd.f32 %v7587, %v7601
  %v7616 = vadd.f32 %v7588, %v7602
  %v7617 = vadd.f32 %v7589, %v7603
  %v7618 = vadd.f32 %v7590, %v7604
  %v7619 = vadd.f32 %v7591, %v7605
  %v7620 = vadd.f32 %v7592, %v7606
  %v7621 = vadd.f32 %v7593, %v7607
  %v7622 = vmul.f32 %v2902, %v1436
  %v7623 = vmul.f32 %v2906, %v1436
  %v7624 = vmul.f32 %v2910, %v1436
  %v7625 = vmul.f32 %v2914, %v1436
  %v7626 = vmul.f32 %v2918, %v1436
  %v7627 = vmul.f32 %v2922, %v1436
  %v7628 = vmul.f32 %v2926, %v1436
  %v7629 = vmul.f32 %v2930, %v1436
  %v7630 = vmul.f32 %v2934, %v1436
  %v7631 = vmul.f32 %v2938, %v1436
  %v7632 = vmul.f32 %v2942, %v1436
  %v7633 = vmul.f32 %v2946, %v1436
  %v7634 = vmul.f32 %v2950, %v1436
  %v7635 = vmul.f32 %v2954, %v1436
  %v7636 = vadd.f32 %v7608, %v7622
  %v7637 = vadd.f32 %v7609, %v7623
  %v7638 = vadd.f32 %v7610, %v7624
  %v7639 = vadd.f32 %v7611, %v7625
  %v7640 = vadd.f32 %v7612, %v7626
  %v7641 = vadd.f32 %v7613, %v7627
  %v7642 = vadd.f32 %v7614, %v7628
  %v7643 = vadd.f32 %v7615, %v7629
  %v7644 = vadd.f32 %v7616, %v7630
  %v7645 = vadd.f32 %v7617, %v7631
  %v7646 = vadd.f32 %v7618, %v7632
  %v7647 = vadd.f32 %v7619, %v7633
  %v7648 = vadd.f32 %v7620, %v7634
  %v7649 = vadd.f32 %v7621, %v7635
  %v7650 = vmul.f32 %v2990, %v1524
  %v7651 = vmul.f32 %v2994, %v1524
  %v7652 = vmul.f32 %v2998, %v1524
  %v7653 = vmul.f32 %v3002, %v1524
  %v7654 = vmul.f32 %v3006, %v1524
  %v7655 = vmul.f32 %v3010, %v1524
  %v7656 = vmul.f32 %v3014, %v1524
  %v7657 = vmul.f32 %v3018, %v1524
  %v7658 = vmul.f32 %v3022, %v1524
  %v7659 = vmul.f32 %v3026, %v1524
  %v7660 = vmul.f32 %v3030, %v1524
  %v7661 = vmul.f32 %v3034, %v1524
  %v7662 = vmul.f32 %v3038, %v1524
  %v7663 = vmul.f32 %v3042, %v1524
  %v7664 = vadd.f32 %v7636, %v7650
  %v7665 = vadd.f32 %v7637, %v7651
  %v7666 = vadd.f32 %v7638, %v7652
  %v7667 = vadd.f32 %v7639, %v7653
  %v7668 = vadd.f32 %v7640, %v7654
  %v7669 = vadd.f32 %v7641, %v7655
  %v7670 = vadd.f32 %v7642, %v7656
  %v7671 = vadd.f32 %v7643, %v7657
  %v7672 = vadd.f32 %v7644, %v7658
  %v7673 = vadd.f32 %v7645, %v7659
  %v7674 = vadd.f32 %v7646, %v7660
  %v7675 = vadd.f32 %v7647, %v7661
  %v7676 = vadd.f32 %v7648, %v7662
  %v7677 = vadd.f32 %v7649, %v7663
  %v7678 = vmul.f32 %v3093, %v1641
  %v7679 = vmul.f32 %v3098, %v1641
  %v7680 = vmul.f32 %v3103, %v1641
  %v7681 = vmul.f32 %v3108, %v1641
  %v7682 = vmul.f32 %v3113, %v1641
  %v7683 = vmul.f32 %v3118, %v1641
  %v7684 = vmul.f32 %v3123, %v1641
  %v7685 = vmul.f32 %v3128, %v1641
  %v7686 = vmul.f32 %v3133, %v1641
  %v7687 = vmul.f32 %v3138, %v1641
  %v7688 = vmul.f32 %v3143, %v1641
  %v7689 = vmul.f32 %v3148, %v1641
  %v7690 = vmul.f32 %v3153, %v1641
  %v7691 = vmul.f32 %v3158, %v1641
  %v7692 = vadd.f32 %v7664, %v7678
  %v7693 = vadd.f32 %v7665, %v7679
  %v7694 = vadd.f32 %v7666, %v7680
  %v7695 = vadd.f32 %v7667, %v7681
  %v7696 = vadd.f32 %v7668, %v7682
  %v7697 = vadd.f32 %v7669, %v7683
  %v7698 = vadd.f32 %v7670, %v7684
  %v7699 = vadd.f32 %v7671, %v7685
  %v7700 = vadd.f32 %v7672, %v7686
  %v7701 = vadd.f32 %v7673, %v7687
  %v7702 = vadd.f32 %v7674, %v7688
  %v7703 = vadd.f32 %v7675, %v7689
  %v7704 = vadd.f32 %v7676, %v7690
  %v7705 = vadd.f32 %v7677, %v7691
  %v7706 = vmul.f32 %v3194, %v1729
  %v7707 = vmul.f32 %v3198, %v1729
  %v7708 = vmul.f32 %v3202, %v1729
  %v7709 = vmul.f32 %v3206, %v1729
  %v7710 = vmul.f32 %v3210, %v1729
  %v7711 = vmul.f32 %v3214, %v1729
  %v7712 = vmul.f32 %v3218, %v1729
  %v7713 = vmul.f32 %v3222, %v1729
  %v7714 = vmul.f32 %v3226, %v1729
  %v7715 = vmul.f32 %v3230, %v1729
  %v7716 = vmul.f32 %v3234, %v1729
  %v7717 = vmul.f32 %v3238, %v1729
  %v7718 = vmul.f32 %v3242, %v1729
  %v7719 = vmul.f32 %v3246, %v1729
  %v7720 = vadd.f32 %v7692, %v7706
  %v7721 = vadd.f32 %v7693, %v7707
  %v7722 = vadd.f32 %v7694, %v7708
  %v7723 = vadd.f32 %v7695, %v7709
  %v7724 = vadd.f32 %v7696, %v7710
  %v7725 = vadd.f32 %v7697, %v7711
  %v7726 = vadd.f32 %v7698, %v7712
  %v7727 = vadd.f32 %v7699, %v7713
  %v7728 = vadd.f32 %v7700, %v7714
  %v7729 = vadd.f32 %v7701, %v7715
  %v7730 = vadd.f32 %v7702, %v7716
  %v7731 = vadd.f32 %v7703, %v7717
  %v7732 = vadd.f32 %v7704, %v7718
  %v7733 = vadd.f32 %v7705, %v7719
  %v7734 = vmul.f32 %v3282, %v1817
  %v7735 = vmul.f32 %v3286, %v1817
  %v7736 = vmul.f32 %v3290, %v1817
  %v7737 = vmul.f32 %v3294, %v1817
  %v7738 = vmul.f32 %v3298, %v1817
  %v7739 = vmul.f32 %v3302, %v1817
  %v7740 = vmul.f32 %v3306, %v1817
  %v7741 = vmul.f32 %v3310, %v1817
  %v7742 = vmul.f32 %v3314, %v1817
  %v7743 = vmul.f32 %v3318, %v1817
  %v7744 = vmul.f32 %v3322, %v1817
  %v7745 = vmul.f32 %v3326, %v1817
  %v7746 = vmul.f32 %v3330, %v1817
  %v7747 = vmul.f32 %v3334, %v1817
  %v7748 = vadd.f32 %v7720, %v7734
  %v7749 = vadd.f32 %v7721, %v7735
  %v7750 = vadd.f32 %v7722, %v7736
  %v7751 = vadd.f32 %v7723, %v7737
  %v7752 = vadd.f32 %v7724, %v7738
  %v7753 = vadd.f32 %v7725, %v7739
  %v7754 = vadd.f32 %v7726, %v7740
  %v7755 = vadd.f32 %v7727, %v7741
  %v7756 = vadd.f32 %v7728, %v7742
  %v7757 = vadd.f32 %v7729, %v7743
  %v7758 = vadd.f32 %v7730, %v7744
  %v7759 = vadd.f32 %v7731, %v7745
  %v7760 = vadd.f32 %v7732, %v7746
  %v7761 = vadd.f32 %v7733, %v7747
  %v7762 = vmul.f32 %v3370, %v1905
  %v7763 = vmul.f32 %v3374, %v1905
  %v7764 = vmul.f32 %v3378, %v1905
  %v7765 = vmul.f32 %v3382, %v1905
  %v7766 = vmul.f32 %v3386, %v1905
  %v7767 = vmul.f32 %v3390, %v1905
  %v7768 = vmul.f32 %v3394, %v1905
  %v7769 = vmul.f32 %v3398, %v1905
  %v7770 = vmul.f32 %v3402, %v1905
  %v7771 = vmul.f32 %v3406, %v1905
  %v7772 = vmul.f32 %v3410, %v1905
  %v7773 = vmul.f32 %v3414, %v1905
  %v7774 = vmul.f32 %v3418, %v1905
  %v7775 = vmul.f32 %v3422, %v1905
  %v7776 = vadd.f32 %v7748, %v7762
  %v7777 = vadd.f32 %v7749, %v7763
  %v7778 = vadd.f32 %v7750, %v7764
  %v7779 = vadd.f32 %v7751, %v7765
  %v7780 = vadd.f32 %v7752, %v7766
  %v7781 = vadd.f32 %v7753, %v7767
  %v7782 = vadd.f32 %v7754, %v7768
  %v7783 = vadd.f32 %v7755, %v7769
  %v7784 = vadd.f32 %v7756, %v7770
  %v7785 = vadd.f32 %v7757, %v7771
  %v7786 = vadd.f32 %v7758, %v7772
  %v7787 = vadd.f32 %v7759, %v7773
  %v7788 = vadd.f32 %v7760, %v7774
  %v7789 = vadd.f32 %v7761, %v7775
  %v7790 = vmul.f32 %v4921, %v2021
  %v7791 = vmul.f32 %v4926, %v2021
  %v7792 = vmul.f32 %v4931, %v2021
  %v7793 = vmul.f32 %v4936, %v2021
  %v7794 = vmul.f32 %v4941, %v2021
  %v7795 = vmul.f32 %v4946, %v2021
  %v7796 = vmul.f32 %v4951, %v2021
  %v7797 = vmul.f32 %v4956, %v2021
  %v7798 = vmul.f32 %v4961, %v2021
  %v7799 = vmul.f32 %v4966, %v2021
  %v7800 = vmul.f32 %v4971, %v2021
  %v7801 = vmul.f32 %v4976, %v2021
  %v7802 = vmul.f32 %v4981, %v2021
  %v7803 = vmul.f32 %v4986, %v2021
  %v7804 = vadd.f32 %v7776, %v7790
  %v7805 = vadd.f32 %v7777, %v7791
  %v7806 = vadd.f32 %v7778, %v7792
  %v7807 = vadd.f32 %v7779, %v7793
  %v7808 = vadd.f32 %v7780, %v7794
  %v7809 = vadd.f32 %v7781, %v7795
  %v7810 = vadd.f32 %v7782, %v7796
  %v7811 = vadd.f32 %v7783, %v7797
  %v7812 = vadd.f32 %v7784, %v7798
  %v7813 = vadd.f32 %v7785, %v7799
  %v7814 = vadd.f32 %v7786, %v7800
  %v7815 = vadd.f32 %v7787, %v7801
  %v7816 = vadd.f32 %v7788, %v7802
  %v7817 = vadd.f32 %v7789, %v7803
  %v7818 = vmul.f32 %v5018, %v2109
  %v7819 = vmul.f32 %v5022, %v2109
  %v7820 = vmul.f32 %v5026, %v2109
  %v7821 = vmul.f32 %v5030, %v2109
  %v7822 = vmul.f32 %v5034, %v2109
  %v7823 = vmul.f32 %v5038, %v2109
  %v7824 = vmul.f32 %v5042, %v2109
  %v7825 = vmul.f32 %v5046, %v2109
  %v7826 = vmul.f32 %v5050, %v2109
  %v7827 = vmul.f32 %v5054, %v2109
  %v7828 = vmul.f32 %v5058, %v2109
  %v7829 = vmul.f32 %v5062, %v2109
  %v7830 = vmul.f32 %v5066, %v2109
  %v7831 = vmul.f32 %v5070, %v2109
  %v7832 = vadd.f32 %v7804, %v7818
  %v7833 = vadd.f32 %v7805, %v7819
  %v7834 = vadd.f32 %v7806, %v7820
  %v7835 = vadd.f32 %v7807, %v7821
  %v7836 = vadd.f32 %v7808, %v7822
  %v7837 = vadd.f32 %v7809, %v7823
  %v7838 = vadd.f32 %v7810, %v7824
  %v7839 = vadd.f32 %v7811, %v7825
  %v7840 = vadd.f32 %v7812, %v7826
  %v7841 = vadd.f32 %v7813, %v7827
  %v7842 = vadd.f32 %v7814, %v7828
  %v7843 = vadd.f32 %v7815, %v7829
  %v7844 = vadd.f32 %v7816, %v7830
  %v7845 = vadd.f32 %v7817, %v7831
  %v7846 = vmul.f32 %v5102, %v2197
  %v7847 = vmul.f32 %v5106, %v2197
  %v7848 = vmul.f32 %v5110, %v2197
  %v7849 = vmul.f32 %v5114, %v2197
  %v7850 = vmul.f32 %v5118, %v2197
  %v7851 = vmul.f32 %v5122, %v2197
  %v7852 = vmul.f32 %v5126, %v2197
  %v7853 = vmul.f32 %v5130, %v2197
  %v7854 = vmul.f32 %v5134, %v2197
  %v7855 = vmul.f32 %v5138, %v2197
  %v7856 = vmul.f32 %v5142, %v2197
  %v7857 = vmul.f32 %v5146, %v2197
  %v7858 = vmul.f32 %v5150, %v2197
  %v7859 = vmul.f32 %v5154, %v2197
  %v7860 = vadd.f32 %v7832, %v7846
  %v7861 = vadd.f32 %v7833, %v7847
  %v7862 = vadd.f32 %v7834, %v7848
  %v7863 = vadd.f32 %v7835, %v7849
  %v7864 = vadd.f32 %v7836, %v7850
  %v7865 = vadd.f32 %v7837, %v7851
  %v7866 = vadd.f32 %v7838, %v7852
  %v7867 = vadd.f32 %v7839, %v7853
  %v7868 = vadd.f32 %v7840, %v7854
  %v7869 = vadd.f32 %v7841, %v7855
  %v7870 = vadd.f32 %v7842, %v7856
  %v7871 = vadd.f32 %v7843, %v7857
  %v7872 = vadd.f32 %v7844, %v7858
  %v7873 = vadd.f32 %v7845, %v7859
  %v7874 = vmul.f32 %v5186, %v2285
  %v7875 = vmul.f32 %v5190, %v2285
  %v7876 = vmul.f32 %v5194, %v2285
  %v7877 = vmul.f32 %v5198, %v2285
  %v7878 = vmul.f32 %v5202, %v2285
  %v7879 = vmul.f32 %v5206, %v2285
  %v7880 = vmul.f32 %v5210, %v2285
  %v7881 = vmul.f32 %v5214, %v2285
  %v7882 = vmul.f32 %v5218, %v2285
  %v7883 = vmul.f32 %v5222, %v2285
  %v7884 = vmul.f32 %v5226, %v2285
  %v7885 = vmul.f32 %v5230, %v2285
  %v7886 = vmul.f32 %v5234, %v2285
  %v7887 = vmul.f32 %v5238, %v2285
  %v7888 = vadd.f32 %v7860, %v7874
  %v7889 = vadd.f32 %v7861, %v7875
  %v7890 = vadd.f32 %v7862, %v7876
  %v7891 = vadd.f32 %v7863, %v7877
  %v7892 = vadd.f32 %v7864, %v7878
  %v7893 = vadd.f32 %v7865, %v7879
  %v7894 = vadd.f32 %v7866, %v7880
  %v7895 = vadd.f32 %v7867, %v7881
  %v7896 = vadd.f32 %v7868, %v7882
  %v7897 = vadd.f32 %v7869, %v7883
  %v7898 = vadd.f32 %v7870, %v7884
  %v7899 = vadd.f32 %v7871, %v7885
  %v7900 = vadd.f32 %v7872, %v7886
  %v7901 = vadd.f32 %v7873, %v7887
  %v7902 = vmul.f32 %v6421, %v2402
  %v7903 = vmul.f32 %v6426, %v2402
  %v7904 = vmul.f32 %v6431, %v2402
  %v7905 = vmul.f32 %v6436, %v2402
  %v7906 = vmul.f32 %v6441, %v2402
  %v7907 = vmul.f32 %v6446, %v2402
  %v7908 = vmul.f32 %v6451, %v2402
  %v7909 = vmul.f32 %v6456, %v2402
  %v7910 = vmul.f32 %v6461, %v2402
  %v7911 = vmul.f32 %v6466, %v2402
  %v7912 = vmul.f32 %v6471, %v2402
  %v7913 = vmul.f32 %v6476, %v2402
  %v7914 = vmul.f32 %v6481, %v2402
  %v7915 = vmul.f32 %v6486, %v2402
  %v7916 = vadd.f32 %v7888, %v7902
  %v7917 = vadd.f32 %v7889, %v7903
  %v7918 = vadd.f32 %v7890, %v7904
  %v7919 = vadd.f32 %v7891, %v7905
  %v7920 = vadd.f32 %v7892, %v7906
  %v7921 = vadd.f32 %v7893, %v7907
  %v7922 = vadd.f32 %v7894, %v7908
  %v7923 = vadd.f32 %v7895, %v7909
  %v7924 = vadd.f32 %v7896, %v7910
  %v7925 = vadd.f32 %v7897, %v7911
  %v7926 = vadd.f32 %v7898, %v7912
  %v7927 = vadd.f32 %v7899, %v7913
  %v7928 = vadd.f32 %v7900, %v7914
  %v7929 = vadd.f32 %v7901, %v7915
  %v7930 = vmul.f32 %v6518, %v2490
  %v7931 = vmul.f32 %v6522, %v2490
  %v7932 = vmul.f32 %v6526, %v2490
  %v7933 = vmul.f32 %v6530, %v2490
  %v7934 = vmul.f32 %v6534, %v2490
  %v7935 = vmul.f32 %v6538, %v2490
  %v7936 = vmul.f32 %v6542, %v2490
  %v7937 = vmul.f32 %v6546, %v2490
  %v7938 = vmul.f32 %v6550, %v2490
  %v7939 = vmul.f32 %v6554, %v2490
  %v7940 = vmul.f32 %v6558, %v2490
  %v7941 = vmul.f32 %v6562, %v2490
  %v7942 = vmul.f32 %v6566, %v2490
  %v7943 = vmul.f32 %v6570, %v2490
  %v7944 = vadd.f32 %v7916, %v7930
  %v7945 = vadd.f32 %v7917, %v7931
  %v7946 = vadd.f32 %v7918, %v7932
  %v7947 = vadd.f32 %v7919, %v7933
  %v7948 = vadd.f32 %v7920, %v7934
  %v7949 = vadd.f32 %v7921, %v7935
  %v7950 = vadd.f32 %v7922, %v7936
  %v7951 = vadd.f32 %v7923, %v7937
  %v7952 = vadd.f32 %v7924, %v7938
  %v7953 = vadd.f32 %v7925, %v7939
  %v7954 = vadd.f32 %v7926, %v7940
  %v7955 = vadd.f32 %v7927, %v7941
  %v7956 = vadd.f32 %v7928, %v7942
  %v7957 = vadd.f32 %v7929, %v7943
  %v7958 = vmul.f32 %v6602, %v2578
  %v7959 = vmul.f32 %v6606, %v2578
  %v7960 = vmul.f32 %v6610, %v2578
  %v7961 = vmul.f32 %v6614, %v2578
  %v7962 = vmul.f32 %v6618, %v2578
  %v7963 = vmul.f32 %v6622, %v2578
  %v7964 = vmul.f32 %v6626, %v2578
  %v7965 = vmul.f32 %v6630, %v2578
  %v7966 = vmul.f32 %v6634, %v2578
  %v7967 = vmul.f32 %v6638, %v2578
  %v7968 = vmul.f32 %v6642, %v2578
  %v7969 = vmul.f32 %v6646, %v2578
  %v7970 = vmul.f32 %v6650, %v2578
  %v7971 = vmul.f32 %v6654, %v2578
  %v7972 = vadd.f32 %v7944, %v7958
  %v7973 = vadd.f32 %v7945, %v7959
  %v7974 = vadd.f32 %v7946, %v7960
  %v7975 = vadd.f32 %v7947, %v7961
  %v7976 = vadd.f32 %v7948, %v7962
  %v7977 = vadd.f32 %v7949, %v7963
  %v7978 = vadd.f32 %v7950, %v7964
  %v7979 = vadd.f32 %v7951, %v7965
  %v7980 = vadd.f32 %v7952, %v7966
  %v7981 = vadd.f32 %v7953, %v7967
  %v7982 = vadd.f32 %v7954, %v7968
  %v7983 = vadd.f32 %v7955, %v7969
  %v7984 = vadd.f32 %v7956, %v7970
  %v7985 = vadd.f32 %v7957, %v7971
  %v7986 = vmul.f32 %v6686, %v2666
  %v7987 = vmul.f32 %v6690, %v2666
  %v7988 = vmul.f32 %v6694, %v2666
  %v7989 = vmul.f32 %v6698, %v2666
  %v7990 = vmul.f32 %v6702, %v2666
  %v7991 = vmul.f32 %v6706, %v2666
  %v7992 = vmul.f32 %v6710, %v2666
  %v7993 = vmul.f32 %v6714, %v2666
  %v7994 = vmul.f32 %v6718, %v2666
  %v7995 = vmul.f32 %v6722, %v2666
  %v7996 = vmul.f32 %v6726, %v2666
  %v7997 = vmul.f32 %v6730, %v2666
  %v7998 = vmul.f32 %v6734, %v2666
  %v7999 = vmul.f32 %v6738, %v2666
  %v8000 = vadd.f32 %v7972, %v7986
  %v8001 = vadd.f32 %v7973, %v7987
  %v8002 = vadd.f32 %v7974, %v7988
  %v8003 = vadd.f32 %v7975, %v7989
  %v8004 = vadd.f32 %v7976, %v7990
  %v8005 = vadd.f32 %v7977, %v7991
  %v8006 = vadd.f32 %v7978, %v7992
  %v8007 = vadd.f32 %v7979, %v7993
  %v8008 = vadd.f32 %v7980, %v7994
  %v8009 = vadd.f32 %v7981, %v7995
  %v8010 = vadd.f32 %v7982, %v7996
  %v8011 = vadd.f32 %v7983, %v7997
  %v8012 = vadd.f32 %v7984, %v7998
  %v8013 = vadd.f32 %v7985, %v7999
  %v8014 = vmul.f32 %v6785, %v2783
  %v8015 = vmul.f32 %v6790, %v2783
  %v8016 = vmul.f32 %v6795, %v2783
  %v8017 = vmul.f32 %v6800, %v2783
  %v8018 = vmul.f32 %v6805, %v2783
  %v8019 = vmul.f32 %v6810, %v2783
  %v8020 = vmul.f32 %v6815, %v2783
  %v8021 = vmul.f32 %v6820, %v2783
  %v8022 = vmul.f32 %v6825, %v2783
  %v8023 = vmul.f32 %v6830, %v2783
  %v8024 = vmul.f32 %v6835, %v2783
  %v8025 = vmul.f32 %v6840, %v2783
  %v8026 = vmul.f32 %v6845, %v2783
  %v8027 = vmul.f32 %v6850, %v2783
  %v8028 = vadd.f32 %v8000, %v8014
  %v8029 = vadd.f32 %v8001, %v8015
  %v8030 = vadd.f32 %v8002, %v8016
  %v8031 = vadd.f32 %v8003, %v8017
  %v8032 = vadd.f32 %v8004, %v8018
  %v8033 = vadd.f32 %v8005, %v8019
  %v8034 = vadd.f32 %v8006, %v8020
  %v8035 = vadd.f32 %v8007, %v8021
  %v8036 = vadd.f32 %v8008, %v8022
  %v8037 = vadd.f32 %v8009, %v8023
  %v8038 = vadd.f32 %v8010, %v8024
  %v8039 = vadd.f32 %v8011, %v8025
  %v8040 = vadd.f32 %v8012, %v8026
  %v8041 = vadd.f32 %v8013, %v8027
  %v8042 = vmul.f32 %v6882, %v2871
  %v8043 = vmul.f32 %v6886, %v2871
  %v8044 = vmul.f32 %v6890, %v2871
  %v8045 = vmul.f32 %v6894, %v2871
  %v8046 = vmul.f32 %v6898, %v2871
  %v8047 = vmul.f32 %v6902, %v2871
  %v8048 = vmul.f32 %v6906, %v2871
  %v8049 = vmul.f32 %v6910, %v2871
  %v8050 = vmul.f32 %v6914, %v2871
  %v8051 = vmul.f32 %v6918, %v2871
  %v8052 = vmul.f32 %v6922, %v2871
  %v8053 = vmul.f32 %v6926, %v2871
  %v8054 = vmul.f32 %v6930, %v2871
  %v8055 = vmul.f32 %v6934, %v2871
  %v8056 = vadd.f32 %v8028, %v8042
  %v8057 = vadd.f32 %v8029, %v8043
  %v8058 = vadd.f32 %v8030, %v8044
  %v8059 = vadd.f32 %v8031, %v8045
  %v8060 = vadd.f32 %v8032, %v8046
  %v8061 = vadd.f32 %v8033, %v8047
  %v8062 = vadd.f32 %v8034, %v8048
  %v8063 = vadd.f32 %v8035, %v8049
  %v8064 = vadd.f32 %v8036, %v8050
  %v8065 = vadd.f32 %v8037, %v8051
  %v8066 = vadd.f32 %v8038, %v8052
  %v8067 = vadd.f32 %v8039, %v8053
  %v8068 = vadd.f32 %v8040, %v8054
  %v8069 = vadd.f32 %v8041, %v8055
  %v8070 = vmul.f32 %v6966, %v2959
  %v8071 = vmul.f32 %v6970, %v2959
  %v8072 = vmul.f32 %v6974, %v2959
  %v8073 = vmul.f32 %v6978, %v2959
  %v8074 = vmul.f32 %v6982, %v2959
  %v8075 = vmul.f32 %v6986, %v2959
  %v8076 = vmul.f32 %v6990, %v2959
  %v8077 = vmul.f32 %v6994, %v2959
  %v8078 = vmul.f32 %v6998, %v2959
  %v8079 = vmul.f32 %v7002, %v2959
  %v8080 = vmul.f32 %v7006, %v2959
  %v8081 = vmul.f32 %v7010, %v2959
  %v8082 = vmul.f32 %v7014, %v2959
  %v8083 = vmul.f32 %v7018, %v2959
  %v8084 = vadd.f32 %v8056, %v8070
  %v8085 = vadd.f32 %v8057, %v8071
  %v8086 = vadd.f32 %v8058, %v8072
  %v8087 = vadd.f32 %v8059, %v8073
  %v8088 = vadd.f32 %v8060, %v8074
  %v8089 = vadd.f32 %v8061, %v8075
  %v8090 = vadd.f32 %v8062, %v8076
  %v8091 = vadd.f32 %v8063, %v8077
  %v8092 = vadd.f32 %v8064, %v8078
  %v8093 = vadd.f32 %v8065, %v8079
  %v8094 = vadd.f32 %v8066, %v8080
  %v8095 = vadd.f32 %v8067, %v8081
  %v8096 = vadd.f32 %v8068, %v8082
  %v8097 = vadd.f32 %v8069, %v8083
  %v8098 = vmul.f32 %v7050, %v3047
  %v8099 = vmul.f32 %v7054, %v3047
  %v8100 = vmul.f32 %v7058, %v3047
  %v8101 = vmul.f32 %v7062, %v3047
  %v8102 = vmul.f32 %v7066, %v3047
  %v8103 = vmul.f32 %v7070, %v3047
  %v8104 = vmul.f32 %v7074, %v3047
  %v8105 = vmul.f32 %v7078, %v3047
  %v8106 = vmul.f32 %v7082, %v3047
  %v8107 = vmul.f32 %v7086, %v3047
  %v8108 = vmul.f32 %v7090, %v3047
  %v8109 = vmul.f32 %v7094, %v3047
  %v8110 = vmul.f32 %v7098, %v3047
  %v8111 = vmul.f32 %v7102, %v3047
  %v8112 = vadd.f32 %v8084, %v8098
  %v8113 = vadd.f32 %v8085, %v8099
  %v8114 = vadd.f32 %v8086, %v8100
  %v8115 = vadd.f32 %v8087, %v8101
  %v8116 = vadd.f32 %v8088, %v8102
  %v8117 = vadd.f32 %v8089, %v8103
  %v8118 = vadd.f32 %v8090, %v8104
  %v8119 = vadd.f32 %v8091, %v8105
  %v8120 = vadd.f32 %v8092, %v8106
  %v8121 = vadd.f32 %v8093, %v8107
  %v8122 = vadd.f32 %v8094, %v8108
  %v8123 = vadd.f32 %v8095, %v8109
  %v8124 = vadd.f32 %v8096, %v8110
  %v8125 = vadd.f32 %v8097, %v8111
  %v8126 = vld [vmem:[%s6403 + $0x1] sm:$0x7f]
  %v8127 = vld [vmem:[%s6403 + $0x9] sm:$0x7f]
  %v8128 = vld [vmem:[%s6403 + $0x11] sm:$0x7f]
  %v8129 = vld [vmem:[%s6403 + $0x19] sm:$0x7f]
  %v8130 = vld [vmem:[%s6403 + $0x21] sm:$0x7f]
  %v8131 = vld [vmem:[%s6403 + $0x29] sm:$0x7f]
  %v8132 = vld [vmem:[%s6403 + $0x31] sm:$0x7f]
  %v8133 = vld [vmem:[%s6403 + $0x41] sm:$0x7f]
  %v8134 = vld [vmem:[%s6403 + $0x49] sm:$0x7f]
  %v8135 = vld [vmem:[%s6403 + $0x51] sm:$0x7f]
  %v8136 = vld [vmem:[%s6403 + $0x59] sm:$0x7f]
  %v8137 = vld [vmem:[%s6403 + $0x61] sm:$0x7f]
  %v8138 = vld [vmem:[%s6403 + $0x69] sm:$0x7f]
  %v8139 = vld [vmem:[%s6403 + $0x71] sm:$0x7f]
  %8141 = vset.pattern.permute.xlu0 0
  %8142 = vperm.xlu0 %8141, %v8126
  %v8143 = vpop.permute.xlu0 %8142
  %8146 = vset.pattern.permute.xlu0 0
  %8147 = vperm.xlu0 %8146, %v8127
  %v8148 = vpop.permute.xlu0 %8147
  %8151 = vset.pattern.permute.xlu0 0
  %8152 = vperm.xlu0 %8151, %v8128
  %v8153 = vpop.permute.xlu0 %8152
  %8156 = vset.pattern.permute.xlu0 0
  %8157 = vperm.xlu0 %8156, %v8129
  %v8158 = vpop.permute.xlu0 %8157
  %8161 = vset.pattern.permute.xlu0 0
  %8162 = vperm.xlu0 %8161, %v8130
  %v8163 = vpop.permute.xlu0 %8162
  %8166 = vset.pattern.permute.xlu0 0
  %8167 = vperm.xlu0 %8166, %v8131
  %v8168 = vpop.permute.xlu0 %8167
  %8171 = vset.pattern.permute.xlu0 0
  %8172 = vperm.xlu0 %8171, %v8132
  %v8173 = vpop.permute.xlu0 %8172
  %8176 = vset.pattern.permute.xlu0 0
  %8177 = vperm.xlu0 %8176, %v8133
  %v8178 = vpop.permute.xlu0 %8177
  %8181 = vset.pattern.permute.xlu0 0
  %8182 = vperm.xlu0 %8181, %v8134
  %v8183 = vpop.permute.xlu0 %8182
  %8186 = vset.pattern.permute.xlu0 0
  %8187 = vperm.xlu0 %8186, %v8135
  %v8188 = vpop.permute.xlu0 %8187
  %8191 = vset.pattern.permute.xlu0 0
  %8192 = vperm.xlu0 %8191, %v8136
  %v8193 = vpop.permute.xlu0 %8192
  %8196 = vset.pattern.permute.xlu0 0
  %8197 = vperm.xlu0 %8196, %v8137
  %v8198 = vpop.permute.xlu0 %8197
  %8201 = vset.pattern.permute.xlu0 0
  %8202 = vperm.xlu0 %8201, %v8138
  %v8203 = vpop.permute.xlu0 %8202
  %8206 = vset.pattern.permute.xlu0 0
  %8207 = vperm.xlu0 %8206, %v8139
  %v8208 = vpop.permute.xlu0 %8207
  %v8210 = vmul.f32 %v8143, %v3163
  %v8211 = vmul.f32 %v8148, %v3163
  %v8212 = vmul.f32 %v8153, %v3163
  %v8213 = vmul.f32 %v8158, %v3163
  %v8214 = vmul.f32 %v8163, %v3163
  %v8215 = vmul.f32 %v8168, %v3163
  %v8216 = vmul.f32 %v8173, %v3163
  %v8217 = vmul.f32 %v8178, %v3163
  %v8218 = vmul.f32 %v8183, %v3163
  %v8219 = vmul.f32 %v8188, %v3163
  %v8220 = vmul.f32 %v8193, %v3163
  %v8221 = vmul.f32 %v8198, %v3163
  %v8222 = vmul.f32 %v8203, %v3163
  %v8223 = vmul.f32 %v8208, %v3163
  %v8224 = vadd.f32 %v8112, %v8210
  %v8225 = vadd.f32 %v8113, %v8211
  %v8226 = vadd.f32 %v8114, %v8212
  %v8227 = vadd.f32 %v8115, %v8213
  %v8228 = vadd.f32 %v8116, %v8214
  %v8229 = vadd.f32 %v8117, %v8215
  %v8230 = vadd.f32 %v8118, %v8216
  %v8231 = vadd.f32 %v8119, %v8217
  %v8232 = vadd.f32 %v8120, %v8218
  %v8233 = vadd.f32 %v8121, %v8219
  %v8234 = vadd.f32 %v8122, %v8220
  %v8235 = vadd.f32 %v8123, %v8221
  %v8236 = vadd.f32 %v8124, %v8222
  %v8237 = vadd.f32 %v8125, %v8223
  %8238 = vset.pattern.permute.xlu0 1
  %8239 = vperm.xlu0 %8238, %v8126
  %v8240 = vpop.permute.xlu0 %8239
  %8242 = vset.pattern.permute.xlu0 1
  %8243 = vperm.xlu0 %8242, %v8127
  %v8244 = vpop.permute.xlu0 %8243
  %8246 = vset.pattern.permute.xlu0 1
  %8247 = vperm.xlu0 %8246, %v8128
  %v8248 = vpop.permute.xlu0 %8247
  %8250 = vset.pattern.permute.xlu0 1
  %8251 = vperm.xlu0 %8250, %v8129
  %v8252 = vpop.permute.xlu0 %8251
  %8254 = vset.pattern.permute.xlu0 1
  %8255 = vperm.xlu0 %8254, %v8130
  %v8256 = vpop.permute.xlu0 %8255
  %8258 = vset.pattern.permute.xlu0 1
  %8259 = vperm.xlu0 %8258, %v8131
  %v8260 = vpop.permute.xlu0 %8259
  %8262 = vset.pattern.permute.xlu0 1
  %8263 = vperm.xlu0 %8262, %v8132
  %v8264 = vpop.permute.xlu0 %8263
  %8266 = vset.pattern.permute.xlu0 1
  %8267 = vperm.xlu0 %8266, %v8133
  %v8268 = vpop.permute.xlu0 %8267
  %8270 = vset.pattern.permute.xlu0 1
  %8271 = vperm.xlu0 %8270, %v8134
  %v8272 = vpop.permute.xlu0 %8271
  %8274 = vset.pattern.permute.xlu0 1
  %8275 = vperm.xlu0 %8274, %v8135
  %v8276 = vpop.permute.xlu0 %8275
  %8278 = vset.pattern.permute.xlu0 1
  %8279 = vperm.xlu0 %8278, %v8136
  %v8280 = vpop.permute.xlu0 %8279
  %8282 = vset.pattern.permute.xlu0 1
  %8283 = vperm.xlu0 %8282, %v8137
  %v8284 = vpop.permute.xlu0 %8283
  %8286 = vset.pattern.permute.xlu0 1
  %8287 = vperm.xlu0 %8286, %v8138
  %v8288 = vpop.permute.xlu0 %8287
  %8290 = vset.pattern.permute.xlu0 1
  %8291 = vperm.xlu0 %8290, %v8139
  %v8292 = vpop.permute.xlu0 %8291
  %v8294 = vmul.f32 %v8240, %v3251
  %v8295 = vmul.f32 %v8244, %v3251
  %v8296 = vmul.f32 %v8248, %v3251
  %v8297 = vmul.f32 %v8252, %v3251
  %v8298 = vmul.f32 %v8256, %v3251
  %v8299 = vmul.f32 %v8260, %v3251
  %v8300 = vmul.f32 %v8264, %v3251
  %v8301 = vmul.f32 %v8268, %v3251
  %v8302 = vmul.f32 %v8272, %v3251
  %v8303 = vmul.f32 %v8276, %v3251
  %v8304 = vmul.f32 %v8280, %v3251
  %v8305 = vmul.f32 %v8284, %v3251
  %v8306 = vmul.f32 %v8288, %v3251
  %v8307 = vmul.f32 %v8292, %v3251
  %v8308 = vadd.f32 %v8224, %v8294
  %v8309 = vadd.f32 %v8225, %v8295
  %v8310 = vadd.f32 %v8226, %v8296
  %v8311 = vadd.f32 %v8227, %v8297
  %v8312 = vadd.f32 %v8228, %v8298
  %v8313 = vadd.f32 %v8229, %v8299
  %v8314 = vadd.f32 %v8230, %v8300
  %v8315 = vadd.f32 %v8231, %v8301
  %v8316 = vadd.f32 %v8232, %v8302
  %v8317 = vadd.f32 %v8233, %v8303
  %v8318 = vadd.f32 %v8234, %v8304
  %v8319 = vadd.f32 %v8235, %v8305
  %v8320 = vadd.f32 %v8236, %v8306
  %v8321 = vadd.f32 %v8237, %v8307
  %8322 = vset.pattern.permute.xlu0 2
  %8323 = vperm.xlu0 %8322, %v8126
  %v8324 = vpop.permute.xlu0 %8323
  %8326 = vset.pattern.permute.xlu0 2
  %8327 = vperm.xlu0 %8326, %v8127
  %v8328 = vpop.permute.xlu0 %8327
  %8330 = vset.pattern.permute.xlu0 2
  %8331 = vperm.xlu0 %8330, %v8128
  %v8332 = vpop.permute.xlu0 %8331
  %8334 = vset.pattern.permute.xlu0 2
  %8335 = vperm.xlu0 %8334, %v8129
  %v8336 = vpop.permute.xlu0 %8335
  %8338 = vset.pattern.permute.xlu0 2
  %8339 = vperm.xlu0 %8338, %v8130
  %v8340 = vpop.permute.xlu0 %8339
  %8342 = vset.pattern.permute.xlu0 2
  %8343 = vperm.xlu0 %8342, %v8131
  %v8344 = vpop.permute.xlu0 %8343
  %8346 = vset.pattern.permute.xlu0 2
  %8347 = vperm.xlu0 %8346, %v8132
  %v8348 = vpop.permute.xlu0 %8347
  %8350 = vset.pattern.permute.xlu0 2
  %8351 = vperm.xlu0 %8350, %v8133
  %v8352 = vpop.permute.xlu0 %8351
  %8354 = vset.pattern.permute.xlu0 2
  %8355 = vperm.xlu0 %8354, %v8134
  %v8356 = vpop.permute.xlu0 %8355
  %8358 = vset.pattern.permute.xlu0 2
  %8359 = vperm.xlu0 %8358, %v8135
  %v8360 = vpop.permute.xlu0 %8359
  %8362 = vset.pattern.permute.xlu0 2
  %8363 = vperm.xlu0 %8362, %v8136
  %v8364 = vpop.permute.xlu0 %8363
  %8366 = vset.pattern.permute.xlu0 2
  %8367 = vperm.xlu0 %8366, %v8137
  %v8368 = vpop.permute.xlu0 %8367
  %8370 = vset.pattern.permute.xlu0 2
  %8371 = vperm.xlu0 %8370, %v8138
  %v8372 = vpop.permute.xlu0 %8371
  %8374 = vset.pattern.permute.xlu0 2
  %8375 = vperm.xlu0 %8374, %v8139
  %v8376 = vpop.permute.xlu0 %8375
  %v8378 = vmul.f32 %v8324, %v3339
  %v8379 = vmul.f32 %v8328, %v3339
  %v8380 = vmul.f32 %v8332, %v3339
  %v8381 = vmul.f32 %v8336, %v3339
  %v8382 = vmul.f32 %v8340, %v3339
  %v8383 = vmul.f32 %v8344, %v3339
  %v8384 = vmul.f32 %v8348, %v3339
  %v8385 = vmul.f32 %v8352, %v3339
  %v8386 = vmul.f32 %v8356, %v3339
  %v8387 = vmul.f32 %v8360, %v3339
  %v8388 = vmul.f32 %v8364, %v3339
  %v8389 = vmul.f32 %v8368, %v3339
  %v8390 = vmul.f32 %v8372, %v3339
  %v8391 = vmul.f32 %v8376, %v3339
  %v8392 = vadd.f32 %v8308, %v8378
  %v8393 = vadd.f32 %v8309, %v8379
  %v8394 = vadd.f32 %v8310, %v8380
  %v8395 = vadd.f32 %v8311, %v8381
  %v8396 = vadd.f32 %v8312, %v8382
  %v8397 = vadd.f32 %v8313, %v8383
  %v8398 = vadd.f32 %v8314, %v8384
  %v8399 = vadd.f32 %v8315, %v8385
  %v8400 = vadd.f32 %v8316, %v8386
  %v8401 = vadd.f32 %v8317, %v8387
  %v8402 = vadd.f32 %v8318, %v8388
  %v8403 = vadd.f32 %v8319, %v8389
  %v8404 = vadd.f32 %v8320, %v8390
  %v8405 = vadd.f32 %v8321, %v8391
  %8406 = vset.pattern.permute.xlu0 3
  %8407 = vperm.xlu0 %8406, %v8126
  %v8408 = vpop.permute.xlu0 %8407
  %8410 = vset.pattern.permute.xlu0 3
  %8411 = vperm.xlu0 %8410, %v8127
  %v8412 = vpop.permute.xlu0 %8411
  %8414 = vset.pattern.permute.xlu0 3
  %8415 = vperm.xlu0 %8414, %v8128
  %v8416 = vpop.permute.xlu0 %8415
  %8418 = vset.pattern.permute.xlu0 3
  %8419 = vperm.xlu0 %8418, %v8129
  %v8420 = vpop.permute.xlu0 %8419
  %8422 = vset.pattern.permute.xlu0 3
  %8423 = vperm.xlu0 %8422, %v8130
  %v8424 = vpop.permute.xlu0 %8423
  %8426 = vset.pattern.permute.xlu0 3
  %8427 = vperm.xlu0 %8426, %v8131
  %v8428 = vpop.permute.xlu0 %8427
  %8430 = vset.pattern.permute.xlu0 3
  %8431 = vperm.xlu0 %8430, %v8132
  %v8432 = vpop.permute.xlu0 %8431
  %8434 = vset.pattern.permute.xlu0 3
  %8435 = vperm.xlu0 %8434, %v8133
  %v8436 = vpop.permute.xlu0 %8435
  %8438 = vset.pattern.permute.xlu0 3
  %8439 = vperm.xlu0 %8438, %v8134
  %v8440 = vpop.permute.xlu0 %8439
  %8442 = vset.pattern.permute.xlu0 3
  %8443 = vperm.xlu0 %8442, %v8135
  %v8444 = vpop.permute.xlu0 %8443
  %8446 = vset.pattern.permute.xlu0 3
  %8447 = vperm.xlu0 %8446, %v8136
  %v8448 = vpop.permute.xlu0 %8447
  %8450 = vset.pattern.permute.xlu0 3
  %8451 = vperm.xlu0 %8450, %v8137
  %v8452 = vpop.permute.xlu0 %8451
  %8454 = vset.pattern.permute.xlu0 3
  %8455 = vperm.xlu0 %8454, %v8138
  %v8456 = vpop.permute.xlu0 %8455
  %8458 = vset.pattern.permute.xlu0 3
  %8459 = vperm.xlu0 %8458, %v8139
  %v8460 = vpop.permute.xlu0 %8459
  %v8462 = vmul.f32 %v8408, %v3427
  %v8463 = vmul.f32 %v8412, %v3427
  %v8464 = vmul.f32 %v8416, %v3427
  %v8465 = vmul.f32 %v8420, %v3427
  %v8466 = vmul.f32 %v8424, %v3427
  %v8467 = vmul.f32 %v8428, %v3427
  %v8468 = vmul.f32 %v8432, %v3427
  %v8469 = vmul.f32 %v8436, %v3427
  %v8470 = vmul.f32 %v8440, %v3427
  %v8471 = vmul.f32 %v8444, %v3427
  %v8472 = vmul.f32 %v8448, %v3427
  %v8473 = vmul.f32 %v8452, %v3427
  %v8474 = vmul.f32 %v8456, %v3427
  %v8475 = vmul.f32 %v8460, %v3427
  %v8476 = vadd.f32 %v8392, %v8462
  %v8477 = vadd.f32 %v8393, %v8463
  %v8478 = vadd.f32 %v8394, %v8464
  %v8479 = vadd.f32 %v8395, %v8465
  %v8480 = vadd.f32 %v8396, %v8466
  %v8481 = vadd.f32 %v8397, %v8467
  %v8482 = vadd.f32 %v8398, %v8468
  %v8483 = vadd.f32 %v8399, %v8469
  %v8484 = vadd.f32 %v8400, %v8470
  %v8485 = vadd.f32 %v8401, %v8471
  %v8486 = vadd.f32 %v8402, %v8472
  %v8487 = vadd.f32 %v8403, %v8473
  %v8488 = vadd.f32 %v8404, %v8474
  %v8489 = vadd.f32 %v8405, %v8475
  %v8490 = vadd.f32 %v8476, %v3460
  %v8491 = vadd.f32 %v8477, %v3460
  %v8492 = vadd.f32 %v8478, %v3460
  %v8493 = vadd.f32 %v8479, %v3460
  %v8494 = vadd.f32 %v8480, %v3460
  %v8495 = vadd.f32 %v8481, %v3460
  %v8496 = vadd.f32 %v8482, %v3460
  %v8497 = vadd.f32 %v8483, %v3460
  %v8498 = vadd.f32 %v8484, %v3460
  %v8499 = vadd.f32 %v8485, %v3460
  %v8500 = vadd.f32 %v8486, %v3460
  %v8501 = vadd.f32 %v8487, %v3460
  %v8502 = vadd.f32 %v8488, %v3460
  %v8503 = vadd.f32 %v8489, %v3460
  %v8504 = vadd.s32 %v31, 15
  %v8505 = vadd.s32 %v32, 15
  %v8506 = vadd.s32 %v33, 15
  %v8507 = vadd.s32 %v34, 15
  %v8508 = vadd.s32 %v35, 15
  %v8509 = vadd.s32 %v36, 15
  %v8510 = vadd.s32 %v37, 15
  %v8511 = vadd.s32 %v38, 15
  %v8512 = vadd.s32 %v39, 15
  %v8513 = vadd.s32 %v40, 15
  %v8514 = vadd.s32 %v41, 15
  %v8515 = vadd.s32 %v42, 15
  %v8516 = vadd.s32 %v43, 15
  %v8517 = vadd.s32 %v44, 15
  %vm8518 = vcmp.gt.f32.partialorder %v8490, %v7174
  %vm8519 = vcmp.gt.f32.partialorder %v8491, %v7175
  %vm8520 = vcmp.gt.f32.partialorder %v8492, %v7176
  %vm8521 = vcmp.gt.f32.partialorder %v8493, %v7177
  %vm8522 = vcmp.gt.f32.partialorder %v8494, %v7178
  %vm8523 = vcmp.gt.f32.partialorder %v8495, %v7179
  %vm8524 = vcmp.gt.f32.partialorder %v8496, %v7180
  %vm8525 = vcmp.gt.f32.partialorder %v8497, %v7181
  %vm8526 = vcmp.gt.f32.partialorder %v8498, %v7182
  %vm8527 = vcmp.gt.f32.partialorder %v8499, %v7183
  %vm8528 = vcmp.gt.f32.partialorder %v8500, %v7184
  %vm8529 = vcmp.gt.f32.partialorder %v8501, %v7185
  %vm8530 = vcmp.gt.f32.partialorder %v8502, %v7186
  %vm8531 = vcmp.gt.f32.partialorder %v8503, %v7187
  %v8532 = vmax.f32 %v7174, %v8490
  %v8533 = vmax.f32 %v7175, %v8491
  %v8534 = vmax.f32 %v7176, %v8492
  %v8535 = vmax.f32 %v7177, %v8493
  %v8536 = vmax.f32 %v7178, %v8494
  %v8537 = vmax.f32 %v7179, %v8495
  %v8538 = vmax.f32 %v7180, %v8496
  %v8539 = vmax.f32 %v7181, %v8497
  %v8540 = vmax.f32 %v7182, %v8498
  %v8541 = vmax.f32 %v7183, %v8499
  %v8542 = vmax.f32 %v7184, %v8500
  %v8543 = vmax.f32 %v7185, %v8501
  %v8544 = vmax.f32 %v7186, %v8502
  %v8545 = vmax.f32 %v7187, %v8503
  %8546 = vset.pattern.permute.xlu0 0
  %8547 = vperm.xlu0 %8546, %v8504
  %v8548 = vpop.permute.xlu0 %8547
  %8549 = vset.pattern.permute.xlu0 0
  %8550 = vperm.xlu0 %8549, %v8505
  %v8551 = vpop.permute.xlu0 %8550
  %8552 = vset.pattern.permute.xlu0 0
  %8553 = vperm.xlu0 %8552, %v8506
  %v8554 = vpop.permute.xlu0 %8553
  %8555 = vset.pattern.permute.xlu0 0
  %8556 = vperm.xlu0 %8555, %v8507
  %v8557 = vpop.permute.xlu0 %8556
  %8558 = vset.pattern.permute.xlu0 0
  %8559 = vperm.xlu0 %8558, %v8508
  %v8560 = vpop.permute.xlu0 %8559
  %8561 = vset.pattern.permute.xlu0 0
  %8562 = vperm.xlu0 %8561, %v8509
  %v8563 = vpop.permute.xlu0 %8562
  %8564 = vset.pattern.permute.xlu0 0
  %8565 = vperm.xlu0 %8564, %v8510
  %v8566 = vpop.permute.xlu0 %8565
  %8567 = vset.pattern.permute.xlu0 0
  %8568 = vperm.xlu0 %8567, %v8511
  %v8569 = vpop.permute.xlu0 %8568
  %8570 = vset.pattern.permute.xlu0 0
  %8571 = vperm.xlu0 %8570, %v8512
  %v8572 = vpop.permute.xlu0 %8571
  %8573 = vset.pattern.permute.xlu0 0
  %8574 = vperm.xlu0 %8573, %v8513
  %v8575 = vpop.permute.xlu0 %8574
  %8576 = vset.pattern.permute.xlu0 0
  %8577 = vperm.xlu0 %8576, %v8514
  %v8578 = vpop.permute.xlu0 %8577
  %8579 = vset.pattern.permute.xlu0 0
  %8580 = vperm.xlu0 %8579, %v8515
  %v8581 = vpop.permute.xlu0 %8580
  %8582 = vset.pattern.permute.xlu0 0
  %8583 = vperm.xlu0 %8582, %v8516
  %v8584 = vpop.permute.xlu0 %8583
  %8585 = vset.pattern.permute.xlu0 0
  %8586 = vperm.xlu0 %8585, %v8517
  %v8587 = vpop.permute.xlu0 %8586
  %v8588 = vsel %vm8518, %v8548, %v7230
  %v8589 = vsel %vm8519, %v8551, %v7231
  %v8590 = vsel %vm8520, %v8554, %v7232
  %v8591 = vsel %vm8521, %v8557, %v7233
  %v8592 = vsel %vm8522, %v8560, %v7234
  %v8593 = vsel %vm8523, %v8563, %v7235
  %v8594 = vsel %vm8524, %v8566, %v7236
  %v8595 = vsel %vm8525, %v8569, %v7237
  %v8596 = vsel %vm8526, %v8572, %v7238
  %v8597 = vsel %vm8527, %v8575, %v7239
  %v8598 = vsel %vm8528, %v8578, %v7240
  %v8599 = vsel %vm8529, %v8581, %v7241
  %v8600 = vsel %vm8530, %v8584, %v7242
  %v8601 = vsel %vm8531, %v8587, %v7243
  %vm8602 = vcmask 63488
  %8603 = vst.msk [vmem:[%s7] sm:$0x7f] %vm8602, %v8588
  %8604 = vst.msk [vmem:[%s7 + $0x8] sm:$0x7f] %vm8602, %v8589
  %8605 = vst.msk [vmem:[%s7 + $0x10] sm:$0x7f] %vm8602, %v8590
  %8606 = vst.msk [vmem:[%s7 + $0x18] sm:$0x7f] %vm8602, %v8591
  %8607 = vst.msk [vmem:[%s7 + $0x20] sm:$0x7f] %vm8602, %v8592
  %8608 = vst.msk [vmem:[%s7 + $0x28] sm:$0x7f] %vm8602, %v8593
  %8609 = vst.msk [vmem:[%s7 + $0x30] sm:$0x7f] %vm8602, %v8594
  %8610 = vst.msk [vmem:[%s7 + $0x38] sm:$0x7f] %vm8602, %v8595
  %8611 = vst.msk [vmem:[%s7 + $0x40] sm:$0x7f] %vm8602, %v8596
  %8612 = vst.msk [vmem:[%s7 + $0x48] sm:$0x7f] %vm8602, %v8597
  %8613 = vst.msk [vmem:[%s7 + $0x50] sm:$0x7f] %vm8602, %v8598
  %8614 = vst.msk [vmem:[%s7 + $0x58] sm:$0x7f] %vm8602, %v8599
  %8615 = vst.msk [vmem:[%s7 + $0x60] sm:$0x7f] %vm8602, %v8600
  %8616 = vst.msk [vmem:[%s7 + $0x68] sm:$0x7f] %vm8602, %v8601
  %v8617 = vsel %vm8602, %v8532, 0.0
  %v8618 = vrot.slane %v8617, 4
  %v8619 = vadd.f32 %v8617, %v8618
  %v8620 = vrot.slane %v8619, 2
  %v8621 = vadd.f32 %v8619, %v8620
  %v8622 = vrot.slane %v8621, 1
  %v8623 = vadd.f32 %v8621, %v8622
  %v8624 = vsel %vm8602, %v8533, 0.0
  %v8625 = vrot.slane %v8624, 4
  %v8626 = vadd.f32 %v8624, %v8625
  %v8627 = vrot.slane %v8626, 2
  %v8628 = vadd.f32 %v8626, %v8627
  %v8629 = vrot.slane %v8628, 1
  %v8630 = vadd.f32 %v8628, %v8629
  %v8631 = vsel %vm8602, %v8534, 0.0
  %v8632 = vrot.slane %v8631, 4
  %v8633 = vadd.f32 %v8631, %v8632
  %v8634 = vrot.slane %v8633, 2
  %v8635 = vadd.f32 %v8633, %v8634
  %v8636 = vrot.slane %v8635, 1
  %v8637 = vadd.f32 %v8635, %v8636
  %v8638 = vsel %vm8602, %v8535, 0.0
  %v8639 = vrot.slane %v8638, 4
  %v8640 = vadd.f32 %v8638, %v8639
  %v8641 = vrot.slane %v8640, 2
  %v8642 = vadd.f32 %v8640, %v8641
  %v8643 = vrot.slane %v8642, 1
  %v8644 = vadd.f32 %v8642, %v8643
  %v8645 = vsel %vm8602, %v8536, 0.0
  %v8646 = vrot.slane %v8645, 4
  %v8647 = vadd.f32 %v8645, %v8646
  %v8648 = vrot.slane %v8647, 2
  %v8649 = vadd.f32 %v8647, %v8648
  %v8650 = vrot.slane %v8649, 1
  %v8651 = vadd.f32 %v8649, %v8650
  %v8652 = vsel %vm8602, %v8537, 0.0
  %v8653 = vrot.slane %v8652, 4
  %v8654 = vadd.f32 %v8652, %v8653
  %v8655 = vrot.slane %v8654, 2
  %v8656 = vadd.f32 %v8654, %v8655
  %v8657 = vrot.slane %v8656, 1
  %v8658 = vadd.f32 %v8656, %v8657
  %v8659 = vsel %vm8602, %v8538, 0.0
  %v8660 = vrot.slane %v8659, 4
  %v8661 = vadd.f32 %v8659, %v8660
  %v8662 = vrot.slane %v8661, 2
  %v8663 = vadd.f32 %v8661, %v8662
  %v8664 = vrot.slane %v8663, 1
  %v8665 = vadd.f32 %v8663, %v8664
  %v8666 = vsel %vm8602, %v8539, 0.0
  %v8667 = vrot.slane %v8666, 4
  %v8668 = vadd.f32 %v8666, %v8667
  %v8669 = vrot.slane %v8668, 2
  %v8670 = vadd.f32 %v8668, %v8669
  %v8671 = vrot.slane %v8670, 1
  %v8672 = vadd.f32 %v8670, %v8671
  %v8673 = vsel %vm8602, %v8540, 0.0
  %v8674 = vrot.slane %v8673, 4
  %v8675 = vadd.f32 %v8673, %v8674
  %v8676 = vrot.slane %v8675, 2
  %v8677 = vadd.f32 %v8675, %v8676
  %v8678 = vrot.slane %v8677, 1
  %v8679 = vadd.f32 %v8677, %v8678
  %v8680 = vsel %vm8602, %v8541, 0.0
  %v8681 = vrot.slane %v8680, 4
  %v8682 = vadd.f32 %v8680, %v8681
  %v8683 = vrot.slane %v8682, 2
  %v8684 = vadd.f32 %v8682, %v8683
  %v8685 = vrot.slane %v8684, 1
  %v8686 = vadd.f32 %v8684, %v8685
  %v8687 = vsel %vm8602, %v8542, 0.0
  %v8688 = vrot.slane %v8687, 4
  %v8689 = vadd.f32 %v8687, %v8688
  %v8690 = vrot.slane %v8689, 2
  %v8691 = vadd.f32 %v8689, %v8690
  %v8692 = vrot.slane %v8691, 1
  %v8693 = vadd.f32 %v8691, %v8692
  %v8694 = vsel %vm8602, %v8543, 0.0
  %v8695 = vrot.slane %v8694, 4
  %v8696 = vadd.f32 %v8694, %v8695
  %v8697 = vrot.slane %v8696, 2
  %v8698 = vadd.f32 %v8696, %v8697
  %v8699 = vrot.slane %v8698, 1
  %v8700 = vadd.f32 %v8698, %v8699
  %v8701 = vsel %vm8602, %v8544, 0.0
  %v8702 = vrot.slane %v8701, 4
  %v8703 = vadd.f32 %v8701, %v8702
  %v8704 = vrot.slane %v8703, 2
  %v8705 = vadd.f32 %v8703, %v8704
  %v8706 = vrot.slane %v8705, 1
  %v8707 = vadd.f32 %v8705, %v8706
  %v8708 = vsel %vm8602, %v8545, 0.0
  %v8709 = vrot.slane %v8708, 4
  %v8710 = vadd.f32 %v8708, %v8709
  %v8711 = vrot.slane %v8710, 2
  %v8712 = vadd.f32 %v8710, %v8711
  %v8713 = vrot.slane %v8712, 1
  %v8714 = vadd.f32 %v8712, %v8713
  %vm8715 = vcmask 64512
  %v8716 = vsel %vm8715, %v8623, 0.0
  %v8717 = vsel %vm8715, %v8630, 0.0
  %v8718 = vadd.f32 %v8716, %v8717
  %v8719 = vsel %vm8715, %v8637, 0.0
  %v8720 = vadd.f32 %v8718, %v8719
  %v8721 = vsel %vm8715, %v8644, 0.0
  %v8722 = vadd.f32 %v8720, %v8721
  %v8723 = vsel %vm8715, %v8651, 0.0
  %v8724 = vadd.f32 %v8722, %v8723
  %v8725 = vsel %vm8715, %v8658, 0.0
  %v8726 = vadd.f32 %v8724, %v8725
  %v8727 = vsel %vm8715, %v8665, 0.0
  %v8728 = vadd.f32 %v8726, %v8727
  %v8729 = vsel %vm8715, %v8672, 0.0
  %v8730 = vsel %vm8715, %v8679, 0.0
  %v8731 = vadd.f32 %v8729, %v8730
  %v8732 = vsel %vm8715, %v8686, 0.0
  %v8733 = vadd.f32 %v8731, %v8732
  %v8734 = vsel %vm8715, %v8693, 0.0
  %v8735 = vadd.f32 %v8733, %v8734
  %v8736 = vsel %vm8715, %v8700, 0.0
  %v8737 = vadd.f32 %v8735, %v8736
  %v8738 = vsel %vm8715, %v8707, 0.0
  %v8739 = vadd.f32 %v8737, %v8738
  %v8740 = vsel %vm8715, %v8714, 0.0
  %v8741 = vadd.f32 %v8739, %v8740
  %v8742 = vsel %vm8715, %v8728, 0.0
  %v8743 = vsel %vm8715, %v8741, 0.0
  %v8744 = vadd.f32 %v8742, %v8743
  %v8745 = vmul.f32 %v8744, 0.010204081
  %v8746 = vsub.f32 %v8532, %v8745
  %v8747 = vsub.f32 %v8533, %v8745
  %v8748 = vsub.f32 %v8534, %v8745
  %v8749 = vsub.f32 %v8535, %v8745
  %v8750 = vsub.f32 %v8536, %v8745
  %v8751 = vsub.f32 %v8537, %v8745
  %v8752 = vsub.f32 %v8538, %v8745
  %v8753 = vsub.f32 %v8539, %v8745
  %v8754 = vsub.f32 %v8540, %v8745
  %v8755 = vsub.f32 %v8541, %v8745
  %v8756 = vsub.f32 %v8542, %v8745
  %v8757 = vsub.f32 %v8543, %v8745
  %v8758 = vsub.f32 %v8544, %v8745
  %v8759 = vsub.f32 %v8545, %v8745
  %v8760 = vmul.f32 %v8746, %v8746
  %v8761 = vmul.f32 %v8747, %v8747
  %v8762 = vmul.f32 %v8748, %v8748
  %v8763 = vmul.f32 %v8749, %v8749
  %v8764 = vmul.f32 %v8750, %v8750
  %v8765 = vmul.f32 %v8751, %v8751
  %v8766 = vmul.f32 %v8752, %v8752
  %v8767 = vmul.f32 %v8753, %v8753
  %v8768 = vmul.f32 %v8754, %v8754
  %v8769 = vmul.f32 %v8755, %v8755
  %v8770 = vmul.f32 %v8756, %v8756
  %v8771 = vmul.f32 %v8757, %v8757
  %v8772 = vmul.f32 %v8758, %v8758
  %v8773 = vmul.f32 %v8759, %v8759
  %v8774 = vsel %vm8602, %v8760, 0.0
  %v8775 = vrot.slane %v8774, 4
  %v8776 = vadd.f32 %v8774, %v8775
  %v8777 = vrot.slane %v8776, 2
  %v8778 = vadd.f32 %v8776, %v8777
  %v8779 = vrot.slane %v8778, 1
  %v8780 = vadd.f32 %v8778, %v8779
  %v8781 = vsel %vm8602, %v8761, 0.0
  %v8782 = vrot.slane %v8781, 4
  %v8783 = vadd.f32 %v8781, %v8782
  %v8784 = vrot.slane %v8783, 2
  %v8785 = vadd.f32 %v8783, %v8784
  %v8786 = vrot.slane %v8785, 1
  %v8787 = vadd.f32 %v8785, %v8786
  %v8788 = vsel %vm8602, %v8762, 0.0
  %v8789 = vrot.slane %v8788, 4
  %v8790 = vadd.f32 %v8788, %v8789
  %v8791 = vrot.slane %v8790, 2
  %v8792 = vadd.f32 %v8790, %v8791
  %v8793 = vrot.slane %v8792, 1
  %v8794 = vadd.f32 %v8792, %v8793
  %v8795 = vsel %vm8602, %v8763, 0.0
  %v8796 = vrot.slane %v8795, 4
  %v8797 = vadd.f32 %v8795, %v8796
  %v8798 = vrot.slane %v8797, 2
  %v8799 = vadd.f32 %v8797, %v8798
  %v8800 = vrot.slane %v8799, 1
  %v8801 = vadd.f32 %v8799, %v8800
  %v8802 = vsel %vm8602, %v8764, 0.0
  %v8803 = vrot.slane %v8802, 4
  %v8804 = vadd.f32 %v8802, %v8803
  %v8805 = vrot.slane %v8804, 2
  %v8806 = vadd.f32 %v8804, %v8805
  %v8807 = vrot.slane %v8806, 1
  %v8808 = vadd.f32 %v8806, %v8807
  %v8809 = vsel %vm8602, %v8765, 0.0
  %v8810 = vrot.slane %v8809, 4
  %v8811 = vadd.f32 %v8809, %v8810
  %v8812 = vrot.slane %v8811, 2
  %v8813 = vadd.f32 %v8811, %v8812
  %v8814 = vrot.slane %v8813, 1
  %v8815 = vadd.f32 %v8813, %v8814
  %v8816 = vsel %vm8602, %v8766, 0.0
  %v8817 = vrot.slane %v8816, 4
  %v8818 = vadd.f32 %v8816, %v8817
  %v8819 = vrot.slane %v8818, 2
  %v8820 = vadd.f32 %v8818, %v8819
  %v8821 = vrot.slane %v8820, 1
  %v8822 = vadd.f32 %v8820, %v8821
  %v8823 = vsel %vm8602, %v8767, 0.0
  %v8824 = vrot.slane %v8823, 4
  %v8825 = vadd.f32 %v8823, %v8824
  %v8826 = vrot.slane %v8825, 2
  %v8827 = vadd.f32 %v8825, %v8826
  %v8828 = vrot.slane %v8827, 1
  %v8829 = vadd.f32 %v8827, %v8828
  %v8830 = vsel %vm8602, %v8768, 0.0
  %v8831 = vrot.slane %v8830, 4
  %v8832 = vadd.f32 %v8830, %v8831
  %v8833 = vrot.slane %v8832, 2
  %v8834 = vadd.f32 %v8832, %v8833
  %v8835 = vrot.slane %v8834, 1
  %v8836 = vadd.f32 %v8834, %v8835
  %v8837 = vsel %vm8602, %v8769, 0.0
  %v8838 = vrot.slane %v8837, 4
  %v8839 = vadd.f32 %v8837, %v8838
  %v8840 = vrot.slane %v8839, 2
  %v8841 = vadd.f32 %v8839, %v8840
  %v8842 = vrot.slane %v8841, 1
  %v8843 = vadd.f32 %v8841, %v8842
  %v8844 = vsel %vm8602, %v8770, 0.0
  %v8845 = vrot.slane %v8844, 4
  %v8846 = vadd.f32 %v8844, %v8845
  %v8847 = vrot.slane %v8846, 2
  %v8848 = vadd.f32 %v8846, %v8847
  %v8849 = vrot.slane %v8848, 1
  %v8850 = vadd.f32 %v8848, %v8849
  %v8851 = vsel %vm8602, %v8771, 0.0
  %v8852 = vrot.slane %v8851, 4
  %v8853 = vadd.f32 %v8851, %v8852
  %v8854 = vrot.slane %v8853, 2
  %v8855 = vadd.f32 %v8853, %v8854
  %v8856 = vrot.slane %v8855, 1
  %v8857 = vadd.f32 %v8855, %v8856
  %v8858 = vsel %vm8602, %v8772, 0.0
  %v8859 = vrot.slane %v8858, 4
  %v8860 = vadd.f32 %v8858, %v8859
  %v8861 = vrot.slane %v8860, 2
  %v8862 = vadd.f32 %v8860, %v8861
  %v8863 = vrot.slane %v8862, 1
  %v8864 = vadd.f32 %v8862, %v8863
  %v8865 = vsel %vm8602, %v8773, 0.0
  %v8866 = vrot.slane %v8865, 4
  %v8867 = vadd.f32 %v8865, %v8866
  %v8868 = vrot.slane %v8867, 2
  %v8869 = vadd.f32 %v8867, %v8868
  %v8870 = vrot.slane %v8869, 1
  %v8871 = vadd.f32 %v8869, %v8870
  %v8872 = vsel %vm8715, %v8780, 0.0
  %v8873 = vsel %vm8715, %v8787, 0.0
  %v8874 = vadd.f32 %v8872, %v8873
  %v8875 = vsel %vm8715, %v8794, 0.0
  %v8876 = vadd.f32 %v8874, %v8875
  %v8877 = vsel %vm8715, %v8801, 0.0
  %v8878 = vadd.f32 %v8876, %v8877
  %v8879 = vsel %vm8715, %v8808, 0.0
  %v8880 = vadd.f32 %v8878, %v8879
  %v8881 = vsel %vm8715, %v8815, 0.0
  %v8882 = vadd.f32 %v8880, %v8881
  %v8883 = vsel %vm8715, %v8822, 0.0
  %v8884 = vadd.f32 %v8882, %v8883
  %v8885 = vsel %vm8715, %v8829, 0.0
  %v8886 = vsel %vm8715, %v8836, 0.0
  %v8887 = vadd.f32 %v8885, %v8886
  %v8888 = vsel %vm8715, %v8843, 0.0
  %v8889 = vadd.f32 %v8887, %v8888
  %v8890 = vsel %vm8715, %v8850, 0.0
  %v8891 = vadd.f32 %v8889, %v8890
  %v8892 = vsel %vm8715, %v8857, 0.0
  %v8893 = vadd.f32 %v8891, %v8892
  %v8894 = vsel %vm8715, %v8864, 0.0
  %v8895 = vadd.f32 %v8893, %v8894
  %v8896 = vsel %vm8715, %v8871, 0.0
  %v8897 = vadd.f32 %v8895, %v8896
  %v8898 = vsel %vm8715, %v8884, 0.0
  %v8899 = vsel %vm8715, %v8897, 0.0
  %v8900 = vadd.f32 %v8898, %v8899
  %v8901 = vmul.f32 %v8900, 0.010204081
  %v8902 = vadd.f32 %v8901, 1e-05
  %v8903 = vrsqrt.pop %v8902
  %v8904 = vmul.f32 %v8746, %v8903
  %v8905 = vmul.f32 %v8747, %v8903
  %v8906 = vmul.f32 %v8748, %v8903
  %v8907 = vmul.f32 %v8749, %v8903
  %v8908 = vmul.f32 %v8750, %v8903
  %v8909 = vmul.f32 %v8751, %v8903
  %v8910 = vmul.f32 %v8752, %v8903
  %v8911 = vmul.f32 %v8753, %v8903
  %v8912 = vmul.f32 %v8754, %v8903
  %v8913 = vmul.f32 %v8755, %v8903
  %v8914 = vmul.f32 %v8756, %v8903
  %v8915 = vmul.f32 %v8757, %v8903
  %v8916 = vmul.f32 %v8758, %v8903
  %v8917 = vmul.f32 %v8759, %v8903
  %v8918 = vld [vmem:[%s3] sm:$0x1]
  %v8920 = vlaneseq
  %v8921 = vshrl.u32 %v8920, 7
  %v8922 = vsub.s32 0, %v8921
  %v8923 = vrot.slane %v8918, %v8922
  %v8925 = vmul.f32 %v8904, %v8923
  %v8926 = vmul.f32 %v8905, %v8923
  %v8927 = vmul.f32 %v8906, %v8923
  %v8928 = vmul.f32 %v8907, %v8923
  %v8929 = vmul.f32 %v8908, %v8923
  %v8930 = vmul.f32 %v8909, %v8923
  %v8931 = vmul.f32 %v8910, %v8923
  %v8932 = vmul.f32 %v8911, %v8923
  %v8933 = vmul.f32 %v8912, %v8923
  %v8934 = vmul.f32 %v8913, %v8923
  %v8935 = vmul.f32 %v8914, %v8923
  %v8936 = vmul.f32 %v8915, %v8923
  %v8937 = vmul.f32 %v8916, %v8923
  %v8938 = vmul.f32 %v8917, %v8923
  %v8939 = vld [vmem:[%s4] sm:$0x1]
  %v8941 = vlaneseq
  %v8942 = vshrl.u32 %v8941, 7
  %v8943 = vsub.s32 0, %v8942
  %v8944 = vrot.slane %v8939, %v8943
  %v8946 = vadd.f32 %v8925, %v8944
  %v8947 = vadd.f32 %v8926, %v8944
  %v8948 = vadd.f32 %v8927, %v8944
  %v8949 = vadd.f32 %v8928, %v8944
  %v8950 = vadd.f32 %v8929, %v8944
  %v8951 = vadd.f32 %v8930, %v8944
  %v8952 = vadd.f32 %v8931, %v8944
  %v8953 = vadd.f32 %v8932, %v8944
  %v8954 = vadd.f32 %v8933, %v8944
  %v8955 = vadd.f32 %v8934, %v8944
  %v8956 = vadd.f32 %v8935, %v8944
  %v8957 = vadd.f32 %v8936, %v8944
  %v8958 = vadd.f32 %v8937, %v8944
  %v8959 = vadd.f32 %v8938, %v8944
  %8960 = vst.msk [vmem:[%s6] sm:$0x7f] %vm8602, %v8946
  %8961 = vst.msk [vmem:[%s6 + $0x8] sm:$0x7f] %vm8602, %v8947
  %8962 = vst.msk [vmem:[%s6 + $0x10] sm:$0x7f] %vm8602, %v8948
  %8963 = vst.msk [vmem:[%s6 + $0x18] sm:$0x7f] %vm8602, %v8949
  %8964 = vst.msk [vmem:[%s6 + $0x20] sm:$0x7f] %vm8602, %v8950
  %8965 = vst.msk [vmem:[%s6 + $0x28] sm:$0x7f] %vm8602, %v8951
  %8966 = vst.msk [vmem:[%s6 + $0x30] sm:$0x7f] %vm8602, %v8952
  %8967 = vst.msk [vmem:[%s6 + $0x38] sm:$0x7f] %vm8602, %v8953
  %8968 = vst.msk [vmem:[%s6 + $0x40] sm:$0x7f] %vm8602, %v8954
  %8969 = vst.msk [vmem:[%s6 + $0x48] sm:$0x7f] %vm8602, %v8955
  %8970 = vst.msk [vmem:[%s6 + $0x50] sm:$0x7f] %vm8602, %v8956
  %8971 = vst.msk [vmem:[%s6 + $0x58] sm:$0x7f] %vm8602, %v8957
  %8972 = vst.msk [vmem:[%s6 + $0x60] sm:$0x7f] %vm8602, %v8958
  %8973 = vst.msk [vmem:[%s6 + $0x68] sm:$0x7f] %vm8602, %v8959
  // Predicated region
  $region26: #{encoder_block.1} parent=0 // pred_check
    _
  $region27: #{encoder_block.1} parent=0 // pred_check_branch
    %8975 = sbr.rel (0) target = $region29
  $region28: #{encoder_block.1} parent=0 // pred_region
    _
  $region29: #{encoder_block.1} parent=0 // pred_fallthru
    _
  // Predicated region
  $region30: #{encoder_block.1} parent=0 // pred_check
    _
  $region31: #{encoder_block.1} parent=0 // pred_check_branch
    %8977 = sbr.rel (0) target = $region33
  $region32: #{encoder_block.1} parent=0 // pred_region
    _
  $region33: #{encoder_block.1} parent=0 // pred_fallthru
    _
  // Predicated region
  $region34: #{encoder_block.1} parent=0 // pred_check
    _
  $region35: #{encoder_block.1} parent=0 // pred_check_branch
    %8979 = sbr.rel (0) target = $region37
  $region36: #{encoder_block.1} parent=0 // pred_region
    _
  $region37: #{encoder_block.1} parent=0 // pred_fallthru
    _
  // Predicated region
  $region38: #{encoder_block.1} parent=0 // pred_check
    _
  $region39: #{encoder_block.1} parent=0 // pred_check_branch
    %8981 = sbr.rel (0) target = $region41
  $region40: #{encoder_block.1} parent=0 // pred_region
    _
  $region41: #{encoder_block.1} parent=0 // pred_fallthru
    _

</llo_original>
